<compile_context>
chip_gen: v7x
topology: tpu7x:2x2x1
jax: 0.10.0
libtpu: 0.0.40
codegen_flags: <defaults>
</compile_context>

<pallas_src>
import jax
import jax.numpy as jnp
import numpy as np
from jax.experimental import pallas as pl
from jax.experimental.pallas import tpu as pltpu


# ---------------------------------------------------------------------------
# In-kernel building blocks
# ---------------------------------------------------------------------------
def _leaky_relu(x, slope=0.2):
    return jnp.where(x >= 0, x, slope * x)


def _conv1d_mxu(x, w16, b, K):
    """'same'-padded, stride-1 Conv1d via im2col + one bf16 MXU matmul.

    x   : (Cin, L) f32        channels on sublanes, length on lanes
    w16 : (Cout, KCpad) bf16  w16[co, k*Cin + ci] == w_torch[co, ci, k];
                              zero-padded so KCpad == round_up(K*Cin, 8)
    b   : (Cout, 1) f32
    returns (Cout, L) f32 = conv(x) + b
    """
    cin, L = x.shape
    pad = (K - 1) // 2
    kc = K * cin
    kcpad = w16.shape[1]
    # one zero-edged padded buffer per conv (not one zeros+concat per shift)
    xp = jnp.concatenate(
        [jnp.zeros((cin, pad), x.dtype), x, jnp.zeros((cin, pad), x.dtype)],
        axis=1)                                               # (Cin, L + K - 1)
    rows = [xp[:, k:k + L] for k in range(K)]                 # K static windows
    if kcpad > kc:
        rows.append(jnp.zeros((kcpad - kc, L), x.dtype))      # pad contraction
    cols = jnp.concatenate(rows, axis=0)                      # (KCpad, L)
    y = jnp.dot(w16, cols.astype(jnp.bfloat16),
                preferred_element_type=jnp.float32)
    return y + b


def _branch(x, w1, b1, w2, b2, w3, b3, p1, p2):
    """[Conv -> LReLU -> AvgPool4] x2 -> Conv -> LReLU.
    The final AvgPool1d(2,2)+flatten is fused into the caller's matmul."""
    h = _leaky_relu(_conv1d_mxu(x, w1, b1, 5))                       # (C1, 1024)
    h = jnp.dot(h.astype(jnp.bfloat16), p1,
                preferred_element_type=jnp.float32)                  # (C1, 256)
    h = _leaky_relu(_conv1d_mxu(h, w2, b2, 15))                      # (C2, 256)
    h = jnp.dot(h.astype(jnp.bfloat16), p2,
                preferred_element_type=jnp.float32)                  # (C2, 64)
    h = _leaky_relu(_conv1d_mxu(h, w3, b3, 15))                      # (C3, 64)
    return h


# ---------------------------------------------------------------------------
# Fully fused kernel: DM+SM branches, FM branch, score head, classifier head
# ---------------------------------------------------------------------------
def disc_kernel(x_ref,
                ds_w1, ds_b1, ds_w2, ds_b2, ds_w3, ds_b3,
                fm_w1, fm_b1, fm_w2, fm_b2, fm_w3, fm_b3,
                p1, p2, pt, m32,
                ws, bs, wct, bc_pad, onehot0,
                head_ref, dm_ref, sm_ref, fm_ref):
    x = x_ref[0]                                                     # (1, 1024)
    p1v, p2v, ptv, m32v = p1[...], p2[...], pt[...], m32[...]        # hoisted

    # --- fused DM + SM branch (block-diagonal conv weights) ------------------
    h = _branch(x, ds_w1[...], ds_b1[...], ds_w2[...], ds_b2[...],
                ds_w3[...], ds_b3[...], p1v, p2v)                    # (64, 64)
    # AvgPool1d(2,2) + torch.flatten(.,1): ONE matmul + two masked sublane sums
    r = jnp.dot(h.astype(jnp.bfloat16), ptv,
                preferred_element_type=jnp.float32)                  # (64, 1024)
    dm_flat = jnp.sum(r[0:32, :] * m32v, axis=0, keepdims=True)      # (1, 1024)
    sm_flat = jnp.sum(r[32:64, :] * m32v, axis=0, keepdims=True)     # (1, 1024)
    dm_ref[0] = dm_flat
    sm_ref[0] = sm_flat

    # --- FM branch on torch.cat((SM, DM), 1), kept entirely in VMEM ----------
    xf = jnp.concatenate([sm_flat, dm_flat], axis=0)                 # (2, 1024)
    hf = _branch(xf, fm_w1[...], fm_b1[...], fm_w2[...], fm_b2[...],
                 fm_w3[...], fm_b3[...], p1v, p2v)                   # (32, 64)
    rf = jnp.dot(hf.astype(jnp.bfloat16), ptv,
                 preferred_element_type=jnp.float32)                 # (32, 1024)
    fm_flat = jnp.sum(rf * m32v, axis=0, keepdims=True)              # (1, 1024)
    fm_ref[0] = fm_flat

    # --- heads, emitted as one lane-dense (1, 128) row ------------------------
    # lane 0: score = Linear(1024, 1) on flattened DM
    score = jnp.sum(dm_flat * ws[...], axis=1, keepdims=True) + bs[...]   # (1,1)
    # lanes 1..classes: Softmax(Linear(1024, classes)) on flattened FM.
    # wct has the class weights at columns 1..classes; bc_pad carries -1e30 on
    # padded lanes so the softmax mass lands only on the real classes.
    logits = jnp.dot(fm_flat.astype(jnp.bfloat16), wct[...],
                     preferred_element_type=jnp.float32) + bc_pad[...]    # (1,128)
    m = jnp.max(logits, axis=1, keepdims=True)
    e = jnp.exp(logits - m)
    probs = e / jnp.sum(e, axis=1, keepdims=True)
    head_ref[0] = probs + score * onehot0[...]


# ---------------------------------------------------------------------------
# pallas_call wrapper
# ---------------------------------------------------------------------------
def _const_spec(a):
    return pl.BlockSpec(a.shape, lambda i: (0,) * a.ndim)


def run_discriminator(x3, kp):
    """x3: (B, 1, 1024) -> (head (B,1,128), DM, SM, FM each (B,1,1024))."""
    B = x3.shape[0]
    consts = [kp["ds_w1"], kp["ds_b1"], kp["ds_w2"], kp["ds_b2"],
              kp["ds_w3"], kp["ds_b3"],
              kp["fm_w1"], kp["fm_b1"], kp["fm_w2"], kp["fm_b2"],
              kp["fm_w3"], kp["fm_b3"],
              kp["P1"], kp["P2"], kp["PT"], kp["M32"],
              kp["ws"], kp["bs"], kp["wct"], kp["bc_pad"], kp["onehot0"]]
    row_spec = pl.BlockSpec((1, 1, 1024), lambda i: (i, 0, 0))
    return pl.pallas_call(
        disc_kernel,
        out_shape=(jax.ShapeDtypeStruct((B, 1, 128), jnp.float32),
                   jax.ShapeDtypeStruct((B, 1, 1024), jnp.float32),
                   jax.ShapeDtypeStruct((B, 1, 1024), jnp.float32),
                   jax.ShapeDtypeStruct((B, 1, 1024), jnp.float32)),
        grid=(B,),
        in_specs=[row_spec] + [_const_spec(c) for c in consts],
        out_specs=(pl.BlockSpec((1, 1, 128), lambda i: (i, 0, 0)),
                   row_spec, row_spec, row_spec),
        compiler_params=pltpu.CompilerParams(
            dimension_semantics=("parallel",)),
    )(x3, *consts)


def discriminator_1024v1_forward(x, kp, classes):
    """Mirrors Discriminator_1024V1.forward: returns (scores, label, DM, SM, FM)."""
    B = x.shape[0]
    x3 = x.reshape(B, 1, -1)                      # X.reshape(B, 1, -1)
    head, dm3, sm3, fm3 = run_discriminator(x3, kp)
    scores = head[:, 0, 0:1]
    label = head[:, 0, 1:1 + classes]
    return scores, label, dm3[:, 0, :], sm3[:, 0, :], fm3[:, 0, :]


# ---------------------------------------------------------------------------
# Parameter construction / preparation (torch layouts -> kernel layouts)
# ---------------------------------------------------------------------------
def init_params(key, classes=2):
    """Synthetic parameters in PyTorch layouts:
    Conv1d weight (Cout, Cin, K), bias (Cout,); Linear weight (out, in), bias (out,)."""
    def conv(k, cin, cout, ksz):
        k1, k2 = jax.random.split(k)
        w = 0.05 * jax.random.normal(k1, (cout, cin, ksz), jnp.float32)
        b = 0.05 * jax.random.normal(k2, (cout,), jnp.float32)
        return (w, b)

    ks = jax.random.split(key, 11)
    return {
        "DM": [conv(ks[0], 1, 8, 5), conv(ks[1], 8, 16, 15), conv(ks[2], 16, 32, 15)],
        "SM": [conv(ks[3], 1, 8, 5), conv(ks[4], 8, 16, 15), conv(ks[5], 16, 32, 15)],
        "FM": [conv(ks[6], 2, 32, 5), conv(ks[7], 32, 32, 15), conv(ks[8], 32, 32, 15)],
        "score": (0.02 * jax.random.normal(ks[9], (1, 1024), jnp.float32),
                  jnp.zeros((1,), jnp.float32)),
        "CM": (0.02 * jax.random.normal(ks[10], (classes, 1024), jnp.float32),
               jnp.zeros((classes,), jnp.float32)),
    }


def _flatten_conv_w(w):
    """(Cout, Cin, K) torch layout -> bf16 (Cout, round_up(K*Cin, 8)),
    column index k*Cin + ci, zero-padded contraction columns."""
    cout, cin, K = w.shape
    wf = jnp.transpose(w, (0, 2, 1)).reshape(cout, K * cin)
    kc = K * cin
    kcp = ((kc + 7) // 8) * 8
    if kcp > kc:
        wf = jnp.concatenate([wf, jnp.zeros((cout, kcp - kc), wf.dtype)], axis=1)
    return wf.astype(jnp.bfloat16)


def _block_diag_w(wa, wb):
    """Two (Cout, Cin, K) convs -> fused (2*Cout, 2*Cin, K) block-diagonal conv."""
    z = jnp.zeros_like(wa)
    return jnp.concatenate([jnp.concatenate([wa, z], axis=1),
                            jnp.concatenate([z, wb], axis=1)], axis=0)


def _pool_matrix(L, s):
    """(L, L//s) 0/1 matrix scaled by 1/s:  x @ P == AvgPool1d(s, s)(x).  bf16."""
    rows = np.arange(L)[:, None] // s
    cols = np.arange(L // s)[None, :]
    return jnp.asarray((rows == cols).astype(np.float32) / s, dtype=jnp.bfloat16)


def _flatten_matrices():
    """PT (64,1024) bf16 and M32 (32,1024) f32 used to fuse AvgPool1d(2,2)+flatten."""
    m = np.arange(1024)[None, :]
    pt = ((np.arange(64)[:, None] // 2) == (m % 32)).astype(np.float32) * 0.5
    m32 = (np.arange(32)[:, None] == (m // 32)).astype(np.float32)
    return jnp.asarray(pt, dtype=jnp.bfloat16), jnp.asarray(m32)


def prepare_kernel_params(p):
    classes = p["CM"][0].shape[0]
    dm, sm, fm = p["DM"], p["SM"], p["FM"]

    def bias(b):
        return b.reshape(-1, 1).astype(jnp.float32)

    pt, m32 = _flatten_matrices()

    # classifier weights at lanes 1..classes of a 128-wide padded slab (lane 0
    # carries the score head); padded lanes get -1e30 bias so softmax ignores them.
    wc = jnp.transpose(p["CM"][0]).astype(jnp.bfloat16)            # (1024, classes)
    wct = jnp.zeros((1024, 128), jnp.bfloat16).at[:, 1:1 + classes].set(wc)
    bc_pad = jnp.full((1, 128), -1e30, jnp.float32)
    bc_pad = bc_pad.at[0, 1:1 + classes].set(p["CM"][1].astype(jnp.float32))
    onehot0 = jnp.zeros((1, 128), jnp.float32).at[0, 0].set(1.0)

    return {
        # fused DM+SM branch (DM -> rows 0..31 of conv3 output, SM -> rows 32..63)
        "ds_w1": _flatten_conv_w(jnp.concatenate([dm[0][0], sm[0][0]], axis=0)),
        "ds_b1": bias(jnp.concatenate([dm[0][1], sm[0][1]], axis=0)),
        "ds_w2": _flatten_conv_w(_block_diag_w(dm[1][0], sm[1][0])),
        "ds_b2": bias(jnp.concatenate([dm[1][1], sm[1][1]], axis=0)),
        "ds_w3": _flatten_conv_w(_block_diag_w(dm[2][0], sm[2][0])),
        "ds_b3": bias(jnp.concatenate([dm[2][1], sm[2][1]], axis=0)),
        # FM branch
        "fm_w1": _flatten_conv_w(fm[0][0]), "fm_b1": bias(fm[0][1]),
        "fm_w2": _flatten_conv_w(fm[1][0]), "fm_b2": bias(fm[1][1]),
        "fm_w3": _flatten_conv_w(fm[2][0]), "fm_b3": bias(fm[2][1]),
        # heads
        "ws": p["score"][0].astype(jnp.float32),                   # (1, 1024)
        "bs": p["score"][1].reshape(1, 1).astype(jnp.float32),
        "wct": wct, "bc_pad": bc_pad, "onehot0": onehot0,
        # pooling / flatten constants (VMEM-resident, constant index maps)
        "P1": _pool_matrix(1024, 4),
        "P2": _pool_matrix(256, 4),
        "PT": pt, "M32": m32,
    }


# ---------------------------------------------------------------------------
# Pure-JAX reference (mirrors the torch module) for a numerical sanity check
# ---------------------------------------------------------------------------
def _ref_conv1d(x, w, b):
    pad = (w.shape[2] - 1) // 2
    y = jax.lax.conv_general_dilated(
        x, w, window_strides=(1,), padding=[(pad, pad)],
        dimension_numbers=("NCH", "OIH", "NCH"),
        precision=jax.lax.Precision.HIGHEST)
    return y + b[None, :, None]


def _ref_pool(x, s):
    B, C, L = x.shape
    return jnp.mean(x.reshape(B, C, L // s, s), axis=-1)


def _ref_branch(x, convs):
    (w1, b1), (w2, b2), (w3, b3) = convs
    h = _ref_pool(jax.nn.leaky_relu(_ref_conv1d(x, w1, b1), 0.2), 4)
    h = _ref_pool(jax.nn.leaky_relu(_ref_conv1d(h, w2, b2), 0.2), 4)
    h = _ref_pool(jax.nn.leaky_relu(_ref_conv1d(h, w3, b3), 0.2), 2)
    return h.reshape(h.shape[0], -1)


def reference_forward(x, p):
    B = x.shape[0]
    x3 = x.reshape(B, 1, -1)
    DM = _ref_branch(x3, p["DM"])
    scores = jnp.dot(DM, p["score"][0].T,
                     precision=jax.lax.Precision.HIGHEST) + p["score"][1]
    SM = _ref_branch(x3, p["SM"])
    FM = _ref_branch(jnp.concatenate([SM[:, None, :], DM[:, None, :]], axis=1),
                     p["FM"])
    logits = jnp.dot(FM, p["CM"][0].T,
                     precision=jax.lax.Precision.HIGHEST) + p["CM"][1]
    return scores, jax.nn.softmax(logits, axis=1), DM, SM, FM


# ---------------------------------------------------------------------------
if __name__ == "__main__":
    key = jax.random.PRNGKey(0)
    kx, kw = jax.random.split(key)

    B, L, classes = 2, 1024, 2            # L is forced to 1024 by Linear(1024, .)
    x = jax.random.normal(kx, (B, L), jnp.float32)
    raw_params = init_params(kw, classes=classes)
    kparams = prepare_kernel_params(raw_params)

    fwd = jax.jit(discriminator_1024v1_forward, static_argnums=(2,))
    scores, label, DM, SM, FM = fwd(x, kparams, classes)
    jax.block_until_ready((scores, label, DM, SM, FM))

    assert scores.shape == (B, 1)
    assert label.shape == (B, classes)
    assert DM.shape == (B, 1024) and SM.shape == (B, 1024) and FM.shape == (B, 1024)

    # numerical sanity check against the pure-JAX reference of the torch module
    # (bf16 MXU inputs with f32 accumulation -> mixed rtol/atol criterion)
    ref = reference_forward(x, raw_params)
    for name, got, want in zip(("scores", "label", "DM", "SM", "FM"),
                               (scores, label, DM, SM, FM), ref):
        err = float(jnp.max(jnp.abs(got - want)))
        scale = float(jnp.max(jnp.abs(want))) + 1e-6
        tol = 5e-2 * scale + 3e-3
        assert err <= tol, f"{name}: max abs err {err} (scale {scale}, tol {tol})"

    print("KERNEL_OK")
</pallas_src>

<mosaic_0001>
module attributes {stable_mosaic.version = 11 : i64} {
  func.func @disc_kernel(%arg0: i32, %arg1: memref<1x1x1024xf32, #tpu.memory_space<vmem>>, %arg2: memref<16x8xbf16, #tpu.memory_space<vmem>>, %arg3: memref<16x1xf32, #tpu.memory_space<vmem>>, %arg4: memref<32x240xbf16, #tpu.memory_space<vmem>>, %arg5: memref<32x1xf32, #tpu.memory_space<vmem>>, %arg6: memref<64x480xbf16, #tpu.memory_space<vmem>>, %arg7: memref<64x1xf32, #tpu.memory_space<vmem>>, %arg8: memref<32x16xbf16, #tpu.memory_space<vmem>>, %arg9: memref<32x1xf32, #tpu.memory_space<vmem>>, %arg10: memref<32x480xbf16, #tpu.memory_space<vmem>>, %arg11: memref<32x1xf32, #tpu.memory_space<vmem>>, %arg12: memref<32x480xbf16, #tpu.memory_space<vmem>>, %arg13: memref<32x1xf32, #tpu.memory_space<vmem>>, %arg14: memref<1024x256xbf16, #tpu.memory_space<vmem>>, %arg15: memref<256x64xbf16, #tpu.memory_space<vmem>>, %arg16: memref<64x1024xbf16, #tpu.memory_space<vmem>>, %arg17: memref<32x1024xf32, #tpu.memory_space<vmem>>, %arg18: memref<1x1024xf32, #tpu.memory_space<vmem>>, %arg19: memref<1x1xf32, #tpu.memory_space<vmem>>, %arg20: memref<1024x128xbf16, #tpu.memory_space<vmem>>, %arg21: memref<1x128xf32, #tpu.memory_space<vmem>>, %arg22: memref<1x128xf32, #tpu.memory_space<vmem>>, %arg23: memref<1x1x128xf32, #tpu.memory_space<vmem>>, %arg24: memref<1x1x1024xf32, #tpu.memory_space<vmem>>, %arg25: memref<1x1x1024xf32, #tpu.memory_space<vmem>>, %arg26: memref<1x1x1024xf32, #tpu.memory_space<vmem>>) attributes {dimension_semantics = [#tpu.dimension_semantics<parallel>], iteration_bounds = array<i64: 2>, scalar_prefetch = 0 : i64, scratch_operands = 0 : i64, tpu.core_type = #tpu.core_type<tc>, window_params = [{transform_indices = @transform_0, window_bounds = array<i64: 1, 1, 1024>}, {pipeline_mode = #tpu.pipeline_mode<synchronous>, transform_indices = @transform_1, window_bounds = array<i64: 16, 8>}, {pipeline_mode = #tpu.pipeline_mode<synchronous>, transform_indices = @transform_2, window_bounds = array<i64: 16, 1>}, {pipeline_mode = #tpu.pipeline_mode<synchronous>, transform_indices = @transform_3, window_bounds = array<i64: 32, 240>}, {pipeline_mode = #tpu.pipeline_mode<synchronous>, transform_indices = @transform_4, window_bounds = array<i64: 32, 1>}, {pipeline_mode = #tpu.pipeline_mode<synchronous>, transform_indices = @transform_5, window_bounds = array<i64: 64, 480>}, {pipeline_mode = #tpu.pipeline_mode<synchronous>, transform_indices = @transform_6, window_bounds = array<i64: 64, 1>}, {pipeline_mode = #tpu.pipeline_mode<synchronous>, transform_indices = @transform_7, window_bounds = array<i64: 32, 16>}, {pipeline_mode = #tpu.pipeline_mode<synchronous>, transform_indices = @transform_8, window_bounds = array<i64: 32, 1>}, {pipeline_mode = #tpu.pipeline_mode<synchronous>, transform_indices = @transform_9, window_bounds = array<i64: 32, 480>}, {pipeline_mode = #tpu.pipeline_mode<synchronous>, transform_indices = @transform_10, window_bounds = array<i64: 32, 1>}, {pipeline_mode = #tpu.pipeline_mode<synchronous>, transform_indices = @transform_11, window_bounds = array<i64: 32, 480>}, {pipeline_mode = #tpu.pipeline_mode<synchronous>, transform_indices = @transform_12, window_bounds = array<i64: 32, 1>}, {pipeline_mode = #tpu.pipeline_mode<synchronous>, transform_indices = @transform_13, window_bounds = array<i64: 1024, 256>}, {pipeline_mode = #tpu.pipeline_mode<synchronous>, transform_indices = @transform_14, window_bounds = array<i64: 256, 64>}, {pipeline_mode = #tpu.pipeline_mode<synchronous>, transform_indices = @transform_15, window_bounds = array<i64: 64, 1024>}, {pipeline_mode = #tpu.pipeline_mode<synchronous>, transform_indices = @transform_16, window_bounds = array<i64: 32, 1024>}, {pipeline_mode = #tpu.pipeline_mode<synchronous>, transform_indices = @transform_17, window_bounds = array<i64: 1, 1024>}, {pipeline_mode = #tpu.pipeline_mode<synchronous>, transform_indices = @transform_18, window_bounds = array<i64: 1, 1>}, {pipeline_mode = #tpu.pipeline_mode<synchronous>, transform_indices = @transform_19, window_bounds = array<i64: 1024, 128>}, {pipeline_mode = #tpu.pipeline_mode<synchronous>, transform_indices = @transform_20, window_bounds = array<i64: 1, 128>}, {pipeline_mode = #tpu.pipeline_mode<synchronous>, transform_indices = @transform_21, window_bounds = array<i64: 1, 128>}, {transform_indices = @transform_22, window_bounds = array<i64: 1, 1, 128>}, {transform_indices = @transform_23, window_bounds = array<i64: 1, 1, 1024>}, {transform_indices = @transform_24, window_bounds = array<i64: 1, 1, 1024>}, {transform_indices = @transform_25, window_bounds = array<i64: 1, 1, 1024>}]} {
    %c0 = arith.constant 0 : index
    %c0_0 = arith.constant 0 : index
    %c0_1 = arith.constant 0 : index
    %0 = vector.load %arg1[%c0, %c0_0, %c0_1] : memref<1x1x1024xf32, #tpu.memory_space<vmem>>, vector<1x1x1024xf32>
    %1 = vector.shape_cast %0 : vector<1x1x1024xf32> to vector<1x1024xf32>
    %c0_2 = arith.constant 0 : index
    %c0_3 = arith.constant 0 : index
    %2 = vector.load %arg14[%c0_2, %c0_3] : memref<1024x256xbf16, #tpu.memory_space<vmem>>, vector<1024x256xbf16>
    %c0_4 = arith.constant 0 : index
    %c0_5 = arith.constant 0 : index
    %3 = vector.load %arg15[%c0_4, %c0_5] : memref<256x64xbf16, #tpu.memory_space<vmem>>, vector<256x64xbf16>
    %c0_6 = arith.constant 0 : index
    %c0_7 = arith.constant 0 : index
    %4 = vector.load %arg16[%c0_6, %c0_7] : memref<64x1024xbf16, #tpu.memory_space<vmem>>, vector<64x1024xbf16>
    %c0_8 = arith.constant 0 : index
    %c0_9 = arith.constant 0 : index
    %5 = vector.load %arg17[%c0_8, %c0_9] : memref<32x1024xf32, #tpu.memory_space<vmem>>, vector<32x1024xf32>
    %c0_10 = arith.constant 0 : index
    %c0_11 = arith.constant 0 : index
    %6 = vector.load %arg2[%c0_10, %c0_11] : memref<16x8xbf16, #tpu.memory_space<vmem>>, vector<16x8xbf16>
    %c0_12 = arith.constant 0 : index
    %c0_13 = arith.constant 0 : index
    %7 = vector.load %arg3[%c0_12, %c0_13] : memref<16x1xf32, #tpu.memory_space<vmem>>, vector<16x1xf32>
    %c0_14 = arith.constant 0 : index
    %c0_15 = arith.constant 0 : index
    %8 = vector.load %arg4[%c0_14, %c0_15] : memref<32x240xbf16, #tpu.memory_space<vmem>>, vector<32x240xbf16>
    %c0_16 = arith.constant 0 : index
    %c0_17 = arith.constant 0 : index
    %9 = vector.load %arg5[%c0_16, %c0_17] : memref<32x1xf32, #tpu.memory_space<vmem>>, vector<32x1xf32>
    %c0_18 = arith.constant 0 : index
    %c0_19 = arith.constant 0 : index
    %10 = vector.load %arg6[%c0_18, %c0_19] : memref<64x480xbf16, #tpu.memory_space<vmem>>, vector<64x480xbf16>
    %c0_20 = arith.constant 0 : index
    %c0_21 = arith.constant 0 : index
    %11 = vector.load %arg7[%c0_20, %c0_21] : memref<64x1xf32, #tpu.memory_space<vmem>>, vector<64x1xf32>
    %cst = arith.constant 0.000000e+00 : f32
    %12 = vector.broadcast %cst : f32 to vector<1x2xf32>
    %cst_22 = arith.constant 0.000000e+00 : f32
    %13 = vector.broadcast %cst_22 : f32 to vector<1x2xf32>
    %14 = tpu.concatenate %12, %1, %13 in 1 : vector<1x2xf32>, vector<1x1024xf32>, vector<1x2xf32> -> vector<1x1028xf32>
    %15 = vector.extract_strided_slice %14 {offsets = [0, 0], sizes = [1, 1024], strides = [1, 1]} : vector<1x1028xf32> to vector<1x1024xf32>
    %16 = vector.extract_strided_slice %14 {offsets = [0, 1], sizes = [1, 1024], strides = [1, 1]} : vector<1x1028xf32> to vector<1x1024xf32>
    %17 = vector.extract_strided_slice %14 {offsets = [0, 2], sizes = [1, 1024], strides = [1, 1]} : vector<1x1028xf32> to vector<1x1024xf32>
    %18 = vector.extract_strided_slice %14 {offsets = [0, 3], sizes = [1, 1024], strides = [1, 1]} : vector<1x1028xf32> to vector<1x1024xf32>
    %19 = vector.extract_strided_slice %14 {offsets = [0, 4], sizes = [1, 1024], strides = [1, 1]} : vector<1x1028xf32> to vector<1x1024xf32>
    %cst_23 = arith.constant 0.000000e+00 : f32
    %20 = vector.broadcast %cst_23 : f32 to vector<3x1024xf32>
    %21 = tpu.concatenate %15, %16, %17, %18, %19, %20 in 0 : vector<1x1024xf32>, vector<1x1024xf32>, vector<1x1024xf32>, vector<1x1024xf32>, vector<1x1024xf32>, vector<3x1024xf32> -> vector<8x1024xf32>
    %22 = arith.truncf %21 : vector<8x1024xf32> to vector<8x1024xbf16>
    %cst_24 = arith.constant dense<0.000000e+00> : vector<16x1024xf32>
    %23 = tpu.matmul %6, %22, %cst_24 {dimension_numbers = #tpu.dot_dimension_numbers<[1], [0], [0], [1], [0, 0, 1, 1], [], []>} : vector<16x8xbf16>, vector<8x1024xbf16>, vector<16x1024xf32> -> vector<16x1024xf32>
    %24 = vector.broadcast %7 : vector<16x1xf32> to vector<16x1024xf32>
    %25 = arith.addf %23, %24 : vector<16x1024xf32>
    %cst_25 = arith.constant 0.000000e+00 : f32
    %26 = vector.broadcast %cst_25 : f32 to vector<16x1024xf32>
    %27 = arith.cmpf oge, %25, %26 : vector<16x1024xf32>
    %cst_26 = arith.constant 2.000000e-01 : f32
    %28 = vector.broadcast %cst_26 : f32 to vector<16x1024xf32>
    %29 = arith.mulf %28, %25 : vector<16x1024xf32>
    %30 = arith.select %27, %25, %29 : vector<16x1024xi1>, vector<16x1024xf32>
    %31 = arith.truncf %30 : vector<16x1024xf32> to vector<16x1024xbf16>
    %cst_27 = arith.constant dense<0.000000e+00> : vector<16x256xf32>
    %32 = tpu.matmul %31, %2, %cst_27 {dimension_numbers = #tpu.dot_dimension_numbers<[1], [0], [0], [1], [0, 0, 1, 1], [], []>} : vector<16x1024xbf16>, vector<1024x256xbf16>, vector<16x256xf32> -> vector<16x256xf32>
    %cst_28 = arith.constant 0.000000e+00 : f32
    %33 = vector.broadcast %cst_28 : f32 to vector<16x7xf32>
    %cst_29 = arith.constant 0.000000e+00 : f32
    %34 = vector.broadcast %cst_29 : f32 to vector<16x7xf32>
    %35 = tpu.concatenate %33, %32, %34 in 1 : vector<16x7xf32>, vector<16x256xf32>, vector<16x7xf32> -> vector<16x270xf32>
    %36 = vector.extract_strided_slice %35 {offsets = [0, 0], sizes = [16, 256], strides = [1, 1]} : vector<16x270xf32> to vector<16x256xf32>
    %37 = vector.extract_strided_slice %35 {offsets = [0, 1], sizes = [16, 256], strides = [1, 1]} : vector<16x270xf32> to vector<16x256xf32>
    %38 = vector.extract_strided_slice %35 {offsets = [0, 2], sizes = [16, 256], strides = [1, 1]} : vector<16x270xf32> to vector<16x256xf32>
    %39 = vector.extract_strided_slice %35 {offsets = [0, 3], sizes = [16, 256], strides = [1, 1]} : vector<16x270xf32> to vector<16x256xf32>
    %40 = vector.extract_strided_slice %35 {offsets = [0, 4], sizes = [16, 256], strides = [1, 1]} : vector<16x270xf32> to vector<16x256xf32>
    %41 = vector.extract_strided_slice %35 {offsets = [0, 5], sizes = [16, 256], strides = [1, 1]} : vector<16x270xf32> to vector<16x256xf32>
    %42 = vector.extract_strided_slice %35 {offsets = [0, 6], sizes = [16, 256], strides = [1, 1]} : vector<16x270xf32> to vector<16x256xf32>
    %43 = vector.extract_strided_slice %35 {offsets = [0, 7], sizes = [16, 256], strides = [1, 1]} : vector<16x270xf32> to vector<16x256xf32>
    %44 = vector.extract_strided_slice %35 {offsets = [0, 8], sizes = [16, 256], strides = [1, 1]} : vector<16x270xf32> to vector<16x256xf32>
    %45 = vector.extract_strided_slice %35 {offsets = [0, 9], sizes = [16, 256], strides = [1, 1]} : vector<16x270xf32> to vector<16x256xf32>
    %46 = vector.extract_strided_slice %35 {offsets = [0, 10], sizes = [16, 256], strides = [1, 1]} : vector<16x270xf32> to vector<16x256xf32>
    %47 = vector.extract_strided_slice %35 {offsets = [0, 11], sizes = [16, 256], strides = [1, 1]} : vector<16x270xf32> to vector<16x256xf32>
    %48 = vector.extract_strided_slice %35 {offsets = [0, 12], sizes = [16, 256], strides = [1, 1]} : vector<16x270xf32> to vector<16x256xf32>
    %49 = vector.extract_strided_slice %35 {offsets = [0, 13], sizes = [16, 256], strides = [1, 1]} : vector<16x270xf32> to vector<16x256xf32>
    %50 = vector.extract_strided_slice %35 {offsets = [0, 14], sizes = [16, 256], strides = [1, 1]} : vector<16x270xf32> to vector<16x256xf32>
    %51 = tpu.concatenate %36, %37, %38, %39, %40, %41, %42, %43, %44, %45, %46, %47, %48, %49, %50 in 0 : vector<16x256xf32>, vector<16x256xf32>, vector<16x256xf32>, vector<16x256xf32>, vector<16x256xf32>, vector<16x256xf32>, vector<16x256xf32>, vector<16x256xf32>, vector<16x256xf32>, vector<16x256xf32>, vector<16x256xf32>, vector<16x256xf32>, vector<16x256xf32>, vector<16x256xf32>, vector<16x256xf32> -> vector<240x256xf32>
    %52 = arith.truncf %51 : vector<240x256xf32> to vector<240x256xbf16>
    %cst_30 = arith.constant dense<0.000000e+00> : vector<32x256xf32>
    %53 = tpu.matmul %8, %52, %cst_30 {dimension_numbers = #tpu.dot_dimension_numbers<[1], [0], [0], [1], [0, 0, 1, 1], [], []>} : vector<32x240xbf16>, vector<240x256xbf16>, vector<32x256xf32> -> vector<32x256xf32>
    %54 = vector.broadcast %9 : vector<32x1xf32> to vector<32x256xf32>
    %55 = arith.addf %53, %54 : vector<32x256xf32>
    %cst_31 = arith.constant 0.000000e+00 : f32
    %56 = vector.broadcast %cst_31 : f32 to vector<32x256xf32>
    %57 = arith.cmpf oge, %55, %56 : vector<32x256xf32>
    %cst_32 = arith.constant 2.000000e-01 : f32
    %58 = vector.broadcast %cst_32 : f32 to vector<32x256xf32>
    %59 = arith.mulf %58, %55 : vector<32x256xf32>
    %60 = arith.select %57, %55, %59 : vector<32x256xi1>, vector<32x256xf32>
    %61 = arith.truncf %60 : vector<32x256xf32> to vector<32x256xbf16>
    %cst_33 = arith.constant dense<0.000000e+00> : vector<32x64xf32>
    %62 = tpu.matmul %61, %3, %cst_33 {dimension_numbers = #tpu.dot_dimension_numbers<[1], [0], [0], [1], [0, 0, 1, 1], [], []>} : vector<32x256xbf16>, vector<256x64xbf16>, vector<32x64xf32> -> vector<32x64xf32>
    %cst_34 = arith.constant 0.000000e+00 : f32
    %63 = vector.broadcast %cst_34 : f32 to vector<32x7xf32>
    %cst_35 = arith.constant 0.000000e+00 : f32
    %64 = vector.broadcast %cst_35 : f32 to vector<32x7xf32>
    %65 = tpu.concatenate %63, %62, %64 in 1 : vector<32x7xf32>, vector<32x64xf32>, vector<32x7xf32> -> vector<32x78xf32>
    %66 = vector.extract_strided_slice %65 {offsets = [0, 0], sizes = [32, 64], strides = [1, 1]} : vector<32x78xf32> to vector<32x64xf32>
    %67 = vector.extract_strided_slice %65 {offsets = [0, 1], sizes = [32, 64], strides = [1, 1]} : vector<32x78xf32> to vector<32x64xf32>
    %68 = vector.extract_strided_slice %65 {offsets = [0, 2], sizes = [32, 64], strides = [1, 1]} : vector<32x78xf32> to vector<32x64xf32>
    %69 = vector.extract_strided_slice %65 {offsets = [0, 3], sizes = [32, 64], strides = [1, 1]} : vector<32x78xf32> to vector<32x64xf32>
    %70 = vector.extract_strided_slice %65 {offsets = [0, 4], sizes = [32, 64], strides = [1, 1]} : vector<32x78xf32> to vector<32x64xf32>
    %71 = vector.extract_strided_slice %65 {offsets = [0, 5], sizes = [32, 64], strides = [1, 1]} : vector<32x78xf32> to vector<32x64xf32>
    %72 = vector.extract_strided_slice %65 {offsets = [0, 6], sizes = [32, 64], strides = [1, 1]} : vector<32x78xf32> to vector<32x64xf32>
    %73 = vector.extract_strided_slice %65 {offsets = [0, 7], sizes = [32, 64], strides = [1, 1]} : vector<32x78xf32> to vector<32x64xf32>
    %74 = vector.extract_strided_slice %65 {offsets = [0, 8], sizes = [32, 64], strides = [1, 1]} : vector<32x78xf32> to vector<32x64xf32>
    %75 = vector.extract_strided_slice %65 {offsets = [0, 9], sizes = [32, 64], strides = [1, 1]} : vector<32x78xf32> to vector<32x64xf32>
    %76 = vector.extract_strided_slice %65 {offsets = [0, 10], sizes = [32, 64], strides = [1, 1]} : vector<32x78xf32> to vector<32x64xf32>
    %77 = vector.extract_strided_slice %65 {offsets = [0, 11], sizes = [32, 64], strides = [1, 1]} : vector<32x78xf32> to vector<32x64xf32>
    %78 = vector.extract_strided_slice %65 {offsets = [0, 12], sizes = [32, 64], strides = [1, 1]} : vector<32x78xf32> to vector<32x64xf32>
    %79 = vector.extract_strided_slice %65 {offsets = [0, 13], sizes = [32, 64], strides = [1, 1]} : vector<32x78xf32> to vector<32x64xf32>
    %80 = vector.extract_strided_slice %65 {offsets = [0, 14], sizes = [32, 64], strides = [1, 1]} : vector<32x78xf32> to vector<32x64xf32>
    %81 = tpu.concatenate %66, %67, %68, %69, %70, %71, %72, %73, %74, %75, %76, %77, %78, %79, %80 in 0 : vector<32x64xf32>, vector<32x64xf32>, vector<32x64xf32>, vector<32x64xf32>, vector<32x64xf32>, vector<32x64xf32>, vector<32x64xf32>, vector<32x64xf32>, vector<32x64xf32>, vector<32x64xf32>, vector<32x64xf32>, vector<32x64xf32>, vector<32x64xf32>, vector<32x64xf32>, vector<32x64xf32> -> vector<480x64xf32>
    %82 = arith.truncf %81 : vector<480x64xf32> to vector<480x64xbf16>
    %cst_36 = arith.constant dense<0.000000e+00> : vector<64x64xf32>
    %83 = tpu.matmul %10, %82, %cst_36 {dimension_numbers = #tpu.dot_dimension_numbers<[1], [0], [0], [1], [0, 0, 1, 1], [], []>} : vector<64x480xbf16>, vector<480x64xbf16>, vector<64x64xf32> -> vector<64x64xf32>
    %84 = vector.broadcast %11 : vector<64x1xf32> to vector<64x64xf32>
    %85 = arith.addf %83, %84 : vector<64x64xf32>
    %cst_37 = arith.constant 0.000000e+00 : f32
    %86 = vector.broadcast %cst_37 : f32 to vector<64x64xf32>
    %87 = arith.cmpf oge, %85, %86 : vector<64x64xf32>
    %cst_38 = arith.constant 2.000000e-01 : f32
    %88 = vector.broadcast %cst_38 : f32 to vector<64x64xf32>
    %89 = arith.mulf %88, %85 : vector<64x64xf32>
    %90 = arith.select %87, %85, %89 : vector<64x64xi1>, vector<64x64xf32>
    %91 = arith.truncf %90 : vector<64x64xf32> to vector<64x64xbf16>
    %cst_39 = arith.constant dense<0.000000e+00> : vector<64x1024xf32>
    %92 = tpu.matmul %91, %4, %cst_39 {dimension_numbers = #tpu.dot_dimension_numbers<[1], [0], [0], [1], [0, 0, 1, 1], [], []>} : vector<64x64xbf16>, vector<64x1024xbf16>, vector<64x1024xf32> -> vector<64x1024xf32>
    %93 = vector.extract_strided_slice %92 {offsets = [0, 0], sizes = [32, 1024], strides = [1, 1]} : vector<64x1024xf32> to vector<32x1024xf32>
    %94 = arith.mulf %93, %5 : vector<32x1024xf32>
    %cst_40 = arith.constant dense<0.000000e+00> : vector<1024xf32>
    %95 = vector.multi_reduction <add>, %94, %cst_40 [0] : vector<32x1024xf32> to vector<1024xf32>
    %96 = vector.shape_cast %95 : vector<1024xf32> to vector<1x1024xf32>
    %97 = vector.extract_strided_slice %92 {offsets = [32, 0], sizes = [32, 1024], strides = [1, 1]} : vector<64x1024xf32> to vector<32x1024xf32>
    %98 = arith.mulf %97, %5 : vector<32x1024xf32>
    %cst_41 = arith.constant dense<0.000000e+00> : vector<1024xf32>
    %99 = vector.multi_reduction <add>, %98, %cst_41 [0] : vector<32x1024xf32> to vector<1024xf32>
    %100 = vector.shape_cast %99 : vector<1024xf32> to vector<1x1024xf32>
    %c0_42 = arith.constant 0 : index
    %c0_43 = arith.constant 0 : index
    %c0_44 = arith.constant 0 : index
    %101 = vector.load %arg24[%c0_42, %c0_43, %c0_44] : memref<1x1x1024xf32, #tpu.memory_space<vmem>>, vector<1x1x1024xf32>
    %102 = vector.shape_cast %101 : vector<1x1x1024xf32> to vector<1x1024xf32>
    %103 = vector.shape_cast %96 : vector<1x1024xf32> to vector<1x1x1024xf32>
    tpu.vector_store %arg24[%c0_42, %c0_43, %c0_44], %103 {strides = array<i32>} : memref<1x1x1024xf32, #tpu.memory_space<vmem>>, vector<1x1x1024xf32>,
    %c0_45 = arith.constant 0 : index
    %c0_46 = arith.constant 0 : index
    %c0_47 = arith.constant 0 : index
    %104 = vector.load %arg25[%c0_45, %c0_46, %c0_47] : memref<1x1x1024xf32, #tpu.memory_space<vmem>>, vector<1x1x1024xf32>
    %105 = vector.shape_cast %104 : vector<1x1x1024xf32> to vector<1x1024xf32>
    %106 = vector.shape_cast %100 : vector<1x1024xf32> to vector<1x1x1024xf32>
    tpu.vector_store %arg25[%c0_45, %c0_46, %c0_47], %106 {strides = array<i32>} : memref<1x1x1024xf32, #tpu.memory_space<vmem>>, vector<1x1x1024xf32>,
    %107 = tpu.concatenate %100, %96 in 0 : vector<1x1024xf32>, vector<1x1024xf32> -> vector<2x1024xf32>
    %c0_48 = arith.constant 0 : index
    %c0_49 = arith.constant 0 : index
    %108 = vector.load %arg8[%c0_48, %c0_49] : memref<32x16xbf16, #tpu.memory_space<vmem>>, vector<32x16xbf16>
    %c0_50 = arith.constant 0 : index
    %c0_51 = arith.constant 0 : index
    %109 = vector.load %arg9[%c0_50, %c0_51] : memref<32x1xf32, #tpu.memory_space<vmem>>, vector<32x1xf32>
    %c0_52 = arith.constant 0 : index
    %c0_53 = arith.constant 0 : index
    %110 = vector.load %arg10[%c0_52, %c0_53] : memref<32x480xbf16, #tpu.memory_space<vmem>>, vector<32x480xbf16>
    %c0_54 = arith.constant 0 : index
    %c0_55 = arith.constant 0 : index
    %111 = vector.load %arg11[%c0_54, %c0_55] : memref<32x1xf32, #tpu.memory_space<vmem>>, vector<32x1xf32>
    %c0_56 = arith.constant 0 : index
    %c0_57 = arith.constant 0 : index
    %112 = vector.load %arg12[%c0_56, %c0_57] : memref<32x480xbf16, #tpu.memory_space<vmem>>, vector<32x480xbf16>
    %c0_58 = arith.constant 0 : index
    %c0_59 = arith.constant 0 : index
    %113 = vector.load %arg13[%c0_58, %c0_59] : memref<32x1xf32, #tpu.memory_space<vmem>>, vector<32x1xf32>
    %cst_60 = arith.constant 0.000000e+00 : f32
    %114 = vector.broadcast %cst_60 : f32 to vector<2x2xf32>
    %cst_61 = arith.constant 0.000000e+00 : f32
    %115 = vector.broadcast %cst_61 : f32 to vector<2x2xf32>
    %116 = tpu.concatenate %114, %107, %115 in 1 : vector<2x2xf32>, vector<2x1024xf32>, vector<2x2xf32> -> vector<2x1028xf32>
    %117 = vector.extract_strided_slice %116 {offsets = [0, 0], sizes = [2, 1024], strides = [1, 1]} : vector<2x1028xf32> to vector<2x1024xf32>
    %118 = vector.extract_strided_slice %116 {offsets = [0, 1], sizes = [2, 1024], strides = [1, 1]} : vector<2x1028xf32> to vector<2x1024xf32>
    %119 = vector.extract_strided_slice %116 {offsets = [0, 2], sizes = [2, 1024], strides = [1, 1]} : vector<2x1028xf32> to vector<2x1024xf32>
    %120 = vector.extract_strided_slice %116 {offsets = [0, 3], sizes = [2, 1024], strides = [1, 1]} : vector<2x1028xf32> to vector<2x1024xf32>
    %121 = vector.extract_strided_slice %116 {offsets = [0, 4], sizes = [2, 1024], strides = [1, 1]} : vector<2x1028xf32> to vector<2x1024xf32>
    %cst_62 = arith.constant 0.000000e+00 : f32
    %122 = vector.broadcast %cst_62 : f32 to vector<6x1024xf32>
    %123 = tpu.concatenate %117, %118, %119, %120, %121, %122 in 0 : vector<2x1024xf32>, vector<2x1024xf32>, vector<2x1024xf32>, vector<2x1024xf32>, vector<2x1024xf32>, vector<6x1024xf32> -> vector<16x1024xf32>
    %124 = arith.truncf %123 : vector<16x1024xf32> to vector<16x1024xbf16>
    %cst_63 = arith.constant dense<0.000000e+00> : vector<32x1024xf32>
    %125 = tpu.matmul %108, %124, %cst_63 {dimension_numbers = #tpu.dot_dimension_numbers<[1], [0], [0], [1], [0, 0, 1, 1], [], []>} : vector<32x16xbf16>, vector<16x1024xbf16>, vector<32x1024xf32> -> vector<32x1024xf32>
    %126 = vector.broadcast %109 : vector<32x1xf32> to vector<32x1024xf32>
    %127 = arith.addf %125, %126 : vector<32x1024xf32>
    %cst_64 = arith.constant 0.000000e+00 : f32
    %128 = vector.broadcast %cst_64 : f32 to vector<32x1024xf32>
    %129 = arith.cmpf oge, %127, %128 : vector<32x1024xf32>
    %cst_65 = arith.constant 2.000000e-01 : f32
    %130 = vector.broadcast %cst_65 : f32 to vector<32x1024xf32>
    %131 = arith.mulf %130, %127 : vector<32x1024xf32>
    %132 = arith.select %129, %127, %131 : vector<32x1024xi1>, vector<32x1024xf32>
    %133 = arith.truncf %132 : vector<32x1024xf32> to vector<32x1024xbf16>
    %cst_66 = arith.constant dense<0.000000e+00> : vector<32x256xf32>
    %134 = tpu.matmul %133, %2, %cst_66 {dimension_numbers = #tpu.dot_dimension_numbers<[1], [0], [0], [1], [0, 0, 1, 1], [], []>} : vector<32x1024xbf16>, vector<1024x256xbf16>, vector<32x256xf32> -> vector<32x256xf32>
    %cst_67 = arith.constant 0.000000e+00 : f32
    %135 = vector.broadcast %cst_67 : f32 to vector<32x7xf32>
    %cst_68 = arith.constant 0.000000e+00 : f32
    %136 = vector.broadcast %cst_68 : f32 to vector<32x7xf32>
    %137 = tpu.concatenate %135, %134, %136 in 1 : vector<32x7xf32>, vector<32x256xf32>, vector<32x7xf32> -> vector<32x270xf32>
    %138 = vector.extract_strided_slice %137 {offsets = [0, 0], sizes = [32, 256], strides = [1, 1]} : vector<32x270xf32> to vector<32x256xf32>
    %139 = vector.extract_strided_slice %137 {offsets = [0, 1], sizes = [32, 256], strides = [1, 1]} : vector<32x270xf32> to vector<32x256xf32>
    %140 = vector.extract_strided_slice %137 {offsets = [0, 2], sizes = [32, 256], strides = [1, 1]} : vector<32x270xf32> to vector<32x256xf32>
    %141 = vector.extract_strided_slice %137 {offsets = [0, 3], sizes = [32, 256], strides = [1, 1]} : vector<32x270xf32> to vector<32x256xf32>
    %142 = vector.extract_strided_slice %137 {offsets = [0, 4], sizes = [32, 256], strides = [1, 1]} : vector<32x270xf32> to vector<32x256xf32>
    %143 = vector.extract_strided_slice %137 {offsets = [0, 5], sizes = [32, 256], strides = [1, 1]} : vector<32x270xf32> to vector<32x256xf32>
    %144 = vector.extract_strided_slice %137 {offsets = [0, 6], sizes = [32, 256], strides = [1, 1]} : vector<32x270xf32> to vector<32x256xf32>
    %145 = vector.extract_strided_slice %137 {offsets = [0, 7], sizes = [32, 256], strides = [1, 1]} : vector<32x270xf32> to vector<32x256xf32>
    %146 = vector.extract_strided_slice %137 {offsets = [0, 8], sizes = [32, 256], strides = [1, 1]} : vector<32x270xf32> to vector<32x256xf32>
    %147 = vector.extract_strided_slice %137 {offsets = [0, 9], sizes = [32, 256], strides = [1, 1]} : vector<32x270xf32> to vector<32x256xf32>
    %148 = vector.extract_strided_slice %137 {offsets = [0, 10], sizes = [32, 256], strides = [1, 1]} : vector<32x270xf32> to vector<32x256xf32>
    %149 = vector.extract_strided_slice %137 {offsets = [0, 11], sizes = [32, 256], strides = [1, 1]} : vector<32x270xf32> to vector<32x256xf32>
    %150 = vector.extract_strided_slice %137 {offsets = [0, 12], sizes = [32, 256], strides = [1, 1]} : vector<32x270xf32> to vector<32x256xf32>
    %151 = vector.extract_strided_slice %137 {offsets = [0, 13], sizes = [32, 256], strides = [1, 1]} : vector<32x270xf32> to vector<32x256xf32>
    %152 = vector.extract_strided_slice %137 {offsets = [0, 14], sizes = [32, 256], strides = [1, 1]} : vector<32x270xf32> to vector<32x256xf32>
    %153 = tpu.concatenate %138, %139, %140, %141, %142, %143, %144, %145, %146, %147, %148, %149, %150, %151, %152 in 0 : vector<32x256xf32>, vector<32x256xf32>, vector<32x256xf32>, vector<32x256xf32>, vector<32x256xf32>, vector<32x256xf32>, vector<32x256xf32>, vector<32x256xf32>, vector<32x256xf32>, vector<32x256xf32>, vector<32x256xf32>, vector<32x256xf32>, vector<32x256xf32>, vector<32x256xf32>, vector<32x256xf32> -> vector<480x256xf32>
    %154 = arith.truncf %153 : vector<480x256xf32> to vector<480x256xbf16>
    %cst_69 = arith.constant dense<0.000000e+00> : vector<32x256xf32>
    %155 = tpu.matmul %110, %154, %cst_69 {dimension_numbers = #tpu.dot_dimension_numbers<[1], [0], [0], [1], [0, 0, 1, 1], [], []>} : vector<32x480xbf16>, vector<480x256xbf16>, vector<32x256xf32> -> vector<32x256xf32>
    %156 = vector.broadcast %111 : vector<32x1xf32> to vector<32x256xf32>
    %157 = arith.addf %155, %156 : vector<32x256xf32>
    %cst_70 = arith.constant 0.000000e+00 : f32
    %158 = vector.broadcast %cst_70 : f32 to vector<32x256xf32>
    %159 = arith.cmpf oge, %157, %158 : vector<32x256xf32>
    %cst_71 = arith.constant 2.000000e-01 : f32
    %160 = vector.broadcast %cst_71 : f32 to vector<32x256xf32>
    %161 = arith.mulf %160, %157 : vector<32x256xf32>
    %162 = arith.select %159, %157, %161 : vector<32x256xi1>, vector<32x256xf32>
    %163 = arith.truncf %162 : vector<32x256xf32> to vector<32x256xbf16>
    %cst_72 = arith.constant dense<0.000000e+00> : vector<32x64xf32>
    %164 = tpu.matmul %163, %3, %cst_72 {dimension_numbers = #tpu.dot_dimension_numbers<[1], [0], [0], [1], [0, 0, 1, 1], [], []>} : vector<32x256xbf16>, vector<256x64xbf16>, vector<32x64xf32> -> vector<32x64xf32>
    %cst_73 = arith.constant 0.000000e+00 : f32
    %165 = vector.broadcast %cst_73 : f32 to vector<32x7xf32>
    %cst_74 = arith.constant 0.000000e+00 : f32
    %166 = vector.broadcast %cst_74 : f32 to vector<32x7xf32>
    %167 = tpu.concatenate %165, %164, %166 in 1 : vector<32x7xf32>, vector<32x64xf32>, vector<32x7xf32> -> vector<32x78xf32>
    %168 = vector.extract_strided_slice %167 {offsets = [0, 0], sizes = [32, 64], strides = [1, 1]} : vector<32x78xf32> to vector<32x64xf32>
    %169 = vector.extract_strided_slice %167 {offsets = [0, 1], sizes = [32, 64], strides = [1, 1]} : vector<32x78xf32> to vector<32x64xf32>
    %170 = vector.extract_strided_slice %167 {offsets = [0, 2], sizes = [32, 64], strides = [1, 1]} : vector<32x78xf32> to vector<32x64xf32>
    %171 = vector.extract_strided_slice %167 {offsets = [0, 3], sizes = [32, 64], strides = [1, 1]} : vector<32x78xf32> to vector<32x64xf32>
    %172 = vector.extract_strided_slice %167 {offsets = [0, 4], sizes = [32, 64], strides = [1, 1]} : vector<32x78xf32> to vector<32x64xf32>
    %173 = vector.extract_strided_slice %167 {offsets = [0, 5], sizes = [32, 64], strides = [1, 1]} : vector<32x78xf32> to vector<32x64xf32>
    %174 = vector.extract_strided_slice %167 {offsets = [0, 6], sizes = [32, 64], strides = [1, 1]} : vector<32x78xf32> to vector<32x64xf32>
    %175 = vector.extract_strided_slice %167 {offsets = [0, 7], sizes = [32, 64], strides = [1, 1]} : vector<32x78xf32> to vector<32x64xf32>
    %176 = vector.extract_strided_slice %167 {offsets = [0, 8], sizes = [32, 64], strides = [1, 1]} : vector<32x78xf32> to vector<32x64xf32>
    %177 = vector.extract_strided_slice %167 {offsets = [0, 9], sizes = [32, 64], strides = [1, 1]} : vector<32x78xf32> to vector<32x64xf32>
    %178 = vector.extract_strided_slice %167 {offsets = [0, 10], sizes = [32, 64], strides = [1, 1]} : vector<32x78xf32> to vector<32x64xf32>
    %179 = vector.extract_strided_slice %167 {offsets = [0, 11], sizes = [32, 64], strides = [1, 1]} : vector<32x78xf32> to vector<32x64xf32>
    %180 = vector.extract_strided_slice %167 {offsets = [0, 12], sizes = [32, 64], strides = [1, 1]} : vector<32x78xf32> to vector<32x64xf32>
    %181 = vector.extract_strided_slice %167 {offsets = [0, 13], sizes = [32, 64], strides = [1, 1]} : vector<32x78xf32> to vector<32x64xf32>
    %182 = vector.extract_strided_slice %167 {offsets = [0, 14], sizes = [32, 64], strides = [1, 1]} : vector<32x78xf32> to vector<32x64xf32>
    %183 = tpu.concatenate %168, %169, %170, %171, %172, %173, %174, %175, %176, %177, %178, %179, %180, %181, %182 in 0 : vector<32x64xf32>, vector<32x64xf32>, vector<32x64xf32>, vector<32x64xf32>, vector<32x64xf32>, vector<32x64xf32>, vector<32x64xf32>, vector<32x64xf32>, vector<32x64xf32>, vector<32x64xf32>, vector<32x64xf32>, vector<32x64xf32>, vector<32x64xf32>, vector<32x64xf32>, vector<32x64xf32> -> vector<480x64xf32>
    %184 = arith.truncf %183 : vector<480x64xf32> to vector<480x64xbf16>
    %cst_75 = arith.constant dense<0.000000e+00> : vector<32x64xf32>
    %185 = tpu.matmul %112, %184, %cst_75 {dimension_numbers = #tpu.dot_dimension_numbers<[1], [0], [0], [1], [0, 0, 1, 1], [], []>} : vector<32x480xbf16>, vector<480x64xbf16>, vector<32x64xf32> -> vector<32x64xf32>
    %186 = vector.broadcast %113 : vector<32x1xf32> to vector<32x64xf32>
    %187 = arith.addf %185, %186 : vector<32x64xf32>
    %cst_76 = arith.constant 0.000000e+00 : f32
    %188 = vector.broadcast %cst_76 : f32 to vector<32x64xf32>
    %189 = arith.cmpf oge, %187, %188 : vector<32x64xf32>
    %cst_77 = arith.constant 2.000000e-01 : f32
    %190 = vector.broadcast %cst_77 : f32 to vector<32x64xf32>
    %191 = arith.mulf %190, %187 : vector<32x64xf32>
    %192 = arith.select %189, %187, %191 : vector<32x64xi1>, vector<32x64xf32>
    %193 = arith.truncf %192 : vector<32x64xf32> to vector<32x64xbf16>
    %cst_78 = arith.constant dense<0.000000e+00> : vector<32x1024xf32>
    %194 = tpu.matmul %193, %4, %cst_78 {dimension_numbers = #tpu.dot_dimension_numbers<[1], [0], [0], [1], [0, 0, 1, 1], [], []>} : vector<32x64xbf16>, vector<64x1024xbf16>, vector<32x1024xf32> -> vector<32x1024xf32>
    %195 = arith.mulf %194, %5 : vector<32x1024xf32>
    %cst_79 = arith.constant dense<0.000000e+00> : vector<1024xf32>
    %196 = vector.multi_reduction <add>, %195, %cst_79 [0] : vector<32x1024xf32> to vector<1024xf32>
    %197 = vector.shape_cast %196 : vector<1024xf32> to vector<1x1024xf32>
    %c0_80 = arith.constant 0 : index
    %c0_81 = arith.constant 0 : index
    %c0_82 = arith.constant 0 : index
    %198 = vector.load %arg26[%c0_80, %c0_81, %c0_82] : memref<1x1x1024xf32, #tpu.memory_space<vmem>>, vector<1x1x1024xf32>
    %199 = vector.shape_cast %198 : vector<1x1x1024xf32> to vector<1x1024xf32>
    %200 = vector.shape_cast %197 : vector<1x1024xf32> to vector<1x1x1024xf32>
    tpu.vector_store %arg26[%c0_80, %c0_81, %c0_82], %200 {strides = array<i32>} : memref<1x1x1024xf32, #tpu.memory_space<vmem>>, vector<1x1x1024xf32>,
    %c0_83 = arith.constant 0 : index
    %c0_84 = arith.constant 0 : index
    %201 = vector.load %arg18[%c0_83, %c0_84] : memref<1x1024xf32, #tpu.memory_space<vmem>>, vector<1x1024xf32>
    %202 = arith.mulf %96, %201 : vector<1x1024xf32>
    %cst_85 = arith.constant dense<0.000000e+00> : vector<1xf32>
    %203 = vector.multi_reduction <add>, %202, %cst_85 [1] : vector<1x1024xf32> to vector<1xf32>
    %204 = vector.shape_cast %203 : vector<1xf32> to vector<1x1xf32>
    %c0_86 = arith.constant 0 : index
    %c0_87 = arith.constant 0 : index
    %205 = vector.load %arg19[%c0_86, %c0_87] : memref<1x1xf32, #tpu.memory_space<vmem>>, vector<1x1xf32>
    %206 = arith.addf %204, %205 : vector<1x1xf32>
    %207 = arith.truncf %197 : vector<1x1024xf32> to vector<1x1024xbf16>
    %c0_88 = arith.constant 0 : index
    %c0_89 = arith.constant 0 : index
    %208 = vector.load %arg20[%c0_88, %c0_89] : memref<1024x128xbf16, #tpu.memory_space<vmem>>, vector<1024x128xbf16>
    %cst_90 = arith.constant dense<0.000000e+00> : vector<1x128xf32>
    %209 = tpu.matmul %207, %208, %cst_90 {dimension_numbers = #tpu.dot_dimension_numbers<[1], [0], [0], [1], [0, 0, 1, 1], [], []>} : vector<1x1024xbf16>, vector<1024x128xbf16>, vector<1x128xf32> -> vector<1x128xf32>
    %c0_91 = arith.constant 0 : index
    %c0_92 = arith.constant 0 : index
    %210 = vector.load %arg21[%c0_91, %c0_92] : memref<1x128xf32, #tpu.memory_space<vmem>>, vector<1x128xf32>
    %211 = arith.addf %209, %210 : vector<1x128xf32>
    %cst_93 = arith.constant dense<0xFF800000> : vector<1xf32>
    %212 = vector.multi_reduction <maximumf>, %211, %cst_93 [1] : vector<1x128xf32> to vector<1xf32>
    %213 = vector.shape_cast %212 : vector<1xf32> to vector<1x1xf32>
    %214 = vector.broadcast %213 : vector<1x1xf32> to vector<1x128xf32>
    %215 = arith.subf %211, %214 : vector<1x128xf32>
    %216 = math.exp %215 : vector<1x128xf32>
    %cst_94 = arith.constant dense<0.000000e+00> : vector<1xf32>
    %217 = vector.multi_reduction <add>, %216, %cst_94 [1] : vector<1x128xf32> to vector<1xf32>
    %218 = vector.shape_cast %217 : vector<1xf32> to vector<1x1xf32>
    %219 = vector.broadcast %218 : vector<1x1xf32> to vector<1x128xf32>
    %220 = arith.divf %216, %219 : vector<1x128xf32>
    %c0_95 = arith.constant 0 : index
    %c0_96 = arith.constant 0 : index
    %221 = vector.load %arg22[%c0_95, %c0_96] : memref<1x128xf32, #tpu.memory_space<vmem>>, vector<1x128xf32>
    %222 = vector.broadcast %206 : vector<1x1xf32> to vector<1x128xf32>
    %223 = arith.mulf %222, %221 : vector<1x128xf32>
    %224 = arith.addf %220, %223 : vector<1x128xf32>
    %c0_97 = arith.constant 0 : index
    %c0_98 = arith.constant 0 : index
    %c0_99 = arith.constant 0 : index
    %225 = vector.load %arg23[%c0_97, %c0_98, %c0_99] : memref<1x1x128xf32, #tpu.memory_space<vmem>>, vector<1x1x128xf32>
    %226 = vector.shape_cast %225 : vector<1x1x128xf32> to vector<1x128xf32>
    %227 = vector.shape_cast %224 : vector<1x128xf32> to vector<1x1x128xf32>
    tpu.vector_store %arg23[%c0_97, %c0_98, %c0_99], %227 {strides = array<i32>} : memref<1x1x128xf32, #tpu.memory_space<vmem>>, vector<1x1x128xf32>,
    return
  }
  func.func @transform_0(%arg0: i32) -> (i32, i32, i32) {
    %c0_i32 = arith.constant 0 : i32
    %c0_i32_0 = arith.constant 0 : i32
    %c0_i32_1 = arith.constant 0 : i32
    return %arg0, %c0_i32, %c0_i32_0 : i32, i32, i32
  }
  func.func @transform_1(%arg0: i32) -> (i32, i32) {
    %c0_i32 = arith.constant 0 : i32
    %c0_i32_0 = arith.constant 0 : i32
    %c0_i32_1 = arith.constant 0 : i32
    return %c0_i32, %c0_i32_0 : i32, i32
  }
  func.func @transform_2(%arg0: i32) -> (i32, i32) {
    %c0_i32 = arith.constant 0 : i32
    %c0_i32_0 = arith.constant 0 : i32
    %c0_i32_1 = arith.constant 0 : i32
    return %c0_i32, %c0_i32_0 : i32, i32
  }
  func.func @transform_3(%arg0: i32) -> (i32, i32) {
    %c0_i32 = arith.constant 0 : i32
    %c0_i32_0 = arith.constant 0 : i32
    %c0_i32_1 = arith.constant 0 : i32
    return %c0_i32, %c0_i32_0 : i32, i32
  }
  func.func @transform_4(%arg0: i32) -> (i32, i32) {
    %c0_i32 = arith.constant 0 : i32
    %c0_i32_0 = arith.constant 0 : i32
    %c0_i32_1 = arith.constant 0 : i32
    return %c0_i32, %c0_i32_0 : i32, i32
  }
  func.func @transform_5(%arg0: i32) -> (i32, i32) {
    %c0_i32 = arith.constant 0 : i32
    %c0_i32_0 = arith.constant 0 : i32
    %c0_i32_1 = arith.constant 0 : i32
    return %c0_i32, %c0_i32_0 : i32, i32
  }
  func.func @transform_6(%arg0: i32) -> (i32, i32) {
    %c0_i32 = arith.constant 0 : i32
    %c0_i32_0 = arith.constant 0 : i32
    %c0_i32_1 = arith.constant 0 : i32
    return %c0_i32, %c0_i32_0 : i32, i32
  }
  func.func @transform_7(%arg0: i32) -> (i32, i32) {
    %c0_i32 = arith.constant 0 : i32
    %c0_i32_0 = arith.constant 0 : i32
    %c0_i32_1 = arith.constant 0 : i32
    return %c0_i32, %c0_i32_0 : i32, i32
  }
  func.func @transform_8(%arg0: i32) -> (i32, i32) {
    %c0_i32 = arith.constant 0 : i32
    %c0_i32_0 = arith.constant 0 : i32
    %c0_i32_1 = arith.constant 0 : i32
    return %c0_i32, %c0_i32_0 : i32, i32
  }
  func.func @transform_9(%arg0: i32) -> (i32, i32) {
    %c0_i32 = arith.constant 0 : i32
    %c0_i32_0 = arith.constant 0 : i32
    %c0_i32_1 = arith.constant 0 : i32
    return %c0_i32, %c0_i32_0 : i32, i32
  }
  func.func @transform_10(%arg0: i32) -> (i32, i32) {
    %c0_i32 = arith.constant 0 : i32
    %c0_i32_0 = arith.constant 0 : i32
    %c0_i32_1 = arith.constant 0 : i32
    return %c0_i32, %c0_i32_0 : i32, i32
  }
  func.func @transform_11(%arg0: i32) -> (i32, i32) {
    %c0_i32 = arith.constant 0 : i32
    %c0_i32_0 = arith.constant 0 : i32
    %c0_i32_1 = arith.constant 0 : i32
    return %c0_i32, %c0_i32_0 : i32, i32
  }
  func.func @transform_12(%arg0: i32) -> (i32, i32) {
    %c0_i32 = arith.constant 0 : i32
    %c0_i32_0 = arith.constant 0 : i32
    %c0_i32_1 = arith.constant 0 : i32
    return %c0_i32, %c0_i32_0 : i32, i32
  }
  func.func @transform_13(%arg0: i32) -> (i32, i32) {
    %c0_i32 = arith.constant 0 : i32
    %c0_i32_0 = arith.constant 0 : i32
    %c0_i32_1 = arith.constant 0 : i32
    return %c0_i32, %c0_i32_0 : i32, i32
  }
  func.func @transform_14(%arg0: i32) -> (i32, i32) {
    %c0_i32 = arith.constant 0 : i32
    %c0_i32_0 = arith.constant 0 : i32
    %c0_i32_1 = arith.constant 0 : i32
    return %c0_i32, %c0_i32_0 : i32, i32
  }
  func.func @transform_15(%arg0: i32) -> (i32, i32) {
    %c0_i32 = arith.constant 0 : i32
    %c0_i32_0 = arith.constant 0 : i32
    %c0_i32_1 = arith.constant 0 : i32
    return %c0_i32, %c0_i32_0 : i32, i32
  }
  func.func @transform_16(%arg0: i32) -> (i32, i32) {
    %c0_i32 = arith.constant 0 : i32
    %c0_i32_0 = arith.constant 0 : i32
    %c0_i32_1 = arith.constant 0 : i32
    return %c0_i32, %c0_i32_0 : i32, i32
  }
  func.func @transform_17(%arg0: i32) -> (i32, i32) {
    %c0_i32 = arith.constant 0 : i32
    %c0_i32_0 = arith.constant 0 : i32
    %c0_i32_1 = arith.constant 0 : i32
    return %c0_i32, %c0_i32_0 : i32, i32
  }
  func.func @transform_18(%arg0: i32) -> (i32, i32) {
    %c0_i32 = arith.constant 0 : i32
    %c0_i32_0 = arith.constant 0 : i32
    %c0_i32_1 = arith.constant 0 : i32
    return %c0_i32, %c0_i32_0 : i32, i32
  }
  func.func @transform_19(%arg0: i32) -> (i32, i32) {
    %c0_i32 = arith.constant 0 : i32
    %c0_i32_0 = arith.constant 0 : i32
    %c0_i32_1 = arith.constant 0 : i32
    return %c0_i32, %c0_i32_0 : i32, i32
  }
  func.func @transform_20(%arg0: i32) -> (i32, i32) {
    %c0_i32 = arith.constant 0 : i32
    %c0_i32_0 = arith.constant 0 : i32
    %c0_i32_1 = arith.constant 0 : i32
    return %c0_i32, %c0_i32_0 : i32, i32
  }
  func.func @transform_21(%arg0: i32) -> (i32, i32) {
    %c0_i32 = arith.constant 0 : i32
    %c0_i32_0 = arith.constant 0 : i32
    %c0_i32_1 = arith.constant 0 : i32
    return %c0_i32, %c0_i32_0 : i32, i32
  }
  func.func @transform_22(%arg0: i32) -> (i32, i32, i32) {
    %c0_i32 = arith.constant 0 : i32
    %c0_i32_0 = arith.constant 0 : i32
    %c0_i32_1 = arith.constant 0 : i32
    return %arg0, %c0_i32, %c0_i32_0 : i32, i32, i32
  }
  func.func @transform_23(%arg0: i32) -> (i32, i32, i32) {
    %c0_i32 = arith.constant 0 : i32
    %c0_i32_0 = arith.constant 0 : i32
    %c0_i32_1 = arith.constant 0 : i32
    return %arg0, %c0_i32, %c0_i32_0 : i32, i32, i32
  }
  func.func @transform_24(%arg0: i32) -> (i32, i32, i32) {
    %c0_i32 = arith.constant 0 : i32
    %c0_i32_0 = arith.constant 0 : i32
    %c0_i32_1 = arith.constant 0 : i32
    return %arg0, %c0_i32, %c0_i32_0 : i32, i32, i32
  }
  func.func @transform_25(%arg0: i32) -> (i32, i32, i32) {
    %c0_i32 = arith.constant 0 : i32
    %c0_i32_0 = arith.constant 0 : i32
    %c0_i32_1 = arith.constant 0 : i32
    return %arg0, %c0_i32, %c0_i32_0 : i32, i32, i32
  }
}

</mosaic_0001>

<llo_original>
// kernel: discriminator_1024v1_forward.1
$region0: #{discriminator_1024v1_forward.1}
  #allocation0 [shape = 'u32[]', space=smem, size = 0x4, offset = 0x4, fixed_abs, tag = 'smem constant byte address 0x4 - core index']
  #allocation1 [shape = 'u32[144,128]{1,0:T(1,128)}', space=vmem, size = 0x12000, scoped, tag = 'internal scratch']
  #allocation2 [shape = 'f32[1,1]{1,0:T(1,128)S(1)}', space=vmem, size = 0x200, scoped, tag = 'scoped memory for discriminator_1024v1_forward.1']
  %s0 = inlined_call_operand.vmem [shape: f32[2,1,1024], index: 0, kind: input, shape index: {}]
  %s1 = inlined_call_operand.vmem [shape: bf16[16,8], index: 1, kind: input, shape index: {}]
  %s2 = inlined_call_operand.vmem [shape: f32[16,1], index: 2, kind: input, shape index: {}]
  %s3 = inlined_call_operand.vmem [shape: bf16[32,240], index: 3, kind: input, shape index: {}]
  %s4 = inlined_call_operand.vmem [shape: f32[32,1], index: 4, kind: input, shape index: {}]
  %s5 = inlined_call_operand.hbm [shape: bf16[64,480], index: 5, kind: input, shape index: {}]
  %s6 = inlined_call_operand.vmem [shape: f32[64,1], index: 6, kind: input, shape index: {}]
  %s7 = inlined_call_operand.vmem [shape: bf16[32,16], index: 7, kind: input, shape index: {}]
  %s8 = inlined_call_operand.vmem [shape: f32[32,1], index: 8, kind: input, shape index: {}]
  %s9 = inlined_call_operand.hbm [shape: bf16[32,480], index: 9, kind: input, shape index: {}]
  %s10 = inlined_call_operand.vmem [shape: f32[32,1], index: 10, kind: input, shape index: {}]
  %s11 = inlined_call_operand.hbm [shape: bf16[32,480], index: 11, kind: input, shape index: {}]
  %s12 = inlined_call_operand.vmem [shape: f32[32,1], index: 12, kind: input, shape index: {}]
  %s13 = inlined_call_operand.hbm [shape: bf16[1024,256], index: 13, kind: input, shape index: {}]
  %s14 = inlined_call_operand.vmem [shape: bf16[256,64], index: 14, kind: input, shape index: {}]
  %s15 = inlined_call_operand.hbm [shape: bf16[64,1024], index: 15, kind: input, shape index: {}]
  %s16 = inlined_call_operand.hbm [shape: f32[32,1024], index: 16, kind: input, shape index: {}]
  %s17 = inlined_call_operand.hbm [shape: f32[1,1024], index: 17, kind: input, shape index: {}]
  %s18 = inlined_call_operand.<no memory space> [shape: f32[1,1], index: 18, kind: input, shape index: {}]
  %s19 = inlined_call_operand.vmem [shape: bf16[1024,128], index: 19, kind: input, shape index: {}]
  %s20 = inlined_call_operand.vmem [shape: f32[1,128], index: 20, kind: input, shape index: {}]
  %s21 = inlined_call_operand.vmem [shape: f32[1,128], index: 21, kind: input, shape index: {}]
  %s22 = inlined_call_operand.vmem [shape: f32[2,1,128], index: 22, kind: output, shape index: {0}]
  %s23 = inlined_call_operand.vmem [shape: f32[2,1,1024], index: 23, kind: output, shape index: {1}]
  %s24 = inlined_call_operand.vmem [shape: f32[2,1,1024], index: 24, kind: output, shape index: {2}]
  %s25 = inlined_call_operand.vmem [shape: f32[2,1,1024], index: 25, kind: output, shape index: {3}]
  %26 = xla_tuple %s22, %s23, %s24, %s25
  %s27 = sld [smem:[#allocation0]]
  $region173: #{discriminator_1024v1_forward.1} parent=0
    _
  %s29 = ssub.s32 1, %s27
  %s30 = scalar_select 0, %s29, %s27
  %v31 = vstv %s18
  %32 = vst [vmem:[#allocation2] sm:$0x1] %v31
  $region1: #{discriminator_1024v1_forward.1} parent=0
    #allocation3 [shape = 'u8[65536]{0}', space=vmem, size = 0x10000, scoped, tag = 'input window, operand 5, single buffered']
    #allocation4 [shape = 's32[2]{0}', space=sflag, size = 0x8, scoped, tag = 'scoped memory for discriminator_1024v1_forward.1']
    #allocation5 [shape = 'u8[32768]{0}', space=vmem, size = 0x8000, scoped, tag = 'input window, operand 9, single buffered']
    #allocation6 [shape = 's32[1]{0}', space=sflag, size = 0x4, scoped, tag = 'scoped memory for discriminator_1024v1_forward.1']
    #allocation7 [shape = 'u8[32768]{0}', space=vmem, size = 0x8000, scoped, tag = 'input window, operand 11, single buffered']
    #allocation8 [shape = 'u8[524288]{0}', space=vmem, size = 0x80000, scoped, tag = 'input window, operand 13, single buffered']
    #allocation9 [shape = 's32[1]{0}', space=sflag, size = 0x4, scoped, tag = 'scoped memory for discriminator_1024v1_forward.1']
    #allocation10 [shape = 'u8[131072]{0}', space=vmem, size = 0x20000, scoped, tag = 'input window, operand 15, single buffered']
    #allocation11 [shape = 'u8[131072]{0}', space=vmem, size = 0x20000, scoped, tag = 'input window, operand 16, single buffered']
    #allocation12 [shape = 's32[1]{0}', space=sflag, size = 0x4, scoped, tag = 'scoped memory for discriminator_1024v1_forward.1']
    #allocation13 [shape = 'u8[4096]{0}', space=vmem, size = 0x1000, scoped, tag = 'input window, operand 17, single buffered']
    %33 = vsyncpa [#allocation4], 0
    %34 = vsyncpa [#allocation6], 0
    %35 = vsyncpa [#allocation9], 0
    %36 = vsyncpa [#allocation12], 0
    loop: start=0, step=1, limit=4
    $region2: #{discriminator_1024v1_forward.1} parent=1 // loop_pre_header
      _
    $region3: #{discriminator_1024v1_forward.1} parent=1 // loop_header
      %s38 = sphi 0, %s42
      %p39 = scmp.ge.s32.totalorder %s38, 4
      %s48 = sphi 0, %s50
      %s51 = sphi 0, %s48
      %s52 = sphi 0, %s51
      %s68 = sphi 0, %s52
      %s72 = sphi 0, %s72
      %s74 = sphi 0, %s72
      %s75 = sphi 0, %s74
      %s89 = sphi 0, %s75
      %s93 = sphi 0, %s93
      %s95 = sphi 0, %s93
      %s96 = sphi 0, %s95
      %s110 = sphi 0, %s96
      %s114 = sphi 0, %s114
      %s116 = sphi 0, %s114
      %s117 = sphi 0, %s116
      %s131 = sphi 0, %s117
      %s135 = sphi 0, %s135
      %s137 = sphi 0, %s135
      %s138 = sphi 0, %s137
      %s152 = sphi 0, %s138
      %s156 = sphi 0, %s156
      %s158 = sphi 0, %s156
      %s159 = sphi 0, %s158
      %s173 = sphi 0, %s159
      %s177 = sphi 0, %s177
      %s179 = sphi 0, %s177
      %s180 = sphi 0, %s179
      %s194 = sphi 0, %s180
      %s198 = sphi 0, %s198
      %s200 = sphi 0, %s198
      %s201 = sphi 0, %s200
      %s215 = sphi 0, %s201
      %s219 = sphi 0, %s219
      %s221 = sphi 0, %s219
      %s222 = sphi 0, %s221
      %s236 = sphi 0, %s222
      %s240 = sphi 0, %s240
      %s242 = sphi 0, %s240
      %s243 = sphi 0, %s242
      %s257 = sphi 0, %s243
      %s261 = sphi 0, %s261
      %s263 = sphi 0, %s261
      %s264 = sphi 0, %s263
      %s278 = sphi 0, %s264
      %s282 = sphi 0, %s282
      %s284 = sphi 0, %s282
      %s285 = sphi 0, %s284
      %s299 = sphi 0, %s285
      %s303 = sphi 0, %s303
      %s305 = sphi 0, %s303
      %s306 = sphi 0, %s305
      %s320 = sphi 0, %s306
      %s324 = sphi 0, %s324
      %s326 = sphi 0, %s324
      %s327 = sphi 0, %s326
      %s341 = sphi 0, %s327
      %s345 = sphi 0, %s345
      %s347 = sphi 0, %s345
      %s348 = sphi 0, %s347
      %s362 = sphi 0, %s348
      %s366 = sphi 0, %s366
      %s368 = sphi 0, %s366
      %s369 = sphi 0, %s368
      %s383 = sphi 0, %s369
      %s387 = sphi 0, %s387
      %s389 = sphi 0, %s387
      %s390 = sphi 0, %s389
      %s404 = sphi 0, %s390
      %s408 = sphi 0, %s408
      %s410 = sphi 0, %s408
      %s411 = sphi 0, %s410
      %s425 = sphi 0, %s411
      %s429 = sphi 0, %s429
      %s431 = sphi 0, %s429
      %s432 = sphi 0, %s431
      %s446 = sphi 0, %s432
      %s450 = sphi 0, %s450
      %s452 = sphi 0, %s450
      %s453 = sphi 0, %s452
      %s467 = sphi 0, %s453
      %s471 = sphi 0, %s471
      %s473 = sphi 0, %s471
      %s474 = sphi 0, %s473
      %s488 = sphi 0, %s474
      %s492 = sphi 0, %s492
      %s494 = sphi 0, %s492
      %s495 = sphi 0, %s494
      %s509 = sphi 0, %s495
      %s515 = sphi 0, %s517
      %s518 = sphi 0, %s515
      %s519 = sphi 0, %s518
      %s535 = sphi 0, %s519
      %s541 = sphi 0, %s543
      %s544 = sphi 0, %s541
      %s545 = sphi 0, %s544
      %s561 = sphi 0, %s545
      %s567 = sphi 0, %s569
      %s570 = sphi 0, %s567
      %s571 = sphi 0, %s570
      %s587 = sphi 0, %s571
      %s593 = sphi 0, %s595
      %s596 = sphi 0, %s593
      %s597 = sphi 0, %s596
      %s613 = sphi 0, %s597
    $region4: #{discriminator_1024v1_forward.1} parent=1 // loop_header_branch
      %41 = sbr.rel (%p39) target = $region8
    $region5: #{discriminator_1024v1_forward.1} parent=1 // loop_body
      %s43 = ssub.s32 %s38, 1
      %s44 = ssub.s32 %s38, 2
      %s45 = sadd.s32 %s38, 1
      %s46 = ssub.s32 %s38, %s45
      %p47 = scmp.eq.s32.totalorder %s46, 0
      %s49 = sadd.s32 %s48, 1
      %s50 = scalar_select %p47, %s48, %s49
      %p53 = pneg %p47
      %p54 = scmp.eq.s32.totalorder %s38, 1
      %p55 = por %p53, %p54
      %p56 = scmp.ne.s32.totalorder %s48, %s51
      %p57 = scmp.eq.s32.totalorder %s38, 0
      %p58 = por %p56, %p57
      %p59 = scmp.ne.s32.totalorder %s48, %s51
      %p60 = scmp.eq.s32.totalorder %s43, 1
      %p61 = por %p59, %p60
      %p62 = scmp.ne.s32.totalorder %s51, %s52
      %p63 = scmp.eq.s32.totalorder %s43, 0
      %p64 = por %p62, %p63
      %p65 = scmp.ne.s32.totalorder %s51, %s52
      %p66 = scmp.eq.s32.totalorder %s44, 1
      %p67 = por %p65, %p66
      %p69 = scmp.ne.s32.totalorder %s52, %s68
      %p70 = scmp.eq.s32.totalorder %s44, 0
      %p71 = por %p69, %p70
      %s73 = sadd.s32 %s72, 1
      %p76 = scmp.eq.s32.totalorder %s38, 1
      %p77 = scmp.ne.s32.totalorder %s72, %s74
      %p78 = scmp.eq.s32.totalorder %s38, 0
      %p79 = por %p77, %p78
      %p80 = scmp.ne.s32.totalorder %s72, %s74
      %p81 = scmp.eq.s32.totalorder %s43, 1
      %p82 = por %p80, %p81
      %p83 = scmp.ne.s32.totalorder %s74, %s75
      %p84 = scmp.eq.s32.totalorder %s43, 0
      %p85 = por %p83, %p84
      %p86 = scmp.ne.s32.totalorder %s74, %s75
      %p87 = scmp.eq.s32.totalorder %s44, 1
      %p88 = por %p86, %p87
      %p90 = scmp.ne.s32.totalorder %s75, %s89
      %p91 = scmp.eq.s32.totalorder %s44, 0
      %p92 = por %p90, %p91
      %s94 = sadd.s32 %s93, 1
      %p97 = scmp.eq.s32.totalorder %s38, 1
      %p98 = scmp.ne.s32.totalorder %s93, %s95
      %p99 = scmp.eq.s32.totalorder %s38, 0
      %p100 = por %p98, %p99
      %p101 = scmp.ne.s32.totalorder %s93, %s95
      %p102 = scmp.eq.s32.totalorder %s43, 1
      %p103 = por %p101, %p102
      %p104 = scmp.ne.s32.totalorder %s95, %s96
      %p105 = scmp.eq.s32.totalorder %s43, 0
      %p106 = por %p104, %p105
      %p107 = scmp.ne.s32.totalorder %s95, %s96
      %p108 = scmp.eq.s32.totalorder %s44, 1
      %p109 = por %p107, %p108
      %p111 = scmp.ne.s32.totalorder %s96, %s110
      %p112 = scmp.eq.s32.totalorder %s44, 0
      %p113 = por %p111, %p112
      %s115 = sadd.s32 %s114, 1
      %p118 = scmp.eq.s32.totalorder %s38, 1
      %p119 = scmp.ne.s32.totalorder %s114, %s116
      %p120 = scmp.eq.s32.totalorder %s38, 0
      %p121 = por %p119, %p120
      %p122 = scmp.ne.s32.totalorder %s114, %s116
      %p123 = scmp.eq.s32.totalorder %s43, 1
      %p124 = por %p122, %p123
      %p125 = scmp.ne.s32.totalorder %s116, %s117
      %p126 = scmp.eq.s32.totalorder %s43, 0
      %p127 = por %p125, %p126
      %p128 = scmp.ne.s32.totalorder %s116, %s117
      %p129 = scmp.eq.s32.totalorder %s44, 1
      %p130 = por %p128, %p129
      %p132 = scmp.ne.s32.totalorder %s117, %s131
      %p133 = scmp.eq.s32.totalorder %s44, 0
      %p134 = por %p132, %p133
      %s136 = sadd.s32 %s135, 1
      %p139 = scmp.eq.s32.totalorder %s38, 1
      %p140 = scmp.ne.s32.totalorder %s135, %s137
      %p141 = scmp.eq.s32.totalorder %s38, 0
      %p142 = por %p140, %p141
      %p143 = scmp.ne.s32.totalorder %s135, %s137
      %p144 = scmp.eq.s32.totalorder %s43, 1
      %p145 = por %p143, %p144
      %p146 = scmp.ne.s32.totalorder %s137, %s138
      %p147 = scmp.eq.s32.totalorder %s43, 0
      %p148 = por %p146, %p147
      %p149 = scmp.ne.s32.totalorder %s137, %s138
      %p150 = scmp.eq.s32.totalorder %s44, 1
      %p151 = por %p149, %p150
      %p153 = scmp.ne.s32.totalorder %s138, %s152
      %p154 = scmp.eq.s32.totalorder %s44, 0
      %p155 = por %p153, %p154
      %s157 = sadd.s32 %s156, 1
      %p160 = scmp.eq.s32.totalorder %s38, 1
      %p161 = scmp.ne.s32.totalorder %s156, %s158
      %p162 = scmp.eq.s32.totalorder %s38, 0
      %p163 = por %p161, %p162
      %p164 = scmp.ne.s32.totalorder %s156, %s158
      %p165 = scmp.eq.s32.totalorder %s43, 1
      %p166 = por %p164, %p165
      %p167 = scmp.ne.s32.totalorder %s158, %s159
      %p168 = scmp.eq.s32.totalorder %s43, 0
      %p169 = por %p167, %p168
      %p170 = scmp.ne.s32.totalorder %s158, %s159
      %p171 = scmp.eq.s32.totalorder %s44, 1
      %p172 = por %p170, %p171
      %p174 = scmp.ne.s32.totalorder %s159, %s173
      %p175 = scmp.eq.s32.totalorder %s44, 0
      %p176 = por %p174, %p175
      %s178 = sadd.s32 %s177, 1
      %p181 = scmp.eq.s32.totalorder %s38, 1
      %p182 = scmp.ne.s32.totalorder %s177, %s179
      %p183 = scmp.eq.s32.totalorder %s38, 0
      %p184 = por %p182, %p183
      %p185 = scmp.ne.s32.totalorder %s177, %s179
      %p186 = scmp.eq.s32.totalorder %s43, 1
      %p187 = por %p185, %p186
      %p188 = scmp.ne.s32.totalorder %s179, %s180
      %p189 = scmp.eq.s32.totalorder %s43, 0
      %p190 = por %p188, %p189
      %p191 = scmp.ne.s32.totalorder %s179, %s180
      %p192 = scmp.eq.s32.totalorder %s44, 1
      %p193 = por %p191, %p192
      %p195 = scmp.ne.s32.totalorder %s180, %s194
      %p196 = scmp.eq.s32.totalorder %s44, 0
      %p197 = por %p195, %p196
      %s199 = sadd.s32 %s198, 1
      %p202 = scmp.eq.s32.totalorder %s38, 1
      %p203 = scmp.ne.s32.totalorder %s198, %s200
      %p204 = scmp.eq.s32.totalorder %s38, 0
      %p205 = por %p203, %p204
      %p206 = scmp.ne.s32.totalorder %s198, %s200
      %p207 = scmp.eq.s32.totalorder %s43, 1
      %p208 = por %p206, %p207
      %p209 = scmp.ne.s32.totalorder %s200, %s201
      %p210 = scmp.eq.s32.totalorder %s43, 0
      %p211 = por %p209, %p210
      %p212 = scmp.ne.s32.totalorder %s200, %s201
      %p213 = scmp.eq.s32.totalorder %s44, 1
      %p214 = por %p212, %p213
      %p216 = scmp.ne.s32.totalorder %s201, %s215
      %p217 = scmp.eq.s32.totalorder %s44, 0
      %p218 = por %p216, %p217
      %s220 = sadd.s32 %s219, 1
      %p223 = scmp.eq.s32.totalorder %s38, 1
      %p224 = scmp.ne.s32.totalorder %s219, %s221
      %p225 = scmp.eq.s32.totalorder %s38, 0
      %p226 = por %p224, %p225
      %p227 = scmp.ne.s32.totalorder %s219, %s221
      %p228 = scmp.eq.s32.totalorder %s43, 1
      %p229 = por %p227, %p228
      %p230 = scmp.ne.s32.totalorder %s221, %s222
      %p231 = scmp.eq.s32.totalorder %s43, 0
      %p232 = por %p230, %p231
      %p233 = scmp.ne.s32.totalorder %s221, %s222
      %p234 = scmp.eq.s32.totalorder %s44, 1
      %p235 = por %p233, %p234
      %p237 = scmp.ne.s32.totalorder %s222, %s236
      %p238 = scmp.eq.s32.totalorder %s44, 0
      %p239 = por %p237, %p238
      %s241 = sadd.s32 %s240, 1
      %p244 = scmp.eq.s32.totalorder %s38, 1
      %p245 = scmp.ne.s32.totalorder %s240, %s242
      %p246 = scmp.eq.s32.totalorder %s38, 0
      %p247 = por %p245, %p246
      %p248 = scmp.ne.s32.totalorder %s240, %s242
      %p249 = scmp.eq.s32.totalorder %s43, 1
      %p250 = por %p248, %p249
      %p251 = scmp.ne.s32.totalorder %s242, %s243
      %p252 = scmp.eq.s32.totalorder %s43, 0
      %p253 = por %p251, %p252
      %p254 = scmp.ne.s32.totalorder %s242, %s243
      %p255 = scmp.eq.s32.totalorder %s44, 1
      %p256 = por %p254, %p255
      %p258 = scmp.ne.s32.totalorder %s243, %s257
      %p259 = scmp.eq.s32.totalorder %s44, 0
      %p260 = por %p258, %p259
      %s262 = sadd.s32 %s261, 1
      %p265 = scmp.eq.s32.totalorder %s38, 1
      %p266 = scmp.ne.s32.totalorder %s261, %s263
      %p267 = scmp.eq.s32.totalorder %s38, 0
      %p268 = por %p266, %p267
      %p269 = scmp.ne.s32.totalorder %s261, %s263
      %p270 = scmp.eq.s32.totalorder %s43, 1
      %p271 = por %p269, %p270
      %p272 = scmp.ne.s32.totalorder %s263, %s264
      %p273 = scmp.eq.s32.totalorder %s43, 0
      %p274 = por %p272, %p273
      %p275 = scmp.ne.s32.totalorder %s263, %s264
      %p276 = scmp.eq.s32.totalorder %s44, 1
      %p277 = por %p275, %p276
      %p279 = scmp.ne.s32.totalorder %s264, %s278
      %p280 = scmp.eq.s32.totalorder %s44, 0
      %p281 = por %p279, %p280
      %s283 = sadd.s32 %s282, 1
      %p286 = scmp.eq.s32.totalorder %s38, 1
      %p287 = scmp.ne.s32.totalorder %s282, %s284
      %p288 = scmp.eq.s32.totalorder %s38, 0
      %p289 = por %p287, %p288
      %p290 = scmp.ne.s32.totalorder %s282, %s284
      %p291 = scmp.eq.s32.totalorder %s43, 1
      %p292 = por %p290, %p291
      %p293 = scmp.ne.s32.totalorder %s284, %s285
      %p294 = scmp.eq.s32.totalorder %s43, 0
      %p295 = por %p293, %p294
      %p296 = scmp.ne.s32.totalorder %s284, %s285
      %p297 = scmp.eq.s32.totalorder %s44, 1
      %p298 = por %p296, %p297
      %p300 = scmp.ne.s32.totalorder %s285, %s299
      %p301 = scmp.eq.s32.totalorder %s44, 0
      %p302 = por %p300, %p301
      %s304 = sadd.s32 %s303, 1
      %p307 = scmp.eq.s32.totalorder %s38, 1
      %p308 = scmp.ne.s32.totalorder %s303, %s305
      %p309 = scmp.eq.s32.totalorder %s38, 0
      %p310 = por %p308, %p309
      %p311 = scmp.ne.s32.totalorder %s303, %s305
      %p312 = scmp.eq.s32.totalorder %s43, 1
      %p313 = por %p311, %p312
      %p314 = scmp.ne.s32.totalorder %s305, %s306
      %p315 = scmp.eq.s32.totalorder %s43, 0
      %p316 = por %p314, %p315
      %p317 = scmp.ne.s32.totalorder %s305, %s306
      %p318 = scmp.eq.s32.totalorder %s44, 1
      %p319 = por %p317, %p318
      %p321 = scmp.ne.s32.totalorder %s306, %s320
      %p322 = scmp.eq.s32.totalorder %s44, 0
      %p323 = por %p321, %p322
      %s325 = sadd.s32 %s324, 1
      %p328 = scmp.eq.s32.totalorder %s38, 1
      %p329 = scmp.ne.s32.totalorder %s324, %s326
      %p330 = scmp.eq.s32.totalorder %s38, 0
      %p331 = por %p329, %p330
      %p332 = scmp.ne.s32.totalorder %s324, %s326
      %p333 = scmp.eq.s32.totalorder %s43, 1
      %p334 = por %p332, %p333
      %p335 = scmp.ne.s32.totalorder %s326, %s327
      %p336 = scmp.eq.s32.totalorder %s43, 0
      %p337 = por %p335, %p336
      %p338 = scmp.ne.s32.totalorder %s326, %s327
      %p339 = scmp.eq.s32.totalorder %s44, 1
      %p340 = por %p338, %p339
      %p342 = scmp.ne.s32.totalorder %s327, %s341
      %p343 = scmp.eq.s32.totalorder %s44, 0
      %p344 = por %p342, %p343
      %s346 = sadd.s32 %s345, 1
      %p349 = scmp.eq.s32.totalorder %s38, 1
      %p350 = scmp.ne.s32.totalorder %s345, %s347
      %p351 = scmp.eq.s32.totalorder %s38, 0
      %p352 = por %p350, %p351
      %p353 = scmp.ne.s32.totalorder %s345, %s347
      %p354 = scmp.eq.s32.totalorder %s43, 1
      %p355 = por %p353, %p354
      %p356 = scmp.ne.s32.totalorder %s347, %s348
      %p357 = scmp.eq.s32.totalorder %s43, 0
      %p358 = por %p356, %p357
      %p359 = scmp.ne.s32.totalorder %s347, %s348
      %p360 = scmp.eq.s32.totalorder %s44, 1
      %p361 = por %p359, %p360
      %p363 = scmp.ne.s32.totalorder %s348, %s362
      %p364 = scmp.eq.s32.totalorder %s44, 0
      %p365 = por %p363, %p364
      %s367 = sadd.s32 %s366, 1
      %p370 = scmp.eq.s32.totalorder %s38, 1
      %p371 = scmp.ne.s32.totalorder %s366, %s368
      %p372 = scmp.eq.s32.totalorder %s38, 0
      %p373 = por %p371, %p372
      %p374 = scmp.ne.s32.totalorder %s366, %s368
      %p375 = scmp.eq.s32.totalorder %s43, 1
      %p376 = por %p374, %p375
      %p377 = scmp.ne.s32.totalorder %s368, %s369
      %p378 = scmp.eq.s32.totalorder %s43, 0
      %p379 = por %p377, %p378
      %p380 = scmp.ne.s32.totalorder %s368, %s369
      %p381 = scmp.eq.s32.totalorder %s44, 1
      %p382 = por %p380, %p381
      %p384 = scmp.ne.s32.totalorder %s369, %s383
      %p385 = scmp.eq.s32.totalorder %s44, 0
      %p386 = por %p384, %p385
      %s388 = sadd.s32 %s387, 1
      %p391 = scmp.eq.s32.totalorder %s38, 1
      %p392 = scmp.ne.s32.totalorder %s387, %s389
      %p393 = scmp.eq.s32.totalorder %s38, 0
      %p394 = por %p392, %p393
      %p395 = scmp.ne.s32.totalorder %s387, %s389
      %p396 = scmp.eq.s32.totalorder %s43, 1
      %p397 = por %p395, %p396
      %p398 = scmp.ne.s32.totalorder %s389, %s390
      %p399 = scmp.eq.s32.totalorder %s43, 0
      %p400 = por %p398, %p399
      %p401 = scmp.ne.s32.totalorder %s389, %s390
      %p402 = scmp.eq.s32.totalorder %s44, 1
      %p403 = por %p401, %p402
      %p405 = scmp.ne.s32.totalorder %s390, %s404
      %p406 = scmp.eq.s32.totalorder %s44, 0
      %p407 = por %p405, %p406
      %s409 = sadd.s32 %s408, 1
      %p412 = scmp.eq.s32.totalorder %s38, 1
      %p413 = scmp.ne.s32.totalorder %s408, %s410
      %p414 = scmp.eq.s32.totalorder %s38, 0
      %p415 = por %p413, %p414
      %p416 = scmp.ne.s32.totalorder %s408, %s410
      %p417 = scmp.eq.s32.totalorder %s43, 1
      %p418 = por %p416, %p417
      %p419 = scmp.ne.s32.totalorder %s410, %s411
      %p420 = scmp.eq.s32.totalorder %s43, 0
      %p421 = por %p419, %p420
      %p422 = scmp.ne.s32.totalorder %s410, %s411
      %p423 = scmp.eq.s32.totalorder %s44, 1
      %p424 = por %p422, %p423
      %p426 = scmp.ne.s32.totalorder %s411, %s425
      %p427 = scmp.eq.s32.totalorder %s44, 0
      %p428 = por %p426, %p427
      %s430 = sadd.s32 %s429, 1
      %p433 = scmp.eq.s32.totalorder %s38, 1
      %p434 = scmp.ne.s32.totalorder %s429, %s431
      %p435 = scmp.eq.s32.totalorder %s38, 0
      %p436 = por %p434, %p435
      %p437 = scmp.ne.s32.totalorder %s429, %s431
      %p438 = scmp.eq.s32.totalorder %s43, 1
      %p439 = por %p437, %p438
      %p440 = scmp.ne.s32.totalorder %s431, %s432
      %p441 = scmp.eq.s32.totalorder %s43, 0
      %p442 = por %p440, %p441
      %p443 = scmp.ne.s32.totalorder %s431, %s432
      %p444 = scmp.eq.s32.totalorder %s44, 1
      %p445 = por %p443, %p444
      %p447 = scmp.ne.s32.totalorder %s432, %s446
      %p448 = scmp.eq.s32.totalorder %s44, 0
      %p449 = por %p447, %p448
      %s451 = sadd.s32 %s450, 1
      %p454 = scmp.eq.s32.totalorder %s38, 1
      %p455 = scmp.ne.s32.totalorder %s450, %s452
      %p456 = scmp.eq.s32.totalorder %s38, 0
      %p457 = por %p455, %p456
      %p458 = scmp.ne.s32.totalorder %s450, %s452
      %p459 = scmp.eq.s32.totalorder %s43, 1
      %p460 = por %p458, %p459
      %p461 = scmp.ne.s32.totalorder %s452, %s453
      %p462 = scmp.eq.s32.totalorder %s43, 0
      %p463 = por %p461, %p462
      %p464 = scmp.ne.s32.totalorder %s452, %s453
      %p465 = scmp.eq.s32.totalorder %s44, 1
      %p466 = por %p464, %p465
      %p468 = scmp.ne.s32.totalorder %s453, %s467
      %p469 = scmp.eq.s32.totalorder %s44, 0
      %p470 = por %p468, %p469
      %s472 = sadd.s32 %s471, 1
      %p475 = scmp.eq.s32.totalorder %s38, 1
      %p476 = scmp.ne.s32.totalorder %s471, %s473
      %p477 = scmp.eq.s32.totalorder %s38, 0
      %p478 = por %p476, %p477
      %p479 = scmp.ne.s32.totalorder %s471, %s473
      %p480 = scmp.eq.s32.totalorder %s43, 1
      %p481 = por %p479, %p480
      %p482 = scmp.ne.s32.totalorder %s473, %s474
      %p483 = scmp.eq.s32.totalorder %s43, 0
      %p484 = por %p482, %p483
      %p485 = scmp.ne.s32.totalorder %s473, %s474
      %p486 = scmp.eq.s32.totalorder %s44, 1
      %p487 = por %p485, %p486
      %p489 = scmp.ne.s32.totalorder %s474, %s488
      %p490 = scmp.eq.s32.totalorder %s44, 0
      %p491 = por %p489, %p490
      %s493 = sadd.s32 %s492, 1
      %p496 = scmp.eq.s32.totalorder %s38, 1
      %p497 = scmp.ne.s32.totalorder %s492, %s494
      %p498 = scmp.eq.s32.totalorder %s38, 0
      %p499 = por %p497, %p498
      %p500 = scmp.ne.s32.totalorder %s492, %s494
      %p501 = scmp.eq.s32.totalorder %s43, 1
      %p502 = por %p500, %p501
      %p503 = scmp.ne.s32.totalorder %s494, %s495
      %p504 = scmp.eq.s32.totalorder %s43, 0
      %p505 = por %p503, %p504
      %p506 = scmp.ne.s32.totalorder %s494, %s495
      %p507 = scmp.eq.s32.totalorder %s44, 1
      %p508 = por %p506, %p507
      %p510 = scmp.ne.s32.totalorder %s495, %s509
      %p511 = scmp.eq.s32.totalorder %s44, 0
      %p512 = por %p510, %p511
      %s513 = ssub.s32 %s38, %s45
      %p514 = scmp.eq.s32.totalorder %s513, 0
      %s516 = sadd.s32 %s515, 1
      %s517 = scalar_select %p514, %s515, %s516
      %p520 = pneg %p514
      %p521 = scmp.eq.s32.totalorder %s38, 1
      %p522 = por %p520, %p521
      %p523 = scmp.ne.s32.totalorder %s515, %s518
      %p524 = scmp.eq.s32.totalorder %s38, 0
      %p525 = por %p523, %p524
      %p526 = scmp.ne.s32.totalorder %s515, %s518
      %p527 = scmp.eq.s32.totalorder %s43, 1
      %p528 = por %p526, %p527
      %p529 = scmp.ne.s32.totalorder %s518, %s519
      %p530 = scmp.eq.s32.totalorder %s43, 0
      %p531 = por %p529, %p530
      %p532 = scmp.ne.s32.totalorder %s518, %s519
      %p533 = scmp.eq.s32.totalorder %s44, 1
      %p534 = por %p532, %p533
      %p536 = scmp.ne.s32.totalorder %s519, %s535
      %p537 = scmp.eq.s32.totalorder %s44, 0
      %p538 = por %p536, %p537
      %s539 = ssub.s32 %s38, %s45
      %p540 = scmp.eq.s32.totalorder %s539, 0
      %s542 = sadd.s32 %s541, 1
      %s543 = scalar_select %p540, %s541, %s542
      %p546 = pneg %p540
      %p547 = scmp.eq.s32.totalorder %s38, 1
      %p548 = por %p546, %p547
      %p549 = scmp.ne.s32.totalorder %s541, %s544
      %p550 = scmp.eq.s32.totalorder %s38, 0
      %p551 = por %p549, %p550
      %p552 = scmp.ne.s32.totalorder %s541, %s544
      %p553 = scmp.eq.s32.totalorder %s43, 1
      %p554 = por %p552, %p553
      %p555 = scmp.ne.s32.totalorder %s544, %s545
      %p556 = scmp.eq.s32.totalorder %s43, 0
      %p557 = por %p555, %p556
      %p558 = scmp.ne.s32.totalorder %s544, %s545
      %p559 = scmp.eq.s32.totalorder %s44, 1
      %p560 = por %p558, %p559
      %p562 = scmp.ne.s32.totalorder %s545, %s561
      %p563 = scmp.eq.s32.totalorder %s44, 0
      %p564 = por %p562, %p563
      %s565 = ssub.s32 %s38, %s45
      %p566 = scmp.eq.s32.totalorder %s565, 0
      %s568 = sadd.s32 %s567, 1
      %s569 = scalar_select %p566, %s567, %s568
      %p572 = pneg %p566
      %p573 = scmp.eq.s32.totalorder %s38, 1
      %p574 = por %p572, %p573
      %p575 = scmp.ne.s32.totalorder %s567, %s570
      %p576 = scmp.eq.s32.totalorder %s38, 0
      %p577 = por %p575, %p576
      %p578 = scmp.ne.s32.totalorder %s567, %s570
      %p579 = scmp.eq.s32.totalorder %s43, 1
      %p580 = por %p578, %p579
      %p581 = scmp.ne.s32.totalorder %s570, %s571
      %p582 = scmp.eq.s32.totalorder %s43, 0
      %p583 = por %p581, %p582
      %p584 = scmp.ne.s32.totalorder %s570, %s571
      %p585 = scmp.eq.s32.totalorder %s44, 1
      %p586 = por %p584, %p585
      %p588 = scmp.ne.s32.totalorder %s571, %s587
      %p589 = scmp.eq.s32.totalorder %s44, 0
      %p590 = por %p588, %p589
      %s591 = ssub.s32 %s38, %s45
      %p592 = scmp.eq.s32.totalorder %s591, 0
      %s594 = sadd.s32 %s593, 1
      %s595 = scalar_select %p592, %s593, %s594
      %p598 = pneg %p592
      %p599 = scmp.eq.s32.totalorder %s38, 1
      %p600 = por %p598, %p599
      %p601 = scmp.ne.s32.totalorder %s593, %s596
      %p602 = scmp.eq.s32.totalorder %s38, 0
      %p603 = por %p601, %p602
      %p604 = scmp.ne.s32.totalorder %s593, %s596
      %p605 = scmp.eq.s32.totalorder %s43, 1
      %p606 = por %p604, %p605
      %p607 = scmp.ne.s32.totalorder %s596, %s597
      %p608 = scmp.eq.s32.totalorder %s43, 0
      %p609 = por %p607, %p608
      %p610 = scmp.ne.s32.totalorder %s596, %s597
      %p611 = scmp.eq.s32.totalorder %s44, 1
      %p612 = por %p610, %p611
      %p614 = scmp.ne.s32.totalorder %s597, %s613
      %p615 = scmp.eq.s32.totalorder %s44, 0
      %p616 = por %p614, %p615
      %p617 = scmp.le.s32.totalorder 1, %s38
      %p618 = scmp.lt.s32.totalorder %s38, 3
      %p619 = pnand %p617, %p618
      %p620 = pneg %p619
      // Predicated region
      $region9: #{discriminator_1024v1_forward.1} parent=5 // pred_check
        _
      $region10: #{discriminator_1024v1_forward.1} parent=5 // pred_check_branch
        %622 = sbr.rel (%p619) target = $region12
      $region11: #{discriminator_1024v1_forward.1} parent=5 // pred_region
        %s623 = ssub.s32 %s38, 1
        // Predicated region
        $region13: #{discriminator_1024v1_forward.1} parent=11 // pred_check
          %p624 = pneg %p85
        $region14: #{discriminator_1024v1_forward.1} parent=11 // pred_check_branch
          %626 = sbr.rel (%p624) target = $region16
        $region15: #{discriminator_1024v1_forward.1} parent=11 // pred_region
          _
        $region16: #{discriminator_1024v1_forward.1} parent=11 // pred_fallthru
          _
        // Predicated region
        $region17: #{discriminator_1024v1_forward.1} parent=11 // pred_check
          %p627 = pneg %p106
        $region18: #{discriminator_1024v1_forward.1} parent=11 // pred_check_branch
          %629 = sbr.rel (%p627) target = $region20
        $region19: #{discriminator_1024v1_forward.1} parent=11 // pred_region
          _
        $region20: #{discriminator_1024v1_forward.1} parent=11 // pred_fallthru
          _
        // Predicated region
        $region21: #{discriminator_1024v1_forward.1} parent=11 // pred_check
          %p630 = pneg %p127
        $region22: #{discriminator_1024v1_forward.1} parent=11 // pred_check_branch
          %632 = sbr.rel (%p630) target = $region24
        $region23: #{discriminator_1024v1_forward.1} parent=11 // pred_region
          _
        $region24: #{discriminator_1024v1_forward.1} parent=11 // pred_fallthru
          _
        // Predicated region
        $region25: #{discriminator_1024v1_forward.1} parent=11 // pred_check
          %p633 = pneg %p148
        $region26: #{discriminator_1024v1_forward.1} parent=11 // pred_check_branch
          %635 = sbr.rel (%p633) target = $region28
        $region27: #{discriminator_1024v1_forward.1} parent=11 // pred_region
          _
        $region28: #{discriminator_1024v1_forward.1} parent=11 // pred_fallthru
          _
        // Predicated region
        $region29: #{discriminator_1024v1_forward.1} parent=11 // pred_check
          %p636 = pneg %p169
        $region30: #{discriminator_1024v1_forward.1} parent=11 // pred_check_branch
          %638 = sbr.rel (%p636) target = $region32
        $region31: #{discriminator_1024v1_forward.1} parent=11 // pred_region
          %s640 = ssub.s32 2048, 2048
          %641 = vsyncadd [#allocation4], %s640
          %s642 = sshll.u32 [#allocation3], 4
          %s643 = int_to_ptr.vmem [resolvable:$true] %s642
          %648 = dma.hbm_to_vmem [thread:$0]  %s5, 2048, %s643, [#allocation4], 256, 256, 16
        $region32: #{discriminator_1024v1_forward.1} parent=11 // pred_fallthru
          _
        // Predicated region
        $region33: #{discriminator_1024v1_forward.1} parent=11 // pred_check
          %p649 = pneg %p190
        $region34: #{discriminator_1024v1_forward.1} parent=11 // pred_check_branch
          %651 = sbr.rel (%p649) target = $region36
        $region35: #{discriminator_1024v1_forward.1} parent=11 // pred_region
          _
        $region36: #{discriminator_1024v1_forward.1} parent=11 // pred_fallthru
          _
        // Predicated region
        $region37: #{discriminator_1024v1_forward.1} parent=11 // pred_check
          %p652 = pneg %p211
        $region38: #{discriminator_1024v1_forward.1} parent=11 // pred_check_branch
          %654 = sbr.rel (%p652) target = $region40
        $region39: #{discriminator_1024v1_forward.1} parent=11 // pred_region
          _
        $region40: #{discriminator_1024v1_forward.1} parent=11 // pred_fallthru
          _
        // Predicated region
        $region41: #{discriminator_1024v1_forward.1} parent=11 // pred_check
          %p655 = pneg %p232
        $region42: #{discriminator_1024v1_forward.1} parent=11 // pred_check_branch
          %657 = sbr.rel (%p655) target = $region44
        $region43: #{discriminator_1024v1_forward.1} parent=11 // pred_region
          _
        $region44: #{discriminator_1024v1_forward.1} parent=11 // pred_fallthru
          _
        // Predicated region
        $region45: #{discriminator_1024v1_forward.1} parent=11 // pred_check
          %p658 = pneg %p253
        $region46: #{discriminator_1024v1_forward.1} parent=11 // pred_check_branch
          %660 = sbr.rel (%p658) target = $region48
        $region47: #{discriminator_1024v1_forward.1} parent=11 // pred_region
          %s662 = ssub.s32 1024, 1024
          %663 = vsyncadd [#allocation6], %s662
          %s664 = sshll.u32 [#allocation5], 4
          %s665 = int_to_ptr.vmem [resolvable:$true] %s664
          %670 = dma.hbm_to_vmem [thread:$0]  %s9, 1024, %s665, [#allocation6], 256, 256, 16
        $region48: #{discriminator_1024v1_forward.1} parent=11 // pred_fallthru
          _
        // Predicated region
        $region49: #{discriminator_1024v1_forward.1} parent=11 // pred_check
          %p671 = pneg %p274
        $region50: #{discriminator_1024v1_forward.1} parent=11 // pred_check_branch
          %673 = sbr.rel (%p671) target = $region52
        $region51: #{discriminator_1024v1_forward.1} parent=11 // pred_region
          _
        $region52: #{discriminator_1024v1_forward.1} parent=11 // pred_fallthru
          _
        // Predicated region
        $region53: #{discriminator_1024v1_forward.1} parent=11 // pred_check
          %p674 = pneg %p295
        $region54: #{discriminator_1024v1_forward.1} parent=11 // pred_check_branch
          %676 = sbr.rel (%p674) target = $region56
        $region55: #{discriminator_1024v1_forward.1} parent=11 // pred_region
          %s678 = ssub.s32 1024, 1024
          %679 = vsyncadd [#allocation6], %s678
          %s680 = sshll.u32 [#allocation7], 4
          %s681 = int_to_ptr.vmem [resolvable:$true] %s680
          %686 = dma.hbm_to_vmem [thread:$0]  %s11, 1024, %s681, [#allocation6], 256, 256, 16
        $region56: #{discriminator_1024v1_forward.1} parent=11 // pred_fallthru
          _
        // Predicated region
        $region57: #{discriminator_1024v1_forward.1} parent=11 // pred_check
          %p687 = pneg %p316
        $region58: #{discriminator_1024v1_forward.1} parent=11 // pred_check_branch
          %689 = sbr.rel (%p687) target = $region60
        $region59: #{discriminator_1024v1_forward.1} parent=11 // pred_region
          _
        $region60: #{discriminator_1024v1_forward.1} parent=11 // pred_fallthru
          _
        // Predicated region
        $region61: #{discriminator_1024v1_forward.1} parent=11 // pred_check
          %p690 = pneg %p337
        $region62: #{discriminator_1024v1_forward.1} parent=11 // pred_check_branch
          %692 = sbr.rel (%p690) target = $region64
        $region63: #{discriminator_1024v1_forward.1} parent=11 // pred_region
          %s694 = ssub.s32 16384, 16384
          %695 = vsyncadd [#allocation9], %s694
          %s696 = sshll.u32 [#allocation8], 4
          %s697 = int_to_ptr.vmem [resolvable:$true] %s696
          %702 = dma.hbm_to_vmem [thread:$0]  %s13, 16384, %s697, [#allocation9], 128, 128, 8
        $region64: #{discriminator_1024v1_forward.1} parent=11 // pred_fallthru
          _
        // Predicated region
        $region65: #{discriminator_1024v1_forward.1} parent=11 // pred_check
          %p703 = pneg %p358
        $region66: #{discriminator_1024v1_forward.1} parent=11 // pred_check_branch
          %705 = sbr.rel (%p703) target = $region68
        $region67: #{discriminator_1024v1_forward.1} parent=11 // pred_region
          _
        $region68: #{discriminator_1024v1_forward.1} parent=11 // pred_fallthru
          _
        // Predicated region
        $region69: #{discriminator_1024v1_forward.1} parent=11 // pred_check
          %p706 = pneg %p379
        $region70: #{discriminator_1024v1_forward.1} parent=11 // pred_check_branch
          %708 = sbr.rel (%p706) target = $region72
        $region71: #{discriminator_1024v1_forward.1} parent=11 // pred_region
          %s710 = ssub.s32 4096, 4096
          %711 = vsyncadd [#allocation9], %s710
          %s712 = sshll.u32 [#allocation10], 4
          %s713 = int_to_ptr.vmem [resolvable:$true] %s712
          %718 = dma.hbm_to_vmem [thread:$0]  %s15, 4096, %s713, [#allocation9], 512, 512, 32
        $region72: #{discriminator_1024v1_forward.1} parent=11 // pred_fallthru
          _
        // Predicated region
        $region73: #{discriminator_1024v1_forward.1} parent=11 // pred_check
          %p719 = pneg %p400
        $region74: #{discriminator_1024v1_forward.1} parent=11 // pred_check_branch
          %721 = sbr.rel (%p719) target = $region76
        $region75: #{discriminator_1024v1_forward.1} parent=11 // pred_region
          %s723 = ssub.s32 4096, 4096
          %724 = vsyncadd [#allocation12], %s723
          %s725 = sshll.u32 [#allocation11], 4
          %s726 = int_to_ptr.vmem [resolvable:$true] %s725
          %731 = dma.hbm_to_vmem [thread:$0]  %s16, 4096, %s726, [#allocation12], 1024, 1024, 64
        $region76: #{discriminator_1024v1_forward.1} parent=11 // pred_fallthru
          _
        // Predicated region
        $region77: #{discriminator_1024v1_forward.1} parent=11 // pred_check
          %p732 = pneg %p421
        $region78: #{discriminator_1024v1_forward.1} parent=11 // pred_check_branch
          %734 = sbr.rel (%p732) target = $region80
        $region79: #{discriminator_1024v1_forward.1} parent=11 // pred_region
          %s736 = ssub.s32 128, 128
          %737 = vsyncadd [#allocation12], %s736
          %s739 = sshll.u32 [#allocation13], 4
          %s740 = int_to_ptr.vmem [resolvable:$true] %s739
          %742 = dma.hbm_to_vmem [thread:$0]  %s17, 128, %s740, [#allocation12]
        $region80: #{discriminator_1024v1_forward.1} parent=11 // pred_fallthru
          _
        // Predicated region
        $region81: #{discriminator_1024v1_forward.1} parent=11 // pred_check
          %p743 = pneg %p442
        $region82: #{discriminator_1024v1_forward.1} parent=11 // pred_check_branch
          %745 = sbr.rel (%p743) target = $region84
        $region83: #{discriminator_1024v1_forward.1} parent=11 // pred_region
          _
        $region84: #{discriminator_1024v1_forward.1} parent=11 // pred_fallthru
          _
        // Predicated region
        $region85: #{discriminator_1024v1_forward.1} parent=11 // pred_check
          %p746 = pneg %p463
        $region86: #{discriminator_1024v1_forward.1} parent=11 // pred_check_branch
          %748 = sbr.rel (%p746) target = $region88
        $region87: #{discriminator_1024v1_forward.1} parent=11 // pred_region
          _
        $region88: #{discriminator_1024v1_forward.1} parent=11 // pred_fallthru
          _
        // Predicated region
        $region89: #{discriminator_1024v1_forward.1} parent=11 // pred_check
          %p749 = pneg %p484
        $region90: #{discriminator_1024v1_forward.1} parent=11 // pred_check_branch
          %751 = sbr.rel (%p749) target = $region92
        $region91: #{discriminator_1024v1_forward.1} parent=11 // pred_region
          _
        $region92: #{discriminator_1024v1_forward.1} parent=11 // pred_fallthru
          _
        // Predicated region
        $region93: #{discriminator_1024v1_forward.1} parent=11 // pred_check
          %p752 = pneg %p505
        $region94: #{discriminator_1024v1_forward.1} parent=11 // pred_check_branch
          %754 = sbr.rel (%p752) target = $region96
        $region95: #{discriminator_1024v1_forward.1} parent=11 // pred_region
          _
        $region96: #{discriminator_1024v1_forward.1} parent=11 // pred_fallthru
          _
      $region12: #{discriminator_1024v1_forward.1} parent=5 // pred_fallthru
        _
      %p755 = scmp.lt.s32.totalorder %s38, 2
      // Predicated region
      $region97: #{discriminator_1024v1_forward.1} parent=5 // pred_check
        %p756 = pneg %p755
      $region98: #{discriminator_1024v1_forward.1} parent=5 // pred_check_branch
        %758 = sbr.rel (%p756) target = $region100
      $region99: #{discriminator_1024v1_forward.1} parent=5 // pred_region
        // Predicated region
        $region101: #{discriminator_1024v1_forward.1} parent=99 // pred_check
          %p759 = pneg %p58
        $region102: #{discriminator_1024v1_forward.1} parent=99 // pred_check_branch
          %761 = sbr.rel (%p759) target = $region104
        $region103: #{discriminator_1024v1_forward.1} parent=99 // pred_region
          %p762 = scmp.lt.s32.totalorder %s38, 1
          %s763 = scalar_select %p762, %s38, 1
          %s764 = smul.addr %s763, 8
          %s765 = scalar_lea.vmem %s0, %s764
        $region104: #{discriminator_1024v1_forward.1} parent=99 // pred_fallthru
          _
      $region100: #{discriminator_1024v1_forward.1} parent=5 // pred_fallthru
        _
      %p766 = scmp.le.s32.totalorder 1, %s38
      %p767 = scmp.lt.s32.totalorder %s38, 3
      %p768 = pnand %p766, %p767
      %p769 = pneg %p768
      // Predicated region
      $region105: #{discriminator_1024v1_forward.1} parent=5 // pred_check
        _
      $region106: #{discriminator_1024v1_forward.1} parent=5 // pred_check_branch
        %771 = sbr.rel (%p768) target = $region108
      $region107: #{discriminator_1024v1_forward.1} parent=5 // pred_region
        %s772 = ssub.s32 %s38, 1
        // Predicated region
        $region109: #{discriminator_1024v1_forward.1} parent=107 // pred_check
          %p773 = pneg %p169
        $region110: #{discriminator_1024v1_forward.1} parent=107 // pred_check_branch
          %775 = sbr.rel (%p773) target = $region112
        $region111: #{discriminator_1024v1_forward.1} parent=107 // pred_region
          %776 = dma.done [#allocation4], 2048
        $region112: #{discriminator_1024v1_forward.1} parent=107 // pred_fallthru
          _
        // Predicated region
        $region113: #{discriminator_1024v1_forward.1} parent=107 // pred_check
          %p777 = pneg %p253
        $region114: #{discriminator_1024v1_forward.1} parent=107 // pred_check_branch
          %779 = sbr.rel (%p777) target = $region116
        $region115: #{discriminator_1024v1_forward.1} parent=107 // pred_region
          %780 = dma.done [#allocation6], 1024
        $region116: #{discriminator_1024v1_forward.1} parent=107 // pred_fallthru
          _
        // Predicated region
        $region117: #{discriminator_1024v1_forward.1} parent=107 // pred_check
          %p781 = pneg %p295
        $region118: #{discriminator_1024v1_forward.1} parent=107 // pred_check_branch
          %783 = sbr.rel (%p781) target = $region120
        $region119: #{discriminator_1024v1_forward.1} parent=107 // pred_region
          %784 = dma.done [#allocation6], 1024
        $region120: #{discriminator_1024v1_forward.1} parent=107 // pred_fallthru
          _
        // Predicated region
        $region121: #{discriminator_1024v1_forward.1} parent=107 // pred_check
          %p785 = pneg %p337
        $region122: #{discriminator_1024v1_forward.1} parent=107 // pred_check_branch
          %787 = sbr.rel (%p785) target = $region124
        $region123: #{discriminator_1024v1_forward.1} parent=107 // pred_region
          %788 = dma.done [#allocation9], 16384
        $region124: #{discriminator_1024v1_forward.1} parent=107 // pred_fallthru
          _
        // Predicated region
        $region125: #{discriminator_1024v1_forward.1} parent=107 // pred_check
          %p789 = pneg %p379
        $region126: #{discriminator_1024v1_forward.1} parent=107 // pred_check_branch
          %791 = sbr.rel (%p789) target = $region128
        $region127: #{discriminator_1024v1_forward.1} parent=107 // pred_region
          %792 = dma.done [#allocation9], 4096
        $region128: #{discriminator_1024v1_forward.1} parent=107 // pred_fallthru
          _
        // Predicated region
        $region129: #{discriminator_1024v1_forward.1} parent=107 // pred_check
          %p793 = pneg %p400
        $region130: #{discriminator_1024v1_forward.1} parent=107 // pred_check_branch
          %795 = sbr.rel (%p793) target = $region132
        $region131: #{discriminator_1024v1_forward.1} parent=107 // pred_region
          %796 = dma.done [#allocation12], 4096
        $region132: #{discriminator_1024v1_forward.1} parent=107 // pred_fallthru
          _
        // Predicated region
        $region133: #{discriminator_1024v1_forward.1} parent=107 // pred_check
          %p797 = pneg %p421
        $region134: #{discriminator_1024v1_forward.1} parent=107 // pred_check_branch
          %799 = sbr.rel (%p797) target = $region136
        $region135: #{discriminator_1024v1_forward.1} parent=107 // pred_region
          %800 = dma.done [#allocation12], 128
        $region136: #{discriminator_1024v1_forward.1} parent=107 // pred_fallthru
          _
        %p801 = scmp.lt.s32.totalorder %s43, 1
        %s802 = scalar_select %p801, %s43, 1
        %s803 = smul.addr %s802, 8
        %s804 = scalar_lea.vmem %s0, %s803
        %p805 = pneg %p64
        %p806 = pneg %p61
        %p807 = pneg %p85
        %p808 = pneg %p82
        %p809 = pneg %p106
        %p810 = pneg %p103
        %p811 = pneg %p127
        %p812 = pneg %p124
        %p813 = pneg %p148
        %p814 = pneg %p145
        %p815 = pneg %p169
        %p816 = pneg %p166
        %p817 = pneg %p190
        %p818 = pneg %p187
        %p819 = pneg %p211
        %p820 = pneg %p208
        %p821 = pneg %p232
        %p822 = pneg %p229
        %p823 = pneg %p253
        %p824 = pneg %p250
        %p825 = pneg %p274
        %p826 = pneg %p271
        %p827 = pneg %p295
        %p828 = pneg %p292
        %p829 = pneg %p316
        %p830 = pneg %p313
        %p831 = pneg %p337
        %p832 = pneg %p334
        %p833 = pneg %p358
        %p834 = pneg %p355
        %p835 = pneg %p379
        %p836 = pneg %p376
        %p837 = pneg %p400
        %p838 = pneg %p397
        %p839 = pneg %p421
        %p840 = pneg %p418
        %p841 = pneg %p442
        %p842 = pneg %p439
        %p843 = pneg %p463
        %p844 = pneg %p460
        %p845 = pneg %p484
        %p846 = pneg %p481
        %p847 = pneg %p505
        %p848 = pneg %p502
        %p849 = pneg %p531
        %p850 = pneg %p528
        %p851 = scmp.lt.s32.totalorder %s43, 1
        %s852 = scalar_select %p851, %s43, 1
        %s853 = scalar_lea.vmem %s22, %s852
        %p854 = pneg %p557
        %p855 = pneg %p554
        %p856 = scmp.lt.s32.totalorder %s43, 1
        %s857 = scalar_select %p856, %s43, 1
        %s858 = smul.addr %s857, 8
        %s859 = scalar_lea.vmem %s23, %s858
        %p860 = pneg %p583
        %p861 = pneg %p580
        %p862 = scmp.lt.s32.totalorder %s43, 1
        %s863 = scalar_select %p862, %s43, 1
        %s864 = smul.addr %s863, 8
        %s865 = scalar_lea.vmem %s24, %s864
        %p866 = pneg %p609
        %p867 = pneg %p606
        %p868 = scmp.lt.s32.totalorder %s43, 1
        %s869 = scalar_select %p868, %s43, 1
        %s870 = smul.addr %s869, 8
        %s871 = scalar_lea.vmem %s25, %s870
        %p872 = scmp.lt.s32.totalorder %s43, 1
        %s873 = scalar_select %p872, %s43, 1
        %s874 = smul.addr %s873, 8
        %s875 = scalar_lea.vmem %s0, %s874
        %p876 = scmp.lt.s32.totalorder %s43, 1
        %s877 = scalar_select %p876, %s43, 1
        %s878 = scalar_lea.vmem %s22, %s877
        %p879 = scmp.lt.s32.totalorder %s43, 1
        %s880 = scalar_select %p879, %s43, 1
        %s881 = smul.addr %s880, 8
        %s882 = scalar_lea.vmem %s23, %s881
        %p883 = scmp.lt.s32.totalorder %s43, 1
        %s884 = scalar_select %p883, %s43, 1
        %s885 = smul.addr %s884, 8
        %s886 = scalar_lea.vmem %s24, %s885
        %p887 = scmp.lt.s32.totalorder %s43, 1
        %s888 = scalar_select %p887, %s43, 1
        %s889 = smul.addr %s888, 8
        %s890 = scalar_lea.vmem %s25, %s889
        %v892 = vld [vmem:[%s875] sm:$0xff]
        %v893 = vld [vmem:[#allocation8] sm:$0xff]
        %v894 = vld [vmem:[#allocation8 + $0x8] sm:$0xff]
        %v895 = vld [vmem:[#allocation8 + $0x10] sm:$0xff]
        %v896 = vld [vmem:[#allocation8 + $0x18] sm:$0xff]
        %v897 = vld [vmem:[#allocation8 + $0x20] sm:$0xff]
        %v898 = vld [vmem:[#allocation8 + $0x28] sm:$0xff]
        %v899 = vld [vmem:[#allocation8 + $0x30] sm:$0xff]
        %v900 = vld [vmem:[#allocation8 + $0x38] sm:$0xff]
        %v901 = vld [vmem:[#allocation8 + $0x40] sm:$0xff]
        %v902 = vld [vmem:[#allocation8 + $0x48] sm:$0xff]
        %v903 = vld [vmem:[#allocation8 + $0x50] sm:$0xff]
        %v904 = vld [vmem:[#allocation8 + $0x58] sm:$0xff]
        %v905 = vld [vmem:[#allocation8 + $0x60] sm:$0xff]
        %v906 = vld [vmem:[#allocation8 + $0x68] sm:$0xff]
        %v907 = vld [vmem:[#allocation8 + $0x70] sm:$0xff]
        %v908 = vld [vmem:[#allocation8 + $0x78] sm:$0xff]
        %v909 = vld [vmem:[#allocation8 + $0x80] sm:$0xff]
        %v910 = vld [vmem:[#allocation8 + $0x88] sm:$0xff]
        %v911 = vld [vmem:[#allocation8 + $0x90] sm:$0xff]
        %v912 = vld [vmem:[#allocation8 + $0x98] sm:$0xff]
        %v913 = vld [vmem:[#allocation8 + $0xa0] sm:$0xff]
        %v914 = vld [vmem:[#allocation8 + $0xa8] sm:$0xff]
        %v915 = vld [vmem:[#allocation8 + $0xb0] sm:$0xff]
        %v916 = vld [vmem:[#allocation8 + $0xb8] sm:$0xff]
        %v917 = vld [vmem:[#allocation8 + $0xc0] sm:$0xff]
        %v918 = vld [vmem:[#allocation8 + $0xc8] sm:$0xff]
        %v919 = vld [vmem:[#allocation8 + $0xd0] sm:$0xff]
        %v920 = vld [vmem:[#allocation8 + $0xd8] sm:$0xff]
        %v921 = vld [vmem:[#allocation8 + $0xe0] sm:$0xff]
        %v922 = vld [vmem:[#allocation8 + $0xe8] sm:$0xff]
        %v923 = vld [vmem:[#allocation8 + $0xf0] sm:$0xff]
        %v924 = vld [vmem:[#allocation8 + $0xf8] sm:$0xff]
        %v925 = vld [vmem:[#allocation8 + $0x100] sm:$0xff]
        %v926 = vld [vmem:[#allocation8 + $0x108] sm:$0xff]
        %v927 = vld [vmem:[#allocation8 + $0x110] sm:$0xff]
        %v928 = vld [vmem:[#allocation8 + $0x118] sm:$0xff]
        %v929 = vld [vmem:[#allocation8 + $0x120] sm:$0xff]
        %v930 = vld [vmem:[#allocation8 + $0x128] sm:$0xff]
        %v931 = vld [vmem:[#allocation8 + $0x130] sm:$0xff]
        %v932 = vld [vmem:[#allocation8 + $0x138] sm:$0xff]
        %v933 = vld [vmem:[#allocation8 + $0x140] sm:$0xff]
        %v934 = vld [vmem:[#allocation8 + $0x148] sm:$0xff]
        %v935 = vld [vmem:[#allocation8 + $0x150] sm:$0xff]
        %v936 = vld [vmem:[#allocation8 + $0x158] sm:$0xff]
        %v937 = vld [vmem:[#allocation8 + $0x160] sm:$0xff]
        %v938 = vld [vmem:[#allocation8 + $0x168] sm:$0xff]
        %v939 = vld [vmem:[#allocation8 + $0x170] sm:$0xff]
        %v940 = vld [vmem:[#allocation8 + $0x178] sm:$0xff]
        %v941 = vld [vmem:[#allocation8 + $0x180] sm:$0xff]
        %v942 = vld [vmem:[#allocation8 + $0x188] sm:$0xff]
        %v943 = vld [vmem:[#allocation8 + $0x190] sm:$0xff]
        %v944 = vld [vmem:[#allocation8 + $0x198] sm:$0xff]
        %v945 = vld [vmem:[#allocation8 + $0x1a0] sm:$0xff]
        %v946 = vld [vmem:[#allocation8 + $0x1a8] sm:$0xff]
        %v947 = vld [vmem:[#allocation8 + $0x1b0] sm:$0xff]
        %v948 = vld [vmem:[#allocation8 + $0x1b8] sm:$0xff]
        %v949 = vld [vmem:[#allocation8 + $0x1c0] sm:$0xff]
        %v950 = vld [vmem:[#allocation8 + $0x1c8] sm:$0xff]
        %v951 = vld [vmem:[#allocation8 + $0x1d0] sm:$0xff]
        %v952 = vld [vmem:[#allocation8 + $0x1d8] sm:$0xff]
        %v953 = vld [vmem:[#allocation8 + $0x1e0] sm:$0xff]
        %v954 = vld [vmem:[#allocation8 + $0x1e8] sm:$0xff]
        %v955 = vld [vmem:[#allocation8 + $0x1f0] sm:$0xff]
        %v956 = vld [vmem:[#allocation8 + $0x1f8] sm:$0xff]
        %v957 = vld [vmem:[#allocation8 + $0x200] sm:$0xff]
        %v958 = vld [vmem:[#allocation8 + $0x208] sm:$0xff]
        %v959 = vld [vmem:[#allocation8 + $0x210] sm:$0xff]
        %v960 = vld [vmem:[#allocation8 + $0x218] sm:$0xff]
        %v961 = vld [vmem:[#allocation8 + $0x220] sm:$0xff]
        %v962 = vld [vmem:[#allocation8 + $0x228] sm:$0xff]
        %v963 = vld [vmem:[#allocation8 + $0x230] sm:$0xff]
        %v964 = vld [vmem:[#allocation8 + $0x238] sm:$0xff]
        %v965 = vld [vmem:[#allocation8 + $0x240] sm:$0xff]
        %v966 = vld [vmem:[#allocation8 + $0x248] sm:$0xff]
        %v967 = vld [vmem:[#allocation8 + $0x250] sm:$0xff]
        %v968 = vld [vmem:[#allocation8 + $0x258] sm:$0xff]
        %v969 = vld [vmem:[#allocation8 + $0x260] sm:$0xff]
        %v970 = vld [vmem:[#allocation8 + $0x268] sm:$0xff]
        %v971 = vld [vmem:[#allocation8 + $0x270] sm:$0xff]
        %v972 = vld [vmem:[#allocation8 + $0x278] sm:$0xff]
        %v973 = vld [vmem:[#allocation8 + $0x280] sm:$0xff]
        %v974 = vld [vmem:[#allocation8 + $0x288] sm:$0xff]
        %v975 = vld [vmem:[#allocation8 + $0x290] sm:$0xff]
        %v976 = vld [vmem:[#allocation8 + $0x298] sm:$0xff]
        %v977 = vld [vmem:[#allocation8 + $0x2a0] sm:$0xff]
        %v978 = vld [vmem:[#allocation8 + $0x2a8] sm:$0xff]
        %v979 = vld [vmem:[#allocation8 + $0x2b0] sm:$0xff]
        %v980 = vld [vmem:[#allocation8 + $0x2b8] sm:$0xff]
        %v981 = vld [vmem:[#allocation8 + $0x2c0] sm:$0xff]
        %v982 = vld [vmem:[#allocation8 + $0x2c8] sm:$0xff]
        %v983 = vld [vmem:[#allocation8 + $0x2d0] sm:$0xff]
        %v984 = vld [vmem:[#allocation8 + $0x2d8] sm:$0xff]
        %v985 = vld [vmem:[#allocation8 + $0x2e0] sm:$0xff]
        %v986 = vld [vmem:[#allocation8 + $0x2e8] sm:$0xff]
        %v987 = vld [vmem:[#allocation8 + $0x2f0] sm:$0xff]
        %v988 = vld [vmem:[#allocation8 + $0x2f8] sm:$0xff]
        %v989 = vld [vmem:[#allocation8 + $0x300] sm:$0xff]
        %v990 = vld [vmem:[#allocation8 + $0x308] sm:$0xff]
        %v991 = vld [vmem:[#allocation8 + $0x310] sm:$0xff]
        %v992 = vld [vmem:[#allocation8 + $0x318] sm:$0xff]
        %v993 = vld [vmem:[#allocation8 + $0x320] sm:$0xff]
        %v994 = vld [vmem:[#allocation8 + $0x328] sm:$0xff]
        %v995 = vld [vmem:[#allocation8 + $0x330] sm:$0xff]
        %v996 = vld [vmem:[#allocation8 + $0x338] sm:$0xff]
        %v997 = vld [vmem:[#allocation8 + $0x340] sm:$0xff]
        %v998 = vld [vmem:[#allocation8 + $0x348] sm:$0xff]
        %v999 = vld [vmem:[#allocation8 + $0x350] sm:$0xff]
        %v1000 = vld [vmem:[#allocation8 + $0x358] sm:$0xff]
        %v1001 = vld [vmem:[#allocation8 + $0x360] sm:$0xff]
        %v1002 = vld [vmem:[#allocation8 + $0x368] sm:$0xff]
        %v1003 = vld [vmem:[#allocation8 + $0x370] sm:$0xff]
        %v1004 = vld [vmem:[#allocation8 + $0x378] sm:$0xff]
        %v1005 = vld [vmem:[#allocation8 + $0x380] sm:$0xff]
        %v1006 = vld [vmem:[#allocation8 + $0x388] sm:$0xff]
        %v1007 = vld [vmem:[#allocation8 + $0x390] sm:$0xff]
        %v1008 = vld [vmem:[#allocation8 + $0x398] sm:$0xff]
        %v1009 = vld [vmem:[#allocation8 + $0x3a0] sm:$0xff]
        %v1010 = vld [vmem:[#allocation8 + $0x3a8] sm:$0xff]
        %v1011 = vld [vmem:[#allocation8 + $0x3b0] sm:$0xff]
        %v1012 = vld [vmem:[#allocation8 + $0x3b8] sm:$0xff]
        %v1013 = vld [vmem:[#allocation8 + $0x3c0] sm:$0xff]
        %v1014 = vld [vmem:[#allocation8 + $0x3c8] sm:$0xff]
        %v1015 = vld [vmem:[#allocation8 + $0x3d0] sm:$0xff]
        %v1016 = vld [vmem:[#allocation8 + $0x3d8] sm:$0xff]
        %v1017 = vld [vmem:[#allocation8 + $0x3e0] sm:$0xff]
        %v1018 = vld [vmem:[#allocation8 + $0x3e8] sm:$0xff]
        %v1019 = vld [vmem:[#allocation8 + $0x3f0] sm:$0xff]
        %v1020 = vld [vmem:[#allocation8 + $0x3f8] sm:$0xff]
        %v1021 = vld [vmem:[%s14] sm:$0xf]
        %v1022 = vld [vmem:[%s14 + $0x4] sm:$0xf]
        %v1023 = vld [vmem:[%s14 + $0x8] sm:$0xf]
        %v1024 = vld [vmem:[%s14 + $0xc] sm:$0xf]
        %v1025 = vld [vmem:[%s14 + $0x10] sm:$0xf]
        %v1026 = vld [vmem:[%s14 + $0x14] sm:$0xf]
        %v1027 = vld [vmem:[%s14 + $0x18] sm:$0xf]
        %v1028 = vld [vmem:[%s14 + $0x1c] sm:$0xf]
        %v1029 = vld [vmem:[%s14 + $0x20] sm:$0xf]
        %v1030 = vld [vmem:[%s14 + $0x24] sm:$0xf]
        %v1031 = vld [vmem:[%s14 + $0x28] sm:$0xf]
        %v1032 = vld [vmem:[%s14 + $0x2c] sm:$0xf]
        %v1033 = vld [vmem:[%s14 + $0x30] sm:$0xf]
        %v1034 = vld [vmem:[%s14 + $0x34] sm:$0xf]
        %v1035 = vld [vmem:[%s14 + $0x38] sm:$0xf]
        %v1036 = vld [vmem:[%s14 + $0x3c] sm:$0xf]
        %v1037 = vld [vmem:[%s14 + $0x40] sm:$0xf]
        %v1038 = vld [vmem:[%s14 + $0x44] sm:$0xf]
        %v1039 = vld [vmem:[%s14 + $0x48] sm:$0xf]
        %v1040 = vld [vmem:[%s14 + $0x4c] sm:$0xf]
        %v1041 = vld [vmem:[%s14 + $0x50] sm:$0xf]
        %v1042 = vld [vmem:[%s14 + $0x54] sm:$0xf]
        %v1043 = vld [vmem:[%s14 + $0x58] sm:$0xf]
        %v1044 = vld [vmem:[%s14 + $0x5c] sm:$0xf]
        %v1045 = vld [vmem:[%s14 + $0x60] sm:$0xf]
        %v1046 = vld [vmem:[%s14 + $0x64] sm:$0xf]
        %v1047 = vld [vmem:[%s14 + $0x68] sm:$0xf]
        %v1048 = vld [vmem:[%s14 + $0x6c] sm:$0xf]
        %v1049 = vld [vmem:[%s14 + $0x70] sm:$0xf]
        %v1050 = vld [vmem:[%s14 + $0x74] sm:$0xf]
        %v1051 = vld [vmem:[%s14 + $0x78] sm:$0xf]
        %v1052 = vld [vmem:[%s14 + $0x7c] sm:$0xf]
        %v1053 = vld [vmem:[#allocation10] sm:$0xff]
        %v1054 = vld [vmem:[#allocation10 + $0x8] sm:$0xff]
        %v1055 = vld [vmem:[#allocation10 + $0x10] sm:$0xff]
        %v1056 = vld [vmem:[#allocation10 + $0x18] sm:$0xff]
        %v1057 = vld [vmem:[#allocation10 + $0x20] sm:$0xff]
        %v1058 = vld [vmem:[#allocation10 + $0x28] sm:$0xff]
        %v1059 = vld [vmem:[#allocation10 + $0x30] sm:$0xff]
        %v1060 = vld [vmem:[#allocation10 + $0x38] sm:$0xff]
        %v1061 = vld [vmem:[#allocation10 + $0x40] sm:$0xff]
        %v1062 = vld [vmem:[#allocation10 + $0x48] sm:$0xff]
        %v1063 = vld [vmem:[#allocation10 + $0x50] sm:$0xff]
        %v1064 = vld [vmem:[#allocation10 + $0x58] sm:$0xff]
        %v1065 = vld [vmem:[#allocation10 + $0x60] sm:$0xff]
        %v1066 = vld [vmem:[#allocation10 + $0x68] sm:$0xff]
        %v1067 = vld [vmem:[#allocation10 + $0x70] sm:$0xff]
        %v1068 = vld [vmem:[#allocation10 + $0x78] sm:$0xff]
        %v1069 = vld [vmem:[#allocation10 + $0x80] sm:$0xff]
        %v1070 = vld [vmem:[#allocation10 + $0x88] sm:$0xff]
        %v1071 = vld [vmem:[#allocation10 + $0x90] sm:$0xff]
        %v1072 = vld [vmem:[#allocation10 + $0x98] sm:$0xff]
        %v1073 = vld [vmem:[#allocation10 + $0xa0] sm:$0xff]
        %v1074 = vld [vmem:[#allocation10 + $0xa8] sm:$0xff]
        %v1075 = vld [vmem:[#allocation10 + $0xb0] sm:$0xff]
        %v1076 = vld [vmem:[#allocation10 + $0xb8] sm:$0xff]
        %v1077 = vld [vmem:[#allocation10 + $0xc0] sm:$0xff]
        %v1078 = vld [vmem:[#allocation10 + $0xc8] sm:$0xff]
        %v1079 = vld [vmem:[#allocation10 + $0xd0] sm:$0xff]
        %v1080 = vld [vmem:[#allocation10 + $0xd8] sm:$0xff]
        %v1081 = vld [vmem:[#allocation10 + $0xe0] sm:$0xff]
        %v1082 = vld [vmem:[#allocation10 + $0xe8] sm:$0xff]
        %v1083 = vld [vmem:[#allocation10 + $0xf0] sm:$0xff]
        %v1084 = vld [vmem:[#allocation10 + $0xf8] sm:$0xff]
        %v1085 = vld [vmem:[#allocation11] sm:$0xff]
        %v1086 = vld [vmem:[#allocation11 + $0x8] sm:$0xff]
        %v1087 = vld [vmem:[#allocation11 + $0x10] sm:$0xff]
        %v1088 = vld [vmem:[#allocation11 + $0x18] sm:$0xff]
        %v1089 = vld [vmem:[#allocation11 + $0x20] sm:$0xff]
        %v1090 = vld [vmem:[#allocation11 + $0x28] sm:$0xff]
        %v1091 = vld [vmem:[#allocation11 + $0x30] sm:$0xff]
        %v1092 = vld [vmem:[#allocation11 + $0x38] sm:$0xff]
        %v1093 = vld [vmem:[#allocation11 + $0x40] sm:$0xff]
        %v1094 = vld [vmem:[#allocation11 + $0x48] sm:$0xff]
        %v1095 = vld [vmem:[#allocation11 + $0x50] sm:$0xff]
        %v1096 = vld [vmem:[#allocation11 + $0x58] sm:$0xff]
        %v1097 = vld [vmem:[#allocation11 + $0x60] sm:$0xff]
        %v1098 = vld [vmem:[#allocation11 + $0x68] sm:$0xff]
        %v1099 = vld [vmem:[#allocation11 + $0x70] sm:$0xff]
        %v1100 = vld [vmem:[#allocation11 + $0x78] sm:$0xff]
        %v1101 = vld [vmem:[#allocation11 + $0x80] sm:$0xff]
        %v1102 = vld [vmem:[#allocation11 + $0x88] sm:$0xff]
        %v1103 = vld [vmem:[#allocation11 + $0x90] sm:$0xff]
        %v1104 = vld [vmem:[#allocation11 + $0x98] sm:$0xff]
        %v1105 = vld [vmem:[#allocation11 + $0xa0] sm:$0xff]
        %v1106 = vld [vmem:[#allocation11 + $0xa8] sm:$0xff]
        %v1107 = vld [vmem:[#allocation11 + $0xb0] sm:$0xff]
        %v1108 = vld [vmem:[#allocation11 + $0xb8] sm:$0xff]
        %v1109 = vld [vmem:[#allocation11 + $0xc0] sm:$0xff]
        %v1110 = vld [vmem:[#allocation11 + $0xc8] sm:$0xff]
        %v1111 = vld [vmem:[#allocation11 + $0xd0] sm:$0xff]
        %v1112 = vld [vmem:[#allocation11 + $0xd8] sm:$0xff]
        %v1113 = vld [vmem:[#allocation11 + $0xe0] sm:$0xff]
        %v1114 = vld [vmem:[#allocation11 + $0xe8] sm:$0xff]
        %v1115 = vld [vmem:[#allocation11 + $0xf0] sm:$0xff]
        %v1116 = vld [vmem:[#allocation11 + $0xf8] sm:$0xff]
        %v1117 = vld [vmem:[%s1] sm:$0xf]
        %v1118 = vld [vmem:[%s1 + $0x4] sm:$0xf]
        %v1119 = vld [vmem:[%s2] sm:$0xff]
        %v1120 = vld [vmem:[%s2 + $0x8] sm:$0xff]
        %v1121 = vld [vmem:[%s3] sm:$0xff]
        %v1122 = vld [vmem:[%s3 + $0x8] sm:$0xff]
        %v1123 = vld [vmem:[%s3 + $0x10] sm:$0xff]
        %v1124 = vld [vmem:[%s3 + $0x18] sm:$0xff]
        %v1125 = vld [vmem:[%s4] sm:$0xff]
        %v1126 = vld [vmem:[%s4 + $0x8] sm:$0xff]
        %v1127 = vld [vmem:[%s4 + $0x10] sm:$0xff]
        %v1128 = vld [vmem:[%s4 + $0x18] sm:$0xff]
        %v1129 = vld [vmem:[#allocation3] sm:$0xff]
        %v1130 = vld [vmem:[#allocation3 + $0x8] sm:$0xff]
        %v1131 = vld [vmem:[#allocation3 + $0x10] sm:$0xff]
        %v1132 = vld [vmem:[#allocation3 + $0x18] sm:$0xff]
        %v1133 = vld [vmem:[#allocation3 + $0x20] sm:$0xff]
        %v1134 = vld [vmem:[#allocation3 + $0x28] sm:$0xff]
        %v1135 = vld [vmem:[#allocation3 + $0x30] sm:$0xff]
        %v1136 = vld [vmem:[#allocation3 + $0x38] sm:$0xff]
        %v1137 = vld [vmem:[#allocation3 + $0x40] sm:$0xff]
        %v1138 = vld [vmem:[#allocation3 + $0x48] sm:$0xff]
        %v1139 = vld [vmem:[#allocation3 + $0x50] sm:$0xff]
        %v1140 = vld [vmem:[#allocation3 + $0x58] sm:$0xff]
        %v1141 = vld [vmem:[#allocation3 + $0x60] sm:$0xff]
        %v1142 = vld [vmem:[#allocation3 + $0x68] sm:$0xff]
        %v1143 = vld [vmem:[#allocation3 + $0x70] sm:$0xff]
        %v1144 = vld [vmem:[#allocation3 + $0x78] sm:$0xff]
        %v1145 = vld [vmem:[%s6] sm:$0xff]
        %v1146 = vld [vmem:[%s6 + $0x8] sm:$0xff]
        %v1147 = vld [vmem:[%s6 + $0x10] sm:$0xff]
        %v1148 = vld [vmem:[%s6 + $0x18] sm:$0xff]
        %v1149 = vld [vmem:[%s6 + $0x20] sm:$0xff]
        %v1150 = vld [vmem:[%s6 + $0x28] sm:$0xff]
        %v1151 = vld [vmem:[%s6 + $0x30] sm:$0xff]
        %v1152 = vld [vmem:[%s6 + $0x38] sm:$0xff]
        %v1154 = vlaneseq
        %v1155 = vshrl.u32 %v1154, 7
        %v1156 = vsub.s32 0, %v1155
        %v1157 = vrot.slane %v892, %v1156
        %v1158 = vlaneseq
        %v1159 = vshrl.u32 %v1158, 7
        %v1160 = vsub.s32 1, %v1159
        %v1161 = vrot.slane %v892, %v1160
        %v1162 = vlaneseq
        %v1163 = vshrl.u32 %v1162, 7
        %v1164 = vsub.s32 2, %v1163
        %v1165 = vrot.slane %v892, %v1164
        %v1166 = vlaneseq
        %v1167 = vshrl.u32 %v1166, 7
        %v1168 = vsub.s32 3, %v1167
        %v1169 = vrot.slane %v892, %v1168
        %v1170 = vlaneseq
        %v1171 = vshrl.u32 %v1170, 7
        %v1172 = vsub.s32 4, %v1171
        %v1173 = vrot.slane %v892, %v1172
        %v1174 = vlaneseq
        %v1175 = vshrl.u32 %v1174, 7
        %v1176 = vsub.s32 5, %v1175
        %v1177 = vrot.slane %v892, %v1176
        %v1178 = vlaneseq
        %v1179 = vshrl.u32 %v1178, 7
        %v1180 = vsub.s32 6, %v1179
        %v1181 = vrot.slane %v892, %v1180
        %v1182 = vlaneseq
        %v1183 = vshrl.u32 %v1182, 7
        %v1184 = vsub.s32 7, %v1183
        %v1185 = vrot.slane %v892, %v1184
        %1186 = vrot.lane.b32.xlu0 %v1157, 2
        %v1187 = vpop.permute.xlu0 %1186
        %1188 = vrot.lane.b32.xlu0 %v1161, 2
        %v1189 = vpop.permute.xlu0 %1188
        %1190 = vrot.lane.b32.xlu0 %v1165, 2
        %v1191 = vpop.permute.xlu0 %1190
        %1192 = vrot.lane.b32.xlu0 %v1169, 2
        %v1193 = vpop.permute.xlu0 %1192
        %1194 = vrot.lane.b32.xlu0 %v1173, 2
        %v1195 = vpop.permute.xlu0 %1194
        %1196 = vrot.lane.b32.xlu0 %v1177, 2
        %v1197 = vpop.permute.xlu0 %1196
        %1198 = vrot.lane.b32.xlu0 %v1181, 2
        %v1199 = vpop.permute.xlu0 %1198
        %1200 = vrot.lane.b32.xlu0 %v1185, 2
        %v1201 = vpop.permute.xlu0 %1200
        %vm1202 = vcmask 15360
        %v1203 = vsel %vm1202, %v1187, %v1189
        %v1204 = vsel %vm1202, %v1189, %v1191
        %v1205 = vsel %vm1202, %v1191, %v1193
        %v1206 = vsel %vm1202, %v1193, %v1195
        %v1207 = vsel %vm1202, %v1195, %v1197
        %v1208 = vsel %vm1202, %v1197, %v1199
        %v1209 = vsel %vm1202, %v1199, %v1201
        %v1219 = vsel %vm1202, 0.0, %v1187
        %v1220 = vsel %vm1202, %v1201, 0.0
        %v1223 = vrot.slane %v1219, 7
        %v1224 = vrot.slane %v1203, 7
        %v1225 = vrot.slane %v1204, 7
        %v1226 = vrot.slane %v1205, 7
        %v1227 = vrot.slane %v1206, 7
        %v1228 = vrot.slane %v1207, 7
        %v1229 = vrot.slane %v1208, 7
        %v1230 = vrot.slane %v1209, 7
        %v1231 = vrot.slane %v1220, 7
        %1232 = vrot.lane.b32.xlu0 %v1223, 127
        %v1233 = vpop.permute.xlu0 %1232
        %1234 = vrot.lane.b32.xlu0 %v1224, 127
        %v1235 = vpop.permute.xlu0 %1234
        %1236 = vrot.lane.b32.xlu0 %v1225, 127
        %v1237 = vpop.permute.xlu0 %1236
        %1238 = vrot.lane.b32.xlu0 %v1226, 127
        %v1239 = vpop.permute.xlu0 %1238
        %1240 = vrot.lane.b32.xlu0 %v1227, 127
        %v1241 = vpop.permute.xlu0 %1240
        %1242 = vrot.lane.b32.xlu0 %v1228, 127
        %v1243 = vpop.permute.xlu0 %1242
        %1244 = vrot.lane.b32.xlu0 %v1229, 127
        %v1245 = vpop.permute.xlu0 %1244
        %1246 = vrot.lane.b32.xlu0 %v1230, 127
        %v1247 = vpop.permute.xlu0 %1246
        %1248 = vrot.lane.b32.xlu0 %v1231, 127
        %v1249 = vpop.permute.xlu0 %1248
        %vm1250 = vcmask 1039360
        %v1251 = vsel %vm1250, %v1233, %v1235
        %v1252 = vsel %vm1250, %v1235, %v1237
        %v1253 = vsel %vm1250, %v1237, %v1239
        %v1254 = vsel %vm1250, %v1239, %v1241
        %v1255 = vsel %vm1250, %v1241, %v1243
        %v1256 = vsel %vm1250, %v1243, %v1245
        %v1257 = vsel %vm1250, %v1245, %v1247
        %v1258 = vsel %vm1250, %v1247, %v1249
        %v1267 = vrot.slane %v1219, 6
        %v1268 = vrot.slane %v1203, 6
        %v1269 = vrot.slane %v1204, 6
        %v1270 = vrot.slane %v1205, 6
        %v1271 = vrot.slane %v1206, 6
        %v1272 = vrot.slane %v1207, 6
        %v1273 = vrot.slane %v1208, 6
        %v1274 = vrot.slane %v1209, 6
        %v1275 = vrot.slane %v1220, 6
        %1276 = vrot.lane.b32.xlu0 %v1267, 126
        %v1277 = vpop.permute.xlu0 %1276
        %1278 = vrot.lane.b32.xlu0 %v1268, 126
        %v1279 = vpop.permute.xlu0 %1278
        %1280 = vrot.lane.b32.xlu0 %v1269, 126
        %v1281 = vpop.permute.xlu0 %1280
        %1282 = vrot.lane.b32.xlu0 %v1270, 126
        %v1283 = vpop.permute.xlu0 %1282
        %1284 = vrot.lane.b32.xlu0 %v1271, 126
        %v1285 = vpop.permute.xlu0 %1284
        %1286 = vrot.lane.b32.xlu0 %v1272, 126
        %v1287 = vpop.permute.xlu0 %1286
        %1288 = vrot.lane.b32.xlu0 %v1273, 126
        %v1289 = vpop.permute.xlu0 %1288
        %1290 = vrot.lane.b32.xlu0 %v1274, 126
        %v1291 = vpop.permute.xlu0 %1290
        %1292 = vrot.lane.b32.xlu0 %v1275, 126
        %v1293 = vpop.permute.xlu0 %1292
        %vm1294 = vcmask 1031168
        %v1295 = vsel %vm1294, %v1277, %v1279
        %v1296 = vsel %vm1294, %v1279, %v1281
        %v1297 = vsel %vm1294, %v1281, %v1283
        %v1298 = vsel %vm1294, %v1283, %v1285
        %v1299 = vsel %vm1294, %v1285, %v1287
        %v1300 = vsel %vm1294, %v1287, %v1289
        %v1301 = vsel %vm1294, %v1289, %v1291
        %v1302 = vsel %vm1294, %v1291, %v1293
        %v1311 = vrot.slane %v1219, 5
        %v1312 = vrot.slane %v1203, 5
        %v1313 = vrot.slane %v1204, 5
        %v1314 = vrot.slane %v1205, 5
        %v1315 = vrot.slane %v1206, 5
        %v1316 = vrot.slane %v1207, 5
        %v1317 = vrot.slane %v1208, 5
        %v1318 = vrot.slane %v1209, 5
        %v1319 = vrot.slane %v1220, 5
        %1320 = vrot.lane.b32.xlu0 %v1311, 125
        %v1321 = vpop.permute.xlu0 %1320
        %1322 = vrot.lane.b32.xlu0 %v1312, 125
        %v1323 = vpop.permute.xlu0 %1322
        %1324 = vrot.lane.b32.xlu0 %v1313, 125
        %v1325 = vpop.permute.xlu0 %1324
        %1326 = vrot.lane.b32.xlu0 %v1314, 125
        %v1327 = vpop.permute.xlu0 %1326
        %1328 = vrot.lane.b32.xlu0 %v1315, 125
        %v1329 = vpop.permute.xlu0 %1328
        %1330 = vrot.lane.b32.xlu0 %v1316, 125
        %v1331 = vpop.permute.xlu0 %1330
        %1332 = vrot.lane.b32.xlu0 %v1317, 125
        %v1333 = vpop.permute.xlu0 %1332
        %1334 = vrot.lane.b32.xlu0 %v1318, 125
        %v1335 = vpop.permute.xlu0 %1334
        %1336 = vrot.lane.b32.xlu0 %v1319, 125
        %v1337 = vpop.permute.xlu0 %1336
        %vm1338 = vcmask 1022976
        %v1339 = vsel %vm1338, %v1321, %v1323
        %v1340 = vsel %vm1338, %v1323, %v1325
        %v1341 = vsel %vm1338, %v1325, %v1327
        %v1342 = vsel %vm1338, %v1327, %v1329
        %v1343 = vsel %vm1338, %v1329, %v1331
        %v1344 = vsel %vm1338, %v1331, %v1333
        %v1345 = vsel %vm1338, %v1333, %v1335
        %v1346 = vsel %vm1338, %v1335, %v1337
        %v1355 = vrot.slane %v1219, 4
        %v1356 = vrot.slane %v1203, 4
        %v1357 = vrot.slane %v1204, 4
        %v1358 = vrot.slane %v1205, 4
        %v1359 = vrot.slane %v1206, 4
        %v1360 = vrot.slane %v1207, 4
        %v1361 = vrot.slane %v1208, 4
        %v1362 = vrot.slane %v1209, 4
        %v1363 = vrot.slane %v1220, 4
        %1364 = vrot.lane.b32.xlu0 %v1355, 124
        %v1365 = vpop.permute.xlu0 %1364
        %1366 = vrot.lane.b32.xlu0 %v1356, 124
        %v1367 = vpop.permute.xlu0 %1366
        %1368 = vrot.lane.b32.xlu0 %v1357, 124
        %v1369 = vpop.permute.xlu0 %1368
        %1370 = vrot.lane.b32.xlu0 %v1358, 124
        %v1371 = vpop.permute.xlu0 %1370
        %1372 = vrot.lane.b32.xlu0 %v1359, 124
        %v1373 = vpop.permute.xlu0 %1372
        %1374 = vrot.lane.b32.xlu0 %v1360, 124
        %v1375 = vpop.permute.xlu0 %1374
        %1376 = vrot.lane.b32.xlu0 %v1361, 124
        %v1377 = vpop.permute.xlu0 %1376
        %1378 = vrot.lane.b32.xlu0 %v1362, 124
        %v1379 = vpop.permute.xlu0 %1378
        %1380 = vrot.lane.b32.xlu0 %v1363, 124
        %v1381 = vpop.permute.xlu0 %1380
        %vm1382 = vcmask 1014784
        %v1383 = vsel %vm1382, %v1365, %v1367
        %v1384 = vsel %vm1382, %v1367, %v1369
        %v1385 = vsel %vm1382, %v1369, %v1371
        %v1386 = vsel %vm1382, %v1371, %v1373
        %v1387 = vsel %vm1382, %v1373, %v1375
        %v1388 = vsel %vm1382, %v1375, %v1377
        %v1389 = vsel %vm1382, %v1377, %v1379
        %v1390 = vsel %vm1382, %v1379, %v1381
        %vm1399 = vcmask 1040384
        %v1400 = vsel %vm1399, %v1219, %v1251
        %v1401 = vsel %vm1399, %v1203, %v1252
        %v1402 = vsel %vm1399, %v1204, %v1253
        %v1403 = vsel %vm1399, %v1205, %v1254
        %v1404 = vsel %vm1399, %v1206, %v1255
        %v1405 = vsel %vm1399, %v1207, %v1256
        %v1406 = vsel %vm1399, %v1208, %v1257
        %v1407 = vsel %vm1399, %v1209, %v1258
        %vm1408 = vcmask 1041408
        %v1409 = vsel %vm1408, %v1400, %v1295
        %v1410 = vsel %vm1408, %v1401, %v1296
        %v1411 = vsel %vm1408, %v1402, %v1297
        %v1412 = vsel %vm1408, %v1403, %v1298
        %v1413 = vsel %vm1408, %v1404, %v1299
        %v1414 = vsel %vm1408, %v1405, %v1300
        %v1415 = vsel %vm1408, %v1406, %v1301
        %v1416 = vsel %vm1408, %v1407, %v1302
        %vm1417 = vcmask 1042432
        %v1418 = vsel %vm1417, %v1409, %v1339
        %v1419 = vsel %vm1417, %v1410, %v1340
        %v1420 = vsel %vm1417, %v1411, %v1341
        %v1421 = vsel %vm1417, %v1412, %v1342
        %v1422 = vsel %vm1417, %v1413, %v1343
        %v1423 = vsel %vm1417, %v1414, %v1344
        %v1424 = vsel %vm1417, %v1415, %v1345
        %v1425 = vsel %vm1417, %v1416, %v1346
        %vm1426 = vcmask 1043456
        %v1427 = vsel %vm1426, %v1418, %v1383
        %v1428 = vsel %vm1426, %v1419, %v1384
        %v1429 = vsel %vm1426, %v1420, %v1385
        %v1430 = vsel %vm1426, %v1421, %v1386
        %v1431 = vsel %vm1426, %v1422, %v1387
        %v1432 = vsel %vm1426, %v1423, %v1388
        %v1433 = vsel %vm1426, %v1424, %v1389
        %v1434 = vsel %vm1426, %v1425, %v1390
        %vm1435 = vcmask 1044480
        %v1436 = vsel %vm1435, %v1427, 0.0
        %v1437 = vsel %vm1435, %v1428, 0.0
        %v1438 = vsel %vm1435, %v1429, 0.0
        %v1439 = vsel %vm1435, %v1430, 0.0
        %v1440 = vsel %vm1435, %v1431, 0.0
        %v1441 = vsel %vm1435, %v1432, 0.0
        %v1442 = vsel %vm1435, %v1433, 0.0
        %v1443 = vsel %vm1435, %v1434, 0.0
        %v1444 = vpack.c.bf16 %v1436, %v1436
        %v1445 = vpack.c.bf16 %v1437, %v1437
        %v1446 = vpack.c.bf16 %v1438, %v1438
        %v1447 = vpack.c.bf16 %v1439, %v1439
        %v1448 = vpack.c.bf16 %v1440, %v1440
        %v1449 = vpack.c.bf16 %v1441, %v1441
        %v1450 = vpack.c.bf16 %v1442, %v1442
        %v1451 = vpack.c.bf16 %v1443, %v1443
        %1453 = vset.pattern.permute.xlu0 0
        %1454 = vperm.xlu0 %1453, %v1119
        %v1455 = vpop.permute.xlu0 %1454
        %1458 = vset.pattern.permute.xlu0 0
        %1459 = vperm.xlu0 %1458, %v1120
        %v1460 = vpop.permute.xlu0 %1459
        %v1464 = vunpack.c.l.b16 %v1117
        %v1465 = vunpack.c.l.b16 %v1118
        %v1466 = vpack.c.b16 %v1465, %v1464
        %vm1467 = vcmask 64512
        %v1469 = vsel %vm1467, %v1466, 0
        %v1472 = vsel %vm1426, %v1444, 0
        %v1475 = vsel %vm1426, %v1445, 0
        %v1478 = vsel %vm1426, %v1446, 0
        %v1481 = vsel %vm1426, %v1447, 0
        %v1484 = vsel %vm1426, %v1448, 0
        %v1487 = vsel %vm1426, %v1449, 0
        %v1490 = vsel %vm1426, %v1450, 0
        %v1493 = vsel %vm1426, %v1451, 0
        %1495 = vmatprep.subr.bf16.mxu0 %v1475
        %1496 = vmatpush1.bf16.msra.mxu0 %v1472
        %1497 = vmatprep.subr.bf16.mxu0 0
        %1498 = vmatpush1.bf16.msra.mxu0 0
        %1499 = vmatprep.subr.bf16.mxu0 0
        %1500 = vmatpush1.bf16.msra.mxu0 0
        %1501 = vmatprep.subr.bf16.mxu0 0
        %1502 = vmatpush1.bf16.msra.mxu0 0
        %1503 = vmatprep.subr.bf16.mxu0 0
        %1504 = vmatpush1.bf16.msra.mxu0 0
        %1505 = vmatprep.subr.bf16.mxu0 0
        %1506 = vmatpush1.bf16.msra.mxu0 0
        %1507 = vmatprep.subr.bf16.mxu0 0
        %1508 = vmatpush1.bf16.msra.mxu0 0
        %1509 = vmatprep.subr.bf16.mxu0 0
        %1510 = vmatpush1.bf16.msra.mxu0 0
        %1511 = vmatprep.subr.bf16.mxu0 0
        %1512 = vmatpush1.bf16.msra.mxu0 0
        %1513 = vmatprep.subr.bf16.mxu0 0
        %1514 = vmatpush1.bf16.msra.mxu0 0
        %1515 = vmatprep.subr.bf16.mxu0 0
        %1516 = vmatpush1.bf16.msra.mxu0 0
        %1517 = vmatprep.subr.bf16.mxu0 0
        %1518 = vmatpush1.bf16.msra.mxu0 0
        %1519 = vmatprep.subr.bf16.mxu0 0
        %1520 = vmatpush1.bf16.msra.mxu0 0
        %1521 = vmatprep.subr.bf16.mxu0 0
        %1522 = vmatpush1.bf16.msra.mxu0 0
        %1523 = vmatprep.subr.bf16.mxu0 0
        %1524 = vmatpush1.bf16.msra.mxu0 0
        %1525 = vmatprep.subr.bf16.mxu0 0
        %1526 = vmatpush1.bf16.msra.mxu0 0
        %1527 = vmatprep.mubr.bf16.mxu0 0
        %1528 = vmatmul.mubr.bf16.gmra.mrb[0].mxu0 %v1469
        %v1529 = vpop.f32.mrb[0].mxu0
        %v1530 = vadd.f32 %v1455, %v1529
        %v1531 = vpop.f32.mrb[0].mxu0
        %v1532 = vadd.f32 %v1455, %v1531
        %v1533 = vpop.f32.mrb[0].mxu0
        %v1534 = vadd.f32 %v1460, %v1533
        %v1535 = vpop.f32.mrb[0].mxu0
        %v1536 = vadd.f32 %v1460, %v1535
        %1537 = vdwg.mxu0
        %1538 = vmatprep.subr.bf16.mxu0 %v1481
        %1539 = vmatpush1.bf16.msra.mxu0 %v1478
        %1540 = vmatprep.subr.bf16.mxu0 0
        %1541 = vmatpush1.bf16.msra.mxu0 0
        %1542 = vmatprep.subr.bf16.mxu0 0
        %1543 = vmatpush1.bf16.msra.mxu0 0
        %1544 = vmatprep.subr.bf16.mxu0 0
        %1545 = vmatpush1.bf16.msra.mxu0 0
        %1546 = vmatprep.subr.bf16.mxu0 0
        %1547 = vmatpush1.bf16.msra.mxu0 0
        %1548 = vmatprep.subr.bf16.mxu0 0
        %1549 = vmatpush1.bf16.msra.mxu0 0
        %1550 = vmatprep.subr.bf16.mxu0 0
        %1551 = vmatpush1.bf16.msra.mxu0 0
        %1552 = vmatprep.subr.bf16.mxu0 0
        %1553 = vmatpush1.bf16.msra.mxu0 0
        %1554 = vmatprep.subr.bf16.mxu0 0
        %1555 = vmatpush1.bf16.msra.mxu0 0
        %1556 = vmatprep.subr.bf16.mxu0 0
        %1557 = vmatpush1.bf16.msra.mxu0 0
        %1558 = vmatprep.subr.bf16.mxu0 0
        %1559 = vmatpush1.bf16.msra.mxu0 0
        %1560 = vmatprep.subr.bf16.mxu0 0
        %1561 = vmatpush1.bf16.msra.mxu0 0
        %1562 = vmatprep.subr.bf16.mxu0 0
        %1563 = vmatpush1.bf16.msra.mxu0 0
        %1564 = vmatprep.subr.bf16.mxu0 0
        %1565 = vmatpush1.bf16.msra.mxu0 0
        %1566 = vmatprep.subr.bf16.mxu0 0
        %1567 = vmatpush1.bf16.msra.mxu0 0
        %1568 = vmatprep.subr.bf16.mxu0 0
        %1569 = vmatpush1.bf16.msra.mxu0 0
        %1570 = vmatprep.mubr.bf16.mxu0 0
        %1571 = vmatmul.mubr.bf16.gmra.mrb[0].mxu0 %v1469
        %v1572 = vpop.f32.mrb[0].mxu0
        %v1573 = vadd.f32 %v1455, %v1572
        %v1574 = vpop.f32.mrb[0].mxu0
        %v1575 = vadd.f32 %v1455, %v1574
        %v1576 = vpop.f32.mrb[0].mxu0
        %v1577 = vadd.f32 %v1460, %v1576
        %v1578 = vpop.f32.mrb[0].mxu0
        %v1579 = vadd.f32 %v1460, %v1578
        %1580 = vdwg.mxu0
        %1581 = vmatprep.subr.bf16.mxu0 %v1487
        %1582 = vmatpush1.bf16.msra.mxu0 %v1484
        %1583 = vmatprep.subr.bf16.mxu0 0
        %1584 = vmatpush1.bf16.msra.mxu0 0
        %1585 = vmatprep.subr.bf16.mxu0 0
        %1586 = vmatpush1.bf16.msra.mxu0 0
        %1587 = vmatprep.subr.bf16.mxu0 0
        %1588 = vmatpush1.bf16.msra.mxu0 0
        %1589 = vmatprep.subr.bf16.mxu0 0
        %1590 = vmatpush1.bf16.msra.mxu0 0
        %1591 = vmatprep.subr.bf16.mxu0 0
        %1592 = vmatpush1.bf16.msra.mxu0 0
        %1593 = vmatprep.subr.bf16.mxu0 0
        %1594 = vmatpush1.bf16.msra.mxu0 0
        %1595 = vmatprep.subr.bf16.mxu0 0
        %1596 = vmatpush1.bf16.msra.mxu0 0
        %1597 = vmatprep.subr.bf16.mxu0 0
        %1598 = vmatpush1.bf16.msra.mxu0 0
        %1599 = vmatprep.subr.bf16.mxu0 0
        %1600 = vmatpush1.bf16.msra.mxu0 0
        %1601 = vmatprep.subr.bf16.mxu0 0
        %1602 = vmatpush1.bf16.msra.mxu0 0
        %1603 = vmatprep.subr.bf16.mxu0 0
        %1604 = vmatpush1.bf16.msra.mxu0 0
        %1605 = vmatprep.subr.bf16.mxu0 0
        %1606 = vmatpush1.bf16.msra.mxu0 0
        %1607 = vmatprep.subr.bf16.mxu0 0
        %1608 = vmatpush1.bf16.msra.mxu0 0
        %1609 = vmatprep.subr.bf16.mxu0 0
        %1610 = vmatpush1.bf16.msra.mxu0 0
        %1611 = vmatprep.subr.bf16.mxu0 0
        %1612 = vmatpush1.bf16.msra.mxu0 0
        %1613 = vmatprep.mubr.bf16.mxu0 0
        %1614 = vmatmul.mubr.bf16.gmra.mrb[0].mxu0 %v1469
        %v1615 = vpop.f32.mrb[0].mxu0
        %v1616 = vadd.f32 %v1455, %v1615
        %v1617 = vpop.f32.mrb[0].mxu0
        %v1618 = vadd.f32 %v1455, %v1617
        %v1619 = vpop.f32.mrb[0].mxu0
        %v1620 = vadd.f32 %v1460, %v1619
        %v1621 = vpop.f32.mrb[0].mxu0
        %v1622 = vadd.f32 %v1460, %v1621
        %1623 = vdwg.mxu0
        %1624 = vmatprep.subr.bf16.mxu0 %v1493
        %1625 = vmatpush1.bf16.msra.mxu0 %v1490
        %1626 = vmatprep.subr.bf16.mxu0 0
        %1627 = vmatpush1.bf16.msra.mxu0 0
        %1628 = vmatprep.subr.bf16.mxu0 0
        %1629 = vmatpush1.bf16.msra.mxu0 0
        %1630 = vmatprep.subr.bf16.mxu0 0
        %1631 = vmatpush1.bf16.msra.mxu0 0
        %1632 = vmatprep.subr.bf16.mxu0 0
        %1633 = vmatpush1.bf16.msra.mxu0 0
        %1634 = vmatprep.subr.bf16.mxu0 0
        %1635 = vmatpush1.bf16.msra.mxu0 0
        %1636 = vmatprep.subr.bf16.mxu0 0
        %1637 = vmatpush1.bf16.msra.mxu0 0
        %1638 = vmatprep.subr.bf16.mxu0 0
        %1639 = vmatpush1.bf16.msra.mxu0 0
        %1640 = vmatprep.subr.bf16.mxu0 0
        %1641 = vmatpush1.bf16.msra.mxu0 0
        %1642 = vmatprep.subr.bf16.mxu0 0
        %1643 = vmatpush1.bf16.msra.mxu0 0
        %1644 = vmatprep.subr.bf16.mxu0 0
        %1645 = vmatpush1.bf16.msra.mxu0 0
        %1646 = vmatprep.subr.bf16.mxu0 0
        %1647 = vmatpush1.bf16.msra.mxu0 0
        %1648 = vmatprep.subr.bf16.mxu0 0
        %1649 = vmatpush1.bf16.msra.mxu0 0
        %1650 = vmatprep.subr.bf16.mxu0 0
        %1651 = vmatpush1.bf16.msra.mxu0 0
        %1652 = vmatprep.subr.bf16.mxu0 0
        %1653 = vmatpush1.bf16.msra.mxu0 0
        %1654 = vmatprep.subr.bf16.mxu0 0
        %1655 = vmatpush1.bf16.msra.mxu0 0
        %1656 = vmatprep.mubr.bf16.mxu0 0
        %1657 = vmatmul.mubr.bf16.gmra.mrb[0].mxu0 %v1469
        %v1658 = vpop.f32.mrb[0].mxu0
        %v1659 = vadd.f32 %v1455, %v1658
        %v1660 = vpop.f32.mrb[0].mxu0
        %v1661 = vadd.f32 %v1455, %v1660
        %v1662 = vpop.f32.mrb[0].mxu0
        %v1663 = vadd.f32 %v1460, %v1662
        %v1664 = vpop.f32.mrb[0].mxu0
        %v1665 = vadd.f32 %v1460, %v1664
        %1666 = vdwg.mxu0
        %vm1667 = vcmp.ge.f32.partialorder %v1530, 0.0
        %vm1668 = vcmp.ge.f32.partialorder %v1532, 0.0
        %vm1669 = vcmp.ge.f32.partialorder %v1573, 0.0
        %vm1670 = vcmp.ge.f32.partialorder %v1575, 0.0
        %vm1671 = vcmp.ge.f32.partialorder %v1616, 0.0
        %vm1672 = vcmp.ge.f32.partialorder %v1618, 0.0
        %vm1673 = vcmp.ge.f32.partialorder %v1659, 0.0
        %vm1674 = vcmp.ge.f32.partialorder %v1661, 0.0
        %vm1675 = vcmp.ge.f32.partialorder %v1534, 0.0
        %vm1676 = vcmp.ge.f32.partialorder %v1536, 0.0
        %vm1677 = vcmp.ge.f32.partialorder %v1577, 0.0
        %vm1678 = vcmp.ge.f32.partialorder %v1579, 0.0
        %vm1679 = vcmp.ge.f32.partialorder %v1620, 0.0
        %vm1680 = vcmp.ge.f32.partialorder %v1622, 0.0
        %vm1681 = vcmp.ge.f32.partialorder %v1663, 0.0
        %vm1682 = vcmp.ge.f32.partialorder %v1665, 0.0
        %v1683 = vmul.f32 %v1530, 0.2
        %v1684 = vmul.f32 %v1532, 0.2
        %v1685 = vmul.f32 %v1573, 0.2
        %v1686 = vmul.f32 %v1575, 0.2
        %v1687 = vmul.f32 %v1616, 0.2
        %v1688 = vmul.f32 %v1618, 0.2
        %v1689 = vmul.f32 %v1659, 0.2
        %v1690 = vmul.f32 %v1661, 0.2
        %v1691 = vmul.f32 %v1534, 0.2
        %v1692 = vmul.f32 %v1536, 0.2
        %v1693 = vmul.f32 %v1577, 0.2
        %v1694 = vmul.f32 %v1579, 0.2
        %v1695 = vmul.f32 %v1620, 0.2
        %v1696 = vmul.f32 %v1622, 0.2
        %v1697 = vmul.f32 %v1663, 0.2
        %v1698 = vmul.f32 %v1665, 0.2
        %v1699 = vsel %vm1667, %v1530, %v1683
        %v1700 = vsel %vm1668, %v1532, %v1684
        %v1701 = vsel %vm1669, %v1573, %v1685
        %v1702 = vsel %vm1670, %v1575, %v1686
        %v1703 = vsel %vm1671, %v1616, %v1687
        %v1704 = vsel %vm1672, %v1618, %v1688
        %v1705 = vsel %vm1673, %v1659, %v1689
        %v1706 = vsel %vm1674, %v1661, %v1690
        %v1707 = vsel %vm1675, %v1534, %v1691
        %v1708 = vsel %vm1676, %v1536, %v1692
        %v1709 = vsel %vm1677, %v1577, %v1693
        %v1710 = vsel %vm1678, %v1579, %v1694
        %v1711 = vsel %vm1679, %v1620, %v1695
        %v1712 = vsel %vm1680, %v1622, %v1696
        %v1713 = vsel %vm1681, %v1663, %v1697
        %v1714 = vsel %vm1682, %v1665, %v1698
        %v1715 = vpack.c.bf16 %v1707, %v1699
        %v1716 = vpack.c.bf16 %v1708, %v1700
        %v1717 = vpack.c.bf16 %v1709, %v1701
        %v1718 = vpack.c.bf16 %v1710, %v1702
        %v1719 = vpack.c.bf16 %v1711, %v1703
        %v1720 = vpack.c.bf16 %v1712, %v1704
        %v1721 = vpack.c.bf16 %v1713, %v1705
        %v1722 = vpack.c.bf16 %v1714, %v1706
        %v1851 = vunpack.c.l.b16 %v893
        %v1852 = vunpack.c.h.b16 %v893
        %v1853 = vunpack.c.l.b16 %v894
        %v1854 = vunpack.c.h.b16 %v894
        %v1855 = vunpack.c.l.b16 %v895
        %v1856 = vunpack.c.h.b16 %v895
        %v1857 = vunpack.c.l.b16 %v896
        %v1858 = vunpack.c.h.b16 %v896
        %v1859 = vunpack.c.l.b16 %v897
        %v1860 = vunpack.c.h.b16 %v897
        %v1861 = vunpack.c.l.b16 %v898
        %v1862 = vunpack.c.h.b16 %v898
        %v1863 = vunpack.c.l.b16 %v899
        %v1864 = vunpack.c.h.b16 %v899
        %v1865 = vunpack.c.l.b16 %v900
        %v1866 = vunpack.c.h.b16 %v900
        %v1867 = vunpack.c.l.b16 %v901
        %v1868 = vunpack.c.h.b16 %v901
        %v1869 = vunpack.c.l.b16 %v902
        %v1870 = vunpack.c.h.b16 %v902
        %v1871 = vunpack.c.l.b16 %v903
        %v1872 = vunpack.c.h.b16 %v903
        %v1873 = vunpack.c.l.b16 %v904
        %v1874 = vunpack.c.h.b16 %v904
        %v1875 = vunpack.c.l.b16 %v905
        %v1876 = vunpack.c.h.b16 %v905
        %v1877 = vunpack.c.l.b16 %v906
        %v1878 = vunpack.c.h.b16 %v906
        %v1879 = vunpack.c.l.b16 %v907
        %v1880 = vunpack.c.h.b16 %v907
        %v1881 = vunpack.c.l.b16 %v908
        %v1882 = vunpack.c.h.b16 %v908
        %v1883 = vunpack.c.l.b16 %v909
        %v1884 = vunpack.c.h.b16 %v909
        %v1885 = vunpack.c.l.b16 %v910
        %v1886 = vunpack.c.h.b16 %v910
        %v1887 = vunpack.c.l.b16 %v911
        %v1888 = vunpack.c.h.b16 %v911
        %v1889 = vunpack.c.l.b16 %v912
        %v1890 = vunpack.c.h.b16 %v912
        %v1891 = vunpack.c.l.b16 %v913
        %v1892 = vunpack.c.h.b16 %v913
        %v1893 = vunpack.c.l.b16 %v914
        %v1894 = vunpack.c.h.b16 %v914
        %v1895 = vunpack.c.l.b16 %v915
        %v1896 = vunpack.c.h.b16 %v915
        %v1897 = vunpack.c.l.b16 %v916
        %v1898 = vunpack.c.h.b16 %v916
        %v1899 = vunpack.c.l.b16 %v917
        %v1900 = vunpack.c.h.b16 %v917
        %v1901 = vunpack.c.l.b16 %v918
        %v1902 = vunpack.c.h.b16 %v918
        %v1903 = vunpack.c.l.b16 %v919
        %v1904 = vunpack.c.h.b16 %v919
        %v1905 = vunpack.c.l.b16 %v920
        %v1906 = vunpack.c.h.b16 %v920
        %v1907 = vunpack.c.l.b16 %v921
        %v1908 = vunpack.c.h.b16 %v921
        %v1909 = vunpack.c.l.b16 %v922
        %v1910 = vunpack.c.h.b16 %v922
        %v1911 = vunpack.c.l.b16 %v923
        %v1912 = vunpack.c.h.b16 %v923
        %v1913 = vunpack.c.l.b16 %v924
        %v1914 = vunpack.c.h.b16 %v924
        %v1915 = vunpack.c.l.b16 %v925
        %v1916 = vunpack.c.h.b16 %v925
        %v1917 = vunpack.c.l.b16 %v926
        %v1918 = vunpack.c.h.b16 %v926
        %v1919 = vunpack.c.l.b16 %v927
        %v1920 = vunpack.c.h.b16 %v927
        %v1921 = vunpack.c.l.b16 %v928
        %v1922 = vunpack.c.h.b16 %v928
        %v1923 = vunpack.c.l.b16 %v929
        %v1924 = vunpack.c.h.b16 %v929
        %v1925 = vunpack.c.l.b16 %v930
        %v1926 = vunpack.c.h.b16 %v930
        %v1927 = vunpack.c.l.b16 %v931
        %v1928 = vunpack.c.h.b16 %v931
        %v1929 = vunpack.c.l.b16 %v932
        %v1930 = vunpack.c.h.b16 %v932
        %v1931 = vunpack.c.l.b16 %v933
        %v1932 = vunpack.c.h.b16 %v933
        %v1933 = vunpack.c.l.b16 %v934
        %v1934 = vunpack.c.h.b16 %v934
        %v1935 = vunpack.c.l.b16 %v935
        %v1936 = vunpack.c.h.b16 %v935
        %v1937 = vunpack.c.l.b16 %v936
        %v1938 = vunpack.c.h.b16 %v936
        %v1939 = vunpack.c.l.b16 %v937
        %v1940 = vunpack.c.h.b16 %v937
        %v1941 = vunpack.c.l.b16 %v938
        %v1942 = vunpack.c.h.b16 %v938
        %v1943 = vunpack.c.l.b16 %v939
        %v1944 = vunpack.c.h.b16 %v939
        %v1945 = vunpack.c.l.b16 %v940
        %v1946 = vunpack.c.h.b16 %v940
        %v1947 = vunpack.c.l.b16 %v941
        %v1948 = vunpack.c.h.b16 %v941
        %v1949 = vunpack.c.l.b16 %v942
        %v1950 = vunpack.c.h.b16 %v942
        %v1951 = vunpack.c.l.b16 %v943
        %v1952 = vunpack.c.h.b16 %v943
        %v1953 = vunpack.c.l.b16 %v944
        %v1954 = vunpack.c.h.b16 %v944
        %v1955 = vunpack.c.l.b16 %v945
        %v1956 = vunpack.c.h.b16 %v945
        %v1957 = vunpack.c.l.b16 %v946
        %v1958 = vunpack.c.h.b16 %v946
        %v1959 = vunpack.c.l.b16 %v947
        %v1960 = vunpack.c.h.b16 %v947
        %v1961 = vunpack.c.l.b16 %v948
        %v1962 = vunpack.c.h.b16 %v948
        %v1963 = vunpack.c.l.b16 %v949
        %v1964 = vunpack.c.h.b16 %v949
        %v1965 = vunpack.c.l.b16 %v950
        %v1966 = vunpack.c.h.b16 %v950
        %v1967 = vunpack.c.l.b16 %v951
        %v1968 = vunpack.c.h.b16 %v951
        %v1969 = vunpack.c.l.b16 %v952
        %v1970 = vunpack.c.h.b16 %v952
        %v1971 = vunpack.c.l.b16 %v953
        %v1972 = vunpack.c.h.b16 %v953
        %v1973 = vunpack.c.l.b16 %v954
        %v1974 = vunpack.c.h.b16 %v954
        %v1975 = vunpack.c.l.b16 %v955
        %v1976 = vunpack.c.h.b16 %v955
        %v1977 = vunpack.c.l.b16 %v956
        %v1978 = vunpack.c.h.b16 %v956
        %v1979 = vunpack.c.l.b16 %v957
        %v1980 = vunpack.c.h.b16 %v957
        %v1981 = vunpack.c.l.b16 %v958
        %v1982 = vunpack.c.h.b16 %v958
        %v1983 = vunpack.c.l.b16 %v959
        %v1984 = vunpack.c.h.b16 %v959
        %v1985 = vunpack.c.l.b16 %v960
        %v1986 = vunpack.c.h.b16 %v960
        %v1987 = vunpack.c.l.b16 %v961
        %v1988 = vunpack.c.h.b16 %v961
        %v1989 = vunpack.c.l.b16 %v962
        %v1990 = vunpack.c.h.b16 %v962
        %v1991 = vunpack.c.l.b16 %v963
        %v1992 = vunpack.c.h.b16 %v963
        %v1993 = vunpack.c.l.b16 %v964
        %v1994 = vunpack.c.h.b16 %v964
        %v1995 = vunpack.c.l.b16 %v965
        %v1996 = vunpack.c.h.b16 %v965
        %v1997 = vunpack.c.l.b16 %v966
        %v1998 = vunpack.c.h.b16 %v966
        %v1999 = vunpack.c.l.b16 %v967
        %v2000 = vunpack.c.h.b16 %v967
        %v2001 = vunpack.c.l.b16 %v968
        %v2002 = vunpack.c.h.b16 %v968
        %v2003 = vunpack.c.l.b16 %v969
        %v2004 = vunpack.c.h.b16 %v969
        %v2005 = vunpack.c.l.b16 %v970
        %v2006 = vunpack.c.h.b16 %v970
        %v2007 = vunpack.c.l.b16 %v971
        %v2008 = vunpack.c.h.b16 %v971
        %v2009 = vunpack.c.l.b16 %v972
        %v2010 = vunpack.c.h.b16 %v972
        %v2011 = vunpack.c.l.b16 %v973
        %v2012 = vunpack.c.h.b16 %v973
        %v2013 = vunpack.c.l.b16 %v974
        %v2014 = vunpack.c.h.b16 %v974
        %v2015 = vunpack.c.l.b16 %v975
        %v2016 = vunpack.c.h.b16 %v975
        %v2017 = vunpack.c.l.b16 %v976
        %v2018 = vunpack.c.h.b16 %v976
        %v2019 = vunpack.c.l.b16 %v977
        %v2020 = vunpack.c.h.b16 %v977
        %v2021 = vunpack.c.l.b16 %v978
        %v2022 = vunpack.c.h.b16 %v978
        %v2023 = vunpack.c.l.b16 %v979
        %v2024 = vunpack.c.h.b16 %v979
        %v2025 = vunpack.c.l.b16 %v980
        %v2026 = vunpack.c.h.b16 %v980
        %v2027 = vunpack.c.l.b16 %v981
        %v2028 = vunpack.c.h.b16 %v981
        %v2029 = vunpack.c.l.b16 %v982
        %v2030 = vunpack.c.h.b16 %v982
        %v2031 = vunpack.c.l.b16 %v983
        %v2032 = vunpack.c.h.b16 %v983
        %v2033 = vunpack.c.l.b16 %v984
        %v2034 = vunpack.c.h.b16 %v984
        %v2035 = vunpack.c.l.b16 %v985
        %v2036 = vunpack.c.h.b16 %v985
        %v2037 = vunpack.c.l.b16 %v986
        %v2038 = vunpack.c.h.b16 %v986
        %v2039 = vunpack.c.l.b16 %v987
        %v2040 = vunpack.c.h.b16 %v987
        %v2041 = vunpack.c.l.b16 %v988
        %v2042 = vunpack.c.h.b16 %v988
        %v2043 = vunpack.c.l.b16 %v989
        %v2044 = vunpack.c.h.b16 %v989
        %v2045 = vunpack.c.l.b16 %v990
        %v2046 = vunpack.c.h.b16 %v990
        %v2047 = vunpack.c.l.b16 %v991
        %v2048 = vunpack.c.h.b16 %v991
        %v2049 = vunpack.c.l.b16 %v992
        %v2050 = vunpack.c.h.b16 %v992
        %v2051 = vunpack.c.l.b16 %v993
        %v2052 = vunpack.c.h.b16 %v993
        %v2053 = vunpack.c.l.b16 %v994
        %v2054 = vunpack.c.h.b16 %v994
        %v2055 = vunpack.c.l.b16 %v995
        %v2056 = vunpack.c.h.b16 %v995
        %v2057 = vunpack.c.l.b16 %v996
        %v2058 = vunpack.c.h.b16 %v996
        %v2059 = vunpack.c.l.b16 %v997
        %v2060 = vunpack.c.h.b16 %v997
        %v2061 = vunpack.c.l.b16 %v998
        %v2062 = vunpack.c.h.b16 %v998
        %v2063 = vunpack.c.l.b16 %v999
        %v2064 = vunpack.c.h.b16 %v999
        %v2065 = vunpack.c.l.b16 %v1000
        %v2066 = vunpack.c.h.b16 %v1000
        %v2067 = vunpack.c.l.b16 %v1001
        %v2068 = vunpack.c.h.b16 %v1001
        %v2069 = vunpack.c.l.b16 %v1002
        %v2070 = vunpack.c.h.b16 %v1002
        %v2071 = vunpack.c.l.b16 %v1003
        %v2072 = vunpack.c.h.b16 %v1003
        %v2073 = vunpack.c.l.b16 %v1004
        %v2074 = vunpack.c.h.b16 %v1004
        %v2075 = vunpack.c.l.b16 %v1005
        %v2076 = vunpack.c.h.b16 %v1005
        %v2077 = vunpack.c.l.b16 %v1006
        %v2078 = vunpack.c.h.b16 %v1006
        %v2079 = vunpack.c.l.b16 %v1007
        %v2080 = vunpack.c.h.b16 %v1007
        %v2081 = vunpack.c.l.b16 %v1008
        %v2082 = vunpack.c.h.b16 %v1008
        %v2083 = vunpack.c.l.b16 %v1009
        %v2084 = vunpack.c.h.b16 %v1009
        %v2085 = vunpack.c.l.b16 %v1010
        %v2086 = vunpack.c.h.b16 %v1010
        %v2087 = vunpack.c.l.b16 %v1011
        %v2088 = vunpack.c.h.b16 %v1011
        %v2089 = vunpack.c.l.b16 %v1012
        %v2090 = vunpack.c.h.b16 %v1012
        %v2091 = vunpack.c.l.b16 %v1013
        %v2092 = vunpack.c.h.b16 %v1013
        %v2093 = vunpack.c.l.b16 %v1014
        %v2094 = vunpack.c.h.b16 %v1014
        %v2095 = vunpack.c.l.b16 %v1015
        %v2096 = vunpack.c.h.b16 %v1015
        %v2097 = vunpack.c.l.b16 %v1016
        %v2098 = vunpack.c.h.b16 %v1016
        %v2099 = vunpack.c.l.b16 %v1017
        %v2100 = vunpack.c.h.b16 %v1017
        %v2101 = vunpack.c.l.b16 %v1018
        %v2102 = vunpack.c.h.b16 %v1018
        %v2103 = vunpack.c.l.b16 %v1019
        %v2104 = vunpack.c.h.b16 %v1019
        %v2105 = vunpack.c.l.b16 %v1020
        %v2106 = vunpack.c.h.b16 %v1020
        %v2107 = vpack.c.b16 %v1853, %v1851
        %v2108 = vpack.c.b16 %v1854, %v1852
        %v2109 = vpack.c.b16 %v1857, %v1855
        %v2110 = vpack.c.b16 %v1858, %v1856
        %v2111 = vpack.c.b16 %v1861, %v1859
        %v2112 = vpack.c.b16 %v1862, %v1860
        %v2113 = vpack.c.b16 %v1865, %v1863
        %v2114 = vpack.c.b16 %v1866, %v1864
        %v2115 = vpack.c.b16 %v1869, %v1867
        %v2116 = vpack.c.b16 %v1870, %v1868
        %v2117 = vpack.c.b16 %v1873, %v1871
        %v2118 = vpack.c.b16 %v1874, %v1872
        %v2119 = vpack.c.b16 %v1877, %v1875
        %v2120 = vpack.c.b16 %v1878, %v1876
        %v2121 = vpack.c.b16 %v1881, %v1879
        %v2122 = vpack.c.b16 %v1882, %v1880
        %v2123 = vpack.c.b16 %v1885, %v1883
        %v2124 = vpack.c.b16 %v1886, %v1884
        %v2125 = vpack.c.b16 %v1889, %v1887
        %v2126 = vpack.c.b16 %v1890, %v1888
        %v2127 = vpack.c.b16 %v1893, %v1891
        %v2128 = vpack.c.b16 %v1894, %v1892
        %v2129 = vpack.c.b16 %v1897, %v1895
        %v2130 = vpack.c.b16 %v1898, %v1896
        %v2131 = vpack.c.b16 %v1901, %v1899
        %v2132 = vpack.c.b16 %v1902, %v1900
        %v2133 = vpack.c.b16 %v1905, %v1903
        %v2134 = vpack.c.b16 %v1906, %v1904
        %v2135 = vpack.c.b16 %v1909, %v1907
        %v2136 = vpack.c.b16 %v1910, %v1908
        %v2137 = vpack.c.b16 %v1913, %v1911
        %v2138 = vpack.c.b16 %v1914, %v1912
        %v2139 = vpack.c.b16 %v1917, %v1915
        %v2140 = vpack.c.b16 %v1918, %v1916
        %v2141 = vpack.c.b16 %v1921, %v1919
        %v2142 = vpack.c.b16 %v1922, %v1920
        %v2143 = vpack.c.b16 %v1925, %v1923
        %v2144 = vpack.c.b16 %v1926, %v1924
        %v2145 = vpack.c.b16 %v1929, %v1927
        %v2146 = vpack.c.b16 %v1930, %v1928
        %v2147 = vpack.c.b16 %v1933, %v1931
        %v2148 = vpack.c.b16 %v1934, %v1932
        %v2149 = vpack.c.b16 %v1937, %v1935
        %v2150 = vpack.c.b16 %v1938, %v1936
        %v2151 = vpack.c.b16 %v1941, %v1939
        %v2152 = vpack.c.b16 %v1942, %v1940
        %v2153 = vpack.c.b16 %v1945, %v1943
        %v2154 = vpack.c.b16 %v1946, %v1944
        %v2155 = vpack.c.b16 %v1949, %v1947
        %v2156 = vpack.c.b16 %v1950, %v1948
        %v2157 = vpack.c.b16 %v1953, %v1951
        %v2158 = vpack.c.b16 %v1954, %v1952
        %v2159 = vpack.c.b16 %v1957, %v1955
        %v2160 = vpack.c.b16 %v1958, %v1956
        %v2161 = vpack.c.b16 %v1961, %v1959
        %v2162 = vpack.c.b16 %v1962, %v1960
        %v2163 = vpack.c.b16 %v1965, %v1963
        %v2164 = vpack.c.b16 %v1966, %v1964
        %v2165 = vpack.c.b16 %v1969, %v1967
        %v2166 = vpack.c.b16 %v1970, %v1968
        %v2167 = vpack.c.b16 %v1973, %v1971
        %v2168 = vpack.c.b16 %v1974, %v1972
        %v2169 = vpack.c.b16 %v1977, %v1975
        %v2170 = vpack.c.b16 %v1978, %v1976
        %v2171 = vpack.c.b16 %v1981, %v1979
        %v2172 = vpack.c.b16 %v1982, %v1980
        %v2173 = vpack.c.b16 %v1985, %v1983
        %v2174 = vpack.c.b16 %v1986, %v1984
        %v2175 = vpack.c.b16 %v1989, %v1987
        %v2176 = vpack.c.b16 %v1990, %v1988
        %v2177 = vpack.c.b16 %v1993, %v1991
        %v2178 = vpack.c.b16 %v1994, %v1992
        %v2179 = vpack.c.b16 %v1997, %v1995
        %v2180 = vpack.c.b16 %v1998, %v1996
        %v2181 = vpack.c.b16 %v2001, %v1999
        %v2182 = vpack.c.b16 %v2002, %v2000
        %v2183 = vpack.c.b16 %v2005, %v2003
        %v2184 = vpack.c.b16 %v2006, %v2004
        %v2185 = vpack.c.b16 %v2009, %v2007
        %v2186 = vpack.c.b16 %v2010, %v2008
        %v2187 = vpack.c.b16 %v2013, %v2011
        %v2188 = vpack.c.b16 %v2014, %v2012
        %v2189 = vpack.c.b16 %v2017, %v2015
        %v2190 = vpack.c.b16 %v2018, %v2016
        %v2191 = vpack.c.b16 %v2021, %v2019
        %v2192 = vpack.c.b16 %v2022, %v2020
        %v2193 = vpack.c.b16 %v2025, %v2023
        %v2194 = vpack.c.b16 %v2026, %v2024
        %v2195 = vpack.c.b16 %v2029, %v2027
        %v2196 = vpack.c.b16 %v2030, %v2028
        %v2197 = vpack.c.b16 %v2033, %v2031
        %v2198 = vpack.c.b16 %v2034, %v2032
        %v2199 = vpack.c.b16 %v2037, %v2035
        %v2200 = vpack.c.b16 %v2038, %v2036
        %v2201 = vpack.c.b16 %v2041, %v2039
        %v2202 = vpack.c.b16 %v2042, %v2040
        %v2203 = vpack.c.b16 %v2045, %v2043
        %v2204 = vpack.c.b16 %v2046, %v2044
        %v2205 = vpack.c.b16 %v2049, %v2047
        %v2206 = vpack.c.b16 %v2050, %v2048
        %v2207 = vpack.c.b16 %v2053, %v2051
        %v2208 = vpack.c.b16 %v2054, %v2052
        %v2209 = vpack.c.b16 %v2057, %v2055
        %v2210 = vpack.c.b16 %v2058, %v2056
        %v2211 = vpack.c.b16 %v2061, %v2059
        %v2212 = vpack.c.b16 %v2062, %v2060
        %v2213 = vpack.c.b16 %v2065, %v2063
        %v2214 = vpack.c.b16 %v2066, %v2064
        %v2215 = vpack.c.b16 %v2069, %v2067
        %v2216 = vpack.c.b16 %v2070, %v2068
        %v2217 = vpack.c.b16 %v2073, %v2071
        %v2218 = vpack.c.b16 %v2074, %v2072
        %v2219 = vpack.c.b16 %v2077, %v2075
        %v2220 = vpack.c.b16 %v2078, %v2076
        %v2221 = vpack.c.b16 %v2081, %v2079
        %v2222 = vpack.c.b16 %v2082, %v2080
        %v2223 = vpack.c.b16 %v2085, %v2083
        %v2224 = vpack.c.b16 %v2086, %v2084
        %v2225 = vpack.c.b16 %v2089, %v2087
        %v2226 = vpack.c.b16 %v2090, %v2088
        %v2227 = vpack.c.b16 %v2093, %v2091
        %v2228 = vpack.c.b16 %v2094, %v2092
        %v2229 = vpack.c.b16 %v2097, %v2095
        %v2230 = vpack.c.b16 %v2098, %v2096
        %v2231 = vpack.c.b16 %v2101, %v2099
        %v2232 = vpack.c.b16 %v2102, %v2100
        %v2233 = vpack.c.b16 %v2105, %v2103
        %v2234 = vpack.c.b16 %v2106, %v2104
        %2363 = vmatprep.subr.bf16.mxu0 %v2108
        %2364 = vmatpush1.bf16.msra.mxu0 %v2107
        %2365 = vmatprep.subr.bf16.mxu0 %v2110
        %2366 = vmatpush1.bf16.msra.mxu0 %v2109
        %2367 = vmatprep.subr.bf16.mxu0 %v2112
        %2368 = vmatpush1.bf16.msra.mxu0 %v2111
        %2369 = vmatprep.subr.bf16.mxu0 %v2114
        %2370 = vmatpush1.bf16.msra.mxu0 %v2113
        %2371 = vmatprep.subr.bf16.mxu0 %v2116
        %2372 = vmatpush1.bf16.msra.mxu0 %v2115
        %2373 = vmatprep.subr.bf16.mxu0 %v2118
        %2374 = vmatpush1.bf16.msra.mxu0 %v2117
        %2375 = vmatprep.subr.bf16.mxu0 %v2120
        %2376 = vmatpush1.bf16.msra.mxu0 %v2119
        %2377 = vmatprep.subr.bf16.mxu0 %v2122
        %2378 = vmatpush1.bf16.msra.mxu0 %v2121
        %2379 = vmatprep.subr.bf16.mxu0 %v2124
        %2380 = vmatpush1.bf16.msra.mxu0 %v2123
        %2381 = vmatprep.subr.bf16.mxu0 %v2126
        %2382 = vmatpush1.bf16.msra.mxu0 %v2125
        %2383 = vmatprep.subr.bf16.mxu0 %v2128
        %2384 = vmatpush1.bf16.msra.mxu0 %v2127
        %2385 = vmatprep.subr.bf16.mxu0 %v2130
        %2386 = vmatpush1.bf16.msra.mxu0 %v2129
        %2387 = vmatprep.subr.bf16.mxu0 %v2132
        %2388 = vmatpush1.bf16.msra.mxu0 %v2131
        %2389 = vmatprep.subr.bf16.mxu0 %v2134
        %2390 = vmatpush1.bf16.msra.mxu0 %v2133
        %2391 = vmatprep.subr.bf16.mxu0 %v2136
        %2392 = vmatpush1.bf16.msra.mxu0 %v2135
        %2393 = vmatprep.subr.bf16.mxu0 %v2138
        %2394 = vmatpush1.bf16.msra.mxu0 %v2137
        %2395 = vmatprep.mubr.bf16.mxu0 %v1716
        %2396 = vmatmul.mubr.bf16.gmra.mrb[0].mxu0 %v1715
        %v2397 = vpop.f32.mrb[0].mxu0
        %v2398 = vadd.f32 0.0, %v2397
        %v2399 = vpop.f32.mrb[0].mxu0
        %v2400 = vadd.f32 0.0, %v2399
        %v2401 = vpop.f32.mrb[0].mxu0
        %v2402 = vadd.f32 0.0, %v2401
        %v2403 = vpop.f32.mrb[0].mxu0
        %v2404 = vadd.f32 0.0, %v2403
        %2405 = vdwg.mxu0
        %2406 = vmatprep.subr.bf16.mxu0 %v2140
        %2407 = vmatpush1.bf16.msra.mxu0 %v2139
        %2408 = vmatprep.subr.bf16.mxu0 %v2142
        %2409 = vmatpush1.bf16.msra.mxu0 %v2141
        %2410 = vmatprep.subr.bf16.mxu0 %v2144
        %2411 = vmatpush1.bf16.msra.mxu0 %v2143
        %2412 = vmatprep.subr.bf16.mxu0 %v2146
        %2413 = vmatpush1.bf16.msra.mxu0 %v2145
        %2414 = vmatprep.subr.bf16.mxu0 %v2148
        %2415 = vmatpush1.bf16.msra.mxu0 %v2147
        %2416 = vmatprep.subr.bf16.mxu0 %v2150
        %2417 = vmatpush1.bf16.msra.mxu0 %v2149
        %2418 = vmatprep.subr.bf16.mxu0 %v2152
        %2419 = vmatpush1.bf16.msra.mxu0 %v2151
        %2420 = vmatprep.subr.bf16.mxu0 %v2154
        %2421 = vmatpush1.bf16.msra.mxu0 %v2153
        %2422 = vmatprep.subr.bf16.mxu0 %v2156
        %2423 = vmatpush1.bf16.msra.mxu0 %v2155
        %2424 = vmatprep.subr.bf16.mxu0 %v2158
        %2425 = vmatpush1.bf16.msra.mxu0 %v2157
        %2426 = vmatprep.subr.bf16.mxu0 %v2160
        %2427 = vmatpush1.bf16.msra.mxu0 %v2159
        %2428 = vmatprep.subr.bf16.mxu0 %v2162
        %2429 = vmatpush1.bf16.msra.mxu0 %v2161
        %2430 = vmatprep.subr.bf16.mxu0 %v2164
        %2431 = vmatpush1.bf16.msra.mxu0 %v2163
        %2432 = vmatprep.subr.bf16.mxu0 %v2166
        %2433 = vmatpush1.bf16.msra.mxu0 %v2165
        %2434 = vmatprep.subr.bf16.mxu0 %v2168
        %2435 = vmatpush1.bf16.msra.mxu0 %v2167
        %2436 = vmatprep.subr.bf16.mxu0 %v2170
        %2437 = vmatpush1.bf16.msra.mxu0 %v2169
        %2438 = vmatprep.mubr.bf16.mxu0 %v1718
        %2439 = vmatmul.mubr.bf16.gmra.mrb[0].mxu0 %v1717
        %v2440 = vpop.f32.mrb[0].mxu0
        %v2441 = vadd.f32 %v2398, %v2440
        %v2442 = vpop.f32.mrb[0].mxu0
        %v2443 = vadd.f32 %v2400, %v2442
        %v2444 = vpop.f32.mrb[0].mxu0
        %v2445 = vadd.f32 %v2402, %v2444
        %v2446 = vpop.f32.mrb[0].mxu0
        %v2447 = vadd.f32 %v2404, %v2446
        %2448 = vdwg.mxu0
        %2449 = vmatprep.subr.bf16.mxu0 %v2172
        %2450 = vmatpush1.bf16.msra.mxu0 %v2171
        %2451 = vmatprep.subr.bf16.mxu0 %v2174
        %2452 = vmatpush1.bf16.msra.mxu0 %v2173
        %2453 = vmatprep.subr.bf16.mxu0 %v2176
        %2454 = vmatpush1.bf16.msra.mxu0 %v2175
        %2455 = vmatprep.subr.bf16.mxu0 %v2178
        %2456 = vmatpush1.bf16.msra.mxu0 %v2177
        %2457 = vmatprep.subr.bf16.mxu0 %v2180
        %2458 = vmatpush1.bf16.msra.mxu0 %v2179
        %2459 = vmatprep.subr.bf16.mxu0 %v2182
        %2460 = vmatpush1.bf16.msra.mxu0 %v2181
        %2461 = vmatprep.subr.bf16.mxu0 %v2184
        %2462 = vmatpush1.bf16.msra.mxu0 %v2183
        %2463 = vmatprep.subr.bf16.mxu0 %v2186
        %2464 = vmatpush1.bf16.msra.mxu0 %v2185
        %2465 = vmatprep.subr.bf16.mxu0 %v2188
        %2466 = vmatpush1.bf16.msra.mxu0 %v2187
        %2467 = vmatprep.subr.bf16.mxu0 %v2190
        %2468 = vmatpush1.bf16.msra.mxu0 %v2189
        %2469 = vmatprep.subr.bf16.mxu0 %v2192
        %2470 = vmatpush1.bf16.msra.mxu0 %v2191
        %2471 = vmatprep.subr.bf16.mxu0 %v2194
        %2472 = vmatpush1.bf16.msra.mxu0 %v2193
        %2473 = vmatprep.subr.bf16.mxu0 %v2196
        %2474 = vmatpush1.bf16.msra.mxu0 %v2195
        %2475 = vmatprep.subr.bf16.mxu0 %v2198
        %2476 = vmatpush1.bf16.msra.mxu0 %v2197
        %2477 = vmatprep.subr.bf16.mxu0 %v2200
        %2478 = vmatpush1.bf16.msra.mxu0 %v2199
        %2479 = vmatprep.subr.bf16.mxu0 %v2202
        %2480 = vmatpush1.bf16.msra.mxu0 %v2201
        %2481 = vmatprep.mubr.bf16.mxu0 %v1720
        %2482 = vmatmul.mubr.bf16.gmra.mrb[0].mxu0 %v1719
        %v2483 = vpop.f32.mrb[0].mxu0
        %v2484 = vadd.f32 %v2441, %v2483
        %v2485 = vpop.f32.mrb[0].mxu0
        %v2486 = vadd.f32 %v2443, %v2485
        %v2487 = vpop.f32.mrb[0].mxu0
        %v2488 = vadd.f32 %v2445, %v2487
        %v2489 = vpop.f32.mrb[0].mxu0
        %v2490 = vadd.f32 %v2447, %v2489
        %2491 = vdwg.mxu0
        %2492 = vmatprep.subr.bf16.mxu0 %v2204
        %2493 = vmatpush1.bf16.msra.mxu0 %v2203
        %2494 = vmatprep.subr.bf16.mxu0 %v2206
        %2495 = vmatpush1.bf16.msra.mxu0 %v2205
        %2496 = vmatprep.subr.bf16.mxu0 %v2208
        %2497 = vmatpush1.bf16.msra.mxu0 %v2207
        %2498 = vmatprep.subr.bf16.mxu0 %v2210
        %2499 = vmatpush1.bf16.msra.mxu0 %v2209
        %2500 = vmatprep.subr.bf16.mxu0 %v2212
        %2501 = vmatpush1.bf16.msra.mxu0 %v2211
        %2502 = vmatprep.subr.bf16.mxu0 %v2214
        %2503 = vmatpush1.bf16.msra.mxu0 %v2213
        %2504 = vmatprep.subr.bf16.mxu0 %v2216
        %2505 = vmatpush1.bf16.msra.mxu0 %v2215
        %2506 = vmatprep.subr.bf16.mxu0 %v2218
        %2507 = vmatpush1.bf16.msra.mxu0 %v2217
        %2508 = vmatprep.subr.bf16.mxu0 %v2220
        %2509 = vmatpush1.bf16.msra.mxu0 %v2219
        %2510 = vmatprep.subr.bf16.mxu0 %v2222
        %2511 = vmatpush1.bf16.msra.mxu0 %v2221
        %2512 = vmatprep.subr.bf16.mxu0 %v2224
        %2513 = vmatpush1.bf16.msra.mxu0 %v2223
        %2514 = vmatprep.subr.bf16.mxu0 %v2226
        %2515 = vmatpush1.bf16.msra.mxu0 %v2225
        %2516 = vmatprep.subr.bf16.mxu0 %v2228
        %2517 = vmatpush1.bf16.msra.mxu0 %v2227
        %2518 = vmatprep.subr.bf16.mxu0 %v2230
        %2519 = vmatpush1.bf16.msra.mxu0 %v2229
        %2520 = vmatprep.subr.bf16.mxu0 %v2232
        %2521 = vmatpush1.bf16.msra.mxu0 %v2231
        %2522 = vmatprep.subr.bf16.mxu0 %v2234
        %2523 = vmatpush1.bf16.msra.mxu0 %v2233
        %2524 = vmatprep.mubr.bf16.mxu0 %v1722
        %2525 = vmatmul.mubr.bf16.gmra.mrb[0].mxu0 %v1721
        %v2526 = vpop.f32.mrb[0].mxu0
        %v2527 = vadd.f32 %v2484, %v2526
        %v2528 = vpop.f32.mrb[0].mxu0
        %v2529 = vadd.f32 %v2486, %v2528
        %v2530 = vpop.f32.mrb[0].mxu0
        %v2531 = vadd.f32 %v2488, %v2530
        %v2532 = vpop.f32.mrb[0].mxu0
        %v2533 = vadd.f32 %v2490, %v2532
        %2534 = vdwg.mxu0
        %2539 = vrot.lane.b32.xlu0 %v2527, 7
        %v2540 = vpop.permute.xlu0 %2539
        %2541 = vrot.lane.b32.xlu0 %v2529, 7
        %v2542 = vpop.permute.xlu0 %2541
        %2543 = vrot.lane.b32.xlu0 %v2531, 7
        %v2544 = vpop.permute.xlu0 %2543
        %2545 = vrot.lane.b32.xlu0 %v2533, 7
        %v2546 = vpop.permute.xlu0 %2545
        %vm2547 = vcmask 56320
        %v2548 = vsel %vm2547, %v2540, %v2542
        %v2549 = vsel %vm2547, %v2544, %v2546
        %v2556 = vsel %vm2547, 0.0, %v2540
        %v2557 = vsel %vm2547, 0.0, %v2544
        %v2558 = vsel %vm2547, %v2542, 0.0
        %v2559 = vsel %vm2547, %v2546, 0.0
        %2564 = vrot.lane.b32.xlu0 %v2556, 127
        %v2565 = vpop.permute.xlu0 %2564
        %2566 = vrot.lane.b32.xlu0 %v2548, 127
        %v2567 = vpop.permute.xlu0 %2566
        %2568 = vrot.lane.b32.xlu0 %v2558, 127
        %v2569 = vpop.permute.xlu0 %2568
        %2570 = vrot.lane.b32.xlu0 %v2557, 127
        %v2571 = vpop.permute.xlu0 %2570
        %2572 = vrot.lane.b32.xlu0 %v2549, 127
        %v2573 = vpop.permute.xlu0 %2572
        %2574 = vrot.lane.b32.xlu0 %v2559, 127
        %v2575 = vpop.permute.xlu0 %2574
        %v2576 = vsel %vm1250, %v2565, %v2567
        %v2577 = vsel %vm1250, %v2567, %v2569
        %v2578 = vsel %vm1250, %v2571, %v2573
        %v2579 = vsel %vm1250, %v2573, %v2575
        %2584 = vrot.lane.b32.xlu0 %v2556, 126
        %v2585 = vpop.permute.xlu0 %2584
        %2586 = vrot.lane.b32.xlu0 %v2548, 126
        %v2587 = vpop.permute.xlu0 %2586
        %2588 = vrot.lane.b32.xlu0 %v2558, 126
        %v2589 = vpop.permute.xlu0 %2588
        %2590 = vrot.lane.b32.xlu0 %v2557, 126
        %v2591 = vpop.permute.xlu0 %2590
        %2592 = vrot.lane.b32.xlu0 %v2549, 126
        %v2593 = vpop.permute.xlu0 %2592
        %2594 = vrot.lane.b32.xlu0 %v2559, 126
        %v2595 = vpop.permute.xlu0 %2594
        %v2596 = vsel %vm1294, %v2585, %v2587
        %v2597 = vsel %vm1294, %v2587, %v2589
        %v2598 = vsel %vm1294, %v2591, %v2593
        %v2599 = vsel %vm1294, %v2593, %v2595
        %2604 = vrot.lane.b32.xlu0 %v2556, 125
        %v2605 = vpop.permute.xlu0 %2604
        %2606 = vrot.lane.b32.xlu0 %v2548, 125
        %v2607 = vpop.permute.xlu0 %2606
        %2608 = vrot.lane.b32.xlu0 %v2558, 125
        %v2609 = vpop.permute.xlu0 %2608
        %2610 = vrot.lane.b32.xlu0 %v2557, 125
        %v2611 = vpop.permute.xlu0 %2610
        %2612 = vrot.lane.b32.xlu0 %v2549, 125
        %v2613 = vpop.permute.xlu0 %2612
        %2614 = vrot.lane.b32.xlu0 %v2559, 125
        %v2615 = vpop.permute.xlu0 %2614
        %v2616 = vsel %vm1338, %v2605, %v2607
        %v2617 = vsel %vm1338, %v2607, %v2609
        %v2618 = vsel %vm1338, %v2611, %v2613
        %v2619 = vsel %vm1338, %v2613, %v2615
        %2624 = vrot.lane.b32.xlu0 %v2556, 124
        %v2625 = vpop.permute.xlu0 %2624
        %2626 = vrot.lane.b32.xlu0 %v2548, 124
        %v2627 = vpop.permute.xlu0 %2626
        %2628 = vrot.lane.b32.xlu0 %v2558, 124
        %v2629 = vpop.permute.xlu0 %2628
        %2630 = vrot.lane.b32.xlu0 %v2557, 124
        %v2631 = vpop.permute.xlu0 %2630
        %2632 = vrot.lane.b32.xlu0 %v2549, 124
        %v2633 = vpop.permute.xlu0 %2632
        %2634 = vrot.lane.b32.xlu0 %v2559, 124
        %v2635 = vpop.permute.xlu0 %2634
        %v2636 = vsel %vm1382, %v2625, %v2627
        %v2637 = vsel %vm1382, %v2627, %v2629
        %v2638 = vsel %vm1382, %v2631, %v2633
        %v2639 = vsel %vm1382, %v2633, %v2635
        %2644 = vrot.lane.b32.xlu0 %v2556, 123
        %v2645 = vpop.permute.xlu0 %2644
        %2646 = vrot.lane.b32.xlu0 %v2548, 123
        %v2647 = vpop.permute.xlu0 %2646
        %2648 = vrot.lane.b32.xlu0 %v2558, 123
        %v2649 = vpop.permute.xlu0 %2648
        %2650 = vrot.lane.b32.xlu0 %v2557, 123
        %v2651 = vpop.permute.xlu0 %2650
        %2652 = vrot.lane.b32.xlu0 %v2549, 123
        %v2653 = vpop.permute.xlu0 %2652
        %2654 = vrot.lane.b32.xlu0 %v2559, 123
        %v2655 = vpop.permute.xlu0 %2654
        %vm2656 = vcmask 1006592
        %v2657 = vsel %vm2656, %v2645, %v2647
        %v2658 = vsel %vm2656, %v2647, %v2649
        %v2659 = vsel %vm2656, %v2651, %v2653
        %v2660 = vsel %vm2656, %v2653, %v2655
        %2665 = vrot.lane.b32.xlu0 %v2556, 122
        %v2666 = vpop.permute.xlu0 %2665
        %2667 = vrot.lane.b32.xlu0 %v2548, 122
        %v2668 = vpop.permute.xlu0 %2667
        %2669 = vrot.lane.b32.xlu0 %v2558, 122
        %v2670 = vpop.permute.xlu0 %2669
        %2671 = vrot.lane.b32.xlu0 %v2557, 122
        %v2672 = vpop.permute.xlu0 %2671
        %2673 = vrot.lane.b32.xlu0 %v2549, 122
        %v2674 = vpop.permute.xlu0 %2673
        %2675 = vrot.lane.b32.xlu0 %v2559, 122
        %v2676 = vpop.permute.xlu0 %2675
        %vm2677 = vcmask 998400
        %v2678 = vsel %vm2677, %v2666, %v2668
        %v2679 = vsel %vm2677, %v2668, %v2670
        %v2680 = vsel %vm2677, %v2672, %v2674
        %v2681 = vsel %vm2677, %v2674, %v2676
        %2686 = vrot.lane.b32.xlu0 %v2556, 121
        %v2687 = vpop.permute.xlu0 %2686
        %2688 = vrot.lane.b32.xlu0 %v2548, 121
        %v2689 = vpop.permute.xlu0 %2688
        %2690 = vrot.lane.b32.xlu0 %v2558, 121
        %v2691 = vpop.permute.xlu0 %2690
        %2692 = vrot.lane.b32.xlu0 %v2557, 121
        %v2693 = vpop.permute.xlu0 %2692
        %2694 = vrot.lane.b32.xlu0 %v2549, 121
        %v2695 = vpop.permute.xlu0 %2694
        %2696 = vrot.lane.b32.xlu0 %v2559, 121
        %v2697 = vpop.permute.xlu0 %2696
        %vm2698 = vcmask 990208
        %v2699 = vsel %vm2698, %v2687, %v2689
        %v2700 = vsel %vm2698, %v2689, %v2691
        %v2701 = vsel %vm2698, %v2693, %v2695
        %v2702 = vsel %vm2698, %v2695, %v2697
        %2707 = vrot.lane.b32.xlu0 %v2556, 120
        %v2708 = vpop.permute.xlu0 %2707
        %2709 = vrot.lane.b32.xlu0 %v2548, 120
        %v2710 = vpop.permute.xlu0 %2709
        %2711 = vrot.lane.b32.xlu0 %v2558, 120
        %v2712 = vpop.permute.xlu0 %2711
        %2713 = vrot.lane.b32.xlu0 %v2557, 120
        %v2714 = vpop.permute.xlu0 %2713
        %2715 = vrot.lane.b32.xlu0 %v2549, 120
        %v2716 = vpop.permute.xlu0 %2715
        %2717 = vrot.lane.b32.xlu0 %v2559, 120
        %v2718 = vpop.permute.xlu0 %2717
        %vm2719 = vcmask 982016
        %v2720 = vsel %vm2719, %v2708, %v2710
        %v2721 = vsel %vm2719, %v2710, %v2712
        %v2722 = vsel %vm2719, %v2714, %v2716
        %v2723 = vsel %vm2719, %v2716, %v2718
        %2728 = vrot.lane.b32.xlu0 %v2556, 119
        %v2729 = vpop.permute.xlu0 %2728
        %2730 = vrot.lane.b32.xlu0 %v2548, 119
        %v2731 = vpop.permute.xlu0 %2730
        %2732 = vrot.lane.b32.xlu0 %v2558, 119
        %v2733 = vpop.permute.xlu0 %2732
        %2734 = vrot.lane.b32.xlu0 %v2557, 119
        %v2735 = vpop.permute.xlu0 %2734
        %2736 = vrot.lane.b32.xlu0 %v2549, 119
        %v2737 = vpop.permute.xlu0 %2736
        %2738 = vrot.lane.b32.xlu0 %v2559, 119
        %v2739 = vpop.permute.xlu0 %2738
        %vm2740 = vcmask 973824
        %v2741 = vsel %vm2740, %v2729, %v2731
        %v2742 = vsel %vm2740, %v2731, %v2733
        %v2743 = vsel %vm2740, %v2735, %v2737
        %v2744 = vsel %vm2740, %v2737, %v2739
        %2749 = vrot.lane.b32.xlu0 %v2556, 118
        %v2750 = vpop.permute.xlu0 %2749
        %2751 = vrot.lane.b32.xlu0 %v2548, 118
        %v2752 = vpop.permute.xlu0 %2751
        %2753 = vrot.lane.b32.xlu0 %v2558, 118
        %v2754 = vpop.permute.xlu0 %2753
        %2755 = vrot.lane.b32.xlu0 %v2557, 118
        %v2756 = vpop.permute.xlu0 %2755
        %2757 = vrot.lane.b32.xlu0 %v2549, 118
        %v2758 = vpop.permute.xlu0 %2757
        %2759 = vrot.lane.b32.xlu0 %v2559, 118
        %v2760 = vpop.permute.xlu0 %2759
        %vm2761 = vcmask 965632
        %v2762 = vsel %vm2761, %v2750, %v2752
        %v2763 = vsel %vm2761, %v2752, %v2754
        %v2764 = vsel %vm2761, %v2756, %v2758
        %v2765 = vsel %vm2761, %v2758, %v2760
        %2770 = vrot.lane.b32.xlu0 %v2556, 117
        %v2771 = vpop.permute.xlu0 %2770
        %2772 = vrot.lane.b32.xlu0 %v2548, 117
        %v2773 = vpop.permute.xlu0 %2772
        %2774 = vrot.lane.b32.xlu0 %v2558, 117
        %v2775 = vpop.permute.xlu0 %2774
        %2776 = vrot.lane.b32.xlu0 %v2557, 117
        %v2777 = vpop.permute.xlu0 %2776
        %2778 = vrot.lane.b32.xlu0 %v2549, 117
        %v2779 = vpop.permute.xlu0 %2778
        %2780 = vrot.lane.b32.xlu0 %v2559, 117
        %v2781 = vpop.permute.xlu0 %2780
        %vm2782 = vcmask 957440
        %v2783 = vsel %vm2782, %v2771, %v2773
        %v2784 = vsel %vm2782, %v2773, %v2775
        %v2785 = vsel %vm2782, %v2777, %v2779
        %v2786 = vsel %vm2782, %v2779, %v2781
        %2791 = vrot.lane.b32.xlu0 %v2556, 116
        %v2792 = vpop.permute.xlu0 %2791
        %2793 = vrot.lane.b32.xlu0 %v2548, 116
        %v2794 = vpop.permute.xlu0 %2793
        %2795 = vrot.lane.b32.xlu0 %v2558, 116
        %v2796 = vpop.permute.xlu0 %2795
        %2797 = vrot.lane.b32.xlu0 %v2557, 116
        %v2798 = vpop.permute.xlu0 %2797
        %2799 = vrot.lane.b32.xlu0 %v2549, 116
        %v2800 = vpop.permute.xlu0 %2799
        %2801 = vrot.lane.b32.xlu0 %v2559, 116
        %v2802 = vpop.permute.xlu0 %2801
        %vm2803 = vcmask 949248
        %v2804 = vsel %vm2803, %v2792, %v2794
        %v2805 = vsel %vm2803, %v2794, %v2796
        %v2806 = vsel %vm2803, %v2798, %v2800
        %v2807 = vsel %vm2803, %v2800, %v2802
        %2812 = vrot.lane.b32.xlu0 %v2556, 115
        %v2813 = vpop.permute.xlu0 %2812
        %2814 = vrot.lane.b32.xlu0 %v2548, 115
        %v2815 = vpop.permute.xlu0 %2814
        %2816 = vrot.lane.b32.xlu0 %v2558, 115
        %v2817 = vpop.permute.xlu0 %2816
        %2818 = vrot.lane.b32.xlu0 %v2557, 115
        %v2819 = vpop.permute.xlu0 %2818
        %2820 = vrot.lane.b32.xlu0 %v2549, 115
        %v2821 = vpop.permute.xlu0 %2820
        %2822 = vrot.lane.b32.xlu0 %v2559, 115
        %v2823 = vpop.permute.xlu0 %2822
        %vm2824 = vcmask 941056
        %v2825 = vsel %vm2824, %v2813, %v2815
        %v2826 = vsel %vm2824, %v2815, %v2817
        %v2827 = vsel %vm2824, %v2819, %v2821
        %v2828 = vsel %vm2824, %v2821, %v2823
        %2833 = vrot.lane.b32.xlu0 %v2556, 114
        %v2834 = vpop.permute.xlu0 %2833
        %2835 = vrot.lane.b32.xlu0 %v2548, 114
        %v2836 = vpop.permute.xlu0 %2835
        %2837 = vrot.lane.b32.xlu0 %v2558, 114
        %v2838 = vpop.permute.xlu0 %2837
        %2839 = vrot.lane.b32.xlu0 %v2557, 114
        %v2840 = vpop.permute.xlu0 %2839
        %2841 = vrot.lane.b32.xlu0 %v2549, 114
        %v2842 = vpop.permute.xlu0 %2841
        %2843 = vrot.lane.b32.xlu0 %v2559, 114
        %v2844 = vpop.permute.xlu0 %2843
        %vm2845 = vcmask 932864
        %v2846 = vsel %vm2845, %v2834, %v2836
        %v2847 = vsel %vm2845, %v2836, %v2838
        %v2848 = vsel %vm2845, %v2840, %v2842
        %v2849 = vsel %vm2845, %v2842, %v2844
        %v2854 = vpack.c.bf16 %v2557, %v2556
        %v2855 = vpack.c.bf16 %v2549, %v2548
        %v2856 = vpack.c.bf16 %v2578, %v2576
        %v2857 = vpack.c.bf16 %v2579, %v2577
        %v2858 = vpack.c.bf16 %v2598, %v2596
        %v2859 = vpack.c.bf16 %v2599, %v2597
        %v2860 = vpack.c.bf16 %v2618, %v2616
        %v2861 = vpack.c.bf16 %v2619, %v2617
        %v2862 = vpack.c.bf16 %v2638, %v2636
        %v2863 = vpack.c.bf16 %v2639, %v2637
        %v2864 = vpack.c.bf16 %v2659, %v2657
        %v2865 = vpack.c.bf16 %v2660, %v2658
        %v2866 = vpack.c.bf16 %v2680, %v2678
        %v2867 = vpack.c.bf16 %v2681, %v2679
        %v2868 = vpack.c.bf16 %v2701, %v2699
        %v2869 = vpack.c.bf16 %v2702, %v2700
        %v2870 = vpack.c.bf16 %v2722, %v2720
        %v2871 = vpack.c.bf16 %v2723, %v2721
        %v2872 = vpack.c.bf16 %v2743, %v2741
        %v2873 = vpack.c.bf16 %v2744, %v2742
        %v2874 = vpack.c.bf16 %v2764, %v2762
        %v2875 = vpack.c.bf16 %v2765, %v2763
        %v2876 = vpack.c.bf16 %v2785, %v2783
        %v2877 = vpack.c.bf16 %v2786, %v2784
        %v2878 = vpack.c.bf16 %v2806, %v2804
        %v2879 = vpack.c.bf16 %v2807, %v2805
        %v2880 = vpack.c.bf16 %v2827, %v2825
        %v2881 = vpack.c.bf16 %v2828, %v2826
        %v2882 = vpack.c.bf16 %v2848, %v2846
        %v2883 = vpack.c.bf16 %v2849, %v2847
        %2885 = vset.pattern.permute.xlu0 0
        %2886 = vperm.xlu0 %2885, %v1125
        %v2887 = vpop.permute.xlu0 %2886
        %2890 = vset.pattern.permute.xlu0 0
        %2891 = vperm.xlu0 %2890, %v1126
        %v2892 = vpop.permute.xlu0 %2891
        %2895 = vset.pattern.permute.xlu0 0
        %2896 = vperm.xlu0 %2895, %v1127
        %v2897 = vpop.permute.xlu0 %2896
        %2900 = vset.pattern.permute.xlu0 0
        %2901 = vperm.xlu0 %2900, %v1128
        %v2902 = vpop.permute.xlu0 %2901
        %v2908 = vunpack.c.l.b16 %v1121
        %v2909 = vunpack.c.h.b16 %v1121
        %v2910 = vunpack.c.l.b16 %v1122
        %v2911 = vunpack.c.h.b16 %v1122
        %v2912 = vunpack.c.l.b16 %v1123
        %v2913 = vunpack.c.h.b16 %v1123
        %v2914 = vunpack.c.l.b16 %v1124
        %v2915 = vunpack.c.h.b16 %v1124
        %v2916 = vpack.c.b16 %v2910, %v2908
        %v2917 = vpack.c.b16 %v2911, %v2909
        %v2918 = vpack.c.b16 %v2914, %v2912
        %v2919 = vpack.c.b16 %v2915, %v2913
        %vm2922 = vcmask 916480
        %v2924 = vsel %vm2922, %v2917, 0
        %v2927 = vsel %vm2922, %v2919, 0
        %2929 = vmatprep.subr.bf16.mxu0 %v2855
        %2930 = vmatpush1.bf16.msra.mxu0 %v2854
        %2931 = vmatprep.subr.bf16.mxu0 %v2857
        %2932 = vmatpush1.bf16.msra.mxu0 %v2856
        %2933 = vmatprep.subr.bf16.mxu0 %v2859
        %2934 = vmatpush1.bf16.msra.mxu0 %v2858
        %2935 = vmatprep.subr.bf16.mxu0 %v2861
        %2936 = vmatpush1.bf16.msra.mxu0 %v2860
        %2937 = vmatprep.subr.bf16.mxu0 %v2863
        %2938 = vmatpush1.bf16.msra.mxu0 %v2862
        %2939 = vmatprep.subr.bf16.mxu0 %v2865
        %2940 = vmatpush1.bf16.msra.mxu0 %v2864
        %2941 = vmatprep.subr.bf16.mxu0 %v2867
        %2942 = vmatpush1.bf16.msra.mxu0 %v2866
        %2943 = vmatprep.subr.bf16.mxu0 %v2869
        %2944 = vmatpush1.bf16.msra.mxu0 %v2868
        %2945 = vmatprep.subr.bf16.mxu0 %v2871
        %2946 = vmatpush1.bf16.msra.mxu0 %v2870
        %2947 = vmatprep.subr.bf16.mxu0 %v2873
        %2948 = vmatpush1.bf16.msra.mxu0 %v2872
        %2949 = vmatprep.subr.bf16.mxu0 %v2875
        %2950 = vmatpush1.bf16.msra.mxu0 %v2874
        %2951 = vmatprep.subr.bf16.mxu0 %v2877
        %2952 = vmatpush1.bf16.msra.mxu0 %v2876
        %2953 = vmatprep.subr.bf16.mxu0 %v2879
        %2954 = vmatpush1.bf16.msra.mxu0 %v2878
        %2955 = vmatprep.subr.bf16.mxu0 %v2881
        %2956 = vmatpush1.bf16.msra.mxu0 %v2880
        %2957 = vmatprep.subr.bf16.mxu0 %v2883
        %2958 = vmatpush1.bf16.msra.mxu0 %v2882
        %2959 = vmatprep.subr.bf16.mxu0 0
        %2960 = vmatpush1.bf16.msra.mxu0 0
        %2961 = vmatprep.mubr.bf16.mxu0 %v2924
        %2962 = vmatmul.mubr.bf16.gmra.mrb[0].mxu0 %v2916
        %v2963 = vpop.f32.mrb[0].mxu0
        %v2964 = vadd.f32 %v2887, %v2963
        %v2965 = vpop.f32.mrb[0].mxu0
        %v2966 = vadd.f32 %v2887, %v2965
        %v2967 = vpop.f32.mrb[0].mxu0
        %v2968 = vadd.f32 %v2892, %v2967
        %v2969 = vpop.f32.mrb[0].mxu0
        %v2970 = vadd.f32 %v2892, %v2969
        %2971 = vmatprep.mubr.bf16.mxu0 %v2927
        %2972 = vmatmul.mubr.bf16.gmra.mrb[0].mxu0 %v2918
        %v2973 = vpop.f32.mrb[0].mxu0
        %v2974 = vadd.f32 %v2897, %v2973
        %v2975 = vpop.f32.mrb[0].mxu0
        %v2976 = vadd.f32 %v2897, %v2975
        %v2977 = vpop.f32.mrb[0].mxu0
        %v2978 = vadd.f32 %v2902, %v2977
        %v2979 = vpop.f32.mrb[0].mxu0
        %v2980 = vadd.f32 %v2902, %v2979
        %2981 = vdwg.mxu0
        %vm2982 = vcmp.ge.f32.partialorder %v2964, 0.0
        %vm2983 = vcmp.ge.f32.partialorder %v2966, 0.0
        %vm2984 = vcmp.ge.f32.partialorder %v2968, 0.0
        %vm2985 = vcmp.ge.f32.partialorder %v2970, 0.0
        %vm2986 = vcmp.ge.f32.partialorder %v2974, 0.0
        %vm2987 = vcmp.ge.f32.partialorder %v2976, 0.0
        %vm2988 = vcmp.ge.f32.partialorder %v2978, 0.0
        %vm2989 = vcmp.ge.f32.partialorder %v2980, 0.0
        %v2990 = vmul.f32 %v2964, 0.2
        %v2991 = vmul.f32 %v2966, 0.2
        %v2992 = vmul.f32 %v2968, 0.2
        %v2993 = vmul.f32 %v2970, 0.2
        %v2994 = vmul.f32 %v2974, 0.2
        %v2995 = vmul.f32 %v2976, 0.2
        %v2996 = vmul.f32 %v2978, 0.2
        %v2997 = vmul.f32 %v2980, 0.2
        %v2998 = vsel %vm2982, %v2964, %v2990
        %v2999 = vsel %vm2983, %v2966, %v2991
        %v3000 = vsel %vm2984, %v2968, %v2992
        %v3001 = vsel %vm2985, %v2970, %v2993
        %v3002 = vsel %vm2986, %v2974, %v2994
        %v3003 = vsel %vm2987, %v2976, %v2995
        %v3004 = vsel %vm2988, %v2978, %v2996
        %v3005 = vsel %vm2989, %v2980, %v2997
        %v3006 = vpack.c.bf16 %v3000, %v2998
        %v3007 = vpack.c.bf16 %v3001, %v2999
        %v3008 = vpack.c.bf16 %v3004, %v3002
        %v3009 = vpack.c.bf16 %v3005, %v3003
        %v3042 = vunpack.c.l.b16 %v1021
        %v3043 = vunpack.c.l.b16 %v1022
        %v3044 = vunpack.c.l.b16 %v1023
        %v3045 = vunpack.c.l.b16 %v1024
        %v3046 = vunpack.c.l.b16 %v1025
        %v3047 = vunpack.c.l.b16 %v1026
        %v3048 = vunpack.c.l.b16 %v1027
        %v3049 = vunpack.c.l.b16 %v1028
        %v3050 = vunpack.c.l.b16 %v1029
        %v3051 = vunpack.c.l.b16 %v1030
        %v3052 = vunpack.c.l.b16 %v1031
        %v3053 = vunpack.c.l.b16 %v1032
        %v3054 = vunpack.c.l.b16 %v1033
        %v3055 = vunpack.c.l.b16 %v1034
        %v3056 = vunpack.c.l.b16 %v1035
        %v3057 = vunpack.c.l.b16 %v1036
        %v3058 = vunpack.c.l.b16 %v1037
        %v3059 = vunpack.c.l.b16 %v1038
        %v3060 = vunpack.c.l.b16 %v1039
        %v3061 = vunpack.c.l.b16 %v1040
        %v3062 = vunpack.c.l.b16 %v1041
        %v3063 = vunpack.c.l.b16 %v1042
        %v3064 = vunpack.c.l.b16 %v1043
        %v3065 = vunpack.c.l.b16 %v1044
        %v3066 = vunpack.c.l.b16 %v1045
        %v3067 = vunpack.c.l.b16 %v1046
        %v3068 = vunpack.c.l.b16 %v1047
        %v3069 = vunpack.c.l.b16 %v1048
        %v3070 = vunpack.c.l.b16 %v1049
        %v3071 = vunpack.c.l.b16 %v1050
        %v3072 = vunpack.c.l.b16 %v1051
        %v3073 = vunpack.c.l.b16 %v1052
        %v3074 = vpack.c.b16 %v3043, %v3042
        %v3075 = vpack.c.b16 %v3045, %v3044
        %v3076 = vpack.c.b16 %v3047, %v3046
        %v3077 = vpack.c.b16 %v3049, %v3048
        %v3078 = vpack.c.b16 %v3051, %v3050
        %v3079 = vpack.c.b16 %v3053, %v3052
        %v3080 = vpack.c.b16 %v3055, %v3054
        %v3081 = vpack.c.b16 %v3057, %v3056
        %v3082 = vpack.c.b16 %v3059, %v3058
        %v3083 = vpack.c.b16 %v3061, %v3060
        %v3084 = vpack.c.b16 %v3063, %v3062
        %v3085 = vpack.c.b16 %v3065, %v3064
        %v3086 = vpack.c.b16 %v3067, %v3066
        %v3087 = vpack.c.b16 %v3069, %v3068
        %v3088 = vpack.c.b16 %v3071, %v3070
        %v3089 = vpack.c.b16 %v3073, %v3072
        %3106 = vmatprep.subr.bf16.mxu0 0
        %3107 = vmatpush1.bf16.msra.mxu0 %v3074
        %3108 = vmatprep.subr.bf16.mxu0 0
        %3109 = vmatpush1.bf16.msra.mxu0 %v3075
        %3110 = vmatprep.subr.bf16.mxu0 0
        %3111 = vmatpush1.bf16.msra.mxu0 %v3076
        %3112 = vmatprep.subr.bf16.mxu0 0
        %3113 = vmatpush1.bf16.msra.mxu0 %v3077
        %3114 = vmatprep.subr.bf16.mxu0 0
        %3115 = vmatpush1.bf16.msra.mxu0 %v3078
        %3116 = vmatprep.subr.bf16.mxu0 0
        %3117 = vmatpush1.bf16.msra.mxu0 %v3079
        %3118 = vmatprep.subr.bf16.mxu0 0
        %3119 = vmatpush1.bf16.msra.mxu0 %v3080
        %3120 = vmatprep.subr.bf16.mxu0 0
        %3121 = vmatpush1.bf16.msra.mxu0 %v3081
        %3122 = vmatprep.subr.bf16.mxu0 0
        %3123 = vmatpush1.bf16.msra.mxu0 %v3082
        %3124 = vmatprep.subr.bf16.mxu0 0
        %3125 = vmatpush1.bf16.msra.mxu0 %v3083
        %3126 = vmatprep.subr.bf16.mxu0 0
        %3127 = vmatpush1.bf16.msra.mxu0 %v3084
        %3128 = vmatprep.subr.bf16.mxu0 0
        %3129 = vmatpush1.bf16.msra.mxu0 %v3085
        %3130 = vmatprep.subr.bf16.mxu0 0
        %3131 = vmatpush1.bf16.msra.mxu0 %v3086
        %3132 = vmatprep.subr.bf16.mxu0 0
        %3133 = vmatpush1.bf16.msra.mxu0 %v3087
        %3134 = vmatprep.subr.bf16.mxu0 0
        %3135 = vmatpush1.bf16.msra.mxu0 %v3088
        %3136 = vmatprep.subr.bf16.mxu0 0
        %3137 = vmatpush1.bf16.msra.mxu0 %v3089
        %3138 = vmatprep.mubr.bf16.mxu0 %v3007
        %3139 = vmatmul.mubr.bf16.gmra.mrb[0].mxu0 %v3006
        %v3140 = vpop.f32.mrb[0].mxu0
        %v3141 = vadd.f32 0.0, %v3140
        %v3142 = vpop.f32.mrb[0].mxu0
        %v3143 = vpop.f32.mrb[0].mxu0
        %v3144 = vadd.f32 0.0, %v3143
        %v3145 = vpop.f32.mrb[0].mxu0
        %3146 = vmatprep.mubr.bf16.mxu0 %v3009
        %3147 = vmatmul.mubr.bf16.gmra.mrb[0].mxu0 %v3008
        %v3148 = vpop.f32.mrb[0].mxu0
        %v3149 = vadd.f32 0.0, %v3148
        %v3150 = vpop.f32.mrb[0].mxu0
        %v3151 = vpop.f32.mrb[0].mxu0
        %v3152 = vadd.f32 0.0, %v3151
        %v3153 = vpop.f32.mrb[0].mxu0
        %3154 = vdwg.mxu0
        %3159 = vrot.lane.b32.xlu0 %v3141, 7
        %v3160 = vpop.permute.xlu0 %3159
        %3161 = vrot.lane.b32.xlu0 %v3144, 7
        %v3162 = vpop.permute.xlu0 %3161
        %3163 = vrot.lane.b32.xlu0 %v3149, 7
        %v3164 = vpop.permute.xlu0 %3163
        %3165 = vrot.lane.b32.xlu0 %v3152, 7
        %v3166 = vpop.permute.xlu0 %3165
        %v3171 = vsel %vm2547, 0.0, %v3160
        %v3172 = vsel %vm2547, 0.0, %v3162
        %v3173 = vsel %vm2547, 0.0, %v3164
        %v3174 = vsel %vm2547, 0.0, %v3166
        %vm3175 = vcmask 580608
        %v3176 = vsel %vm3175, %v3171, 0.0
        %v3177 = vsel %vm3175, %v3172, 0.0
        %v3178 = vsel %vm3175, %v3173, 0.0
        %v3179 = vsel %vm3175, %v3174, 0.0
        %3184 = vrot.lane.b32.xlu0 %v3176, 127
        %v3185 = vpop.permute.xlu0 %3184
        %3186 = vrot.lane.b32.xlu0 %v3177, 127
        %v3187 = vpop.permute.xlu0 %3186
        %3188 = vrot.lane.b32.xlu0 %v3178, 127
        %v3189 = vpop.permute.xlu0 %3188
        %3190 = vrot.lane.b32.xlu0 %v3179, 127
        %v3191 = vpop.permute.xlu0 %3190
        %3196 = vrot.lane.b32.xlu0 %v3176, 126
        %v3197 = vpop.permute.xlu0 %3196
        %3198 = vrot.lane.b32.xlu0 %v3177, 126
        %v3199 = vpop.permute.xlu0 %3198
        %3200 = vrot.lane.b32.xlu0 %v3178, 126
        %v3201 = vpop.permute.xlu0 %3200
        %3202 = vrot.lane.b32.xlu0 %v3179, 126
        %v3203 = vpop.permute.xlu0 %3202
        %3208 = vrot.lane.b32.xlu0 %v3176, 125
        %v3209 = vpop.permute.xlu0 %3208
        %3210 = vrot.lane.b32.xlu0 %v3177, 125
        %v3211 = vpop.permute.xlu0 %3210
        %3212 = vrot.lane.b32.xlu0 %v3178, 125
        %v3213 = vpop.permute.xlu0 %3212
        %3214 = vrot.lane.b32.xlu0 %v3179, 125
        %v3215 = vpop.permute.xlu0 %3214
        %3220 = vrot.lane.b32.xlu0 %v3176, 124
        %v3221 = vpop.permute.xlu0 %3220
        %3222 = vrot.lane.b32.xlu0 %v3177, 124
        %v3223 = vpop.permute.xlu0 %3222
        %3224 = vrot.lane.b32.xlu0 %v3178, 124
        %v3225 = vpop.permute.xlu0 %3224
        %3226 = vrot.lane.b32.xlu0 %v3179, 124
        %v3227 = vpop.permute.xlu0 %3226
        %3232 = vrot.lane.b32.xlu0 %v3176, 123
        %v3233 = vpop.permute.xlu0 %3232
        %3234 = vrot.lane.b32.xlu0 %v3177, 123
        %v3235 = vpop.permute.xlu0 %3234
        %3236 = vrot.lane.b32.xlu0 %v3178, 123
        %v3237 = vpop.permute.xlu0 %3236
        %3238 = vrot.lane.b32.xlu0 %v3179, 123
        %v3239 = vpop.permute.xlu0 %3238
        %3244 = vrot.lane.b32.xlu0 %v3176, 122
        %v3245 = vpop.permute.xlu0 %3244
        %3246 = vrot.lane.b32.xlu0 %v3177, 122
        %v3247 = vpop.permute.xlu0 %3246
        %3248 = vrot.lane.b32.xlu0 %v3178, 122
        %v3249 = vpop.permute.xlu0 %3248
        %3250 = vrot.lane.b32.xlu0 %v3179, 122
        %v3251 = vpop.permute.xlu0 %3250
        %3256 = vrot.lane.b32.xlu0 %v3176, 121
        %v3257 = vpop.permute.xlu0 %3256
        %3258 = vrot.lane.b32.xlu0 %v3177, 121
        %v3259 = vpop.permute.xlu0 %3258
        %3260 = vrot.lane.b32.xlu0 %v3178, 121
        %v3261 = vpop.permute.xlu0 %3260
        %3262 = vrot.lane.b32.xlu0 %v3179, 121
        %v3263 = vpop.permute.xlu0 %3262
        %3268 = vrot.lane.b32.xlu0 %v3176, 120
        %v3269 = vpop.permute.xlu0 %3268
        %3270 = vrot.lane.b32.xlu0 %v3177, 120
        %v3271 = vpop.permute.xlu0 %3270
        %3272 = vrot.lane.b32.xlu0 %v3178, 120
        %v3273 = vpop.permute.xlu0 %3272
        %3274 = vrot.lane.b32.xlu0 %v3179, 120
        %v3275 = vpop.permute.xlu0 %3274
        %3280 = vrot.lane.b32.xlu0 %v3176, 119
        %v3281 = vpop.permute.xlu0 %3280
        %3282 = vrot.lane.b32.xlu0 %v3177, 119
        %v3283 = vpop.permute.xlu0 %3282
        %3284 = vrot.lane.b32.xlu0 %v3178, 119
        %v3285 = vpop.permute.xlu0 %3284
        %3286 = vrot.lane.b32.xlu0 %v3179, 119
        %v3287 = vpop.permute.xlu0 %3286
        %3292 = vrot.lane.b32.xlu0 %v3176, 118
        %v3293 = vpop.permute.xlu0 %3292
        %3294 = vrot.lane.b32.xlu0 %v3177, 118
        %v3295 = vpop.permute.xlu0 %3294
        %3296 = vrot.lane.b32.xlu0 %v3178, 118
        %v3297 = vpop.permute.xlu0 %3296
        %3298 = vrot.lane.b32.xlu0 %v3179, 118
        %v3299 = vpop.permute.xlu0 %3298
        %3304 = vrot.lane.b32.xlu0 %v3176, 117
        %v3305 = vpop.permute.xlu0 %3304
        %3306 = vrot.lane.b32.xlu0 %v3177, 117
        %v3307 = vpop.permute.xlu0 %3306
        %3308 = vrot.lane.b32.xlu0 %v3178, 117
        %v3309 = vpop.permute.xlu0 %3308
        %3310 = vrot.lane.b32.xlu0 %v3179, 117
        %v3311 = vpop.permute.xlu0 %3310
        %3316 = vrot.lane.b32.xlu0 %v3176, 116
        %v3317 = vpop.permute.xlu0 %3316
        %3318 = vrot.lane.b32.xlu0 %v3177, 116
        %v3319 = vpop.permute.xlu0 %3318
        %3320 = vrot.lane.b32.xlu0 %v3178, 116
        %v3321 = vpop.permute.xlu0 %3320
        %3322 = vrot.lane.b32.xlu0 %v3179, 116
        %v3323 = vpop.permute.xlu0 %3322
        %3328 = vrot.lane.b32.xlu0 %v3176, 115
        %v3329 = vpop.permute.xlu0 %3328
        %3330 = vrot.lane.b32.xlu0 %v3177, 115
        %v3331 = vpop.permute.xlu0 %3330
        %3332 = vrot.lane.b32.xlu0 %v3178, 115
        %v3333 = vpop.permute.xlu0 %3332
        %3334 = vrot.lane.b32.xlu0 %v3179, 115
        %v3335 = vpop.permute.xlu0 %3334
        %3340 = vrot.lane.b32.xlu0 %v3176, 114
        %v3341 = vpop.permute.xlu0 %3340
        %3342 = vrot.lane.b32.xlu0 %v3177, 114
        %v3343 = vpop.permute.xlu0 %3342
        %3344 = vrot.lane.b32.xlu0 %v3178, 114
        %v3345 = vpop.permute.xlu0 %3344
        %3346 = vrot.lane.b32.xlu0 %v3179, 114
        %v3347 = vpop.permute.xlu0 %3346
        %v3352 = vpack.c.bf16 %v3177, %v3176
        %v3353 = vpack.c.bf16 %v3179, %v3178
        %v3354 = vpack.c.bf16 %v3187, %v3185
        %v3355 = vpack.c.bf16 %v3191, %v3189
        %v3356 = vpack.c.bf16 %v3199, %v3197
        %v3357 = vpack.c.bf16 %v3203, %v3201
        %v3358 = vpack.c.bf16 %v3211, %v3209
        %v3359 = vpack.c.bf16 %v3215, %v3213
        %v3360 = vpack.c.bf16 %v3223, %v3221
        %v3361 = vpack.c.bf16 %v3227, %v3225
        %v3362 = vpack.c.bf16 %v3235, %v3233
        %v3363 = vpack.c.bf16 %v3239, %v3237
        %v3364 = vpack.c.bf16 %v3247, %v3245
        %v3365 = vpack.c.bf16 %v3251, %v3249
        %v3366 = vpack.c.bf16 %v3259, %v3257
        %v3367 = vpack.c.bf16 %v3263, %v3261
        %v3368 = vpack.c.bf16 %v3271, %v3269
        %v3369 = vpack.c.bf16 %v3275, %v3273
        %v3370 = vpack.c.bf16 %v3283, %v3281
        %v3371 = vpack.c.bf16 %v3287, %v3285
        %v3372 = vpack.c.bf16 %v3295, %v3293
        %v3373 = vpack.c.bf16 %v3299, %v3297
        %v3374 = vpack.c.bf16 %v3307, %v3305
        %v3375 = vpack.c.bf16 %v3311, %v3309
        %v3376 = vpack.c.bf16 %v3319, %v3317
        %v3377 = vpack.c.bf16 %v3323, %v3321
        %v3378 = vpack.c.bf16 %v3331, %v3329
        %v3379 = vpack.c.bf16 %v3335, %v3333
        %v3380 = vpack.c.bf16 %v3343, %v3341
        %v3381 = vpack.c.bf16 %v3347, %v3345
        %3383 = vset.pattern.permute.xlu0 0
        %3384 = vperm.xlu0 %3383, %v1145
        %v3385 = vpop.permute.xlu0 %3384
        %3388 = vset.pattern.permute.xlu0 0
        %3389 = vperm.xlu0 %3388, %v1146
        %v3390 = vpop.permute.xlu0 %3389
        %3393 = vset.pattern.permute.xlu0 0
        %3394 = vperm.xlu0 %3393, %v1147
        %v3395 = vpop.permute.xlu0 %3394
        %3398 = vset.pattern.permute.xlu0 0
        %3399 = vperm.xlu0 %3398, %v1148
        %v3400 = vpop.permute.xlu0 %3399
        %3403 = vset.pattern.permute.xlu0 0
        %3404 = vperm.xlu0 %3403, %v1149
        %v3405 = vpop.permute.xlu0 %3404
        %3408 = vset.pattern.permute.xlu0 0
        %3409 = vperm.xlu0 %3408, %v1150
        %v3410 = vpop.permute.xlu0 %3409
        %3413 = vset.pattern.permute.xlu0 0
        %3414 = vperm.xlu0 %3413, %v1151
        %v3415 = vpop.permute.xlu0 %3414
        %3418 = vset.pattern.permute.xlu0 0
        %3419 = vperm.xlu0 %3418, %v1152
        %v3420 = vpop.permute.xlu0 %3419
        %v3438 = vunpack.c.l.b16 %v1129
        %v3439 = vunpack.c.h.b16 %v1129
        %v3440 = vunpack.c.l.b16 %v1130
        %v3441 = vunpack.c.h.b16 %v1130
        %v3442 = vunpack.c.l.b16 %v1131
        %v3443 = vunpack.c.h.b16 %v1131
        %v3444 = vunpack.c.l.b16 %v1132
        %v3445 = vunpack.c.h.b16 %v1132
        %v3446 = vunpack.c.l.b16 %v1133
        %v3447 = vunpack.c.h.b16 %v1133
        %v3448 = vunpack.c.l.b16 %v1134
        %v3449 = vunpack.c.h.b16 %v1134
        %v3450 = vunpack.c.l.b16 %v1135
        %v3451 = vunpack.c.h.b16 %v1135
        %v3452 = vunpack.c.l.b16 %v1136
        %v3453 = vunpack.c.h.b16 %v1136
        %v3454 = vunpack.c.l.b16 %v1137
        %v3455 = vunpack.c.h.b16 %v1137
        %v3456 = vunpack.c.l.b16 %v1138
        %v3457 = vunpack.c.h.b16 %v1138
        %v3458 = vunpack.c.l.b16 %v1139
        %v3459 = vunpack.c.h.b16 %v1139
        %v3460 = vunpack.c.l.b16 %v1140
        %v3461 = vunpack.c.h.b16 %v1140
        %v3462 = vunpack.c.l.b16 %v1141
        %v3463 = vunpack.c.h.b16 %v1141
        %v3464 = vunpack.c.l.b16 %v1142
        %v3465 = vunpack.c.h.b16 %v1142
        %v3466 = vunpack.c.l.b16 %v1143
        %v3467 = vunpack.c.h.b16 %v1143
        %v3468 = vunpack.c.l.b16 %v1144
        %v3469 = vunpack.c.h.b16 %v1144
        %v3470 = vpack.c.b16 %v3442, %v3438
        %v3471 = vpack.c.b16 %v3443, %v3439
        %v3472 = vpack.c.b16 %v3444, %v3440
        %v3473 = vpack.c.b16 %v3445, %v3441
        %v3474 = vpack.c.b16 %v3450, %v3446
        %v3475 = vpack.c.b16 %v3451, %v3447
        %v3476 = vpack.c.b16 %v3452, %v3448
        %v3477 = vpack.c.b16 %v3453, %v3449
        %v3478 = vpack.c.b16 %v3458, %v3454
        %v3479 = vpack.c.b16 %v3459, %v3455
        %v3480 = vpack.c.b16 %v3460, %v3456
        %v3481 = vpack.c.b16 %v3461, %v3457
        %v3482 = vpack.c.b16 %v3466, %v3462
        %v3483 = vpack.c.b16 %v3467, %v3463
        %v3484 = vpack.c.b16 %v3468, %v3464
        %v3485 = vpack.c.b16 %v3469, %v3465
        %vm3498 = vcmask 785408
        %v3500 = vsel %vm3498, %v3473, 0
        %v3503 = vsel %vm3498, %v3477, 0
        %v3506 = vsel %vm3498, %v3481, 0
        %v3509 = vsel %vm3498, %v3485, 0
        %3511 = vmatprep.subr.bf16.mxu0 0
        %3512 = vmatpush1.bf16.msra.mxu0 %v3352
        %3513 = vmatprep.subr.bf16.mxu0 0
        %3514 = vmatpush1.bf16.msra.mxu0 %v3353
        %3515 = vmatprep.subr.bf16.mxu0 0
        %3516 = vmatpush1.bf16.msra.mxu0 %v3354
        %3517 = vmatprep.subr.bf16.mxu0 0
        %3518 = vmatpush1.bf16.msra.mxu0 %v3355
        %3519 = vmatprep.subr.bf16.mxu0 0
        %3520 = vmatpush1.bf16.msra.mxu0 %v3356
        %3521 = vmatprep.subr.bf16.mxu0 0
        %3522 = vmatpush1.bf16.msra.mxu0 %v3357
        %3523 = vmatprep.subr.bf16.mxu0 0
        %3524 = vmatpush1.bf16.msra.mxu0 %v3358
        %3525 = vmatprep.subr.bf16.mxu0 0
        %3526 = vmatpush1.bf16.msra.mxu0 %v3359
        %3527 = vmatprep.subr.bf16.mxu0 0
        %3528 = vmatpush1.bf16.msra.mxu0 %v3360
        %3529 = vmatprep.subr.bf16.mxu0 0
        %3530 = vmatpush1.bf16.msra.mxu0 %v3361
        %3531 = vmatprep.subr.bf16.mxu0 0
        %3532 = vmatpush1.bf16.msra.mxu0 %v3362
        %3533 = vmatprep.subr.bf16.mxu0 0
        %3534 = vmatpush1.bf16.msra.mxu0 %v3363
        %3535 = vmatprep.subr.bf16.mxu0 0
        %3536 = vmatpush1.bf16.msra.mxu0 %v3364
        %3537 = vmatprep.subr.bf16.mxu0 0
        %3538 = vmatpush1.bf16.msra.mxu0 %v3365
        %3539 = vmatprep.subr.bf16.mxu0 0
        %3540 = vmatpush1.bf16.msra.mxu0 %v3366
        %3541 = vmatprep.subr.bf16.mxu0 0
        %3542 = vmatpush1.bf16.msra.mxu0 %v3367
        %3543 = vmatprep.mubr.bf16.mxu0 %v3471
        %3544 = vmatmul.mubr.bf16.gmra.mrb[0].mxu0 %v3470
        %v3545 = vpop.f32.mrb[0].mxu0
        %v3546 = vadd.f32 %v3385, %v3545
        %v3547 = vpop.f32.mrb[0].mxu0
        %v3548 = vpop.f32.mrb[0].mxu0
        %v3549 = vadd.f32 %v3390, %v3548
        %v3550 = vpop.f32.mrb[0].mxu0
        %3551 = vmatprep.mubr.bf16.mxu0 %v3475
        %3552 = vmatmul.mubr.bf16.gmra.mrb[0].mxu0 %v3474
        %v3553 = vpop.f32.mrb[0].mxu0
        %v3554 = vadd.f32 %v3395, %v3553
        %v3555 = vpop.f32.mrb[0].mxu0
        %v3556 = vpop.f32.mrb[0].mxu0
        %v3557 = vadd.f32 %v3400, %v3556
        %v3558 = vpop.f32.mrb[0].mxu0
        %3559 = vmatprep.mubr.bf16.mxu0 %v3479
        %3560 = vmatmul.mubr.bf16.gmra.mrb[0].mxu0 %v3478
        %v3561 = vpop.f32.mrb[0].mxu0
        %v3562 = vadd.f32 %v3405, %v3561
        %v3563 = vpop.f32.mrb[0].mxu0
        %v3564 = vpop.f32.mrb[0].mxu0
        %v3565 = vadd.f32 %v3410, %v3564
        %v3566 = vpop.f32.mrb[0].mxu0
        %3567 = vmatprep.mubr.bf16.mxu0 %v3483
        %3568 = vmatmul.mubr.bf16.gmra.mrb[0].mxu0 %v3482
        %v3569 = vpop.f32.mrb[0].mxu0
        %v3570 = vadd.f32 %v3415, %v3569
        %v3571 = vpop.f32.mrb[0].mxu0
        %v3572 = vpop.f32.mrb[0].mxu0
        %v3573 = vadd.f32 %v3420, %v3572
        %v3574 = vpop.f32.mrb[0].mxu0
        %3575 = vdwg.mxu0
        %3576 = vmatprep.subr.bf16.mxu0 0
        %3577 = vmatpush1.bf16.msra.mxu0 %v3368
        %3578 = vmatprep.subr.bf16.mxu0 0
        %3579 = vmatpush1.bf16.msra.mxu0 %v3369
        %3580 = vmatprep.subr.bf16.mxu0 0
        %3581 = vmatpush1.bf16.msra.mxu0 %v3370
        %3582 = vmatprep.subr.bf16.mxu0 0
        %3583 = vmatpush1.bf16.msra.mxu0 %v3371
        %3584 = vmatprep.subr.bf16.mxu0 0
        %3585 = vmatpush1.bf16.msra.mxu0 %v3372
        %3586 = vmatprep.subr.bf16.mxu0 0
        %3587 = vmatpush1.bf16.msra.mxu0 %v3373
        %3588 = vmatprep.subr.bf16.mxu0 0
        %3589 = vmatpush1.bf16.msra.mxu0 %v3374
        %3590 = vmatprep.subr.bf16.mxu0 0
        %3591 = vmatpush1.bf16.msra.mxu0 %v3375
        %3592 = vmatprep.subr.bf16.mxu0 0
        %3593 = vmatpush1.bf16.msra.mxu0 %v3376
        %3594 = vmatprep.subr.bf16.mxu0 0
        %3595 = vmatpush1.bf16.msra.mxu0 %v3377
        %3596 = vmatprep.subr.bf16.mxu0 0
        %3597 = vmatpush1.bf16.msra.mxu0 %v3378
        %3598 = vmatprep.subr.bf16.mxu0 0
        %3599 = vmatpush1.bf16.msra.mxu0 %v3379
        %3600 = vmatprep.subr.bf16.mxu0 0
        %3601 = vmatpush1.bf16.msra.mxu0 %v3380
        %3602 = vmatprep.subr.bf16.mxu0 0
        %3603 = vmatpush1.bf16.msra.mxu0 %v3381
        %3604 = vmatprep.subr.bf16.mxu0 0
        %3605 = vmatpush1.bf16.msra.mxu0 0
        %3606 = vmatprep.subr.bf16.mxu0 0
        %3607 = vmatpush1.bf16.msra.mxu0 0
        %3608 = vmatprep.mubr.bf16.mxu0 %v3500
        %3609 = vmatmul.mubr.bf16.gmra.mrb[0].mxu0 %v3472
        %v3610 = vpop.f32.mrb[0].mxu0
        %v3611 = vadd.f32 %v3546, %v3610
        %v3612 = vpop.f32.mrb[0].mxu0
        %v3613 = vpop.f32.mrb[0].mxu0
        %v3614 = vadd.f32 %v3549, %v3613
        %v3615 = vpop.f32.mrb[0].mxu0
        %3616 = vmatprep.mubr.bf16.mxu0 %v3503
        %3617 = vmatmul.mubr.bf16.gmra.mrb[0].mxu0 %v3476
        %v3618 = vpop.f32.mrb[0].mxu0
        %v3619 = vadd.f32 %v3554, %v3618
        %v3620 = vpop.f32.mrb[0].mxu0
        %v3621 = vpop.f32.mrb[0].mxu0
        %v3622 = vadd.f32 %v3557, %v3621
        %v3623 = vpop.f32.mrb[0].mxu0
        %3624 = vmatprep.mubr.bf16.mxu0 %v3506
        %3625 = vmatmul.mubr.bf16.gmra.mrb[0].mxu0 %v3480
        %v3626 = vpop.f32.mrb[0].mxu0
        %v3627 = vadd.f32 %v3562, %v3626
        %v3628 = vpop.f32.mrb[0].mxu0
        %v3629 = vpop.f32.mrb[0].mxu0
        %v3630 = vadd.f32 %v3565, %v3629
        %v3631 = vpop.f32.mrb[0].mxu0
        %3632 = vmatprep.mubr.bf16.mxu0 %v3509
        %3633 = vmatmul.mubr.bf16.gmra.mrb[0].mxu0 %v3484
        %v3634 = vpop.f32.mrb[0].mxu0
        %v3635 = vadd.f32 %v3570, %v3634
        %v3636 = vpop.f32.mrb[0].mxu0
        %v3637 = vpop.f32.mrb[0].mxu0
        %v3638 = vadd.f32 %v3573, %v3637
        %v3639 = vpop.f32.mrb[0].mxu0
        %3640 = vdwg.mxu0
        %vm3641 = vcmp.ge.f32.partialorder %v3611, 0.0
        %vm3642 = vcmp.ge.f32.partialorder %v3614, 0.0
        %vm3643 = vcmp.ge.f32.partialorder %v3619, 0.0
        %vm3644 = vcmp.ge.f32.partialorder %v3622, 0.0
        %vm3645 = vcmp.ge.f32.partialorder %v3627, 0.0
        %vm3646 = vcmp.ge.f32.partialorder %v3630, 0.0
        %vm3647 = vcmp.ge.f32.partialorder %v3635, 0.0
        %vm3648 = vcmp.ge.f32.partialorder %v3638, 0.0
        %v3649 = vmul.f32 %v3611, 0.2
        %v3650 = vmul.f32 %v3614, 0.2
        %v3651 = vmul.f32 %v3619, 0.2
        %v3652 = vmul.f32 %v3622, 0.2
        %v3653 = vmul.f32 %v3627, 0.2
        %v3654 = vmul.f32 %v3630, 0.2
        %v3655 = vmul.f32 %v3635, 0.2
        %v3656 = vmul.f32 %v3638, 0.2
        %v3657 = vsel %vm3641, %v3611, %v3649
        %v3658 = vsel %vm3642, %v3614, %v3650
        %v3659 = vsel %vm3643, %v3619, %v3651
        %v3660 = vsel %vm3644, %v3622, %v3652
        %v3661 = vsel %vm3645, %v3627, %v3653
        %v3662 = vsel %vm3646, %v3630, %v3654
        %v3663 = vsel %vm3647, %v3635, %v3655
        %v3664 = vsel %vm3648, %v3638, %v3656
        %v3665 = vpack.c.bf16 %v3658, %v3657
        %v3666 = vpack.c.bf16 %v3660, %v3659
        %v3667 = vpack.c.bf16 %v3662, %v3661
        %v3668 = vpack.c.bf16 %v3664, %v3663
        %v3701 = vunpack.c.l.b16 %v1053
        %v3702 = vunpack.c.h.b16 %v1053
        %v3703 = vunpack.c.l.b16 %v1054
        %v3704 = vunpack.c.h.b16 %v1054
        %v3705 = vunpack.c.l.b16 %v1055
        %v3706 = vunpack.c.h.b16 %v1055
        %v3707 = vunpack.c.l.b16 %v1056
        %v3708 = vunpack.c.h.b16 %v1056
        %v3709 = vunpack.c.l.b16 %v1057
        %v3710 = vunpack.c.h.b16 %v1057
        %v3711 = vunpack.c.l.b16 %v1058
        %v3712 = vunpack.c.h.b16 %v1058
        %v3713 = vunpack.c.l.b16 %v1059
        %v3714 = vunpack.c.h.b16 %v1059
        %v3715 = vunpack.c.l.b16 %v1060
        %v3716 = vunpack.c.h.b16 %v1060
        %v3717 = vunpack.c.l.b16 %v1061
        %v3718 = vunpack.c.h.b16 %v1061
        %v3719 = vunpack.c.l.b16 %v1062
        %v3720 = vunpack.c.h.b16 %v1062
        %v3721 = vunpack.c.l.b16 %v1063
        %v3722 = vunpack.c.h.b16 %v1063
        %v3723 = vunpack.c.l.b16 %v1064
        %v3724 = vunpack.c.h.b16 %v1064
        %v3725 = vunpack.c.l.b16 %v1065
        %v3726 = vunpack.c.h.b16 %v1065
        %v3727 = vunpack.c.l.b16 %v1066
        %v3728 = vunpack.c.h.b16 %v1066
        %v3729 = vunpack.c.l.b16 %v1067
        %v3730 = vunpack.c.h.b16 %v1067
        %v3731 = vunpack.c.l.b16 %v1068
        %v3732 = vunpack.c.h.b16 %v1068
        %v3733 = vunpack.c.l.b16 %v1069
        %v3734 = vunpack.c.h.b16 %v1069
        %v3735 = vunpack.c.l.b16 %v1070
        %v3736 = vunpack.c.h.b16 %v1070
        %v3737 = vunpack.c.l.b16 %v1071
        %v3738 = vunpack.c.h.b16 %v1071
        %v3739 = vunpack.c.l.b16 %v1072
        %v3740 = vunpack.c.h.b16 %v1072
        %v3741 = vunpack.c.l.b16 %v1073
        %v3742 = vunpack.c.h.b16 %v1073
        %v3743 = vunpack.c.l.b16 %v1074
        %v3744 = vunpack.c.h.b16 %v1074
        %v3745 = vunpack.c.l.b16 %v1075
        %v3746 = vunpack.c.h.b16 %v1075
        %v3747 = vunpack.c.l.b16 %v1076
        %v3748 = vunpack.c.h.b16 %v1076
        %v3749 = vunpack.c.l.b16 %v1077
        %v3750 = vunpack.c.h.b16 %v1077
        %v3751 = vunpack.c.l.b16 %v1078
        %v3752 = vunpack.c.h.b16 %v1078
        %v3753 = vunpack.c.l.b16 %v1079
        %v3754 = vunpack.c.h.b16 %v1079
        %v3755 = vunpack.c.l.b16 %v1080
        %v3756 = vunpack.c.h.b16 %v1080
        %v3757 = vunpack.c.l.b16 %v1081
        %v3758 = vunpack.c.h.b16 %v1081
        %v3759 = vunpack.c.l.b16 %v1082
        %v3760 = vunpack.c.h.b16 %v1082
        %v3761 = vunpack.c.l.b16 %v1083
        %v3762 = vunpack.c.h.b16 %v1083
        %v3763 = vunpack.c.l.b16 %v1084
        %v3764 = vunpack.c.h.b16 %v1084
        %v3765 = vpack.c.b16 %v3709, %v3701
        %v3766 = vpack.c.b16 %v3710, %v3702
        %v3767 = vpack.c.b16 %v3711, %v3703
        %v3768 = vpack.c.b16 %v3712, %v3704
        %v3769 = vpack.c.b16 %v3713, %v3705
        %v3770 = vpack.c.b16 %v3714, %v3706
        %v3771 = vpack.c.b16 %v3715, %v3707
        %v3772 = vpack.c.b16 %v3716, %v3708
        %v3773 = vpack.c.b16 %v3725, %v3717
        %v3774 = vpack.c.b16 %v3726, %v3718
        %v3775 = vpack.c.b16 %v3727, %v3719
        %v3776 = vpack.c.b16 %v3728, %v3720
        %v3777 = vpack.c.b16 %v3729, %v3721
        %v3778 = vpack.c.b16 %v3730, %v3722
        %v3779 = vpack.c.b16 %v3731, %v3723
        %v3780 = vpack.c.b16 %v3732, %v3724
        %v3781 = vpack.c.b16 %v3741, %v3733
        %v3782 = vpack.c.b16 %v3742, %v3734
        %v3783 = vpack.c.b16 %v3743, %v3735
        %v3784 = vpack.c.b16 %v3744, %v3736
        %v3785 = vpack.c.b16 %v3745, %v3737
        %v3786 = vpack.c.b16 %v3746, %v3738
        %v3787 = vpack.c.b16 %v3747, %v3739
        %v3788 = vpack.c.b16 %v3748, %v3740
        %v3789 = vpack.c.b16 %v3757, %v3749
        %v3790 = vpack.c.b16 %v3758, %v3750
        %v3791 = vpack.c.b16 %v3759, %v3751
        %v3792 = vpack.c.b16 %v3760, %v3752
        %v3793 = vpack.c.b16 %v3761, %v3753
        %v3794 = vpack.c.b16 %v3762, %v3754
        %v3795 = vpack.c.b16 %v3763, %v3755
        %v3796 = vpack.c.b16 %v3764, %v3756
        %vm3829 = vcmask 523264
        %v3831 = vsel %vm3829, %v3665, 0
        %v3834 = vsel %vm3829, %v3666, 0
        %v3837 = vsel %vm3829, %v3667, 0
        %v3840 = vsel %vm3829, %v3668, 0
        %3842 = vmatprep.subr.bf16.mxu0 %v3766
        %3843 = vmatpush1.bf16.msra.mxu0 %v3765
        %3844 = vmatprep.subr.bf16.mxu0 %v3774
        %3845 = vmatpush1.bf16.msra.mxu0 %v3773
        %3846 = vmatprep.subr.bf16.mxu0 %v3782
        %3847 = vmatpush1.bf16.msra.mxu0 %v3781
        %3848 = vmatprep.subr.bf16.mxu0 %v3790
        %3849 = vmatpush1.bf16.msra.mxu0 %v3789
        %3850 = vmatprep.subr.bf16.mxu0 0
        %3851 = vmatpush1.bf16.msra.mxu0 0
        %3852 = vmatprep.subr.bf16.mxu0 0
        %3853 = vmatpush1.bf16.msra.mxu0 0
        %3854 = vmatprep.subr.bf16.mxu0 0
        %3855 = vmatpush1.bf16.msra.mxu0 0
        %3856 = vmatprep.subr.bf16.mxu0 0
        %3857 = vmatpush1.bf16.msra.mxu0 0
        %3858 = vmatprep.subr.bf16.mxu0 0
        %3859 = vmatpush1.bf16.msra.mxu0 0
        %3860 = vmatprep.subr.bf16.mxu0 0
        %3861 = vmatpush1.bf16.msra.mxu0 0
        %3862 = vmatprep.subr.bf16.mxu0 0
        %3863 = vmatpush1.bf16.msra.mxu0 0
        %3864 = vmatprep.subr.bf16.mxu0 0
        %3865 = vmatpush1.bf16.msra.mxu0 0
        %3866 = vmatprep.subr.bf16.mxu0 0
        %3867 = vmatpush1.bf16.msra.mxu0 0
        %3868 = vmatprep.subr.bf16.mxu0 0
        %3869 = vmatpush1.bf16.msra.mxu0 0
        %3870 = vmatprep.subr.bf16.mxu0 0
        %3871 = vmatpush1.bf16.msra.mxu0 0
        %3872 = vmatprep.subr.bf16.mxu0 0
        %3873 = vmatpush1.bf16.msra.mxu0 0
        %3874 = vmatprep.mubr.bf16.mxu0 0
        %3875 = vmatmul.mubr.bf16.gmra.mrb[0].mxu0 %v3831
        %v3876 = vpop.f32.mrb[0].mxu0
        %v3877 = vadd.f32 0.0, %v3876
        %v3878 = vpop.f32.mrb[0].mxu0
        %v3879 = vadd.f32 0.0, %v3878
        %v3880 = vpop.f32.mrb[0].mxu0
        %v3881 = vadd.f32 0.0, %v3880
        %v3882 = vpop.f32.mrb[0].mxu0
        %v3883 = vadd.f32 0.0, %v3882
        %3884 = vmatprep.mubr.bf16.mxu0 0
        %3885 = vmatmul.mubr.bf16.gmra.mrb[0].mxu0 %v3834
        %v3886 = vpop.f32.mrb[0].mxu0
        %v3887 = vadd.f32 0.0, %v3886
        %v3888 = vpop.f32.mrb[0].mxu0
        %v3889 = vadd.f32 0.0, %v3888
        %v3890 = vpop.f32.mrb[0].mxu0
        %v3891 = vadd.f32 0.0, %v3890
        %v3892 = vpop.f32.mrb[0].mxu0
        %v3893 = vadd.f32 0.0, %v3892
        %3894 = vmatprep.mubr.bf16.mxu0 0
        %3895 = vmatmul.mubr.bf16.gmra.mrb[0].mxu0 %v3837
        %v3896 = vpop.f32.mrb[0].mxu0
        %v3897 = vadd.f32 0.0, %v3896
        %v3898 = vpop.f32.mrb[0].mxu0
        %v3899 = vadd.f32 0.0, %v3898
        %v3900 = vpop.f32.mrb[0].mxu0
        %v3901 = vadd.f32 0.0, %v3900
        %v3902 = vpop.f32.mrb[0].mxu0
        %v3903 = vadd.f32 0.0, %v3902
        %3904 = vmatprep.mubr.bf16.mxu0 0
        %3905 = vmatmul.mubr.bf16.gmra.mrb[0].mxu0 %v3840
        %v3906 = vpop.f32.mrb[0].mxu0
        %v3907 = vadd.f32 0.0, %v3906
        %v3908 = vpop.f32.mrb[0].mxu0
        %v3909 = vadd.f32 0.0, %v3908
        %v3910 = vpop.f32.mrb[0].mxu0
        %v3911 = vadd.f32 0.0, %v3910
        %v3912 = vpop.f32.mrb[0].mxu0
        %v3913 = vadd.f32 0.0, %v3912
        %3914 = vdwg.mxu0
        %3915 = vmatprep.subr.bf16.mxu0 %v3768
        %3916 = vmatpush1.bf16.msra.mxu0 %v3767
        %3917 = vmatprep.subr.bf16.mxu0 %v3776
        %3918 = vmatpush1.bf16.msra.mxu0 %v3775
        %3919 = vmatprep.subr.bf16.mxu0 %v3784
        %3920 = vmatpush1.bf16.msra.mxu0 %v3783
        %3921 = vmatprep.subr.bf16.mxu0 %v3792
        %3922 = vmatpush1.bf16.msra.mxu0 %v3791
        %3923 = vmatprep.subr.bf16.mxu0 0
        %3924 = vmatpush1.bf16.msra.mxu0 0
        %3925 = vmatprep.subr.bf16.mxu0 0
        %3926 = vmatpush1.bf16.msra.mxu0 0
        %3927 = vmatprep.subr.bf16.mxu0 0
        %3928 = vmatpush1.bf16.msra.mxu0 0
        %3929 = vmatprep.subr.bf16.mxu0 0
        %3930 = vmatpush1.bf16.msra.mxu0 0
        %3931 = vmatprep.subr.bf16.mxu0 0
        %3932 = vmatpush1.bf16.msra.mxu0 0
        %3933 = vmatprep.subr.bf16.mxu0 0
        %3934 = vmatpush1.bf16.msra.mxu0 0
        %3935 = vmatprep.subr.bf16.mxu0 0
        %3936 = vmatpush1.bf16.msra.mxu0 0
        %3937 = vmatprep.subr.bf16.mxu0 0
        %3938 = vmatpush1.bf16.msra.mxu0 0
        %3939 = vmatprep.subr.bf16.mxu0 0
        %3940 = vmatpush1.bf16.msra.mxu0 0
        %3941 = vmatprep.subr.bf16.mxu0 0
        %3942 = vmatpush1.bf16.msra.mxu0 0
        %3943 = vmatprep.subr.bf16.mxu0 0
        %3944 = vmatpush1.bf16.msra.mxu0 0
        %3945 = vmatprep.subr.bf16.mxu0 0
        %3946 = vmatpush1.bf16.msra.mxu0 0
        %3947 = vmatprep.mubr.bf16.mxu0 0
        %3948 = vmatmul.mubr.bf16.gmra.mrb[0].mxu0 %v3831
        %v3949 = vpop.f32.mrb[0].mxu0
        %v3950 = vadd.f32 0.0, %v3949
        %v3951 = vpop.f32.mrb[0].mxu0
        %v3952 = vadd.f32 0.0, %v3951
        %v3953 = vpop.f32.mrb[0].mxu0
        %v3954 = vadd.f32 0.0, %v3953
        %v3955 = vpop.f32.mrb[0].mxu0
        %v3956 = vadd.f32 0.0, %v3955
        %3957 = vmatprep.mubr.bf16.mxu0 0
        %3958 = vmatmul.mubr.bf16.gmra.mrb[0].mxu0 %v3834
        %v3959 = vpop.f32.mrb[0].mxu0
        %v3960 = vadd.f32 0.0, %v3959
        %v3961 = vpop.f32.mrb[0].mxu0
        %v3962 = vadd.f32 0.0, %v3961
        %v3963 = vpop.f32.mrb[0].mxu0
        %v3964 = vadd.f32 0.0, %v3963
        %v3965 = vpop.f32.mrb[0].mxu0
        %v3966 = vadd.f32 0.0, %v3965
        %3967 = vmatprep.mubr.bf16.mxu0 0
        %3968 = vmatmul.mubr.bf16.gmra.mrb[0].mxu0 %v3837
        %v3969 = vpop.f32.mrb[0].mxu0
        %v3970 = vadd.f32 0.0, %v3969
        %v3971 = vpop.f32.mrb[0].mxu0
        %v3972 = vadd.f32 0.0, %v3971
        %v3973 = vpop.f32.mrb[0].mxu0
        %v3974 = vadd.f32 0.0, %v3973
        %v3975 = vpop.f32.mrb[0].mxu0
        %v3976 = vadd.f32 0.0, %v3975
        %3977 = vmatprep.mubr.bf16.mxu0 0
        %3978 = vmatmul.mubr.bf16.gmra.mrb[0].mxu0 %v3840
        %v3979 = vpop.f32.mrb[0].mxu0
        %v3980 = vadd.f32 0.0, %v3979
        %v3981 = vpop.f32.mrb[0].mxu0
        %v3982 = vadd.f32 0.0, %v3981
        %v3983 = vpop.f32.mrb[0].mxu0
        %v3984 = vadd.f32 0.0, %v3983
        %v3985 = vpop.f32.mrb[0].mxu0
        %v3986 = vadd.f32 0.0, %v3985
        %3987 = vdwg.mxu0
        %3988 = vmatprep.subr.bf16.mxu0 %v3770
        %3989 = vmatpush1.bf16.msra.mxu0 %v3769
        %3990 = vmatprep.subr.bf16.mxu0 %v3778
        %3991 = vmatpush1.bf16.msra.mxu0 %v3777
        %3992 = vmatprep.subr.bf16.mxu0 %v3786
        %3993 = vmatpush1.bf16.msra.mxu0 %v3785
        %3994 = vmatprep.subr.bf16.mxu0 %v3794
        %3995 = vmatpush1.bf16.msra.mxu0 %v3793
        %3996 = vmatprep.subr.bf16.mxu0 0
        %3997 = vmatpush1.bf16.msra.mxu0 0
        %3998 = vmatprep.subr.bf16.mxu0 0
        %3999 = vmatpush1.bf16.msra.mxu0 0
        %4000 = vmatprep.subr.bf16.mxu0 0
        %4001 = vmatpush1.bf16.msra.mxu0 0
        %4002 = vmatprep.subr.bf16.mxu0 0
        %4003 = vmatpush1.bf16.msra.mxu0 0
        %4004 = vmatprep.subr.bf16.mxu0 0
        %4005 = vmatpush1.bf16.msra.mxu0 0
        %4006 = vmatprep.subr.bf16.mxu0 0
        %4007 = vmatpush1.bf16.msra.mxu0 0
        %4008 = vmatprep.subr.bf16.mxu0 0
        %4009 = vmatpush1.bf16.msra.mxu0 0
        %4010 = vmatprep.subr.bf16.mxu0 0
        %4011 = vmatpush1.bf16.msra.mxu0 0
        %4012 = vmatprep.subr.bf16.mxu0 0
        %4013 = vmatpush1.bf16.msra.mxu0 0
        %4014 = vmatprep.subr.bf16.mxu0 0
        %4015 = vmatpush1.bf16.msra.mxu0 0
        %4016 = vmatprep.subr.bf16.mxu0 0
        %4017 = vmatpush1.bf16.msra.mxu0 0
        %4018 = vmatprep.subr.bf16.mxu0 0
        %4019 = vmatpush1.bf16.msra.mxu0 0
        %4020 = vmatprep.mubr.bf16.mxu0 0
        %4021 = vmatmul.mubr.bf16.gmra.mrb[0].mxu0 %v3831
        %v4022 = vpop.f32.mrb[0].mxu0
        %v4023 = vadd.f32 0.0, %v4022
        %v4024 = vpop.f32.mrb[0].mxu0
        %v4025 = vadd.f32 0.0, %v4024
        %v4026 = vpop.f32.mrb[0].mxu0
        %v4027 = vadd.f32 0.0, %v4026
        %v4028 = vpop.f32.mrb[0].mxu0
        %v4029 = vadd.f32 0.0, %v4028
        %4030 = vmatprep.mubr.bf16.mxu0 0
        %4031 = vmatmul.mubr.bf16.gmra.mrb[0].mxu0 %v3834
        %v4032 = vpop.f32.mrb[0].mxu0
        %v4033 = vadd.f32 0.0, %v4032
        %v4034 = vpop.f32.mrb[0].mxu0
        %v4035 = vadd.f32 0.0, %v4034
        %v4036 = vpop.f32.mrb[0].mxu0
        %v4037 = vadd.f32 0.0, %v4036
        %v4038 = vpop.f32.mrb[0].mxu0
        %v4039 = vadd.f32 0.0, %v4038
        %4040 = vmatprep.mubr.bf16.mxu0 0
        %4041 = vmatmul.mubr.bf16.gmra.mrb[0].mxu0 %v3837
        %v4042 = vpop.f32.mrb[0].mxu0
        %v4043 = vadd.f32 0.0, %v4042
        %v4044 = vpop.f32.mrb[0].mxu0
        %v4045 = vadd.f32 0.0, %v4044
        %v4046 = vpop.f32.mrb[0].mxu0
        %v4047 = vadd.f32 0.0, %v4046
        %v4048 = vpop.f32.mrb[0].mxu0
        %v4049 = vadd.f32 0.0, %v4048
        %4050 = vmatprep.mubr.bf16.mxu0 0
        %4051 = vmatmul.mubr.bf16.gmra.mrb[0].mxu0 %v3840
        %v4052 = vpop.f32.mrb[0].mxu0
        %v4053 = vadd.f32 0.0, %v4052
        %v4054 = vpop.f32.mrb[0].mxu0
        %v4055 = vadd.f32 0.0, %v4054
        %v4056 = vpop.f32.mrb[0].mxu0
        %v4057 = vadd.f32 0.0, %v4056
        %v4058 = vpop.f32.mrb[0].mxu0
        %v4059 = vadd.f32 0.0, %v4058
        %4060 = vdwg.mxu0
        %4061 = vmatprep.subr.bf16.mxu0 %v3772
        %4062 = vmatpush1.bf16.msra.mxu0 %v3771
        %4063 = vmatprep.subr.bf16.mxu0 %v3780
        %4064 = vmatpush1.bf16.msra.mxu0 %v3779
        %4065 = vmatprep.subr.bf16.mxu0 %v3788
        %4066 = vmatpush1.bf16.msra.mxu0 %v3787
        %4067 = vmatprep.subr.bf16.mxu0 %v3796
        %4068 = vmatpush1.bf16.msra.mxu0 %v3795
        %4069 = vmatprep.subr.bf16.mxu0 0
        %4070 = vmatpush1.bf16.msra.mxu0 0
        %4071 = vmatprep.subr.bf16.mxu0 0
        %4072 = vmatpush1.bf16.msra.mxu0 0
        %4073 = vmatprep.subr.bf16.mxu0 0
        %4074 = vmatpush1.bf16.msra.mxu0 0
        %4075 = vmatprep.subr.bf16.mxu0 0
        %4076 = vmatpush1.bf16.msra.mxu0 0
        %4077 = vmatprep.subr.bf16.mxu0 0
        %4078 = vmatpush1.bf16.msra.mxu0 0
        %4079 = vmatprep.subr.bf16.mxu0 0
        %4080 = vmatpush1.bf16.msra.mxu0 0
        %4081 = vmatprep.subr.bf16.mxu0 0
        %4082 = vmatpush1.bf16.msra.mxu0 0
        %4083 = vmatprep.subr.bf16.mxu0 0
        %4084 = vmatpush1.bf16.msra.mxu0 0
        %4085 = vmatprep.subr.bf16.mxu0 0
        %4086 = vmatpush1.bf16.msra.mxu0 0
        %4087 = vmatprep.subr.bf16.mxu0 0
        %4088 = vmatpush1.bf16.msra.mxu0 0
        %4089 = vmatprep.subr.bf16.mxu0 0
        %4090 = vmatpush1.bf16.msra.mxu0 0
        %4091 = vmatprep.subr.bf16.mxu0 0
        %4092 = vmatpush1.bf16.msra.mxu0 0
        %4093 = vmatprep.mubr.bf16.mxu0 0
        %4094 = vmatmul.mubr.bf16.gmra.mrb[0].mxu0 %v3831
        %v4095 = vpop.f32.mrb[0].mxu0
        %v4096 = vadd.f32 0.0, %v4095
        %v4097 = vpop.f32.mrb[0].mxu0
        %v4098 = vadd.f32 0.0, %v4097
        %v4099 = vpop.f32.mrb[0].mxu0
        %v4100 = vadd.f32 0.0, %v4099
        %v4101 = vpop.f32.mrb[0].mxu0
        %v4102 = vadd.f32 0.0, %v4101
        %4103 = vmatprep.mubr.bf16.mxu0 0
        %4104 = vmatmul.mubr.bf16.gmra.mrb[0].mxu0 %v3834
        %v4105 = vpop.f32.mrb[0].mxu0
        %v4106 = vadd.f32 0.0, %v4105
        %v4107 = vpop.f32.mrb[0].mxu0
        %v4108 = vadd.f32 0.0, %v4107
        %v4109 = vpop.f32.mrb[0].mxu0
        %v4110 = vadd.f32 0.0, %v4109
        %v4111 = vpop.f32.mrb[0].mxu0
        %v4112 = vadd.f32 0.0, %v4111
        %4113 = vmatprep.mubr.bf16.mxu0 0
        %4114 = vmatmul.mubr.bf16.gmra.mrb[0].mxu0 %v3837
        %v4115 = vpop.f32.mrb[0].mxu0
        %v4116 = vadd.f32 0.0, %v4115
        %v4117 = vpop.f32.mrb[0].mxu0
        %v4118 = vadd.f32 0.0, %v4117
        %v4119 = vpop.f32.mrb[0].mxu0
        %v4120 = vadd.f32 0.0, %v4119
        %v4121 = vpop.f32.mrb[0].mxu0
        %v4122 = vadd.f32 0.0, %v4121
        %4123 = vmatprep.mubr.bf16.mxu0 0
        %4124 = vmatmul.mubr.bf16.gmra.mrb[0].mxu0 %v3840
        %v4125 = vpop.f32.mrb[0].mxu0
        %v4126 = vadd.f32 0.0, %v4125
        %v4127 = vpop.f32.mrb[0].mxu0
        %v4128 = vadd.f32 0.0, %v4127
        %v4129 = vpop.f32.mrb[0].mxu0
        %v4130 = vadd.f32 0.0, %v4129
        %v4131 = vpop.f32.mrb[0].mxu0
        %v4132 = vadd.f32 0.0, %v4131
        %4133 = vdwg.mxu0
        %v4134 = vmul.f32 %v3877, %v1085
        %v4135 = vmul.f32 %v3879, %v1086
        %v4136 = vmul.f32 %v3950, %v1087
        %v4137 = vmul.f32 %v3952, %v1088
        %v4138 = vmul.f32 %v4023, %v1089
        %v4139 = vmul.f32 %v4025, %v1090
        %v4140 = vmul.f32 %v4096, %v1091
        %v4141 = vmul.f32 %v4098, %v1092
        %v4142 = vmul.f32 %v3881, %v1093
        %v4143 = vmul.f32 %v3883, %v1094
        %v4144 = vmul.f32 %v3954, %v1095
        %v4145 = vmul.f32 %v3956, %v1096
        %v4146 = vmul.f32 %v4027, %v1097
        %v4147 = vmul.f32 %v4029, %v1098
        %v4148 = vmul.f32 %v4100, %v1099
        %v4149 = vmul.f32 %v4102, %v1100
        %v4150 = vmul.f32 %v3887, %v1101
        %v4151 = vmul.f32 %v3889, %v1102
        %v4152 = vmul.f32 %v3960, %v1103
        %v4153 = vmul.f32 %v3962, %v1104
        %v4154 = vmul.f32 %v4033, %v1105
        %v4155 = vmul.f32 %v4035, %v1106
        %v4156 = vmul.f32 %v4106, %v1107
        %v4157 = vmul.f32 %v4108, %v1108
        %v4158 = vmul.f32 %v3891, %v1109
        %v4159 = vmul.f32 %v3893, %v1110
        %v4160 = vmul.f32 %v3964, %v1111
        %v4161 = vmul.f32 %v3966, %v1112
        %v4162 = vmul.f32 %v4037, %v1113
        %v4163 = vmul.f32 %v4039, %v1114
        %v4164 = vmul.f32 %v4110, %v1115
        %v4165 = vmul.f32 %v4112, %v1116
        %v4166 = vadd.f32 %v4134, %v4142
        %v4167 = vadd.f32 %v4166, %v4150
        %v4168 = vadd.f32 %v4167, %v4158
        %v4169 = vrot.slane %v4168, 4
        %v4170 = vadd.f32 %v4168, %v4169
        %v4171 = vrot.slane %v4170, 2
        %v4172 = vadd.f32 %v4170, %v4171
        %v4173 = vrot.slane %v4172, 1
        %v4174 = vadd.f32 %v4172, %v4173
        %v4175 = vadd.f32 %v4135, %v4143
        %v4176 = vadd.f32 %v4175, %v4151
        %v4177 = vadd.f32 %v4176, %v4159
        %v4178 = vrot.slane %v4177, 4
        %v4179 = vadd.f32 %v4177, %v4178
        %v4180 = vrot.slane %v4179, 2
        %v4181 = vadd.f32 %v4179, %v4180
        %v4182 = vrot.slane %v4181, 1
        %v4183 = vadd.f32 %v4181, %v4182
        %v4184 = vadd.f32 %v4136, %v4144
        %v4185 = vadd.f32 %v4184, %v4152
        %v4186 = vadd.f32 %v4185, %v4160
        %v4187 = vrot.slane %v4186, 4
        %v4188 = vadd.f32 %v4186, %v4187
        %v4189 = vrot.slane %v4188, 2
        %v4190 = vadd.f32 %v4188, %v4189
        %v4191 = vrot.slane %v4190, 1
        %v4192 = vadd.f32 %v4190, %v4191
        %v4193 = vadd.f32 %v4137, %v4145
        %v4194 = vadd.f32 %v4193, %v4153
        %v4195 = vadd.f32 %v4194, %v4161
        %v4196 = vrot.slane %v4195, 4
        %v4197 = vadd.f32 %v4195, %v4196
        %v4198 = vrot.slane %v4197, 2
        %v4199 = vadd.f32 %v4197, %v4198
        %v4200 = vrot.slane %v4199, 1
        %v4201 = vadd.f32 %v4199, %v4200
        %v4202 = vadd.f32 %v4138, %v4146
        %v4203 = vadd.f32 %v4202, %v4154
        %v4204 = vadd.f32 %v4203, %v4162
        %v4205 = vrot.slane %v4204, 4
        %v4206 = vadd.f32 %v4204, %v4205
        %v4207 = vrot.slane %v4206, 2
        %v4208 = vadd.f32 %v4206, %v4207
        %v4209 = vrot.slane %v4208, 1
        %v4210 = vadd.f32 %v4208, %v4209
        %v4211 = vadd.f32 %v4139, %v4147
        %v4212 = vadd.f32 %v4211, %v4155
        %v4213 = vadd.f32 %v4212, %v4163
        %v4214 = vrot.slane %v4213, 4
        %v4215 = vadd.f32 %v4213, %v4214
        %v4216 = vrot.slane %v4215, 2
        %v4217 = vadd.f32 %v4215, %v4216
        %v4218 = vrot.slane %v4217, 1
        %v4219 = vadd.f32 %v4217, %v4218
        %v4220 = vadd.f32 %v4140, %v4148
        %v4221 = vadd.f32 %v4220, %v4156
        %v4222 = vadd.f32 %v4221, %v4164
        %v4223 = vrot.slane %v4222, 4
        %v4224 = vadd.f32 %v4222, %v4223
        %v4225 = vrot.slane %v4224, 2
        %v4226 = vadd.f32 %v4224, %v4225
        %v4227 = vrot.slane %v4226, 1
        %v4228 = vadd.f32 %v4226, %v4227
        %v4229 = vadd.f32 %v4141, %v4149
        %v4230 = vadd.f32 %v4229, %v4157
        %v4231 = vadd.f32 %v4230, %v4165
        %v4232 = vrot.slane %v4231, 4
        %v4233 = vadd.f32 %v4231, %v4232
        %v4234 = vrot.slane %v4233, 2
        %v4235 = vadd.f32 %v4233, %v4234
        %v4236 = vrot.slane %v4235, 1
        %v4237 = vadd.f32 %v4235, %v4236
        %v4238 = vmul.f32 %v3897, %v1085
        %v4239 = vmul.f32 %v3899, %v1086
        %v4240 = vmul.f32 %v3970, %v1087
        %v4241 = vmul.f32 %v3972, %v1088
        %v4242 = vmul.f32 %v4043, %v1089
        %v4243 = vmul.f32 %v4045, %v1090
        %v4244 = vmul.f32 %v4116, %v1091
        %v4245 = vmul.f32 %v4118, %v1092
        %v4246 = vmul.f32 %v3901, %v1093
        %v4247 = vmul.f32 %v3903, %v1094
        %v4248 = vmul.f32 %v3974, %v1095
        %v4249 = vmul.f32 %v3976, %v1096
        %v4250 = vmul.f32 %v4047, %v1097
        %v4251 = vmul.f32 %v4049, %v1098
        %v4252 = vmul.f32 %v4120, %v1099
        %v4253 = vmul.f32 %v4122, %v1100
        %v4254 = vmul.f32 %v3907, %v1101
        %v4255 = vmul.f32 %v3909, %v1102
        %v4256 = vmul.f32 %v3980, %v1103
        %v4257 = vmul.f32 %v3982, %v1104
        %v4258 = vmul.f32 %v4053, %v1105
        %v4259 = vmul.f32 %v4055, %v1106
        %v4260 = vmul.f32 %v4126, %v1107
        %v4261 = vmul.f32 %v4128, %v1108
        %v4262 = vmul.f32 %v3911, %v1109
        %v4263 = vmul.f32 %v3913, %v1110
        %v4264 = vmul.f32 %v3984, %v1111
        %v4265 = vmul.f32 %v3986, %v1112
        %v4266 = vmul.f32 %v4057, %v1113
        %v4267 = vmul.f32 %v4059, %v1114
        %v4268 = vmul.f32 %v4130, %v1115
        %v4269 = vmul.f32 %v4132, %v1116
        %v4270 = vadd.f32 %v4238, %v4246
        %v4271 = vadd.f32 %v4270, %v4254
        %v4272 = vadd.f32 %v4271, %v4262
        %v4273 = vrot.slane %v4272, 4
        %v4274 = vadd.f32 %v4272, %v4273
        %v4275 = vrot.slane %v4274, 2
        %v4276 = vadd.f32 %v4274, %v4275
        %v4277 = vrot.slane %v4276, 1
        %v4278 = vadd.f32 %v4276, %v4277
        %v4279 = vadd.f32 %v4239, %v4247
        %v4280 = vadd.f32 %v4279, %v4255
        %v4281 = vadd.f32 %v4280, %v4263
        %v4282 = vrot.slane %v4281, 4
        %v4283 = vadd.f32 %v4281, %v4282
        %v4284 = vrot.slane %v4283, 2
        %v4285 = vadd.f32 %v4283, %v4284
        %v4286 = vrot.slane %v4285, 1
        %v4287 = vadd.f32 %v4285, %v4286
        %v4288 = vadd.f32 %v4240, %v4248
        %v4289 = vadd.f32 %v4288, %v4256
        %v4290 = vadd.f32 %v4289, %v4264
        %v4291 = vrot.slane %v4290, 4
        %v4292 = vadd.f32 %v4290, %v4291
        %v4293 = vrot.slane %v4292, 2
        %v4294 = vadd.f32 %v4292, %v4293
        %v4295 = vrot.slane %v4294, 1
        %v4296 = vadd.f32 %v4294, %v4295
        %v4297 = vadd.f32 %v4241, %v4249
        %v4298 = vadd.f32 %v4297, %v4257
        %v4299 = vadd.f32 %v4298, %v4265
        %v4300 = vrot.slane %v4299, 4
        %v4301 = vadd.f32 %v4299, %v4300
        %v4302 = vrot.slane %v4301, 2
        %v4303 = vadd.f32 %v4301, %v4302
        %v4304 = vrot.slane %v4303, 1
        %v4305 = vadd.f32 %v4303, %v4304
        %v4306 = vadd.f32 %v4242, %v4250
        %v4307 = vadd.f32 %v4306, %v4258
        %v4308 = vadd.f32 %v4307, %v4266
        %v4309 = vrot.slane %v4308, 4
        %v4310 = vadd.f32 %v4308, %v4309
        %v4311 = vrot.slane %v4310, 2
        %v4312 = vadd.f32 %v4310, %v4311
        %v4313 = vrot.slane %v4312, 1
        %v4314 = vadd.f32 %v4312, %v4313
        %v4315 = vadd.f32 %v4243, %v4251
        %v4316 = vadd.f32 %v4315, %v4259
        %v4317 = vadd.f32 %v4316, %v4267
        %v4318 = vrot.slane %v4317, 4
        %v4319 = vadd.f32 %v4317, %v4318
        %v4320 = vrot.slane %v4319, 2
        %v4321 = vadd.f32 %v4319, %v4320
        %v4322 = vrot.slane %v4321, 1
        %v4323 = vadd.f32 %v4321, %v4322
        %v4324 = vadd.f32 %v4244, %v4252
        %v4325 = vadd.f32 %v4324, %v4260
        %v4326 = vadd.f32 %v4325, %v4268
        %v4327 = vrot.slane %v4326, 4
        %v4328 = vadd.f32 %v4326, %v4327
        %v4329 = vrot.slane %v4328, 2
        %v4330 = vadd.f32 %v4328, %v4329
        %v4331 = vrot.slane %v4330, 1
        %v4332 = vadd.f32 %v4330, %v4331
        %v4333 = vadd.f32 %v4245, %v4253
        %v4334 = vadd.f32 %v4333, %v4261
        %v4335 = vadd.f32 %v4334, %v4269
        %v4336 = vrot.slane %v4335, 4
        %v4337 = vadd.f32 %v4335, %v4336
        %v4338 = vrot.slane %v4337, 2
        %v4339 = vadd.f32 %v4337, %v4338
        %v4340 = vrot.slane %v4339, 1
        %v4341 = vadd.f32 %v4339, %v4340
        %v4350 = vcombine.low %v4174, %v4183
        %v4351 = vcombine.low %v4192, %v4201
        %v4352 = vcombine.low %v4210, %v4219
        %v4353 = vcombine.low %v4228, %v4237
        %v4355 = vunpack.c.l.s4 1966171168
        %v4356 = vunpack.c.0.s8 %v4355
        %v4357 = vlaneseq
        %v4358 = vshrl.u32 %v4357, 7
        %v4359 = vsub.s32 %v4356, %v4358
        %v4360 = vrot.slane %v4350, %v4359
        %v4362 = vunpack.c.l.s4 1966171168
        %v4363 = vunpack.c.0.s8 %v4362
        %v4364 = vlaneseq
        %v4365 = vshrl.u32 %v4364, 7
        %v4366 = vsub.s32 %v4363, %v4365
        %v4367 = vrot.slane %v4351, %v4366
        %v4369 = vunpack.c.l.s4 1966171168
        %v4370 = vunpack.c.0.s8 %v4369
        %v4371 = vlaneseq
        %v4372 = vshrl.u32 %v4371, 7
        %v4373 = vsub.s32 %v4370, %v4372
        %v4374 = vrot.slane %v4352, %v4373
        %v4376 = vunpack.c.l.s4 1966171168
        %v4377 = vunpack.c.0.s8 %v4376
        %v4378 = vlaneseq
        %v4379 = vshrl.u32 %v4378, 7
        %v4380 = vsub.s32 %v4377, %v4379
        %v4381 = vrot.slane %v4353, %v4380
        %v4382 = vcombine.low %v4360, %v4367
        %v4383 = vcombine.low %v4374, %v4381
        %v4385 = vunpack.c.l.s4 1966171168
        %v4386 = vunpack.c.0.s8 %v4385
        %v4387 = vlaneseq
        %v4388 = vshrl.u32 %v4387, 7
        %v4389 = vsub.s32 %v4386, %v4388
        %v4390 = vrot.slane %v4382, %v4389
        %v4392 = vunpack.c.l.s4 1966171168
        %v4393 = vunpack.c.0.s8 %v4392
        %v4394 = vlaneseq
        %v4395 = vshrl.u32 %v4394, 7
        %v4396 = vsub.s32 %v4393, %v4395
        %v4397 = vrot.slane %v4383, %v4396
        %v4398 = vcombine.low %v4390, %v4397
        %4400 = vst [vmem:[%s882] sm:$0xff] %v4398
        %v4409 = vcombine.low %v4278, %v4287
        %v4410 = vcombine.low %v4296, %v4305
        %v4411 = vcombine.low %v4314, %v4323
        %v4412 = vcombine.low %v4332, %v4341
        %v4414 = vunpack.c.l.s4 1966171168
        %v4415 = vunpack.c.0.s8 %v4414
        %v4416 = vlaneseq
        %v4417 = vshrl.u32 %v4416, 7
        %v4418 = vsub.s32 %v4415, %v4417
        %v4419 = vrot.slane %v4409, %v4418
        %v4421 = vunpack.c.l.s4 1966171168
        %v4422 = vunpack.c.0.s8 %v4421
        %v4423 = vlaneseq
        %v4424 = vshrl.u32 %v4423, 7
        %v4425 = vsub.s32 %v4422, %v4424
        %v4426 = vrot.slane %v4410, %v4425
        %v4428 = vunpack.c.l.s4 1966171168
        %v4429 = vunpack.c.0.s8 %v4428
        %v4430 = vlaneseq
        %v4431 = vshrl.u32 %v4430, 7
        %v4432 = vsub.s32 %v4429, %v4431
        %v4433 = vrot.slane %v4411, %v4432
        %v4435 = vunpack.c.l.s4 1966171168
        %v4436 = vunpack.c.0.s8 %v4435
        %v4437 = vlaneseq
        %v4438 = vshrl.u32 %v4437, 7
        %v4439 = vsub.s32 %v4436, %v4438
        %v4440 = vrot.slane %v4412, %v4439
        %v4441 = vcombine.low %v4419, %v4426
        %v4442 = vcombine.low %v4433, %v4440
        %v4444 = vunpack.c.l.s4 1966171168
        %v4445 = vunpack.c.0.s8 %v4444
        %v4446 = vlaneseq
        %v4447 = vshrl.u32 %v4446, 7
        %v4448 = vsub.s32 %v4445, %v4447
        %v4449 = vrot.slane %v4441, %v4448
        %v4451 = vunpack.c.l.s4 1966171168
        %v4452 = vunpack.c.0.s8 %v4451
        %v4453 = vlaneseq
        %v4454 = vshrl.u32 %v4453, 7
        %v4455 = vsub.s32 %v4452, %v4454
        %v4456 = vrot.slane %v4442, %v4455
        %v4457 = vcombine.low %v4449, %v4456
        %4459 = vst [vmem:[%s886] sm:$0xff] %v4457
        %v4460 = vsel %vm1399, %v4278, %v4174
        %v4461 = vsel %vm1399, %v4287, %v4183
        %v4462 = vsel %vm1399, %v4296, %v4192
        %v4463 = vsel %vm1399, %v4305, %v4201
        %v4464 = vsel %vm1399, %v4314, %v4210
        %v4465 = vsel %vm1399, %v4323, %v4219
        %v4466 = vsel %vm1399, %v4332, %v4228
        %v4467 = vsel %vm1399, %v4341, %v4237
        %v4468 = vld [vmem:[%s7] sm:$0xf]
        %v4469 = vld [vmem:[%s7 + $0x4] sm:$0xf]
        %v4470 = vld [vmem:[%s7 + $0x8] sm:$0xf]
        %v4471 = vld [vmem:[%s7 + $0xc] sm:$0xf]
        %v4472 = vld [vmem:[%s8] sm:$0xff]
        %v4473 = vld [vmem:[%s8 + $0x8] sm:$0xff]
        %v4474 = vld [vmem:[%s8 + $0x10] sm:$0xff]
        %v4475 = vld [vmem:[%s8 + $0x18] sm:$0xff]
        %v4476 = vld [vmem:[#allocation5] sm:$0xff]
        %v4477 = vld [vmem:[#allocation5 + $0x8] sm:$0xff]
        %v4478 = vld [vmem:[#allocation5 + $0x10] sm:$0xff]
        %v4479 = vld [vmem:[#allocation5 + $0x18] sm:$0xff]
        %v4480 = vld [vmem:[#allocation5 + $0x20] sm:$0xff]
        %v4481 = vld [vmem:[#allocation5 + $0x28] sm:$0xff]
        %v4482 = vld [vmem:[#allocation5 + $0x30] sm:$0xff]
        %v4483 = vld [vmem:[#allocation5 + $0x38] sm:$0xff]
        %v4484 = vld [vmem:[%s10] sm:$0xff]
        %v4485 = vld [vmem:[%s10 + $0x8] sm:$0xff]
        %v4486 = vld [vmem:[%s10 + $0x10] sm:$0xff]
        %v4487 = vld [vmem:[%s10 + $0x18] sm:$0xff]
        %v4488 = vld [vmem:[#allocation7] sm:$0xff]
        %v4489 = vld [vmem:[#allocation7 + $0x8] sm:$0xff]
        %v4490 = vld [vmem:[#allocation7 + $0x10] sm:$0xff]
        %v4491 = vld [vmem:[#allocation7 + $0x18] sm:$0xff]
        %v4492 = vld [vmem:[#allocation7 + $0x20] sm:$0xff]
        %v4493 = vld [vmem:[#allocation7 + $0x28] sm:$0xff]
        %v4494 = vld [vmem:[#allocation7 + $0x30] sm:$0xff]
        %v4495 = vld [vmem:[#allocation7 + $0x38] sm:$0xff]
        %v4496 = vld [vmem:[%s12] sm:$0xff]
        %v4497 = vld [vmem:[%s12 + $0x8] sm:$0xff]
        %v4498 = vld [vmem:[%s12 + $0x10] sm:$0xff]
        %v4499 = vld [vmem:[%s12 + $0x18] sm:$0xff]
        %4508 = vrot.lane.b32.xlu0 %v4460, 2
        %v4509 = vpop.permute.xlu0 %4508
        %4510 = vrot.lane.b32.xlu0 %v4461, 2
        %v4511 = vpop.permute.xlu0 %4510
        %4512 = vrot.lane.b32.xlu0 %v4462, 2
        %v4513 = vpop.permute.xlu0 %4512
        %4514 = vrot.lane.b32.xlu0 %v4463, 2
        %v4515 = vpop.permute.xlu0 %4514
        %4516 = vrot.lane.b32.xlu0 %v4464, 2
        %v4517 = vpop.permute.xlu0 %4516
        %4518 = vrot.lane.b32.xlu0 %v4465, 2
        %v4519 = vpop.permute.xlu0 %4518
        %4520 = vrot.lane.b32.xlu0 %v4466, 2
        %v4521 = vpop.permute.xlu0 %4520
        %4522 = vrot.lane.b32.xlu0 %v4467, 2
        %v4523 = vpop.permute.xlu0 %4522
        %v4524 = vsel %vm1202, %v4509, %v4511
        %v4525 = vsel %vm1202, %v4511, %v4513
        %v4526 = vsel %vm1202, %v4513, %v4515
        %v4527 = vsel %vm1202, %v4515, %v4517
        %v4528 = vsel %vm1202, %v4517, %v4519
        %v4529 = vsel %vm1202, %v4519, %v4521
        %v4530 = vsel %vm1202, %v4521, %v4523
        %v4540 = vsel %vm1202, 0.0, %v4509
        %v4541 = vsel %vm1202, %v4523, 0.0
        %v4544 = vrot.slane %v4540, 6
        %v4545 = vrot.slane %v4524, 6
        %v4546 = vrot.slane %v4525, 6
        %v4547 = vrot.slane %v4526, 6
        %v4548 = vrot.slane %v4527, 6
        %v4549 = vrot.slane %v4528, 6
        %v4550 = vrot.slane %v4529, 6
        %v4551 = vrot.slane %v4530, 6
        %v4552 = vrot.slane %v4541, 6
        %4553 = vrot.lane.b32.xlu0 %v4544, 127
        %v4554 = vpop.permute.xlu0 %4553
        %4555 = vrot.lane.b32.xlu0 %v4545, 127
        %v4556 = vpop.permute.xlu0 %4555
        %4557 = vrot.lane.b32.xlu0 %v4546, 127
        %v4558 = vpop.permute.xlu0 %4557
        %4559 = vrot.lane.b32.xlu0 %v4547, 127
        %v4560 = vpop.permute.xlu0 %4559
        %4561 = vrot.lane.b32.xlu0 %v4548, 127
        %v4562 = vpop.permute.xlu0 %4561
        %4563 = vrot.lane.b32.xlu0 %v4549, 127
        %v4564 = vpop.permute.xlu0 %4563
        %4565 = vrot.lane.b32.xlu0 %v4550, 127
        %v4566 = vpop.permute.xlu0 %4565
        %4567 = vrot.lane.b32.xlu0 %v4551, 127
        %v4568 = vpop.permute.xlu0 %4567
        %4569 = vrot.lane.b32.xlu0 %v4552, 127
        %v4570 = vpop.permute.xlu0 %4569
        %v4571 = vsel %vm1250, %v4554, %v4556
        %v4572 = vsel %vm1250, %v4556, %v4558
        %v4573 = vsel %vm1250, %v4558, %v4560
        %v4574 = vsel %vm1250, %v4560, %v4562
        %v4575 = vsel %vm1250, %v4562, %v4564
        %v4576 = vsel %vm1250, %v4564, %v4566
        %v4577 = vsel %vm1250, %v4566, %v4568
        %v4578 = vsel %vm1250, %v4568, %v4570
        %v4587 = vrot.slane %v4540, 4
        %v4588 = vrot.slane %v4524, 4
        %v4589 = vrot.slane %v4525, 4
        %v4590 = vrot.slane %v4526, 4
        %v4591 = vrot.slane %v4527, 4
        %v4592 = vrot.slane %v4528, 4
        %v4593 = vrot.slane %v4529, 4
        %v4594 = vrot.slane %v4530, 4
        %v4595 = vrot.slane %v4541, 4
        %4596 = vrot.lane.b32.xlu0 %v4587, 126
        %v4597 = vpop.permute.xlu0 %4596
        %4598 = vrot.lane.b32.xlu0 %v4588, 126
        %v4599 = vpop.permute.xlu0 %4598
        %4600 = vrot.lane.b32.xlu0 %v4589, 126
        %v4601 = vpop.permute.xlu0 %4600
        %4602 = vrot.lane.b32.xlu0 %v4590, 126
        %v4603 = vpop.permute.xlu0 %4602
        %4604 = vrot.lane.b32.xlu0 %v4591, 126
        %v4605 = vpop.permute.xlu0 %4604
        %4606 = vrot.lane.b32.xlu0 %v4592, 126
        %v4607 = vpop.permute.xlu0 %4606
        %4608 = vrot.lane.b32.xlu0 %v4593, 126
        %v4609 = vpop.permute.xlu0 %4608
        %4610 = vrot.lane.b32.xlu0 %v4594, 126
        %v4611 = vpop.permute.xlu0 %4610
        %4612 = vrot.lane.b32.xlu0 %v4595, 126
        %v4613 = vpop.permute.xlu0 %4612
        %v4614 = vsel %vm1294, %v4597, %v4599
        %v4615 = vsel %vm1294, %v4599, %v4601
        %v4616 = vsel %vm1294, %v4601, %v4603
        %v4617 = vsel %vm1294, %v4603, %v4605
        %v4618 = vsel %vm1294, %v4605, %v4607
        %v4619 = vsel %vm1294, %v4607, %v4609
        %v4620 = vsel %vm1294, %v4609, %v4611
        %v4621 = vsel %vm1294, %v4611, %v4613
        %v4630 = vrot.slane %v4540, 2
        %v4631 = vrot.slane %v4524, 2
        %v4632 = vrot.slane %v4525, 2
        %v4633 = vrot.slane %v4526, 2
        %v4634 = vrot.slane %v4527, 2
        %v4635 = vrot.slane %v4528, 2
        %v4636 = vrot.slane %v4529, 2
        %v4637 = vrot.slane %v4530, 2
        %v4638 = vrot.slane %v4541, 2
        %4639 = vrot.lane.b32.xlu0 %v4630, 125
        %v4640 = vpop.permute.xlu0 %4639
        %4641 = vrot.lane.b32.xlu0 %v4631, 125
        %v4642 = vpop.permute.xlu0 %4641
        %4643 = vrot.lane.b32.xlu0 %v4632, 125
        %v4644 = vpop.permute.xlu0 %4643
        %4645 = vrot.lane.b32.xlu0 %v4633, 125
        %v4646 = vpop.permute.xlu0 %4645
        %4647 = vrot.lane.b32.xlu0 %v4634, 125
        %v4648 = vpop.permute.xlu0 %4647
        %4649 = vrot.lane.b32.xlu0 %v4635, 125
        %v4650 = vpop.permute.xlu0 %4649
        %4651 = vrot.lane.b32.xlu0 %v4636, 125
        %v4652 = vpop.permute.xlu0 %4651
        %4653 = vrot.lane.b32.xlu0 %v4637, 125
        %v4654 = vpop.permute.xlu0 %4653
        %4655 = vrot.lane.b32.xlu0 %v4638, 125
        %v4656 = vpop.permute.xlu0 %4655
        %v4657 = vsel %vm1338, %v4640, %v4642
        %v4658 = vsel %vm1338, %v4642, %v4644
        %v4659 = vsel %vm1338, %v4644, %v4646
        %v4660 = vsel %vm1338, %v4646, %v4648
        %v4661 = vsel %vm1338, %v4648, %v4650
        %v4662 = vsel %vm1338, %v4650, %v4652
        %v4663 = vsel %vm1338, %v4652, %v4654
        %v4664 = vsel %vm1338, %v4654, %v4656
        %4673 = vrot.lane.b32.xlu0 %v4540, 124
        %v4674 = vpop.permute.xlu0 %4673
        %4675 = vrot.lane.b32.xlu0 %v4524, 124
        %v4676 = vpop.permute.xlu0 %4675
        %4677 = vrot.lane.b32.xlu0 %v4525, 124
        %v4678 = vpop.permute.xlu0 %4677
        %4679 = vrot.lane.b32.xlu0 %v4526, 124
        %v4680 = vpop.permute.xlu0 %4679
        %4681 = vrot.lane.b32.xlu0 %v4527, 124
        %v4682 = vpop.permute.xlu0 %4681
        %4683 = vrot.lane.b32.xlu0 %v4528, 124
        %v4684 = vpop.permute.xlu0 %4683
        %4685 = vrot.lane.b32.xlu0 %v4529, 124
        %v4686 = vpop.permute.xlu0 %4685
        %4687 = vrot.lane.b32.xlu0 %v4530, 124
        %v4688 = vpop.permute.xlu0 %4687
        %4689 = vrot.lane.b32.xlu0 %v4541, 124
        %v4690 = vpop.permute.xlu0 %4689
        %v4691 = vsel %vm1382, %v4674, %v4676
        %v4692 = vsel %vm1382, %v4676, %v4678
        %v4693 = vsel %vm1382, %v4678, %v4680
        %v4694 = vsel %vm1382, %v4680, %v4682
        %v4695 = vsel %vm1382, %v4682, %v4684
        %v4696 = vsel %vm1382, %v4684, %v4686
        %v4697 = vsel %vm1382, %v4686, %v4688
        %v4698 = vsel %vm1382, %v4688, %v4690
        %v4707 = vsel %vm1408, %v4540, %v4571
        %v4708 = vsel %vm1408, %v4524, %v4572
        %v4709 = vsel %vm1408, %v4525, %v4573
        %v4710 = vsel %vm1408, %v4526, %v4574
        %v4711 = vsel %vm1408, %v4527, %v4575
        %v4712 = vsel %vm1408, %v4528, %v4576
        %v4713 = vsel %vm1408, %v4529, %v4577
        %v4714 = vsel %vm1408, %v4530, %v4578
        %v4715 = vsel %vm1426, %v4707, %v4614
        %v4716 = vsel %vm1426, %v4708, %v4615
        %v4717 = vsel %vm1426, %v4709, %v4616
        %v4718 = vsel %vm1426, %v4710, %v4617
        %v4719 = vsel %vm1426, %v4711, %v4618
        %v4720 = vsel %vm1426, %v4712, %v4619
        %v4721 = vsel %vm1426, %v4713, %v4620
        %v4722 = vsel %vm1426, %v4714, %v4621
        %vm4723 = vcmask 1045504
        %v4724 = vsel %vm4723, %v4715, %v4657
        %v4725 = vsel %vm4723, %v4716, %v4658
        %v4726 = vsel %vm4723, %v4717, %v4659
        %v4727 = vsel %vm4723, %v4718, %v4660
        %v4728 = vsel %vm4723, %v4719, %v4661
        %v4729 = vsel %vm4723, %v4720, %v4662
        %v4730 = vsel %vm4723, %v4721, %v4663
        %v4731 = vsel %vm4723, %v4722, %v4664
        %v4732 = vsel %vm1408, %v4691, 0.0
        %v4733 = vsel %vm1408, %v4692, 0.0
        %v4734 = vsel %vm1408, %v4693, 0.0
        %v4735 = vsel %vm1408, %v4694, 0.0
        %v4736 = vsel %vm1408, %v4695, 0.0
        %v4737 = vsel %vm1408, %v4696, 0.0
        %v4738 = vsel %vm1408, %v4697, 0.0
        %v4739 = vsel %vm1408, %v4698, 0.0
        %v4740 = vpack.c.bf16 %v4732, %v4724
        %v4741 = vpack.c.bf16 %v4733, %v4725
        %v4742 = vpack.c.bf16 %v4734, %v4726
        %v4743 = vpack.c.bf16 %v4735, %v4727
        %v4744 = vpack.c.bf16 %v4736, %v4728
        %v4745 = vpack.c.bf16 %v4737, %v4729
        %v4746 = vpack.c.bf16 %v4738, %v4730
        %v4747 = vpack.c.bf16 %v4739, %v4731
        %4749 = vset.pattern.permute.xlu0 0
        %4750 = vperm.xlu0 %4749, %v4472
        %v4751 = vpop.permute.xlu0 %4750
        %4754 = vset.pattern.permute.xlu0 0
        %4755 = vperm.xlu0 %4754, %v4473
        %v4756 = vpop.permute.xlu0 %4755
        %4759 = vset.pattern.permute.xlu0 0
        %4760 = vperm.xlu0 %4759, %v4474
        %v4761 = vpop.permute.xlu0 %4760
        %4764 = vset.pattern.permute.xlu0 0
        %4765 = vperm.xlu0 %4764, %v4475
        %v4766 = vpop.permute.xlu0 %4765
        %v4772 = vunpack.c.l.b16 %v4468
        %v4773 = vunpack.c.l.b16 %v4469
        %v4774 = vunpack.c.l.b16 %v4470
        %v4775 = vunpack.c.l.b16 %v4471
        %v4776 = vpack.c.b16 %v4773, %v4772
        %v4777 = vpack.c.b16 %v4775, %v4774
        %vm4778 = vcmask 130048
        %v4780 = vsel %vm4778, %v4776, 0
        %v4783 = vsel %vm4778, %v4777, 0
        %4785 = vmatprep.subr.bf16.mxu0 %v4741
        %4786 = vmatpush1.bf16.msra.mxu0 %v4740
        %4787 = vmatprep.subr.bf16.mxu0 0
        %4788 = vmatpush1.bf16.msra.mxu0 0
        %4789 = vmatprep.subr.bf16.mxu0 0
        %4790 = vmatpush1.bf16.msra.mxu0 0
        %4791 = vmatprep.subr.bf16.mxu0 0
        %4792 = vmatpush1.bf16.msra.mxu0 0
        %4793 = vmatprep.subr.bf16.mxu0 0
        %4794 = vmatpush1.bf16.msra.mxu0 0
        %4795 = vmatprep.subr.bf16.mxu0 0
        %4796 = vmatpush1.bf16.msra.mxu0 0
        %4797 = vmatprep.subr.bf16.mxu0 0
        %4798 = vmatpush1.bf16.msra.mxu0 0
        %4799 = vmatprep.subr.bf16.mxu0 0
        %4800 = vmatpush1.bf16.msra.mxu0 0
        %4801 = vmatprep.subr.bf16.mxu0 0
        %4802 = vmatpush1.bf16.msra.mxu0 0
        %4803 = vmatprep.subr.bf16.mxu0 0
        %4804 = vmatpush1.bf16.msra.mxu0 0
        %4805 = vmatprep.subr.bf16.mxu0 0
        %4806 = vmatpush1.bf16.msra.mxu0 0
        %4807 = vmatprep.subr.bf16.mxu0 0
        %4808 = vmatpush1.bf16.msra.mxu0 0
        %4809 = vmatprep.subr.bf16.mxu0 0
        %4810 = vmatpush1.bf16.msra.mxu0 0
        %4811 = vmatprep.subr.bf16.mxu0 0
        %4812 = vmatpush1.bf16.msra.mxu0 0
        %4813 = vmatprep.subr.bf16.mxu0 0
        %4814 = vmatpush1.bf16.msra.mxu0 0
        %4815 = vmatprep.subr.bf16.mxu0 0
        %4816 = vmatpush1.bf16.msra.mxu0 0
        %4817 = vmatprep.mubr.bf16.mxu0 0
        %4818 = vmatmul.mubr.bf16.gmra.mrb[0].mxu0 %v4780
        %v4819 = vpop.f32.mrb[0].mxu0
        %v4820 = vadd.f32 %v4751, %v4819
        %v4821 = vpop.f32.mrb[0].mxu0
        %v4822 = vadd.f32 %v4751, %v4821
        %v4823 = vpop.f32.mrb[0].mxu0
        %v4824 = vadd.f32 %v4756, %v4823
        %v4825 = vpop.f32.mrb[0].mxu0
        %v4826 = vadd.f32 %v4756, %v4825
        %4827 = vmatprep.mubr.bf16.mxu0 0
        %4828 = vmatmul.mubr.bf16.gmra.mrb[0].mxu0 %v4783
        %v4829 = vpop.f32.mrb[0].mxu0
        %v4830 = vadd.f32 %v4761, %v4829
        %v4831 = vpop.f32.mrb[0].mxu0
        %v4832 = vadd.f32 %v4761, %v4831
        %v4833 = vpop.f32.mrb[0].mxu0
        %v4834 = vadd.f32 %v4766, %v4833
        %v4835 = vpop.f32.mrb[0].mxu0
        %v4836 = vadd.f32 %v4766, %v4835
        %4837 = vdwg.mxu0
        %4838 = vmatprep.subr.bf16.mxu0 %v4743
        %4839 = vmatpush1.bf16.msra.mxu0 %v4742
        %4840 = vmatprep.subr.bf16.mxu0 0
        %4841 = vmatpush1.bf16.msra.mxu0 0
        %4842 = vmatprep.subr.bf16.mxu0 0
        %4843 = vmatpush1.bf16.msra.mxu0 0
        %4844 = vmatprep.subr.bf16.mxu0 0
        %4845 = vmatpush1.bf16.msra.mxu0 0
        %4846 = vmatprep.subr.bf16.mxu0 0
        %4847 = vmatpush1.bf16.msra.mxu0 0
        %4848 = vmatprep.subr.bf16.mxu0 0
        %4849 = vmatpush1.bf16.msra.mxu0 0
        %4850 = vmatprep.subr.bf16.mxu0 0
        %4851 = vmatpush1.bf16.msra.mxu0 0
        %4852 = vmatprep.subr.bf16.mxu0 0
        %4853 = vmatpush1.bf16.msra.mxu0 0
        %4854 = vmatprep.subr.bf16.mxu0 0
        %4855 = vmatpush1.bf16.msra.mxu0 0
        %4856 = vmatprep.subr.bf16.mxu0 0
        %4857 = vmatpush1.bf16.msra.mxu0 0
        %4858 = vmatprep.subr.bf16.mxu0 0
        %4859 = vmatpush1.bf16.msra.mxu0 0
        %4860 = vmatprep.subr.bf16.mxu0 0
        %4861 = vmatpush1.bf16.msra.mxu0 0
        %4862 = vmatprep.subr.bf16.mxu0 0
        %4863 = vmatpush1.bf16.msra.mxu0 0
        %4864 = vmatprep.subr.bf16.mxu0 0
        %4865 = vmatpush1.bf16.msra.mxu0 0
        %4866 = vmatprep.subr.bf16.mxu0 0
        %4867 = vmatpush1.bf16.msra.mxu0 0
        %4868 = vmatprep.subr.bf16.mxu0 0
        %4869 = vmatpush1.bf16.msra.mxu0 0
        %4870 = vmatprep.mubr.bf16.mxu0 0
        %4871 = vmatmul.mubr.bf16.gmra.mrb[0].mxu0 %v4780
        %v4872 = vpop.f32.mrb[0].mxu0
        %v4873 = vadd.f32 %v4751, %v4872
        %v4874 = vpop.f32.mrb[0].mxu0
        %v4875 = vadd.f32 %v4751, %v4874
        %v4876 = vpop.f32.mrb[0].mxu0
        %v4877 = vadd.f32 %v4756, %v4876
        %v4878 = vpop.f32.mrb[0].mxu0
        %v4879 = vadd.f32 %v4756, %v4878
        %4880 = vmatprep.mubr.bf16.mxu0 0
        %4881 = vmatmul.mubr.bf16.gmra.mrb[0].mxu0 %v4783
        %v4882 = vpop.f32.mrb[0].mxu0
        %v4883 = vadd.f32 %v4761, %v4882
        %v4884 = vpop.f32.mrb[0].mxu0
        %v4885 = vadd.f32 %v4761, %v4884
        %v4886 = vpop.f32.mrb[0].mxu0
        %v4887 = vadd.f32 %v4766, %v4886
        %v4888 = vpop.f32.mrb[0].mxu0
        %v4889 = vadd.f32 %v4766, %v4888
        %4890 = vdwg.mxu0
        %4891 = vmatprep.subr.bf16.mxu0 %v4745
        %4892 = vmatpush1.bf16.msra.mxu0 %v4744
        %4893 = vmatprep.subr.bf16.mxu0 0
        %4894 = vmatpush1.bf16.msra.mxu0 0
        %4895 = vmatprep.subr.bf16.mxu0 0
        %4896 = vmatpush1.bf16.msra.mxu0 0
        %4897 = vmatprep.subr.bf16.mxu0 0
        %4898 = vmatpush1.bf16.msra.mxu0 0
        %4899 = vmatprep.subr.bf16.mxu0 0
        %4900 = vmatpush1.bf16.msra.mxu0 0
        %4901 = vmatprep.subr.bf16.mxu0 0
        %4902 = vmatpush1.bf16.msra.mxu0 0
        %4903 = vmatprep.subr.bf16.mxu0 0
        %4904 = vmatpush1.bf16.msra.mxu0 0
        %4905 = vmatprep.subr.bf16.mxu0 0
        %4906 = vmatpush1.bf16.msra.mxu0 0
        %4907 = vmatprep.subr.bf16.mxu0 0
        %4908 = vmatpush1.bf16.msra.mxu0 0
        %4909 = vmatprep.subr.bf16.mxu0 0
        %4910 = vmatpush1.bf16.msra.mxu0 0
        %4911 = vmatprep.subr.bf16.mxu0 0
        %4912 = vmatpush1.bf16.msra.mxu0 0
        %4913 = vmatprep.subr.bf16.mxu0 0
        %4914 = vmatpush1.bf16.msra.mxu0 0
        %4915 = vmatprep.subr.bf16.mxu0 0
        %4916 = vmatpush1.bf16.msra.mxu0 0
        %4917 = vmatprep.subr.bf16.mxu0 0
        %4918 = vmatpush1.bf16.msra.mxu0 0
        %4919 = vmatprep.subr.bf16.mxu0 0
        %4920 = vmatpush1.bf16.msra.mxu0 0
        %4921 = vmatprep.subr.bf16.mxu0 0
        %4922 = vmatpush1.bf16.msra.mxu0 0
        %4923 = vmatprep.mubr.bf16.mxu0 0
        %4924 = vmatmul.mubr.bf16.gmra.mrb[0].mxu0 %v4780
        %v4925 = vpop.f32.mrb[0].mxu0
        %v4926 = vadd.f32 %v4751, %v4925
        %v4927 = vpop.f32.mrb[0].mxu0
        %v4928 = vadd.f32 %v4751, %v4927
        %v4929 = vpop.f32.mrb[0].mxu0
        %v4930 = vadd.f32 %v4756, %v4929
        %v4931 = vpop.f32.mrb[0].mxu0
        %v4932 = vadd.f32 %v4756, %v4931
        %4933 = vmatprep.mubr.bf16.mxu0 0
        %4934 = vmatmul.mubr.bf16.gmra.mrb[0].mxu0 %v4783
        %v4935 = vpop.f32.mrb[0].mxu0
        %v4936 = vadd.f32 %v4761, %v4935
        %v4937 = vpop.f32.mrb[0].mxu0
        %v4938 = vadd.f32 %v4761, %v4937
        %v4939 = vpop.f32.mrb[0].mxu0
        %v4940 = vadd.f32 %v4766, %v4939
        %v4941 = vpop.f32.mrb[0].mxu0
        %v4942 = vadd.f32 %v4766, %v4941
        %4943 = vdwg.mxu0
        %4944 = vmatprep.subr.bf16.mxu0 %v4747
        %4945 = vmatpush1.bf16.msra.mxu0 %v4746
        %4946 = vmatprep.subr.bf16.mxu0 0
        %4947 = vmatpush1.bf16.msra.mxu0 0
        %4948 = vmatprep.subr.bf16.mxu0 0
        %4949 = vmatpush1.bf16.msra.mxu0 0
        %4950 = vmatprep.subr.bf16.mxu0 0
        %4951 = vmatpush1.bf16.msra.mxu0 0
        %4952 = vmatprep.subr.bf16.mxu0 0
        %4953 = vmatpush1.bf16.msra.mxu0 0
        %4954 = vmatprep.subr.bf16.mxu0 0
        %4955 = vmatpush1.bf16.msra.mxu0 0
        %4956 = vmatprep.subr.bf16.mxu0 0
        %4957 = vmatpush1.bf16.msra.mxu0 0
        %4958 = vmatprep.subr.bf16.mxu0 0
        %4959 = vmatpush1.bf16.msra.mxu0 0
        %4960 = vmatprep.subr.bf16.mxu0 0
        %4961 = vmatpush1.bf16.msra.mxu0 0
        %4962 = vmatprep.subr.bf16.mxu0 0
        %4963 = vmatpush1.bf16.msra.mxu0 0
        %4964 = vmatprep.subr.bf16.mxu0 0
        %4965 = vmatpush1.bf16.msra.mxu0 0
        %4966 = vmatprep.subr.bf16.mxu0 0
        %4967 = vmatpush1.bf16.msra.mxu0 0
        %4968 = vmatprep.subr.bf16.mxu0 0
        %4969 = vmatpush1.bf16.msra.mxu0 0
        %4970 = vmatprep.subr.bf16.mxu0 0
        %4971 = vmatpush1.bf16.msra.mxu0 0
        %4972 = vmatprep.subr.bf16.mxu0 0
        %4973 = vmatpush1.bf16.msra.mxu0 0
        %4974 = vmatprep.subr.bf16.mxu0 0
        %4975 = vmatpush1.bf16.msra.mxu0 0
        %4976 = vmatprep.mubr.bf16.mxu0 0
        %4977 = vmatmul.mubr.bf16.gmra.mrb[0].mxu0 %v4780
        %v4978 = vpop.f32.mrb[0].mxu0
        %v4979 = vadd.f32 %v4751, %v4978
        %v4980 = vpop.f32.mrb[0].mxu0
        %v4981 = vadd.f32 %v4751, %v4980
        %v4982 = vpop.f32.mrb[0].mxu0
        %v4983 = vadd.f32 %v4756, %v4982
        %v4984 = vpop.f32.mrb[0].mxu0
        %v4985 = vadd.f32 %v4756, %v4984
        %4986 = vmatprep.mubr.bf16.mxu0 0
        %4987 = vmatmul.mubr.bf16.gmra.mrb[0].mxu0 %v4783
        %v4988 = vpop.f32.mrb[0].mxu0
        %v4989 = vadd.f32 %v4761, %v4988
        %v4990 = vpop.f32.mrb[0].mxu0
        %v4991 = vadd.f32 %v4761, %v4990
        %v4992 = vpop.f32.mrb[0].mxu0
        %v4993 = vadd.f32 %v4766, %v4992
        %v4994 = vpop.f32.mrb[0].mxu0
        %v4995 = vadd.f32 %v4766, %v4994
        %4996 = vdwg.mxu0
        %vm4997 = vcmp.ge.f32.partialorder %v4820, 0.0
        %vm4998 = vcmp.ge.f32.partialorder %v4822, 0.0
        %vm4999 = vcmp.ge.f32.partialorder %v4873, 0.0
        %vm5000 = vcmp.ge.f32.partialorder %v4875, 0.0
        %vm5001 = vcmp.ge.f32.partialorder %v4926, 0.0
        %vm5002 = vcmp.ge.f32.partialorder %v4928, 0.0
        %vm5003 = vcmp.ge.f32.partialorder %v4979, 0.0
        %vm5004 = vcmp.ge.f32.partialorder %v4981, 0.0
        %vm5005 = vcmp.ge.f32.partialorder %v4824, 0.0
        %vm5006 = vcmp.ge.f32.partialorder %v4826, 0.0
        %vm5007 = vcmp.ge.f32.partialorder %v4877, 0.0
        %vm5008 = vcmp.ge.f32.partialorder %v4879, 0.0
        %vm5009 = vcmp.ge.f32.partialorder %v4930, 0.0
        %vm5010 = vcmp.ge.f32.partialorder %v4932, 0.0
        %vm5011 = vcmp.ge.f32.partialorder %v4983, 0.0
        %vm5012 = vcmp.ge.f32.partialorder %v4985, 0.0
        %vm5013 = vcmp.ge.f32.partialorder %v4830, 0.0
        %vm5014 = vcmp.ge.f32.partialorder %v4832, 0.0
        %vm5015 = vcmp.ge.f32.partialorder %v4883, 0.0
        %vm5016 = vcmp.ge.f32.partialorder %v4885, 0.0
        %vm5017 = vcmp.ge.f32.partialorder %v4936, 0.0
        %vm5018 = vcmp.ge.f32.partialorder %v4938, 0.0
        %vm5019 = vcmp.ge.f32.partialorder %v4989, 0.0
        %vm5020 = vcmp.ge.f32.partialorder %v4991, 0.0
        %vm5021 = vcmp.ge.f32.partialorder %v4834, 0.0
        %vm5022 = vcmp.ge.f32.partialorder %v4836, 0.0
        %vm5023 = vcmp.ge.f32.partialorder %v4887, 0.0
        %vm5024 = vcmp.ge.f32.partialorder %v4889, 0.0
        %vm5025 = vcmp.ge.f32.partialorder %v4940, 0.0
        %vm5026 = vcmp.ge.f32.partialorder %v4942, 0.0
        %vm5027 = vcmp.ge.f32.partialorder %v4993, 0.0
        %vm5028 = vcmp.ge.f32.partialorder %v4995, 0.0
        %v5029 = vmul.f32 %v4820, 0.2
        %v5030 = vmul.f32 %v4822, 0.2
        %v5031 = vmul.f32 %v4873, 0.2
        %v5032 = vmul.f32 %v4875, 0.2
        %v5033 = vmul.f32 %v4926, 0.2
        %v5034 = vmul.f32 %v4928, 0.2
        %v5035 = vmul.f32 %v4979, 0.2
        %v5036 = vmul.f32 %v4981, 0.2
        %v5037 = vmul.f32 %v4824, 0.2
        %v5038 = vmul.f32 %v4826, 0.2
        %v5039 = vmul.f32 %v4877, 0.2
        %v5040 = vmul.f32 %v4879, 0.2
        %v5041 = vmul.f32 %v4930, 0.2
        %v5042 = vmul.f32 %v4932, 0.2
        %v5043 = vmul.f32 %v4983, 0.2
        %v5044 = vmul.f32 %v4985, 0.2
        %v5045 = vmul.f32 %v4830, 0.2
        %v5046 = vmul.f32 %v4832, 0.2
        %v5047 = vmul.f32 %v4883, 0.2
        %v5048 = vmul.f32 %v4885, 0.2
        %v5049 = vmul.f32 %v4936, 0.2
        %v5050 = vmul.f32 %v4938, 0.2
        %v5051 = vmul.f32 %v4989, 0.2
        %v5052 = vmul.f32 %v4991, 0.2
        %v5053 = vmul.f32 %v4834, 0.2
        %v5054 = vmul.f32 %v4836, 0.2
        %v5055 = vmul.f32 %v4887, 0.2
        %v5056 = vmul.f32 %v4889, 0.2
        %v5057 = vmul.f32 %v4940, 0.2
        %v5058 = vmul.f32 %v4942, 0.2
        %v5059 = vmul.f32 %v4993, 0.2
        %v5060 = vmul.f32 %v4995, 0.2
        %v5061 = vsel %vm4997, %v4820, %v5029
        %v5062 = vsel %vm4998, %v4822, %v5030
        %v5063 = vsel %vm4999, %v4873, %v5031
        %v5064 = vsel %vm5000, %v4875, %v5032
        %v5065 = vsel %vm5001, %v4926, %v5033
        %v5066 = vsel %vm5002, %v4928, %v5034
        %v5067 = vsel %vm5003, %v4979, %v5035
        %v5068 = vsel %vm5004, %v4981, %v5036
        %v5069 = vsel %vm5005, %v4824, %v5037
        %v5070 = vsel %vm5006, %v4826, %v5038
        %v5071 = vsel %vm5007, %v4877, %v5039
        %v5072 = vsel %vm5008, %v4879, %v5040
        %v5073 = vsel %vm5009, %v4930, %v5041
        %v5074 = vsel %vm5010, %v4932, %v5042
        %v5075 = vsel %vm5011, %v4983, %v5043
        %v5076 = vsel %vm5012, %v4985, %v5044
        %v5077 = vsel %vm5013, %v4830, %v5045
        %v5078 = vsel %vm5014, %v4832, %v5046
        %v5079 = vsel %vm5015, %v4883, %v5047
        %v5080 = vsel %vm5016, %v4885, %v5048
        %v5081 = vsel %vm5017, %v4936, %v5049
        %v5082 = vsel %vm5018, %v4938, %v5050
        %v5083 = vsel %vm5019, %v4989, %v5051
        %v5084 = vsel %vm5020, %v4991, %v5052
        %v5085 = vsel %vm5021, %v4834, %v5053
        %v5086 = vsel %vm5022, %v4836, %v5054
        %v5087 = vsel %vm5023, %v4887, %v5055
        %v5088 = vsel %vm5024, %v4889, %v5056
        %v5089 = vsel %vm5025, %v4940, %v5057
        %v5090 = vsel %vm5026, %v4942, %v5058
        %v5091 = vsel %vm5027, %v4993, %v5059
        %v5092 = vsel %vm5028, %v4995, %v5060
        %v5093 = vpack.c.bf16 %v5069, %v5061
        %v5094 = vpack.c.bf16 %v5070, %v5062
        %v5095 = vpack.c.bf16 %v5071, %v5063
        %v5096 = vpack.c.bf16 %v5072, %v5064
        %v5097 = vpack.c.bf16 %v5073, %v5065
        %v5098 = vpack.c.bf16 %v5074, %v5066
        %v5099 = vpack.c.bf16 %v5075, %v5067
        %v5100 = vpack.c.bf16 %v5076, %v5068
        %v5101 = vpack.c.bf16 %v5085, %v5077
        %v5102 = vpack.c.bf16 %v5086, %v5078
        %v5103 = vpack.c.bf16 %v5087, %v5079
        %v5104 = vpack.c.bf16 %v5088, %v5080
        %v5105 = vpack.c.bf16 %v5089, %v5081
        %v5106 = vpack.c.bf16 %v5090, %v5082
        %v5107 = vpack.c.bf16 %v5091, %v5083
        %v5108 = vpack.c.bf16 %v5092, %v5084
        %5109 = vmatprep.subr.bf16.mxu0 %v2108
        %5110 = vmatpush1.bf16.msra.mxu0 %v2107
        %5111 = vmatprep.subr.bf16.mxu0 %v2110
        %5112 = vmatpush1.bf16.msra.mxu0 %v2109
        %5113 = vmatprep.subr.bf16.mxu0 %v2112
        %5114 = vmatpush1.bf16.msra.mxu0 %v2111
        %5115 = vmatprep.subr.bf16.mxu0 %v2114
        %5116 = vmatpush1.bf16.msra.mxu0 %v2113
        %5117 = vmatprep.subr.bf16.mxu0 %v2116
        %5118 = vmatpush1.bf16.msra.mxu0 %v2115
        %5119 = vmatprep.subr.bf16.mxu0 %v2118
        %5120 = vmatpush1.bf16.msra.mxu0 %v2117
        %5121 = vmatprep.subr.bf16.mxu0 %v2120
        %5122 = vmatpush1.bf16.msra.mxu0 %v2119
        %5123 = vmatprep.subr.bf16.mxu0 %v2122
        %5124 = vmatpush1.bf16.msra.mxu0 %v2121
        %5125 = vmatprep.subr.bf16.mxu0 %v2124
        %5126 = vmatpush1.bf16.msra.mxu0 %v2123
        %5127 = vmatprep.subr.bf16.mxu0 %v2126
        %5128 = vmatpush1.bf16.msra.mxu0 %v2125
        %5129 = vmatprep.subr.bf16.mxu0 %v2128
        %5130 = vmatpush1.bf16.msra.mxu0 %v2127
        %5131 = vmatprep.subr.bf16.mxu0 %v2130
        %5132 = vmatpush1.bf16.msra.mxu0 %v2129
        %5133 = vmatprep.subr.bf16.mxu0 %v2132
        %5134 = vmatpush1.bf16.msra.mxu0 %v2131
        %5135 = vmatprep.subr.bf16.mxu0 %v2134
        %5136 = vmatpush1.bf16.msra.mxu0 %v2133
        %5137 = vmatprep.subr.bf16.mxu0 %v2136
        %5138 = vmatpush1.bf16.msra.mxu0 %v2135
        %5139 = vmatprep.subr.bf16.mxu0 %v2138
        %5140 = vmatpush1.bf16.msra.mxu0 %v2137
        %5141 = vmatprep.mubr.bf16.mxu0 %v5094
        %5142 = vmatmul.mubr.bf16.gmra.mrb[0].mxu0 %v5093
        %v5143 = vpop.f32.mrb[0].mxu0
        %v5144 = vadd.f32 0.0, %v5143
        %v5145 = vpop.f32.mrb[0].mxu0
        %v5146 = vadd.f32 0.0, %v5145
        %v5147 = vpop.f32.mrb[0].mxu0
        %v5148 = vadd.f32 0.0, %v5147
        %v5149 = vpop.f32.mrb[0].mxu0
        %v5150 = vadd.f32 0.0, %v5149
        %5151 = vmatprep.mubr.bf16.mxu0 %v5102
        %5152 = vmatmul.mubr.bf16.gmra.mrb[0].mxu0 %v5101
        %v5153 = vpop.f32.mrb[0].mxu0
        %v5154 = vadd.f32 0.0, %v5153
        %v5155 = vpop.f32.mrb[0].mxu0
        %v5156 = vadd.f32 0.0, %v5155
        %v5157 = vpop.f32.mrb[0].mxu0
        %v5158 = vadd.f32 0.0, %v5157
        %v5159 = vpop.f32.mrb[0].mxu0
        %v5160 = vadd.f32 0.0, %v5159
        %5161 = vdwg.mxu0
        %5162 = vmatprep.subr.bf16.mxu0 %v2140
        %5163 = vmatpush1.bf16.msra.mxu0 %v2139
        %5164 = vmatprep.subr.bf16.mxu0 %v2142
        %5165 = vmatpush1.bf16.msra.mxu0 %v2141
        %5166 = vmatprep.subr.bf16.mxu0 %v2144
        %5167 = vmatpush1.bf16.msra.mxu0 %v2143
        %5168 = vmatprep.subr.bf16.mxu0 %v2146
        %5169 = vmatpush1.bf16.msra.mxu0 %v2145
        %5170 = vmatprep.subr.bf16.mxu0 %v2148
        %5171 = vmatpush1.bf16.msra.mxu0 %v2147
        %5172 = vmatprep.subr.bf16.mxu0 %v2150
        %5173 = vmatpush1.bf16.msra.mxu0 %v2149
        %5174 = vmatprep.subr.bf16.mxu0 %v2152
        %5175 = vmatpush1.bf16.msra.mxu0 %v2151
        %5176 = vmatprep.subr.bf16.mxu0 %v2154
        %5177 = vmatpush1.bf16.msra.mxu0 %v2153
        %5178 = vmatprep.subr.bf16.mxu0 %v2156
        %5179 = vmatpush1.bf16.msra.mxu0 %v2155
        %5180 = vmatprep.subr.bf16.mxu0 %v2158
        %5181 = vmatpush1.bf16.msra.mxu0 %v2157
        %5182 = vmatprep.subr.bf16.mxu0 %v2160
        %5183 = vmatpush1.bf16.msra.mxu0 %v2159
        %5184 = vmatprep.subr.bf16.mxu0 %v2162
        %5185 = vmatpush1.bf16.msra.mxu0 %v2161
        %5186 = vmatprep.subr.bf16.mxu0 %v2164
        %5187 = vmatpush1.bf16.msra.mxu0 %v2163
        %5188 = vmatprep.subr.bf16.mxu0 %v2166
        %5189 = vmatpush1.bf16.msra.mxu0 %v2165
        %5190 = vmatprep.subr.bf16.mxu0 %v2168
        %5191 = vmatpush1.bf16.msra.mxu0 %v2167
        %5192 = vmatprep.subr.bf16.mxu0 %v2170
        %5193 = vmatpush1.bf16.msra.mxu0 %v2169
        %5194 = vmatprep.mubr.bf16.mxu0 %v5096
        %5195 = vmatmul.mubr.bf16.gmra.mrb[0].mxu0 %v5095
        %v5196 = vpop.f32.mrb[0].mxu0
        %v5197 = vadd.f32 %v5144, %v5196
        %v5198 = vpop.f32.mrb[0].mxu0
        %v5199 = vadd.f32 %v5146, %v5198
        %v5200 = vpop.f32.mrb[0].mxu0
        %v5201 = vadd.f32 %v5148, %v5200
        %v5202 = vpop.f32.mrb[0].mxu0
        %v5203 = vadd.f32 %v5150, %v5202
        %5204 = vmatprep.mubr.bf16.mxu0 %v5104
        %5205 = vmatmul.mubr.bf16.gmra.mrb[0].mxu0 %v5103
        %v5206 = vpop.f32.mrb[0].mxu0
        %v5207 = vadd.f32 %v5154, %v5206
        %v5208 = vpop.f32.mrb[0].mxu0
        %v5209 = vadd.f32 %v5156, %v5208
        %v5210 = vpop.f32.mrb[0].mxu0
        %v5211 = vadd.f32 %v5158, %v5210
        %v5212 = vpop.f32.mrb[0].mxu0
        %v5213 = vadd.f32 %v5160, %v5212
        %5214 = vdwg.mxu0
        %5215 = vmatprep.subr.bf16.mxu0 %v2172
        %5216 = vmatpush1.bf16.msra.mxu0 %v2171
        %5217 = vmatprep.subr.bf16.mxu0 %v2174
        %5218 = vmatpush1.bf16.msra.mxu0 %v2173
        %5219 = vmatprep.subr.bf16.mxu0 %v2176
        %5220 = vmatpush1.bf16.msra.mxu0 %v2175
        %5221 = vmatprep.subr.bf16.mxu0 %v2178
        %5222 = vmatpush1.bf16.msra.mxu0 %v2177
        %5223 = vmatprep.subr.bf16.mxu0 %v2180
        %5224 = vmatpush1.bf16.msra.mxu0 %v2179
        %5225 = vmatprep.subr.bf16.mxu0 %v2182
        %5226 = vmatpush1.bf16.msra.mxu0 %v2181
        %5227 = vmatprep.subr.bf16.mxu0 %v2184
        %5228 = vmatpush1.bf16.msra.mxu0 %v2183
        %5229 = vmatprep.subr.bf16.mxu0 %v2186
        %5230 = vmatpush1.bf16.msra.mxu0 %v2185
        %5231 = vmatprep.subr.bf16.mxu0 %v2188
        %5232 = vmatpush1.bf16.msra.mxu0 %v2187
        %5233 = vmatprep.subr.bf16.mxu0 %v2190
        %5234 = vmatpush1.bf16.msra.mxu0 %v2189
        %5235 = vmatprep.subr.bf16.mxu0 %v2192
        %5236 = vmatpush1.bf16.msra.mxu0 %v2191
        %5237 = vmatprep.subr.bf16.mxu0 %v2194
        %5238 = vmatpush1.bf16.msra.mxu0 %v2193
        %5239 = vmatprep.subr.bf16.mxu0 %v2196
        %5240 = vmatpush1.bf16.msra.mxu0 %v2195
        %5241 = vmatprep.subr.bf16.mxu0 %v2198
        %5242 = vmatpush1.bf16.msra.mxu0 %v2197
        %5243 = vmatprep.subr.bf16.mxu0 %v2200
        %5244 = vmatpush1.bf16.msra.mxu0 %v2199
        %5245 = vmatprep.subr.bf16.mxu0 %v2202
        %5246 = vmatpush1.bf16.msra.mxu0 %v2201
        %5247 = vmatprep.mubr.bf16.mxu0 %v5098
        %5248 = vmatmul.mubr.bf16.gmra.mrb[0].mxu0 %v5097
        %v5249 = vpop.f32.mrb[0].mxu0
        %v5250 = vadd.f32 %v5197, %v5249
        %v5251 = vpop.f32.mrb[0].mxu0
        %v5252 = vadd.f32 %v5199, %v5251
        %v5253 = vpop.f32.mrb[0].mxu0
        %v5254 = vadd.f32 %v5201, %v5253
        %v5255 = vpop.f32.mrb[0].mxu0
        %v5256 = vadd.f32 %v5203, %v5255
        %5257 = vmatprep.mubr.bf16.mxu0 %v5106
        %5258 = vmatmul.mubr.bf16.gmra.mrb[0].mxu0 %v5105
        %v5259 = vpop.f32.mrb[0].mxu0
        %v5260 = vadd.f32 %v5207, %v5259
        %v5261 = vpop.f32.mrb[0].mxu0
        %v5262 = vadd.f32 %v5209, %v5261
        %v5263 = vpop.f32.mrb[0].mxu0
        %v5264 = vadd.f32 %v5211, %v5263
        %v5265 = vpop.f32.mrb[0].mxu0
        %v5266 = vadd.f32 %v5213, %v5265
        %5267 = vdwg.mxu0
        %5268 = vmatprep.subr.bf16.mxu0 %v2204
        %5269 = vmatpush1.bf16.msra.mxu0 %v2203
        %5270 = vmatprep.subr.bf16.mxu0 %v2206
        %5271 = vmatpush1.bf16.msra.mxu0 %v2205
        %5272 = vmatprep.subr.bf16.mxu0 %v2208
        %5273 = vmatpush1.bf16.msra.mxu0 %v2207
        %5274 = vmatprep.subr.bf16.mxu0 %v2210
        %5275 = vmatpush1.bf16.msra.mxu0 %v2209
        %5276 = vmatprep.subr.bf16.mxu0 %v2212
        %5277 = vmatpush1.bf16.msra.mxu0 %v2211
        %5278 = vmatprep.subr.bf16.mxu0 %v2214
        %5279 = vmatpush1.bf16.msra.mxu0 %v2213
        %5280 = vmatprep.subr.bf16.mxu0 %v2216
        %5281 = vmatpush1.bf16.msra.mxu0 %v2215
        %5282 = vmatprep.subr.bf16.mxu0 %v2218
        %5283 = vmatpush1.bf16.msra.mxu0 %v2217
        %5284 = vmatprep.subr.bf16.mxu0 %v2220
        %5285 = vmatpush1.bf16.msra.mxu0 %v2219
        %5286 = vmatprep.subr.bf16.mxu0 %v2222
        %5287 = vmatpush1.bf16.msra.mxu0 %v2221
        %5288 = vmatprep.subr.bf16.mxu0 %v2224
        %5289 = vmatpush1.bf16.msra.mxu0 %v2223
        %5290 = vmatprep.subr.bf16.mxu0 %v2226
        %5291 = vmatpush1.bf16.msra.mxu0 %v2225
        %5292 = vmatprep.subr.bf16.mxu0 %v2228
        %5293 = vmatpush1.bf16.msra.mxu0 %v2227
        %5294 = vmatprep.subr.bf16.mxu0 %v2230
        %5295 = vmatpush1.bf16.msra.mxu0 %v2229
        %5296 = vmatprep.subr.bf16.mxu0 %v2232
        %5297 = vmatpush1.bf16.msra.mxu0 %v2231
        %5298 = vmatprep.subr.bf16.mxu0 %v2234
        %5299 = vmatpush1.bf16.msra.mxu0 %v2233
        %5300 = vmatprep.mubr.bf16.mxu0 %v5100
        %5301 = vmatmul.mubr.bf16.gmra.mrb[0].mxu0 %v5099
        %v5302 = vpop.f32.mrb[0].mxu0
        %v5303 = vadd.f32 %v5250, %v5302
        %v5304 = vpop.f32.mrb[0].mxu0
        %v5305 = vadd.f32 %v5252, %v5304
        %v5306 = vpop.f32.mrb[0].mxu0
        %v5307 = vadd.f32 %v5254, %v5306
        %v5308 = vpop.f32.mrb[0].mxu0
        %v5309 = vadd.f32 %v5256, %v5308
        %5310 = vmatprep.mubr.bf16.mxu0 %v5108
        %5311 = vmatmul.mubr.bf16.gmra.mrb[0].mxu0 %v5107
        %v5312 = vpop.f32.mrb[0].mxu0
        %v5313 = vadd.f32 %v5260, %v5312
        %v5314 = vpop.f32.mrb[0].mxu0
        %v5315 = vadd.f32 %v5262, %v5314
        %v5316 = vpop.f32.mrb[0].mxu0
        %v5317 = vadd.f32 %v5264, %v5316
        %v5318 = vpop.f32.mrb[0].mxu0
        %v5319 = vadd.f32 %v5266, %v5318
        %5320 = vdwg.mxu0
        %5329 = vrot.lane.b32.xlu0 %v5303, 7
        %v5330 = vpop.permute.xlu0 %5329
        %5331 = vrot.lane.b32.xlu0 %v5305, 7
        %v5332 = vpop.permute.xlu0 %5331
        %5333 = vrot.lane.b32.xlu0 %v5307, 7
        %v5334 = vpop.permute.xlu0 %5333
        %5335 = vrot.lane.b32.xlu0 %v5309, 7
        %v5336 = vpop.permute.xlu0 %5335
        %5337 = vrot.lane.b32.xlu0 %v5313, 7
        %v5338 = vpop.permute.xlu0 %5337
        %5339 = vrot.lane.b32.xlu0 %v5315, 7
        %v5340 = vpop.permute.xlu0 %5339
        %5341 = vrot.lane.b32.xlu0 %v5317, 7
        %v5342 = vpop.permute.xlu0 %5341
        %5343 = vrot.lane.b32.xlu0 %v5319, 7
        %v5344 = vpop.permute.xlu0 %5343
        %v5345 = vsel %vm2547, %v5330, %v5332
        %v5346 = vsel %vm2547, %v5334, %v5336
        %v5347 = vsel %vm2547, %v5338, %v5340
        %v5348 = vsel %vm2547, %v5342, %v5344
        %v5361 = vsel %vm2547, 0.0, %v5330
        %v5362 = vsel %vm2547, 0.0, %v5334
        %v5363 = vsel %vm2547, 0.0, %v5338
        %v5364 = vsel %vm2547, 0.0, %v5342
        %v5365 = vsel %vm2547, %v5332, 0.0
        %v5366 = vsel %vm2547, %v5336, 0.0
        %v5367 = vsel %vm2547, %v5340, 0.0
        %v5368 = vsel %vm2547, %v5344, 0.0
        %5377 = vrot.lane.b32.xlu0 %v5361, 127
        %v5378 = vpop.permute.xlu0 %5377
        %5379 = vrot.lane.b32.xlu0 %v5345, 127
        %v5380 = vpop.permute.xlu0 %5379
        %5381 = vrot.lane.b32.xlu0 %v5365, 127
        %v5382 = vpop.permute.xlu0 %5381
        %5383 = vrot.lane.b32.xlu0 %v5362, 127
        %v5384 = vpop.permute.xlu0 %5383
        %5385 = vrot.lane.b32.xlu0 %v5346, 127
        %v5386 = vpop.permute.xlu0 %5385
        %5387 = vrot.lane.b32.xlu0 %v5366, 127
        %v5388 = vpop.permute.xlu0 %5387
        %5389 = vrot.lane.b32.xlu0 %v5363, 127
        %v5390 = vpop.permute.xlu0 %5389
        %5391 = vrot.lane.b32.xlu0 %v5347, 127
        %v5392 = vpop.permute.xlu0 %5391
        %5393 = vrot.lane.b32.xlu0 %v5367, 127
        %v5394 = vpop.permute.xlu0 %5393
        %5395 = vrot.lane.b32.xlu0 %v5364, 127
        %v5396 = vpop.permute.xlu0 %5395
        %5397 = vrot.lane.b32.xlu0 %v5348, 127
        %v5398 = vpop.permute.xlu0 %5397
        %5399 = vrot.lane.b32.xlu0 %v5368, 127
        %v5400 = vpop.permute.xlu0 %5399
        %v5401 = vsel %vm1250, %v5378, %v5380
        %v5402 = vsel %vm1250, %v5380, %v5382
        %v5403 = vsel %vm1250, %v5384, %v5386
        %v5404 = vsel %vm1250, %v5386, %v5388
        %v5405 = vsel %vm1250, %v5390, %v5392
        %v5406 = vsel %vm1250, %v5392, %v5394
        %v5407 = vsel %vm1250, %v5396, %v5398
        %v5408 = vsel %vm1250, %v5398, %v5400
        %5417 = vrot.lane.b32.xlu0 %v5361, 126
        %v5418 = vpop.permute.xlu0 %5417
        %5419 = vrot.lane.b32.xlu0 %v5345, 126
        %v5420 = vpop.permute.xlu0 %5419
        %5421 = vrot.lane.b32.xlu0 %v5365, 126
        %v5422 = vpop.permute.xlu0 %5421
        %5423 = vrot.lane.b32.xlu0 %v5362, 126
        %v5424 = vpop.permute.xlu0 %5423
        %5425 = vrot.lane.b32.xlu0 %v5346, 126
        %v5426 = vpop.permute.xlu0 %5425
        %5427 = vrot.lane.b32.xlu0 %v5366, 126
        %v5428 = vpop.permute.xlu0 %5427
        %5429 = vrot.lane.b32.xlu0 %v5363, 126
        %v5430 = vpop.permute.xlu0 %5429
        %5431 = vrot.lane.b32.xlu0 %v5347, 126
        %v5432 = vpop.permute.xlu0 %5431
        %5433 = vrot.lane.b32.xlu0 %v5367, 126
        %v5434 = vpop.permute.xlu0 %5433
        %5435 = vrot.lane.b32.xlu0 %v5364, 126
        %v5436 = vpop.permute.xlu0 %5435
        %5437 = vrot.lane.b32.xlu0 %v5348, 126
        %v5438 = vpop.permute.xlu0 %5437
        %5439 = vrot.lane.b32.xlu0 %v5368, 126
        %v5440 = vpop.permute.xlu0 %5439
        %v5441 = vsel %vm1294, %v5418, %v5420
        %v5442 = vsel %vm1294, %v5420, %v5422
        %v5443 = vsel %vm1294, %v5424, %v5426
        %v5444 = vsel %vm1294, %v5426, %v5428
        %v5445 = vsel %vm1294, %v5430, %v5432
        %v5446 = vsel %vm1294, %v5432, %v5434
        %v5447 = vsel %vm1294, %v5436, %v5438
        %v5448 = vsel %vm1294, %v5438, %v5440
        %5457 = vrot.lane.b32.xlu0 %v5361, 125
        %v5458 = vpop.permute.xlu0 %5457
        %5459 = vrot.lane.b32.xlu0 %v5345, 125
        %v5460 = vpop.permute.xlu0 %5459
        %5461 = vrot.lane.b32.xlu0 %v5365, 125
        %v5462 = vpop.permute.xlu0 %5461
        %5463 = vrot.lane.b32.xlu0 %v5362, 125
        %v5464 = vpop.permute.xlu0 %5463
        %5465 = vrot.lane.b32.xlu0 %v5346, 125
        %v5466 = vpop.permute.xlu0 %5465
        %5467 = vrot.lane.b32.xlu0 %v5366, 125
        %v5468 = vpop.permute.xlu0 %5467
        %5469 = vrot.lane.b32.xlu0 %v5363, 125
        %v5470 = vpop.permute.xlu0 %5469
        %5471 = vrot.lane.b32.xlu0 %v5347, 125
        %v5472 = vpop.permute.xlu0 %5471
        %5473 = vrot.lane.b32.xlu0 %v5367, 125
        %v5474 = vpop.permute.xlu0 %5473
        %5475 = vrot.lane.b32.xlu0 %v5364, 125
        %v5476 = vpop.permute.xlu0 %5475
        %5477 = vrot.lane.b32.xlu0 %v5348, 125
        %v5478 = vpop.permute.xlu0 %5477
        %5479 = vrot.lane.b32.xlu0 %v5368, 125
        %v5480 = vpop.permute.xlu0 %5479
        %v5481 = vsel %vm1338, %v5458, %v5460
        %v5482 = vsel %vm1338, %v5460, %v5462
        %v5483 = vsel %vm1338, %v5464, %v5466
        %v5484 = vsel %vm1338, %v5466, %v5468
        %v5485 = vsel %vm1338, %v5470, %v5472
        %v5486 = vsel %vm1338, %v5472, %v5474
        %v5487 = vsel %vm1338, %v5476, %v5478
        %v5488 = vsel %vm1338, %v5478, %v5480
        %5497 = vrot.lane.b32.xlu0 %v5361, 124
        %v5498 = vpop.permute.xlu0 %5497
        %5499 = vrot.lane.b32.xlu0 %v5345, 124
        %v5500 = vpop.permute.xlu0 %5499
        %5501 = vrot.lane.b32.xlu0 %v5365, 124
        %v5502 = vpop.permute.xlu0 %5501
        %5503 = vrot.lane.b32.xlu0 %v5362, 124
        %v5504 = vpop.permute.xlu0 %5503
        %5505 = vrot.lane.b32.xlu0 %v5346, 124
        %v5506 = vpop.permute.xlu0 %5505
        %5507 = vrot.lane.b32.xlu0 %v5366, 124
        %v5508 = vpop.permute.xlu0 %5507
        %5509 = vrot.lane.b32.xlu0 %v5363, 124
        %v5510 = vpop.permute.xlu0 %5509
        %5511 = vrot.lane.b32.xlu0 %v5347, 124
        %v5512 = vpop.permute.xlu0 %5511
        %5513 = vrot.lane.b32.xlu0 %v5367, 124
        %v5514 = vpop.permute.xlu0 %5513
        %5515 = vrot.lane.b32.xlu0 %v5364, 124
        %v5516 = vpop.permute.xlu0 %5515
        %5517 = vrot.lane.b32.xlu0 %v5348, 124
        %v5518 = vpop.permute.xlu0 %5517
        %5519 = vrot.lane.b32.xlu0 %v5368, 124
        %v5520 = vpop.permute.xlu0 %5519
        %v5521 = vsel %vm1382, %v5498, %v5500
        %v5522 = vsel %vm1382, %v5500, %v5502
        %v5523 = vsel %vm1382, %v5504, %v5506
        %v5524 = vsel %vm1382, %v5506, %v5508
        %v5525 = vsel %vm1382, %v5510, %v5512
        %v5526 = vsel %vm1382, %v5512, %v5514
        %v5527 = vsel %vm1382, %v5516, %v5518
        %v5528 = vsel %vm1382, %v5518, %v5520
        %5537 = vrot.lane.b32.xlu0 %v5361, 123
        %v5538 = vpop.permute.xlu0 %5537
        %5539 = vrot.lane.b32.xlu0 %v5345, 123
        %v5540 = vpop.permute.xlu0 %5539
        %5541 = vrot.lane.b32.xlu0 %v5365, 123
        %v5542 = vpop.permute.xlu0 %5541
        %5543 = vrot.lane.b32.xlu0 %v5362, 123
        %v5544 = vpop.permute.xlu0 %5543
        %5545 = vrot.lane.b32.xlu0 %v5346, 123
        %v5546 = vpop.permute.xlu0 %5545
        %5547 = vrot.lane.b32.xlu0 %v5366, 123
        %v5548 = vpop.permute.xlu0 %5547
        %5549 = vrot.lane.b32.xlu0 %v5363, 123
        %v5550 = vpop.permute.xlu0 %5549
        %5551 = vrot.lane.b32.xlu0 %v5347, 123
        %v5552 = vpop.permute.xlu0 %5551
        %5553 = vrot.lane.b32.xlu0 %v5367, 123
        %v5554 = vpop.permute.xlu0 %5553
        %5555 = vrot.lane.b32.xlu0 %v5364, 123
        %v5556 = vpop.permute.xlu0 %5555
        %5557 = vrot.lane.b32.xlu0 %v5348, 123
        %v5558 = vpop.permute.xlu0 %5557
        %5559 = vrot.lane.b32.xlu0 %v5368, 123
        %v5560 = vpop.permute.xlu0 %5559
        %v5561 = vsel %vm2656, %v5538, %v5540
        %v5562 = vsel %vm2656, %v5540, %v5542
        %v5563 = vsel %vm2656, %v5544, %v5546
        %v5564 = vsel %vm2656, %v5546, %v5548
        %v5565 = vsel %vm2656, %v5550, %v5552
        %v5566 = vsel %vm2656, %v5552, %v5554
        %v5567 = vsel %vm2656, %v5556, %v5558
        %v5568 = vsel %vm2656, %v5558, %v5560
        %5577 = vrot.lane.b32.xlu0 %v5361, 122
        %v5578 = vpop.permute.xlu0 %5577
        %5579 = vrot.lane.b32.xlu0 %v5345, 122
        %v5580 = vpop.permute.xlu0 %5579
        %5581 = vrot.lane.b32.xlu0 %v5365, 122
        %v5582 = vpop.permute.xlu0 %5581
        %5583 = vrot.lane.b32.xlu0 %v5362, 122
        %v5584 = vpop.permute.xlu0 %5583
        %5585 = vrot.lane.b32.xlu0 %v5346, 122
        %v5586 = vpop.permute.xlu0 %5585
        %5587 = vrot.lane.b32.xlu0 %v5366, 122
        %v5588 = vpop.permute.xlu0 %5587
        %5589 = vrot.lane.b32.xlu0 %v5363, 122
        %v5590 = vpop.permute.xlu0 %5589
        %5591 = vrot.lane.b32.xlu0 %v5347, 122
        %v5592 = vpop.permute.xlu0 %5591
        %5593 = vrot.lane.b32.xlu0 %v5367, 122
        %v5594 = vpop.permute.xlu0 %5593
        %5595 = vrot.lane.b32.xlu0 %v5364, 122
        %v5596 = vpop.permute.xlu0 %5595
        %5597 = vrot.lane.b32.xlu0 %v5348, 122
        %v5598 = vpop.permute.xlu0 %5597
        %5599 = vrot.lane.b32.xlu0 %v5368, 122
        %v5600 = vpop.permute.xlu0 %5599
        %v5601 = vsel %vm2677, %v5578, %v5580
        %v5602 = vsel %vm2677, %v5580, %v5582
        %v5603 = vsel %vm2677, %v5584, %v5586
        %v5604 = vsel %vm2677, %v5586, %v5588
        %v5605 = vsel %vm2677, %v5590, %v5592
        %v5606 = vsel %vm2677, %v5592, %v5594
        %v5607 = vsel %vm2677, %v5596, %v5598
        %v5608 = vsel %vm2677, %v5598, %v5600
        %5617 = vrot.lane.b32.xlu0 %v5361, 121
        %v5618 = vpop.permute.xlu0 %5617
        %5619 = vrot.lane.b32.xlu0 %v5345, 121
        %v5620 = vpop.permute.xlu0 %5619
        %5621 = vrot.lane.b32.xlu0 %v5365, 121
        %v5622 = vpop.permute.xlu0 %5621
        %5623 = vrot.lane.b32.xlu0 %v5362, 121
        %v5624 = vpop.permute.xlu0 %5623
        %5625 = vrot.lane.b32.xlu0 %v5346, 121
        %v5626 = vpop.permute.xlu0 %5625
        %5627 = vrot.lane.b32.xlu0 %v5366, 121
        %v5628 = vpop.permute.xlu0 %5627
        %5629 = vrot.lane.b32.xlu0 %v5363, 121
        %v5630 = vpop.permute.xlu0 %5629
        %5631 = vrot.lane.b32.xlu0 %v5347, 121
        %v5632 = vpop.permute.xlu0 %5631
        %5633 = vrot.lane.b32.xlu0 %v5367, 121
        %v5634 = vpop.permute.xlu0 %5633
        %5635 = vrot.lane.b32.xlu0 %v5364, 121
        %v5636 = vpop.permute.xlu0 %5635
        %5637 = vrot.lane.b32.xlu0 %v5348, 121
        %v5638 = vpop.permute.xlu0 %5637
        %5639 = vrot.lane.b32.xlu0 %v5368, 121
        %v5640 = vpop.permute.xlu0 %5639
        %v5641 = vsel %vm2698, %v5618, %v5620
        %v5642 = vsel %vm2698, %v5620, %v5622
        %v5643 = vsel %vm2698, %v5624, %v5626
        %v5644 = vsel %vm2698, %v5626, %v5628
        %v5645 = vsel %vm2698, %v5630, %v5632
        %v5646 = vsel %vm2698, %v5632, %v5634
        %v5647 = vsel %vm2698, %v5636, %v5638
        %v5648 = vsel %vm2698, %v5638, %v5640
        %5657 = vrot.lane.b32.xlu0 %v5361, 120
        %v5658 = vpop.permute.xlu0 %5657
        %5659 = vrot.lane.b32.xlu0 %v5345, 120
        %v5660 = vpop.permute.xlu0 %5659
        %5661 = vrot.lane.b32.xlu0 %v5365, 120
        %v5662 = vpop.permute.xlu0 %5661
        %5663 = vrot.lane.b32.xlu0 %v5362, 120
        %v5664 = vpop.permute.xlu0 %5663
        %5665 = vrot.lane.b32.xlu0 %v5346, 120
        %v5666 = vpop.permute.xlu0 %5665
        %5667 = vrot.lane.b32.xlu0 %v5366, 120
        %v5668 = vpop.permute.xlu0 %5667
        %5669 = vrot.lane.b32.xlu0 %v5363, 120
        %v5670 = vpop.permute.xlu0 %5669
        %5671 = vrot.lane.b32.xlu0 %v5347, 120
        %v5672 = vpop.permute.xlu0 %5671
        %5673 = vrot.lane.b32.xlu0 %v5367, 120
        %v5674 = vpop.permute.xlu0 %5673
        %5675 = vrot.lane.b32.xlu0 %v5364, 120
        %v5676 = vpop.permute.xlu0 %5675
        %5677 = vrot.lane.b32.xlu0 %v5348, 120
        %v5678 = vpop.permute.xlu0 %5677
        %5679 = vrot.lane.b32.xlu0 %v5368, 120
        %v5680 = vpop.permute.xlu0 %5679
        %v5681 = vsel %vm2719, %v5658, %v5660
        %v5682 = vsel %vm2719, %v5660, %v5662
        %v5683 = vsel %vm2719, %v5664, %v5666
        %v5684 = vsel %vm2719, %v5666, %v5668
        %v5685 = vsel %vm2719, %v5670, %v5672
        %v5686 = vsel %vm2719, %v5672, %v5674
        %v5687 = vsel %vm2719, %v5676, %v5678
        %v5688 = vsel %vm2719, %v5678, %v5680
        %5697 = vrot.lane.b32.xlu0 %v5361, 119
        %v5698 = vpop.permute.xlu0 %5697
        %5699 = vrot.lane.b32.xlu0 %v5345, 119
        %v5700 = vpop.permute.xlu0 %5699
        %5701 = vrot.lane.b32.xlu0 %v5365, 119
        %v5702 = vpop.permute.xlu0 %5701
        %5703 = vrot.lane.b32.xlu0 %v5362, 119
        %v5704 = vpop.permute.xlu0 %5703
        %5705 = vrot.lane.b32.xlu0 %v5346, 119
        %v5706 = vpop.permute.xlu0 %5705
        %5707 = vrot.lane.b32.xlu0 %v5366, 119
        %v5708 = vpop.permute.xlu0 %5707
        %5709 = vrot.lane.b32.xlu0 %v5363, 119
        %v5710 = vpop.permute.xlu0 %5709
        %5711 = vrot.lane.b32.xlu0 %v5347, 119
        %v5712 = vpop.permute.xlu0 %5711
        %5713 = vrot.lane.b32.xlu0 %v5367, 119
        %v5714 = vpop.permute.xlu0 %5713
        %5715 = vrot.lane.b32.xlu0 %v5364, 119
        %v5716 = vpop.permute.xlu0 %5715
        %5717 = vrot.lane.b32.xlu0 %v5348, 119
        %v5718 = vpop.permute.xlu0 %5717
        %5719 = vrot.lane.b32.xlu0 %v5368, 119
        %v5720 = vpop.permute.xlu0 %5719
        %v5721 = vsel %vm2740, %v5698, %v5700
        %v5722 = vsel %vm2740, %v5700, %v5702
        %v5723 = vsel %vm2740, %v5704, %v5706
        %v5724 = vsel %vm2740, %v5706, %v5708
        %v5725 = vsel %vm2740, %v5710, %v5712
        %v5726 = vsel %vm2740, %v5712, %v5714
        %v5727 = vsel %vm2740, %v5716, %v5718
        %v5728 = vsel %vm2740, %v5718, %v5720
        %5737 = vrot.lane.b32.xlu0 %v5361, 118
        %v5738 = vpop.permute.xlu0 %5737
        %5739 = vrot.lane.b32.xlu0 %v5345, 118
        %v5740 = vpop.permute.xlu0 %5739
        %5741 = vrot.lane.b32.xlu0 %v5365, 118
        %v5742 = vpop.permute.xlu0 %5741
        %5743 = vrot.lane.b32.xlu0 %v5362, 118
        %v5744 = vpop.permute.xlu0 %5743
        %5745 = vrot.lane.b32.xlu0 %v5346, 118
        %v5746 = vpop.permute.xlu0 %5745
        %5747 = vrot.lane.b32.xlu0 %v5366, 118
        %v5748 = vpop.permute.xlu0 %5747
        %5749 = vrot.lane.b32.xlu0 %v5363, 118
        %v5750 = vpop.permute.xlu0 %5749
        %5751 = vrot.lane.b32.xlu0 %v5347, 118
        %v5752 = vpop.permute.xlu0 %5751
        %5753 = vrot.lane.b32.xlu0 %v5367, 118
        %v5754 = vpop.permute.xlu0 %5753
        %5755 = vrot.lane.b32.xlu0 %v5364, 118
        %v5756 = vpop.permute.xlu0 %5755
        %5757 = vrot.lane.b32.xlu0 %v5348, 118
        %v5758 = vpop.permute.xlu0 %5757
        %5759 = vrot.lane.b32.xlu0 %v5368, 118
        %v5760 = vpop.permute.xlu0 %5759
        %v5761 = vsel %vm2761, %v5738, %v5740
        %v5762 = vsel %vm2761, %v5740, %v5742
        %v5763 = vsel %vm2761, %v5744, %v5746
        %v5764 = vsel %vm2761, %v5746, %v5748
        %v5765 = vsel %vm2761, %v5750, %v5752
        %v5766 = vsel %vm2761, %v5752, %v5754
        %v5767 = vsel %vm2761, %v5756, %v5758
        %v5768 = vsel %vm2761, %v5758, %v5760
        %5777 = vrot.lane.b32.xlu0 %v5361, 117
        %v5778 = vpop.permute.xlu0 %5777
        %5779 = vrot.lane.b32.xlu0 %v5345, 117
        %v5780 = vpop.permute.xlu0 %5779
        %5781 = vrot.lane.b32.xlu0 %v5365, 117
        %v5782 = vpop.permute.xlu0 %5781
        %5783 = vrot.lane.b32.xlu0 %v5362, 117
        %v5784 = vpop.permute.xlu0 %5783
        %5785 = vrot.lane.b32.xlu0 %v5346, 117
        %v5786 = vpop.permute.xlu0 %5785
        %5787 = vrot.lane.b32.xlu0 %v5366, 117
        %v5788 = vpop.permute.xlu0 %5787
        %5789 = vrot.lane.b32.xlu0 %v5363, 117
        %v5790 = vpop.permute.xlu0 %5789
        %5791 = vrot.lane.b32.xlu0 %v5347, 117
        %v5792 = vpop.permute.xlu0 %5791
        %5793 = vrot.lane.b32.xlu0 %v5367, 117
        %v5794 = vpop.permute.xlu0 %5793
        %5795 = vrot.lane.b32.xlu0 %v5364, 117
        %v5796 = vpop.permute.xlu0 %5795
        %5797 = vrot.lane.b32.xlu0 %v5348, 117
        %v5798 = vpop.permute.xlu0 %5797
        %5799 = vrot.lane.b32.xlu0 %v5368, 117
        %v5800 = vpop.permute.xlu0 %5799
        %v5801 = vsel %vm2782, %v5778, %v5780
        %v5802 = vsel %vm2782, %v5780, %v5782
        %v5803 = vsel %vm2782, %v5784, %v5786
        %v5804 = vsel %vm2782, %v5786, %v5788
        %v5805 = vsel %vm2782, %v5790, %v5792
        %v5806 = vsel %vm2782, %v5792, %v5794
        %v5807 = vsel %vm2782, %v5796, %v5798
        %v5808 = vsel %vm2782, %v5798, %v5800
        %5817 = vrot.lane.b32.xlu0 %v5361, 116
        %v5818 = vpop.permute.xlu0 %5817
        %5819 = vrot.lane.b32.xlu0 %v5345, 116
        %v5820 = vpop.permute.xlu0 %5819
        %5821 = vrot.lane.b32.xlu0 %v5365, 116
        %v5822 = vpop.permute.xlu0 %5821
        %5823 = vrot.lane.b32.xlu0 %v5362, 116
        %v5824 = vpop.permute.xlu0 %5823
        %5825 = vrot.lane.b32.xlu0 %v5346, 116
        %v5826 = vpop.permute.xlu0 %5825
        %5827 = vrot.lane.b32.xlu0 %v5366, 116
        %v5828 = vpop.permute.xlu0 %5827
        %5829 = vrot.lane.b32.xlu0 %v5363, 116
        %v5830 = vpop.permute.xlu0 %5829
        %5831 = vrot.lane.b32.xlu0 %v5347, 116
        %v5832 = vpop.permute.xlu0 %5831
        %5833 = vrot.lane.b32.xlu0 %v5367, 116
        %v5834 = vpop.permute.xlu0 %5833
        %5835 = vrot.lane.b32.xlu0 %v5364, 116
        %v5836 = vpop.permute.xlu0 %5835
        %5837 = vrot.lane.b32.xlu0 %v5348, 116
        %v5838 = vpop.permute.xlu0 %5837
        %5839 = vrot.lane.b32.xlu0 %v5368, 116
        %v5840 = vpop.permute.xlu0 %5839
        %v5841 = vsel %vm2803, %v5818, %v5820
        %v5842 = vsel %vm2803, %v5820, %v5822
        %v5843 = vsel %vm2803, %v5824, %v5826
        %v5844 = vsel %vm2803, %v5826, %v5828
        %v5845 = vsel %vm2803, %v5830, %v5832
        %v5846 = vsel %vm2803, %v5832, %v5834
        %v5847 = vsel %vm2803, %v5836, %v5838
        %v5848 = vsel %vm2803, %v5838, %v5840
        %5857 = vrot.lane.b32.xlu0 %v5361, 115
        %v5858 = vpop.permute.xlu0 %5857
        %5859 = vrot.lane.b32.xlu0 %v5345, 115
        %v5860 = vpop.permute.xlu0 %5859
        %5861 = vrot.lane.b32.xlu0 %v5365, 115
        %v5862 = vpop.permute.xlu0 %5861
        %5863 = vrot.lane.b32.xlu0 %v5362, 115
        %v5864 = vpop.permute.xlu0 %5863
        %5865 = vrot.lane.b32.xlu0 %v5346, 115
        %v5866 = vpop.permute.xlu0 %5865
        %5867 = vrot.lane.b32.xlu0 %v5366, 115
        %v5868 = vpop.permute.xlu0 %5867
        %5869 = vrot.lane.b32.xlu0 %v5363, 115
        %v5870 = vpop.permute.xlu0 %5869
        %5871 = vrot.lane.b32.xlu0 %v5347, 115
        %v5872 = vpop.permute.xlu0 %5871
        %5873 = vrot.lane.b32.xlu0 %v5367, 115
        %v5874 = vpop.permute.xlu0 %5873
        %5875 = vrot.lane.b32.xlu0 %v5364, 115
        %v5876 = vpop.permute.xlu0 %5875
        %5877 = vrot.lane.b32.xlu0 %v5348, 115
        %v5878 = vpop.permute.xlu0 %5877
        %5879 = vrot.lane.b32.xlu0 %v5368, 115
        %v5880 = vpop.permute.xlu0 %5879
        %v5881 = vsel %vm2824, %v5858, %v5860
        %v5882 = vsel %vm2824, %v5860, %v5862
        %v5883 = vsel %vm2824, %v5864, %v5866
        %v5884 = vsel %vm2824, %v5866, %v5868
        %v5885 = vsel %vm2824, %v5870, %v5872
        %v5886 = vsel %vm2824, %v5872, %v5874
        %v5887 = vsel %vm2824, %v5876, %v5878
        %v5888 = vsel %vm2824, %v5878, %v5880
        %5897 = vrot.lane.b32.xlu0 %v5361, 114
        %v5898 = vpop.permute.xlu0 %5897
        %5899 = vrot.lane.b32.xlu0 %v5345, 114
        %v5900 = vpop.permute.xlu0 %5899
        %5901 = vrot.lane.b32.xlu0 %v5365, 114
        %v5902 = vpop.permute.xlu0 %5901
        %5903 = vrot.lane.b32.xlu0 %v5362, 114
        %v5904 = vpop.permute.xlu0 %5903
        %5905 = vrot.lane.b32.xlu0 %v5346, 114
        %v5906 = vpop.permute.xlu0 %5905
        %5907 = vrot.lane.b32.xlu0 %v5366, 114
        %v5908 = vpop.permute.xlu0 %5907
        %5909 = vrot.lane.b32.xlu0 %v5363, 114
        %v5910 = vpop.permute.xlu0 %5909
        %5911 = vrot.lane.b32.xlu0 %v5347, 114
        %v5912 = vpop.permute.xlu0 %5911
        %5913 = vrot.lane.b32.xlu0 %v5367, 114
        %v5914 = vpop.permute.xlu0 %5913
        %5915 = vrot.lane.b32.xlu0 %v5364, 114
        %v5916 = vpop.permute.xlu0 %5915
        %5917 = vrot.lane.b32.xlu0 %v5348, 114
        %v5918 = vpop.permute.xlu0 %5917
        %5919 = vrot.lane.b32.xlu0 %v5368, 114
        %v5920 = vpop.permute.xlu0 %5919
        %v5921 = vsel %vm2845, %v5898, %v5900
        %v5922 = vsel %vm2845, %v5900, %v5902
        %v5923 = vsel %vm2845, %v5904, %v5906
        %v5924 = vsel %vm2845, %v5906, %v5908
        %v5925 = vsel %vm2845, %v5910, %v5912
        %v5926 = vsel %vm2845, %v5912, %v5914
        %v5927 = vsel %vm2845, %v5916, %v5918
        %v5928 = vsel %vm2845, %v5918, %v5920
        %v5937 = vpack.c.bf16 %v5362, %v5361
        %v5938 = vpack.c.bf16 %v5346, %v5345
        %v5939 = vpack.c.bf16 %v5364, %v5363
        %v5940 = vpack.c.bf16 %v5348, %v5347
        %v5941 = vpack.c.bf16 %v5403, %v5401
        %v5942 = vpack.c.bf16 %v5404, %v5402
        %v5943 = vpack.c.bf16 %v5407, %v5405
        %v5944 = vpack.c.bf16 %v5408, %v5406
        %v5945 = vpack.c.bf16 %v5443, %v5441
        %v5946 = vpack.c.bf16 %v5444, %v5442
        %v5947 = vpack.c.bf16 %v5447, %v5445
        %v5948 = vpack.c.bf16 %v5448, %v5446
        %v5949 = vpack.c.bf16 %v5483, %v5481
        %v5950 = vpack.c.bf16 %v5484, %v5482
        %v5951 = vpack.c.bf16 %v5487, %v5485
        %v5952 = vpack.c.bf16 %v5488, %v5486
        %v5953 = vpack.c.bf16 %v5523, %v5521
        %v5954 = vpack.c.bf16 %v5524, %v5522
        %v5955 = vpack.c.bf16 %v5527, %v5525
        %v5956 = vpack.c.bf16 %v5528, %v5526
        %v5957 = vpack.c.bf16 %v5563, %v5561
        %v5958 = vpack.c.bf16 %v5564, %v5562
        %v5959 = vpack.c.bf16 %v5567, %v5565
        %v5960 = vpack.c.bf16 %v5568, %v5566
        %v5961 = vpack.c.bf16 %v5603, %v5601
        %v5962 = vpack.c.bf16 %v5604, %v5602
        %v5963 = vpack.c.bf16 %v5607, %v5605
        %v5964 = vpack.c.bf16 %v5608, %v5606
        %v5965 = vpack.c.bf16 %v5643, %v5641
        %v5966 = vpack.c.bf16 %v5644, %v5642
        %v5967 = vpack.c.bf16 %v5647, %v5645
        %v5968 = vpack.c.bf16 %v5648, %v5646
        %v5969 = vpack.c.bf16 %v5683, %v5681
        %v5970 = vpack.c.bf16 %v5684, %v5682
        %v5971 = vpack.c.bf16 %v5687, %v5685
        %v5972 = vpack.c.bf16 %v5688, %v5686
        %v5973 = vpack.c.bf16 %v5723, %v5721
        %v5974 = vpack.c.bf16 %v5724, %v5722
        %v5975 = vpack.c.bf16 %v5727, %v5725
        %v5976 = vpack.c.bf16 %v5728, %v5726
        %v5977 = vpack.c.bf16 %v5763, %v5761
        %v5978 = vpack.c.bf16 %v5764, %v5762
        %v5979 = vpack.c.bf16 %v5767, %v5765
        %v5980 = vpack.c.bf16 %v5768, %v5766
        %v5981 = vpack.c.bf16 %v5803, %v5801
        %v5982 = vpack.c.bf16 %v5804, %v5802
        %v5983 = vpack.c.bf16 %v5807, %v5805
        %v5984 = vpack.c.bf16 %v5808, %v5806
        %v5985 = vpack.c.bf16 %v5843, %v5841
        %v5986 = vpack.c.bf16 %v5844, %v5842
        %v5987 = vpack.c.bf16 %v5847, %v5845
        %v5988 = vpack.c.bf16 %v5848, %v5846
        %v5989 = vpack.c.bf16 %v5883, %v5881
        %v5990 = vpack.c.bf16 %v5884, %v5882
        %v5991 = vpack.c.bf16 %v5887, %v5885
        %v5992 = vpack.c.bf16 %v5888, %v5886
        %v5993 = vpack.c.bf16 %v5923, %v5921
        %v5994 = vpack.c.bf16 %v5924, %v5922
        %v5995 = vpack.c.bf16 %v5927, %v5925
        %v5996 = vpack.c.bf16 %v5928, %v5926
        %5998 = vset.pattern.permute.xlu0 0
        %5999 = vperm.xlu0 %5998, %v4484
        %v6000 = vpop.permute.xlu0 %5999
        %6003 = vset.pattern.permute.xlu0 0
        %6004 = vperm.xlu0 %6003, %v4485
        %v6005 = vpop.permute.xlu0 %6004
        %6008 = vset.pattern.permute.xlu0 0
        %6009 = vperm.xlu0 %6008, %v4486
        %v6010 = vpop.permute.xlu0 %6009
        %6013 = vset.pattern.permute.xlu0 0
        %6014 = vperm.xlu0 %6013, %v4487
        %v6015 = vpop.permute.xlu0 %6014
        %v6025 = vunpack.c.l.b16 %v4476
        %v6026 = vunpack.c.h.b16 %v4476
        %v6027 = vunpack.c.l.b16 %v4477
        %v6028 = vunpack.c.h.b16 %v4477
        %v6029 = vunpack.c.l.b16 %v4478
        %v6030 = vunpack.c.h.b16 %v4478
        %v6031 = vunpack.c.l.b16 %v4479
        %v6032 = vunpack.c.h.b16 %v4479
        %v6033 = vunpack.c.l.b16 %v4480
        %v6034 = vunpack.c.h.b16 %v4480
        %v6035 = vunpack.c.l.b16 %v4481
        %v6036 = vunpack.c.h.b16 %v4481
        %v6037 = vunpack.c.l.b16 %v4482
        %v6038 = vunpack.c.h.b16 %v4482
        %v6039 = vunpack.c.l.b16 %v4483
        %v6040 = vunpack.c.h.b16 %v4483
        %v6041 = vpack.c.b16 %v6029, %v6025
        %v6042 = vpack.c.b16 %v6030, %v6026
        %v6043 = vpack.c.b16 %v6031, %v6027
        %v6044 = vpack.c.b16 %v6032, %v6028
        %v6045 = vpack.c.b16 %v6037, %v6033
        %v6046 = vpack.c.b16 %v6038, %v6034
        %v6047 = vpack.c.b16 %v6039, %v6035
        %v6048 = vpack.c.b16 %v6040, %v6036
        %v6056 = vsel %vm3498, %v6044, 0
        %v6059 = vsel %vm3498, %v6048, 0
        %6061 = vmatprep.subr.bf16.mxu0 %v5938
        %6062 = vmatpush1.bf16.msra.mxu0 %v5937
        %6063 = vmatprep.subr.bf16.mxu0 %v5940
        %6064 = vmatpush1.bf16.msra.mxu0 %v5939
        %6065 = vmatprep.subr.bf16.mxu0 %v5942
        %6066 = vmatpush1.bf16.msra.mxu0 %v5941
        %6067 = vmatprep.subr.bf16.mxu0 %v5944
        %6068 = vmatpush1.bf16.msra.mxu0 %v5943
        %6069 = vmatprep.subr.bf16.mxu0 %v5946
        %6070 = vmatpush1.bf16.msra.mxu0 %v5945
        %6071 = vmatprep.subr.bf16.mxu0 %v5948
        %6072 = vmatpush1.bf16.msra.mxu0 %v5947
        %6073 = vmatprep.subr.bf16.mxu0 %v5950
        %6074 = vmatpush1.bf16.msra.mxu0 %v5949
        %6075 = vmatprep.subr.bf16.mxu0 %v5952
        %6076 = vmatpush1.bf16.msra.mxu0 %v5951
        %6077 = vmatprep.subr.bf16.mxu0 %v5954
        %6078 = vmatpush1.bf16.msra.mxu0 %v5953
        %6079 = vmatprep.subr.bf16.mxu0 %v5956
        %6080 = vmatpush1.bf16.msra.mxu0 %v5955
        %6081 = vmatprep.subr.bf16.mxu0 %v5958
        %6082 = vmatpush1.bf16.msra.mxu0 %v5957
        %6083 = vmatprep.subr.bf16.mxu0 %v5960
        %6084 = vmatpush1.bf16.msra.mxu0 %v5959
        %6085 = vmatprep.subr.bf16.mxu0 %v5962
        %6086 = vmatpush1.bf16.msra.mxu0 %v5961
        %6087 = vmatprep.subr.bf16.mxu0 %v5964
        %6088 = vmatpush1.bf16.msra.mxu0 %v5963
        %6089 = vmatprep.subr.bf16.mxu0 %v5966
        %6090 = vmatpush1.bf16.msra.mxu0 %v5965
        %6091 = vmatprep.subr.bf16.mxu0 %v5968
        %6092 = vmatpush1.bf16.msra.mxu0 %v5967
        %6093 = vmatprep.mubr.bf16.mxu0 %v6042
        %6094 = vmatmul.mubr.bf16.gmra.mrb[0].mxu0 %v6041
        %v6095 = vpop.f32.mrb[0].mxu0
        %v6096 = vadd.f32 %v6000, %v6095
        %v6097 = vpop.f32.mrb[0].mxu0
        %v6098 = vadd.f32 %v6000, %v6097
        %v6099 = vpop.f32.mrb[0].mxu0
        %v6100 = vadd.f32 %v6005, %v6099
        %v6101 = vpop.f32.mrb[0].mxu0
        %v6102 = vadd.f32 %v6005, %v6101
        %6103 = vmatprep.mubr.bf16.mxu0 %v6046
        %6104 = vmatmul.mubr.bf16.gmra.mrb[0].mxu0 %v6045
        %v6105 = vpop.f32.mrb[0].mxu0
        %v6106 = vadd.f32 %v6010, %v6105
        %v6107 = vpop.f32.mrb[0].mxu0
        %v6108 = vadd.f32 %v6010, %v6107
        %v6109 = vpop.f32.mrb[0].mxu0
        %v6110 = vadd.f32 %v6015, %v6109
        %v6111 = vpop.f32.mrb[0].mxu0
        %v6112 = vadd.f32 %v6015, %v6111
        %6113 = vdwg.mxu0
        %6114 = vmatprep.subr.bf16.mxu0 %v5970
        %6115 = vmatpush1.bf16.msra.mxu0 %v5969
        %6116 = vmatprep.subr.bf16.mxu0 %v5972
        %6117 = vmatpush1.bf16.msra.mxu0 %v5971
        %6118 = vmatprep.subr.bf16.mxu0 %v5974
        %6119 = vmatpush1.bf16.msra.mxu0 %v5973
        %6120 = vmatprep.subr.bf16.mxu0 %v5976
        %6121 = vmatpush1.bf16.msra.mxu0 %v5975
        %6122 = vmatprep.subr.bf16.mxu0 %v5978
        %6123 = vmatpush1.bf16.msra.mxu0 %v5977
        %6124 = vmatprep.subr.bf16.mxu0 %v5980
        %6125 = vmatpush1.bf16.msra.mxu0 %v5979
        %6126 = vmatprep.subr.bf16.mxu0 %v5982
        %6127 = vmatpush1.bf16.msra.mxu0 %v5981
        %6128 = vmatprep.subr.bf16.mxu0 %v5984
        %6129 = vmatpush1.bf16.msra.mxu0 %v5983
        %6130 = vmatprep.subr.bf16.mxu0 %v5986
        %6131 = vmatpush1.bf16.msra.mxu0 %v5985
        %6132 = vmatprep.subr.bf16.mxu0 %v5988
        %6133 = vmatpush1.bf16.msra.mxu0 %v5987
        %6134 = vmatprep.subr.bf16.mxu0 %v5990
        %6135 = vmatpush1.bf16.msra.mxu0 %v5989
        %6136 = vmatprep.subr.bf16.mxu0 %v5992
        %6137 = vmatpush1.bf16.msra.mxu0 %v5991
        %6138 = vmatprep.subr.bf16.mxu0 %v5994
        %6139 = vmatpush1.bf16.msra.mxu0 %v5993
        %6140 = vmatprep.subr.bf16.mxu0 %v5996
        %6141 = vmatpush1.bf16.msra.mxu0 %v5995
        %6142 = vmatprep.subr.bf16.mxu0 0
        %6143 = vmatpush1.bf16.msra.mxu0 0
        %6144 = vmatprep.subr.bf16.mxu0 0
        %6145 = vmatpush1.bf16.msra.mxu0 0
        %6146 = vmatprep.mubr.bf16.mxu0 %v6056
        %6147 = vmatmul.mubr.bf16.gmra.mrb[0].mxu0 %v6043
        %v6148 = vpop.f32.mrb[0].mxu0
        %v6149 = vadd.f32 %v6096, %v6148
        %v6150 = vpop.f32.mrb[0].mxu0
        %v6151 = vadd.f32 %v6098, %v6150
        %v6152 = vpop.f32.mrb[0].mxu0
        %v6153 = vadd.f32 %v6100, %v6152
        %v6154 = vpop.f32.mrb[0].mxu0
        %v6155 = vadd.f32 %v6102, %v6154
        %6156 = vmatprep.mubr.bf16.mxu0 %v6059
        %6157 = vmatmul.mubr.bf16.gmra.mrb[0].mxu0 %v6047
        %v6158 = vpop.f32.mrb[0].mxu0
        %v6159 = vadd.f32 %v6106, %v6158
        %v6160 = vpop.f32.mrb[0].mxu0
        %v6161 = vadd.f32 %v6108, %v6160
        %v6162 = vpop.f32.mrb[0].mxu0
        %v6163 = vadd.f32 %v6110, %v6162
        %v6164 = vpop.f32.mrb[0].mxu0
        %v6165 = vadd.f32 %v6112, %v6164
        %6166 = vdwg.mxu0
        %vm6167 = vcmp.ge.f32.partialorder %v6149, 0.0
        %vm6168 = vcmp.ge.f32.partialorder %v6151, 0.0
        %vm6169 = vcmp.ge.f32.partialorder %v6153, 0.0
        %vm6170 = vcmp.ge.f32.partialorder %v6155, 0.0
        %vm6171 = vcmp.ge.f32.partialorder %v6159, 0.0
        %vm6172 = vcmp.ge.f32.partialorder %v6161, 0.0
        %vm6173 = vcmp.ge.f32.partialorder %v6163, 0.0
        %vm6174 = vcmp.ge.f32.partialorder %v6165, 0.0
        %v6175 = vmul.f32 %v6149, 0.2
        %v6176 = vmul.f32 %v6151, 0.2
        %v6177 = vmul.f32 %v6153, 0.2
        %v6178 = vmul.f32 %v6155, 0.2
        %v6179 = vmul.f32 %v6159, 0.2
        %v6180 = vmul.f32 %v6161, 0.2
        %v6181 = vmul.f32 %v6163, 0.2
        %v6182 = vmul.f32 %v6165, 0.2
        %v6183 = vsel %vm6167, %v6149, %v6175
        %v6184 = vsel %vm6168, %v6151, %v6176
        %v6185 = vsel %vm6169, %v6153, %v6177
        %v6186 = vsel %vm6170, %v6155, %v6178
        %v6187 = vsel %vm6171, %v6159, %v6179
        %v6188 = vsel %vm6172, %v6161, %v6180
        %v6189 = vsel %vm6173, %v6163, %v6181
        %v6190 = vsel %vm6174, %v6165, %v6182
        %v6191 = vpack.c.bf16 %v6185, %v6183
        %v6192 = vpack.c.bf16 %v6186, %v6184
        %v6193 = vpack.c.bf16 %v6189, %v6187
        %v6194 = vpack.c.bf16 %v6190, %v6188
        %6195 = vmatprep.subr.bf16.mxu0 0
        %6196 = vmatpush1.bf16.msra.mxu0 %v3074
        %6197 = vmatprep.subr.bf16.mxu0 0
        %6198 = vmatpush1.bf16.msra.mxu0 %v3075
        %6199 = vmatprep.subr.bf16.mxu0 0
        %6200 = vmatpush1.bf16.msra.mxu0 %v3076
        %6201 = vmatprep.subr.bf16.mxu0 0
        %6202 = vmatpush1.bf16.msra.mxu0 %v3077
        %6203 = vmatprep.subr.bf16.mxu0 0
        %6204 = vmatpush1.bf16.msra.mxu0 %v3078
        %6205 = vmatprep.subr.bf16.mxu0 0
        %6206 = vmatpush1.bf16.msra.mxu0 %v3079
        %6207 = vmatprep.subr.bf16.mxu0 0
        %6208 = vmatpush1.bf16.msra.mxu0 %v3080
        %6209 = vmatprep.subr.bf16.mxu0 0
        %6210 = vmatpush1.bf16.msra.mxu0 %v3081
        %6211 = vmatprep.subr.bf16.mxu0 0
        %6212 = vmatpush1.bf16.msra.mxu0 %v3082
        %6213 = vmatprep.subr.bf16.mxu0 0
        %6214 = vmatpush1.bf16.msra.mxu0 %v3083
        %6215 = vmatprep.subr.bf16.mxu0 0
        %6216 = vmatpush1.bf16.msra.mxu0 %v3084
        %6217 = vmatprep.subr.bf16.mxu0 0
        %6218 = vmatpush1.bf16.msra.mxu0 %v3085
        %6219 = vmatprep.subr.bf16.mxu0 0
        %6220 = vmatpush1.bf16.msra.mxu0 %v3086
        %6221 = vmatprep.subr.bf16.mxu0 0
        %6222 = vmatpush1.bf16.msra.mxu0 %v3087
        %6223 = vmatprep.subr.bf16.mxu0 0
        %6224 = vmatpush1.bf16.msra.mxu0 %v3088
        %6225 = vmatprep.subr.bf16.mxu0 0
        %6226 = vmatpush1.bf16.msra.mxu0 %v3089
        %6227 = vmatprep.mubr.bf16.mxu0 %v6192
        %6228 = vmatmul.mubr.bf16.gmra.mrb[0].mxu0 %v6191
        %v6229 = vpop.f32.mrb[0].mxu0
        %v6230 = vadd.f32 0.0, %v6229
        %v6231 = vpop.f32.mrb[0].mxu0
        %v6232 = vpop.f32.mrb[0].mxu0
        %v6233 = vadd.f32 0.0, %v6232
        %v6234 = vpop.f32.mrb[0].mxu0
        %6235 = vmatprep.mubr.bf16.mxu0 %v6194
        %6236 = vmatmul.mubr.bf16.gmra.mrb[0].mxu0 %v6193
        %v6237 = vpop.f32.mrb[0].mxu0
        %v6238 = vadd.f32 0.0, %v6237
        %v6239 = vpop.f32.mrb[0].mxu0
        %v6240 = vpop.f32.mrb[0].mxu0
        %v6241 = vadd.f32 0.0, %v6240
        %v6242 = vpop.f32.mrb[0].mxu0
        %6243 = vdwg.mxu0
        %6248 = vrot.lane.b32.xlu0 %v6230, 7
        %v6249 = vpop.permute.xlu0 %6248
        %6250 = vrot.lane.b32.xlu0 %v6233, 7
        %v6251 = vpop.permute.xlu0 %6250
        %6252 = vrot.lane.b32.xlu0 %v6238, 7
        %v6253 = vpop.permute.xlu0 %6252
        %6254 = vrot.lane.b32.xlu0 %v6241, 7
        %v6255 = vpop.permute.xlu0 %6254
        %v6260 = vsel %vm2547, 0.0, %v6249
        %v6261 = vsel %vm2547, 0.0, %v6251
        %v6262 = vsel %vm2547, 0.0, %v6253
        %v6263 = vsel %vm2547, 0.0, %v6255
        %v6264 = vsel %vm3175, %v6260, 0.0
        %v6265 = vsel %vm3175, %v6261, 0.0
        %v6266 = vsel %vm3175, %v6262, 0.0
        %v6267 = vsel %vm3175, %v6263, 0.0
        %6272 = vrot.lane.b32.xlu0 %v6264, 127
        %v6273 = vpop.permute.xlu0 %6272
        %6274 = vrot.lane.b32.xlu0 %v6265, 127
        %v6275 = vpop.permute.xlu0 %6274
        %6276 = vrot.lane.b32.xlu0 %v6266, 127
        %v6277 = vpop.permute.xlu0 %6276
        %6278 = vrot.lane.b32.xlu0 %v6267, 127
        %v6279 = vpop.permute.xlu0 %6278
        %6284 = vrot.lane.b32.xlu0 %v6264, 126
        %v6285 = vpop.permute.xlu0 %6284
        %6286 = vrot.lane.b32.xlu0 %v6265, 126
        %v6287 = vpop.permute.xlu0 %6286
        %6288 = vrot.lane.b32.xlu0 %v6266, 126
        %v6289 = vpop.permute.xlu0 %6288
        %6290 = vrot.lane.b32.xlu0 %v6267, 126
        %v6291 = vpop.permute.xlu0 %6290
        %6296 = vrot.lane.b32.xlu0 %v6264, 125
        %v6297 = vpop.permute.xlu0 %6296
        %6298 = vrot.lane.b32.xlu0 %v6265, 125
        %v6299 = vpop.permute.xlu0 %6298
        %6300 = vrot.lane.b32.xlu0 %v6266, 125
        %v6301 = vpop.permute.xlu0 %6300
        %6302 = vrot.lane.b32.xlu0 %v6267, 125
        %v6303 = vpop.permute.xlu0 %6302
        %6308 = vrot.lane.b32.xlu0 %v6264, 124
        %v6309 = vpop.permute.xlu0 %6308
        %6310 = vrot.lane.b32.xlu0 %v6265, 124
        %v6311 = vpop.permute.xlu0 %6310
        %6312 = vrot.lane.b32.xlu0 %v6266, 124
        %v6313 = vpop.permute.xlu0 %6312
        %6314 = vrot.lane.b32.xlu0 %v6267, 124
        %v6315 = vpop.permute.xlu0 %6314
        %6320 = vrot.lane.b32.xlu0 %v6264, 123
        %v6321 = vpop.permute.xlu0 %6320
        %6322 = vrot.lane.b32.xlu0 %v6265, 123
        %v6323 = vpop.permute.xlu0 %6322
        %6324 = vrot.lane.b32.xlu0 %v6266, 123
        %v6325 = vpop.permute.xlu0 %6324
        %6326 = vrot.lane.b32.xlu0 %v6267, 123
        %v6327 = vpop.permute.xlu0 %6326
        %6332 = vrot.lane.b32.xlu0 %v6264, 122
        %v6333 = vpop.permute.xlu0 %6332
        %6334 = vrot.lane.b32.xlu0 %v6265, 122
        %v6335 = vpop.permute.xlu0 %6334
        %6336 = vrot.lane.b32.xlu0 %v6266, 122
        %v6337 = vpop.permute.xlu0 %6336
        %6338 = vrot.lane.b32.xlu0 %v6267, 122
        %v6339 = vpop.permute.xlu0 %6338
        %6344 = vrot.lane.b32.xlu0 %v6264, 121
        %v6345 = vpop.permute.xlu0 %6344
        %6346 = vrot.lane.b32.xlu0 %v6265, 121
        %v6347 = vpop.permute.xlu0 %6346
        %6348 = vrot.lane.b32.xlu0 %v6266, 121
        %v6349 = vpop.permute.xlu0 %6348
        %6350 = vrot.lane.b32.xlu0 %v6267, 121
        %v6351 = vpop.permute.xlu0 %6350
        %6356 = vrot.lane.b32.xlu0 %v6264, 120
        %v6357 = vpop.permute.xlu0 %6356
        %6358 = vrot.lane.b32.xlu0 %v6265, 120
        %v6359 = vpop.permute.xlu0 %6358
        %6360 = vrot.lane.b32.xlu0 %v6266, 120
        %v6361 = vpop.permute.xlu0 %6360
        %6362 = vrot.lane.b32.xlu0 %v6267, 120
        %v6363 = vpop.permute.xlu0 %6362
        %6368 = vrot.lane.b32.xlu0 %v6264, 119
        %v6369 = vpop.permute.xlu0 %6368
        %6370 = vrot.lane.b32.xlu0 %v6265, 119
        %v6371 = vpop.permute.xlu0 %6370
        %6372 = vrot.lane.b32.xlu0 %v6266, 119
        %v6373 = vpop.permute.xlu0 %6372
        %6374 = vrot.lane.b32.xlu0 %v6267, 119
        %v6375 = vpop.permute.xlu0 %6374
        %6380 = vrot.lane.b32.xlu0 %v6264, 118
        %v6381 = vpop.permute.xlu0 %6380
        %6382 = vrot.lane.b32.xlu0 %v6265, 118
        %v6383 = vpop.permute.xlu0 %6382
        %6384 = vrot.lane.b32.xlu0 %v6266, 118
        %v6385 = vpop.permute.xlu0 %6384
        %6386 = vrot.lane.b32.xlu0 %v6267, 118
        %v6387 = vpop.permute.xlu0 %6386
        %6392 = vrot.lane.b32.xlu0 %v6264, 117
        %v6393 = vpop.permute.xlu0 %6392
        %6394 = vrot.lane.b32.xlu0 %v6265, 117
        %v6395 = vpop.permute.xlu0 %6394
        %6396 = vrot.lane.b32.xlu0 %v6266, 117
        %v6397 = vpop.permute.xlu0 %6396
        %6398 = vrot.lane.b32.xlu0 %v6267, 117
        %v6399 = vpop.permute.xlu0 %6398
        %6404 = vrot.lane.b32.xlu0 %v6264, 116
        %v6405 = vpop.permute.xlu0 %6404
        %6406 = vrot.lane.b32.xlu0 %v6265, 116
        %v6407 = vpop.permute.xlu0 %6406
        %6408 = vrot.lane.b32.xlu0 %v6266, 116
        %v6409 = vpop.permute.xlu0 %6408
        %6410 = vrot.lane.b32.xlu0 %v6267, 116
        %v6411 = vpop.permute.xlu0 %6410
        %6416 = vrot.lane.b32.xlu0 %v6264, 115
        %v6417 = vpop.permute.xlu0 %6416
        %6418 = vrot.lane.b32.xlu0 %v6265, 115
        %v6419 = vpop.permute.xlu0 %6418
        %6420 = vrot.lane.b32.xlu0 %v6266, 115
        %v6421 = vpop.permute.xlu0 %6420
        %6422 = vrot.lane.b32.xlu0 %v6267, 115
        %v6423 = vpop.permute.xlu0 %6422
        %6428 = vrot.lane.b32.xlu0 %v6264, 114
        %v6429 = vpop.permute.xlu0 %6428
        %6430 = vrot.lane.b32.xlu0 %v6265, 114
        %v6431 = vpop.permute.xlu0 %6430
        %6432 = vrot.lane.b32.xlu0 %v6266, 114
        %v6433 = vpop.permute.xlu0 %6432
        %6434 = vrot.lane.b32.xlu0 %v6267, 114
        %v6435 = vpop.permute.xlu0 %6434
        %v6440 = vpack.c.bf16 %v6265, %v6264
        %v6441 = vpack.c.bf16 %v6267, %v6266
        %v6442 = vpack.c.bf16 %v6275, %v6273
        %v6443 = vpack.c.bf16 %v6279, %v6277
        %v6444 = vpack.c.bf16 %v6287, %v6285
        %v6445 = vpack.c.bf16 %v6291, %v6289
        %v6446 = vpack.c.bf16 %v6299, %v6297
        %v6447 = vpack.c.bf16 %v6303, %v6301
        %v6448 = vpack.c.bf16 %v6311, %v6309
        %v6449 = vpack.c.bf16 %v6315, %v6313
        %v6450 = vpack.c.bf16 %v6323, %v6321
        %v6451 = vpack.c.bf16 %v6327, %v6325
        %v6452 = vpack.c.bf16 %v6335, %v6333
        %v6453 = vpack.c.bf16 %v6339, %v6337
        %v6454 = vpack.c.bf16 %v6347, %v6345
        %v6455 = vpack.c.bf16 %v6351, %v6349
        %v6456 = vpack.c.bf16 %v6359, %v6357
        %v6457 = vpack.c.bf16 %v6363, %v6361
        %v6458 = vpack.c.bf16 %v6371, %v6369
        %v6459 = vpack.c.bf16 %v6375, %v6373
        %v6460 = vpack.c.bf16 %v6383, %v6381
        %v6461 = vpack.c.bf16 %v6387, %v6385
        %v6462 = vpack.c.bf16 %v6395, %v6393
        %v6463 = vpack.c.bf16 %v6399, %v6397
        %v6464 = vpack.c.bf16 %v6407, %v6405
        %v6465 = vpack.c.bf16 %v6411, %v6409
        %v6466 = vpack.c.bf16 %v6419, %v6417
        %v6467 = vpack.c.bf16 %v6423, %v6421
        %v6468 = vpack.c.bf16 %v6431, %v6429
        %v6469 = vpack.c.bf16 %v6435, %v6433
        %6471 = vset.pattern.permute.xlu0 0
        %6472 = vperm.xlu0 %6471, %v4496
        %v6473 = vpop.permute.xlu0 %6472
        %6476 = vset.pattern.permute.xlu0 0
        %6477 = vperm.xlu0 %6476, %v4497
        %v6478 = vpop.permute.xlu0 %6477
        %6481 = vset.pattern.permute.xlu0 0
        %6482 = vperm.xlu0 %6481, %v4498
        %v6483 = vpop.permute.xlu0 %6482
        %6486 = vset.pattern.permute.xlu0 0
        %6487 = vperm.xlu0 %6486, %v4499
        %v6488 = vpop.permute.xlu0 %6487
        %v6498 = vunpack.c.l.b16 %v4488
        %v6499 = vunpack.c.h.b16 %v4488
        %v6500 = vunpack.c.l.b16 %v4489
        %v6501 = vunpack.c.h.b16 %v4489
        %v6502 = vunpack.c.l.b16 %v4490
        %v6503 = vunpack.c.h.b16 %v4490
        %v6504 = vunpack.c.l.b16 %v4491
        %v6505 = vunpack.c.h.b16 %v4491
        %v6506 = vunpack.c.l.b16 %v4492
        %v6507 = vunpack.c.h.b16 %v4492
        %v6508 = vunpack.c.l.b16 %v4493
        %v6509 = vunpack.c.h.b16 %v4493
        %v6510 = vunpack.c.l.b16 %v4494
        %v6511 = vunpack.c.h.b16 %v4494
        %v6512 = vunpack.c.l.b16 %v4495
        %v6513 = vunpack.c.h.b16 %v4495
        %v6514 = vpack.c.b16 %v6502, %v6498
        %v6515 = vpack.c.b16 %v6503, %v6499
        %v6516 = vpack.c.b16 %v6504, %v6500
        %v6517 = vpack.c.b16 %v6505, %v6501
        %v6518 = vpack.c.b16 %v6510, %v6506
        %v6519 = vpack.c.b16 %v6511, %v6507
        %v6520 = vpack.c.b16 %v6512, %v6508
        %v6521 = vpack.c.b16 %v6513, %v6509
        %v6529 = vsel %vm3498, %v6517, 0
        %v6532 = vsel %vm3498, %v6521, 0
        %6534 = vmatprep.subr.bf16.mxu0 0
        %6535 = vmatpush1.bf16.msra.mxu0 %v6440
        %6536 = vmatprep.subr.bf16.mxu0 0
        %6537 = vmatpush1.bf16.msra.mxu0 %v6441
        %6538 = vmatprep.subr.bf16.mxu0 0
        %6539 = vmatpush1.bf16.msra.mxu0 %v6442
        %6540 = vmatprep.subr.bf16.mxu0 0
        %6541 = vmatpush1.bf16.msra.mxu0 %v6443
        %6542 = vmatprep.subr.bf16.mxu0 0
        %6543 = vmatpush1.bf16.msra.mxu0 %v6444
        %6544 = vmatprep.subr.bf16.mxu0 0
        %6545 = vmatpush1.bf16.msra.mxu0 %v6445
        %6546 = vmatprep.subr.bf16.mxu0 0
        %6547 = vmatpush1.bf16.msra.mxu0 %v6446
        %6548 = vmatprep.subr.bf16.mxu0 0
        %6549 = vmatpush1.bf16.msra.mxu0 %v6447
        %6550 = vmatprep.subr.bf16.mxu0 0
        %6551 = vmatpush1.bf16.msra.mxu0 %v6448
        %6552 = vmatprep.subr.bf16.mxu0 0
        %6553 = vmatpush1.bf16.msra.mxu0 %v6449
        %6554 = vmatprep.subr.bf16.mxu0 0
        %6555 = vmatpush1.bf16.msra.mxu0 %v6450
        %6556 = vmatprep.subr.bf16.mxu0 0
        %6557 = vmatpush1.bf16.msra.mxu0 %v6451
        %6558 = vmatprep.subr.bf16.mxu0 0
        %6559 = vmatpush1.bf16.msra.mxu0 %v6452
        %6560 = vmatprep.subr.bf16.mxu0 0
        %6561 = vmatpush1.bf16.msra.mxu0 %v6453
        %6562 = vmatprep.subr.bf16.mxu0 0
        %6563 = vmatpush1.bf16.msra.mxu0 %v6454
        %6564 = vmatprep.subr.bf16.mxu0 0
        %6565 = vmatpush1.bf16.msra.mxu0 %v6455
        %6566 = vmatprep.mubr.bf16.mxu0 %v6515
        %6567 = vmatmul.mubr.bf16.gmra.mrb[0].mxu0 %v6514
        %v6568 = vpop.f32.mrb[0].mxu0
        %v6569 = vadd.f32 %v6473, %v6568
        %v6570 = vpop.f32.mrb[0].mxu0
        %v6571 = vpop.f32.mrb[0].mxu0
        %v6572 = vadd.f32 %v6478, %v6571
        %v6573 = vpop.f32.mrb[0].mxu0
        %6574 = vmatprep.mubr.bf16.mxu0 %v6519
        %6575 = vmatmul.mubr.bf16.gmra.mrb[0].mxu0 %v6518
        %v6576 = vpop.f32.mrb[0].mxu0
        %v6577 = vadd.f32 %v6483, %v6576
        %v6578 = vpop.f32.mrb[0].mxu0
        %v6579 = vpop.f32.mrb[0].mxu0
        %v6580 = vadd.f32 %v6488, %v6579
        %v6581 = vpop.f32.mrb[0].mxu0
        %6582 = vdwg.mxu0
        %6583 = vmatprep.subr.bf16.mxu0 0
        %6584 = vmatpush1.bf16.msra.mxu0 %v6456
        %6585 = vmatprep.subr.bf16.mxu0 0
        %6586 = vmatpush1.bf16.msra.mxu0 %v6457
        %6587 = vmatprep.subr.bf16.mxu0 0
        %6588 = vmatpush1.bf16.msra.mxu0 %v6458
        %6589 = vmatprep.subr.bf16.mxu0 0
        %6590 = vmatpush1.bf16.msra.mxu0 %v6459
        %6591 = vmatprep.subr.bf16.mxu0 0
        %6592 = vmatpush1.bf16.msra.mxu0 %v6460
        %6593 = vmatprep.subr.bf16.mxu0 0
        %6594 = vmatpush1.bf16.msra.mxu0 %v6461
        %6595 = vmatprep.subr.bf16.mxu0 0
        %6596 = vmatpush1.bf16.msra.mxu0 %v6462
        %6597 = vmatprep.subr.bf16.mxu0 0
        %6598 = vmatpush1.bf16.msra.mxu0 %v6463
        %6599 = vmatprep.subr.bf16.mxu0 0
        %6600 = vmatpush1.bf16.msra.mxu0 %v6464
        %6601 = vmatprep.subr.bf16.mxu0 0
        %6602 = vmatpush1.bf16.msra.mxu0 %v6465
        %6603 = vmatprep.subr.bf16.mxu0 0
        %6604 = vmatpush1.bf16.msra.mxu0 %v6466
        %6605 = vmatprep.subr.bf16.mxu0 0
        %6606 = vmatpush1.bf16.msra.mxu0 %v6467
        %6607 = vmatprep.subr.bf16.mxu0 0
        %6608 = vmatpush1.bf16.msra.mxu0 %v6468
        %6609 = vmatprep.subr.bf16.mxu0 0
        %6610 = vmatpush1.bf16.msra.mxu0 %v6469
        %6611 = vmatprep.subr.bf16.mxu0 0
        %6612 = vmatpush1.bf16.msra.mxu0 0
        %6613 = vmatprep.subr.bf16.mxu0 0
        %6614 = vmatpush1.bf16.msra.mxu0 0
        %6615 = vmatprep.mubr.bf16.mxu0 %v6529
        %6616 = vmatmul.mubr.bf16.gmra.mrb[0].mxu0 %v6516
        %v6617 = vpop.f32.mrb[0].mxu0
        %v6618 = vadd.f32 %v6569, %v6617
        %v6619 = vpop.f32.mrb[0].mxu0
        %v6620 = vpop.f32.mrb[0].mxu0
        %v6621 = vadd.f32 %v6572, %v6620
        %v6622 = vpop.f32.mrb[0].mxu0
        %6623 = vmatprep.mubr.bf16.mxu0 %v6532
        %6624 = vmatmul.mubr.bf16.gmra.mrb[0].mxu0 %v6520
        %v6625 = vpop.f32.mrb[0].mxu0
        %v6626 = vadd.f32 %v6577, %v6625
        %v6627 = vpop.f32.mrb[0].mxu0
        %v6628 = vpop.f32.mrb[0].mxu0
        %v6629 = vadd.f32 %v6580, %v6628
        %v6630 = vpop.f32.mrb[0].mxu0
        %6631 = vdwg.mxu0
        %vm6632 = vcmp.ge.f32.partialorder %v6618, 0.0
        %vm6633 = vcmp.ge.f32.partialorder %v6621, 0.0
        %vm6634 = vcmp.ge.f32.partialorder %v6626, 0.0
        %vm6635 = vcmp.ge.f32.partialorder %v6629, 0.0
        %v6636 = vmul.f32 %v6618, 0.2
        %v6637 = vmul.f32 %v6621, 0.2
        %v6638 = vmul.f32 %v6626, 0.2
        %v6639 = vmul.f32 %v6629, 0.2
        %v6640 = vsel %vm6632, %v6618, %v6636
        %v6641 = vsel %vm6633, %v6621, %v6637
        %v6642 = vsel %vm6634, %v6626, %v6638
        %v6643 = vsel %vm6635, %v6629, %v6639
        %v6644 = vpack.c.bf16 %v6641, %v6640
        %v6645 = vpack.c.bf16 %v6643, %v6642
        %v6647 = vsel %vm3829, %v6644, 0
        %v6650 = vsel %vm3829, %v6645, 0
        %6652 = vmatprep.subr.bf16.mxu0 %v3766
        %6653 = vmatpush1.bf16.msra.mxu0 %v3765
        %6654 = vmatprep.subr.bf16.mxu0 %v3774
        %6655 = vmatpush1.bf16.msra.mxu0 %v3773
        %6656 = vmatprep.subr.bf16.mxu0 %v3782
        %6657 = vmatpush1.bf16.msra.mxu0 %v3781
        %6658 = vmatprep.subr.bf16.mxu0 %v3790
        %6659 = vmatpush1.bf16.msra.mxu0 %v3789
        %6660 = vmatprep.subr.bf16.mxu0 0
        %6661 = vmatpush1.bf16.msra.mxu0 0
        %6662 = vmatprep.subr.bf16.mxu0 0
        %6663 = vmatpush1.bf16.msra.mxu0 0
        %6664 = vmatprep.subr.bf16.mxu0 0
        %6665 = vmatpush1.bf16.msra.mxu0 0
        %6666 = vmatprep.subr.bf16.mxu0 0
        %6667 = vmatpush1.bf16.msra.mxu0 0
        %6668 = vmatprep.subr.bf16.mxu0 0
        %6669 = vmatpush1.bf16.msra.mxu0 0
        %6670 = vmatprep.subr.bf16.mxu0 0
        %6671 = vmatpush1.bf16.msra.mxu0 0
        %6672 = vmatprep.subr.bf16.mxu0 0
        %6673 = vmatpush1.bf16.msra.mxu0 0
        %6674 = vmatprep.subr.bf16.mxu0 0
        %6675 = vmatpush1.bf16.msra.mxu0 0
        %6676 = vmatprep.subr.bf16.mxu0 0
        %6677 = vmatpush1.bf16.msra.mxu0 0
        %6678 = vmatprep.subr.bf16.mxu0 0
        %6679 = vmatpush1.bf16.msra.mxu0 0
        %6680 = vmatprep.subr.bf16.mxu0 0
        %6681 = vmatpush1.bf16.msra.mxu0 0
        %6682 = vmatprep.subr.bf16.mxu0 0
        %6683 = vmatpush1.bf16.msra.mxu0 0
        %6684 = vmatprep.mubr.bf16.mxu0 0
        %6685 = vmatmul.mubr.bf16.gmra.mrb[0].mxu0 %v6647
        %v6686 = vpop.f32.mrb[0].mxu0
        %v6687 = vadd.f32 0.0, %v6686
        %v6688 = vpop.f32.mrb[0].mxu0
        %v6689 = vadd.f32 0.0, %v6688
        %v6690 = vpop.f32.mrb[0].mxu0
        %v6691 = vadd.f32 0.0, %v6690
        %v6692 = vpop.f32.mrb[0].mxu0
        %v6693 = vadd.f32 0.0, %v6692
        %6694 = vmatprep.mubr.bf16.mxu0 0
        %6695 = vmatmul.mubr.bf16.gmra.mrb[0].mxu0 %v6650
        %v6696 = vpop.f32.mrb[0].mxu0
        %v6697 = vadd.f32 0.0, %v6696
        %v6698 = vpop.f32.mrb[0].mxu0
        %v6699 = vadd.f32 0.0, %v6698
        %v6700 = vpop.f32.mrb[0].mxu0
        %v6701 = vadd.f32 0.0, %v6700
        %v6702 = vpop.f32.mrb[0].mxu0
        %v6703 = vadd.f32 0.0, %v6702
        %6704 = vdwg.mxu0
        %6705 = vmatprep.subr.bf16.mxu0 %v3768
        %6706 = vmatpush1.bf16.msra.mxu0 %v3767
        %6707 = vmatprep.subr.bf16.mxu0 %v3776
        %6708 = vmatpush1.bf16.msra.mxu0 %v3775
        %6709 = vmatprep.subr.bf16.mxu0 %v3784
        %6710 = vmatpush1.bf16.msra.mxu0 %v3783
        %6711 = vmatprep.subr.bf16.mxu0 %v3792
        %6712 = vmatpush1.bf16.msra.mxu0 %v3791
        %6713 = vmatprep.subr.bf16.mxu0 0
        %6714 = vmatpush1.bf16.msra.mxu0 0
        %6715 = vmatprep.subr.bf16.mxu0 0
        %6716 = vmatpush1.bf16.msra.mxu0 0
        %6717 = vmatprep.subr.bf16.mxu0 0
        %6718 = vmatpush1.bf16.msra.mxu0 0
        %6719 = vmatprep.subr.bf16.mxu0 0
        %6720 = vmatpush1.bf16.msra.mxu0 0
        %6721 = vmatprep.subr.bf16.mxu0 0
        %6722 = vmatpush1.bf16.msra.mxu0 0
        %6723 = vmatprep.subr.bf16.mxu0 0
        %6724 = vmatpush1.bf16.msra.mxu0 0
        %6725 = vmatprep.subr.bf16.mxu0 0
        %6726 = vmatpush1.bf16.msra.mxu0 0
        %6727 = vmatprep.subr.bf16.mxu0 0
        %6728 = vmatpush1.bf16.msra.mxu0 0
        %6729 = vmatprep.subr.bf16.mxu0 0
        %6730 = vmatpush1.bf16.msra.mxu0 0
        %6731 = vmatprep.subr.bf16.mxu0 0
        %6732 = vmatpush1.bf16.msra.mxu0 0
        %6733 = vmatprep.subr.bf16.mxu0 0
        %6734 = vmatpush1.bf16.msra.mxu0 0
        %6735 = vmatprep.subr.bf16.mxu0 0
        %6736 = vmatpush1.bf16.msra.mxu0 0
        %6737 = vmatprep.mubr.bf16.mxu0 0
        %6738 = vmatmul.mubr.bf16.gmra.mrb[0].mxu0 %v6647
        %v6739 = vpop.f32.mrb[0].mxu0
        %v6740 = vadd.f32 0.0, %v6739
        %v6741 = vpop.f32.mrb[0].mxu0
        %v6742 = vadd.f32 0.0, %v6741
        %v6743 = vpop.f32.mrb[0].mxu0
        %v6744 = vadd.f32 0.0, %v6743
        %v6745 = vpop.f32.mrb[0].mxu0
        %v6746 = vadd.f32 0.0, %v6745
        %6747 = vmatprep.mubr.bf16.mxu0 0
        %6748 = vmatmul.mubr.bf16.gmra.mrb[0].mxu0 %v6650
        %v6749 = vpop.f32.mrb[0].mxu0
        %v6750 = vadd.f32 0.0, %v6749
        %v6751 = vpop.f32.mrb[0].mxu0
        %v6752 = vadd.f32 0.0, %v6751
        %v6753 = vpop.f32.mrb[0].mxu0
        %v6754 = vadd.f32 0.0, %v6753
        %v6755 = vpop.f32.mrb[0].mxu0
        %v6756 = vadd.f32 0.0, %v6755
        %6757 = vdwg.mxu0
        %6758 = vmatprep.subr.bf16.mxu0 %v3770
        %6759 = vmatpush1.bf16.msra.mxu0 %v3769
        %6760 = vmatprep.subr.bf16.mxu0 %v3778
        %6761 = vmatpush1.bf16.msra.mxu0 %v3777
        %6762 = vmatprep.subr.bf16.mxu0 %v3786
        %6763 = vmatpush1.bf16.msra.mxu0 %v3785
        %6764 = vmatprep.subr.bf16.mxu0 %v3794
        %6765 = vmatpush1.bf16.msra.mxu0 %v3793
        %6766 = vmatprep.subr.bf16.mxu0 0
        %6767 = vmatpush1.bf16.msra.mxu0 0
        %6768 = vmatprep.subr.bf16.mxu0 0
        %6769 = vmatpush1.bf16.msra.mxu0 0
        %6770 = vmatprep.subr.bf16.mxu0 0
        %6771 = vmatpush1.bf16.msra.mxu0 0
        %6772 = vmatprep.subr.bf16.mxu0 0
        %6773 = vmatpush1.bf16.msra.mxu0 0
        %6774 = vmatprep.subr.bf16.mxu0 0
        %6775 = vmatpush1.bf16.msra.mxu0 0
        %6776 = vmatprep.subr.bf16.mxu0 0
        %6777 = vmatpush1.bf16.msra.mxu0 0
        %6778 = vmatprep.subr.bf16.mxu0 0
        %6779 = vmatpush1.bf16.msra.mxu0 0
        %6780 = vmatprep.subr.bf16.mxu0 0
        %6781 = vmatpush1.bf16.msra.mxu0 0
        %6782 = vmatprep.subr.bf16.mxu0 0
        %6783 = vmatpush1.bf16.msra.mxu0 0
        %6784 = vmatprep.subr.bf16.mxu0 0
        %6785 = vmatpush1.bf16.msra.mxu0 0
        %6786 = vmatprep.subr.bf16.mxu0 0
        %6787 = vmatpush1.bf16.msra.mxu0 0
        %6788 = vmatprep.subr.bf16.mxu0 0
        %6789 = vmatpush1.bf16.msra.mxu0 0
        %6790 = vmatprep.mubr.bf16.mxu0 0
        %6791 = vmatmul.mubr.bf16.gmra.mrb[0].mxu0 %v6647
        %v6792 = vpop.f32.mrb[0].mxu0
        %v6793 = vadd.f32 0.0, %v6792
        %v6794 = vpop.f32.mrb[0].mxu0
        %v6795 = vadd.f32 0.0, %v6794
        %v6796 = vpop.f32.mrb[0].mxu0
        %v6797 = vadd.f32 0.0, %v6796
        %v6798 = vpop.f32.mrb[0].mxu0
        %v6799 = vadd.f32 0.0, %v6798
        %6800 = vmatprep.mubr.bf16.mxu0 0
        %6801 = vmatmul.mubr.bf16.gmra.mrb[0].mxu0 %v6650
        %v6802 = vpop.f32.mrb[0].mxu0
        %v6803 = vadd.f32 0.0, %v6802
        %v6804 = vpop.f32.mrb[0].mxu0
        %v6805 = vadd.f32 0.0, %v6804
        %v6806 = vpop.f32.mrb[0].mxu0
        %v6807 = vadd.f32 0.0, %v6806
        %v6808 = vpop.f32.mrb[0].mxu0
        %v6809 = vadd.f32 0.0, %v6808
        %6810 = vdwg.mxu0
        %6811 = vmatprep.subr.bf16.mxu0 %v3772
        %6812 = vmatpush1.bf16.msra.mxu0 %v3771
        %6813 = vmatprep.subr.bf16.mxu0 %v3780
        %6814 = vmatpush1.bf16.msra.mxu0 %v3779
        %6815 = vmatprep.subr.bf16.mxu0 %v3788
        %6816 = vmatpush1.bf16.msra.mxu0 %v3787
        %6817 = vmatprep.subr.bf16.mxu0 %v3796
        %6818 = vmatpush1.bf16.msra.mxu0 %v3795
        %6819 = vmatprep.subr.bf16.mxu0 0
        %6820 = vmatpush1.bf16.msra.mxu0 0
        %6821 = vmatprep.subr.bf16.mxu0 0
        %6822 = vmatpush1.bf16.msra.mxu0 0
        %6823 = vmatprep.subr.bf16.mxu0 0
        %6824 = vmatpush1.bf16.msra.mxu0 0
        %6825 = vmatprep.subr.bf16.mxu0 0
        %6826 = vmatpush1.bf16.msra.mxu0 0
        %6827 = vmatprep.subr.bf16.mxu0 0
        %6828 = vmatpush1.bf16.msra.mxu0 0
        %6829 = vmatprep.subr.bf16.mxu0 0
        %6830 = vmatpush1.bf16.msra.mxu0 0
        %6831 = vmatprep.subr.bf16.mxu0 0
        %6832 = vmatpush1.bf16.msra.mxu0 0
        %6833 = vmatprep.subr.bf16.mxu0 0
        %6834 = vmatpush1.bf16.msra.mxu0 0
        %6835 = vmatprep.subr.bf16.mxu0 0
        %6836 = vmatpush1.bf16.msra.mxu0 0
        %6837 = vmatprep.subr.bf16.mxu0 0
        %6838 = vmatpush1.bf16.msra.mxu0 0
        %6839 = vmatprep.subr.bf16.mxu0 0
        %6840 = vmatpush1.bf16.msra.mxu0 0
        %6841 = vmatprep.subr.bf16.mxu0 0
        %6842 = vmatpush1.bf16.msra.mxu0 0
        %6843 = vmatprep.mubr.bf16.mxu0 0
        %6844 = vmatmul.mubr.bf16.gmra.mrb[0].mxu0 %v6647
        %v6845 = vpop.f32.mrb[0].mxu0
        %v6846 = vadd.f32 0.0, %v6845
        %v6847 = vpop.f32.mrb[0].mxu0
        %v6848 = vadd.f32 0.0, %v6847
        %v6849 = vpop.f32.mrb[0].mxu0
        %v6850 = vadd.f32 0.0, %v6849
        %v6851 = vpop.f32.mrb[0].mxu0
        %v6852 = vadd.f32 0.0, %v6851
        %6853 = vmatprep.mubr.bf16.mxu0 0
        %6854 = vmatmul.mubr.bf16.gmra.mrb[0].mxu0 %v6650
        %v6855 = vpop.f32.mrb[0].mxu0
        %v6856 = vadd.f32 0.0, %v6855
        %v6857 = vpop.f32.mrb[0].mxu0
        %v6858 = vadd.f32 0.0, %v6857
        %v6859 = vpop.f32.mrb[0].mxu0
        %v6860 = vadd.f32 0.0, %v6859
        %v6861 = vpop.f32.mrb[0].mxu0
        %v6862 = vadd.f32 0.0, %v6861
        %6863 = vdwg.mxu0
        %v6864 = vmul.f32 %v6687, %v1085
        %v6865 = vmul.f32 %v6689, %v1086
        %v6866 = vmul.f32 %v6740, %v1087
        %v6867 = vmul.f32 %v6742, %v1088
        %v6868 = vmul.f32 %v6793, %v1089
        %v6869 = vmul.f32 %v6795, %v1090
        %v6870 = vmul.f32 %v6846, %v1091
        %v6871 = vmul.f32 %v6848, %v1092
        %v6872 = vmul.f32 %v6691, %v1093
        %v6873 = vmul.f32 %v6693, %v1094
        %v6874 = vmul.f32 %v6744, %v1095
        %v6875 = vmul.f32 %v6746, %v1096
        %v6876 = vmul.f32 %v6797, %v1097
        %v6877 = vmul.f32 %v6799, %v1098
        %v6878 = vmul.f32 %v6850, %v1099
        %v6879 = vmul.f32 %v6852, %v1100
        %v6880 = vmul.f32 %v6697, %v1101
        %v6881 = vmul.f32 %v6699, %v1102
        %v6882 = vmul.f32 %v6750, %v1103
        %v6883 = vmul.f32 %v6752, %v1104
        %v6884 = vmul.f32 %v6803, %v1105
        %v6885 = vmul.f32 %v6805, %v1106
        %v6886 = vmul.f32 %v6856, %v1107
        %v6887 = vmul.f32 %v6858, %v1108
        %v6888 = vmul.f32 %v6701, %v1109
        %v6889 = vmul.f32 %v6703, %v1110
        %v6890 = vmul.f32 %v6754, %v1111
        %v6891 = vmul.f32 %v6756, %v1112
        %v6892 = vmul.f32 %v6807, %v1113
        %v6893 = vmul.f32 %v6809, %v1114
        %v6894 = vmul.f32 %v6860, %v1115
        %v6895 = vmul.f32 %v6862, %v1116
        %v6896 = vadd.f32 %v6864, %v6872
        %v6897 = vadd.f32 %v6896, %v6880
        %v6898 = vadd.f32 %v6897, %v6888
        %v6899 = vrot.slane %v6898, 4
        %v6900 = vadd.f32 %v6898, %v6899
        %v6901 = vrot.slane %v6900, 2
        %v6902 = vadd.f32 %v6900, %v6901
        %v6903 = vrot.slane %v6902, 1
        %v6904 = vadd.f32 %v6902, %v6903
        %v6905 = vadd.f32 %v6865, %v6873
        %v6906 = vadd.f32 %v6905, %v6881
        %v6907 = vadd.f32 %v6906, %v6889
        %v6908 = vrot.slane %v6907, 4
        %v6909 = vadd.f32 %v6907, %v6908
        %v6910 = vrot.slane %v6909, 2
        %v6911 = vadd.f32 %v6909, %v6910
        %v6912 = vrot.slane %v6911, 1
        %v6913 = vadd.f32 %v6911, %v6912
        %v6914 = vadd.f32 %v6866, %v6874
        %v6915 = vadd.f32 %v6914, %v6882
        %v6916 = vadd.f32 %v6915, %v6890
        %v6917 = vrot.slane %v6916, 4
        %v6918 = vadd.f32 %v6916, %v6917
        %v6919 = vrot.slane %v6918, 2
        %v6920 = vadd.f32 %v6918, %v6919
        %v6921 = vrot.slane %v6920, 1
        %v6922 = vadd.f32 %v6920, %v6921
        %v6923 = vadd.f32 %v6867, %v6875
        %v6924 = vadd.f32 %v6923, %v6883
        %v6925 = vadd.f32 %v6924, %v6891
        %v6926 = vrot.slane %v6925, 4
        %v6927 = vadd.f32 %v6925, %v6926
        %v6928 = vrot.slane %v6927, 2
        %v6929 = vadd.f32 %v6927, %v6928
        %v6930 = vrot.slane %v6929, 1
        %v6931 = vadd.f32 %v6929, %v6930
        %v6932 = vadd.f32 %v6868, %v6876
        %v6933 = vadd.f32 %v6932, %v6884
        %v6934 = vadd.f32 %v6933, %v6892
        %v6935 = vrot.slane %v6934, 4
        %v6936 = vadd.f32 %v6934, %v6935
        %v6937 = vrot.slane %v6936, 2
        %v6938 = vadd.f32 %v6936, %v6937
        %v6939 = vrot.slane %v6938, 1
        %v6940 = vadd.f32 %v6938, %v6939
        %v6941 = vadd.f32 %v6869, %v6877
        %v6942 = vadd.f32 %v6941, %v6885
        %v6943 = vadd.f32 %v6942, %v6893
        %v6944 = vrot.slane %v6943, 4
        %v6945 = vadd.f32 %v6943, %v6944
        %v6946 = vrot.slane %v6945, 2
        %v6947 = vadd.f32 %v6945, %v6946
        %v6948 = vrot.slane %v6947, 1
        %v6949 = vadd.f32 %v6947, %v6948
        %v6950 = vadd.f32 %v6870, %v6878
        %v6951 = vadd.f32 %v6950, %v6886
        %v6952 = vadd.f32 %v6951, %v6894
        %v6953 = vrot.slane %v6952, 4
        %v6954 = vadd.f32 %v6952, %v6953
        %v6955 = vrot.slane %v6954, 2
        %v6956 = vadd.f32 %v6954, %v6955
        %v6957 = vrot.slane %v6956, 1
        %v6958 = vadd.f32 %v6956, %v6957
        %v6959 = vadd.f32 %v6871, %v6879
        %v6960 = vadd.f32 %v6959, %v6887
        %v6961 = vadd.f32 %v6960, %v6895
        %v6962 = vrot.slane %v6961, 4
        %v6963 = vadd.f32 %v6961, %v6962
        %v6964 = vrot.slane %v6963, 2
        %v6965 = vadd.f32 %v6963, %v6964
        %v6966 = vrot.slane %v6965, 1
        %v6967 = vadd.f32 %v6965, %v6966
        %v6976 = vcombine.low %v6904, %v6913
        %v6977 = vcombine.low %v6922, %v6931
        %v6978 = vcombine.low %v6940, %v6949
        %v6979 = vcombine.low %v6958, %v6967
        %v6981 = vunpack.c.l.s4 1966171168
        %v6982 = vunpack.c.0.s8 %v6981
        %v6983 = vlaneseq
        %v6984 = vshrl.u32 %v6983, 7
        %v6985 = vsub.s32 %v6982, %v6984
        %v6986 = vrot.slane %v6976, %v6985
        %v6988 = vunpack.c.l.s4 1966171168
        %v6989 = vunpack.c.0.s8 %v6988
        %v6990 = vlaneseq
        %v6991 = vshrl.u32 %v6990, 7
        %v6992 = vsub.s32 %v6989, %v6991
        %v6993 = vrot.slane %v6977, %v6992
        %v6995 = vunpack.c.l.s4 1966171168
        %v6996 = vunpack.c.0.s8 %v6995
        %v6997 = vlaneseq
        %v6998 = vshrl.u32 %v6997, 7
        %v6999 = vsub.s32 %v6996, %v6998
        %v7000 = vrot.slane %v6978, %v6999
        %v7002 = vunpack.c.l.s4 1966171168
        %v7003 = vunpack.c.0.s8 %v7002
        %v7004 = vlaneseq
        %v7005 = vshrl.u32 %v7004, 7
        %v7006 = vsub.s32 %v7003, %v7005
        %v7007 = vrot.slane %v6979, %v7006
        %v7008 = vcombine.low %v6986, %v6993
        %v7009 = vcombine.low %v7000, %v7007
        %v7011 = vunpack.c.l.s4 1966171168
        %v7012 = vunpack.c.0.s8 %v7011
        %v7013 = vlaneseq
        %v7014 = vshrl.u32 %v7013, 7
        %v7015 = vsub.s32 %v7012, %v7014
        %v7016 = vrot.slane %v7008, %v7015
        %v7018 = vunpack.c.l.s4 1966171168
        %v7019 = vunpack.c.0.s8 %v7018
        %v7020 = vlaneseq
        %v7021 = vshrl.u32 %v7020, 7
        %v7022 = vsub.s32 %v7019, %v7021
        %v7023 = vrot.slane %v7009, %v7022
        %v7024 = vcombine.low %v7016, %v7023
        %7026 = vst [vmem:[%s890] sm:$0xff] %v7024
        %v7027 = vld [vmem:[#allocation13] sm:$0xff]
        %v7029 = vlaneseq
        %v7030 = vshrl.u32 %v7029, 7
        %v7031 = vsub.s32 0, %v7030
        %v7032 = vrot.slane %v7027, %v7031
        %v7033 = vlaneseq
        %v7034 = vshrl.u32 %v7033, 7
        %v7035 = vsub.s32 1, %v7034
        %v7036 = vrot.slane %v7027, %v7035
        %v7037 = vlaneseq
        %v7038 = vshrl.u32 %v7037, 7
        %v7039 = vsub.s32 2, %v7038
        %v7040 = vrot.slane %v7027, %v7039
        %v7041 = vlaneseq
        %v7042 = vshrl.u32 %v7041, 7
        %v7043 = vsub.s32 3, %v7042
        %v7044 = vrot.slane %v7027, %v7043
        %v7045 = vlaneseq
        %v7046 = vshrl.u32 %v7045, 7
        %v7047 = vsub.s32 4, %v7046
        %v7048 = vrot.slane %v7027, %v7047
        %v7049 = vlaneseq
        %v7050 = vshrl.u32 %v7049, 7
        %v7051 = vsub.s32 5, %v7050
        %v7052 = vrot.slane %v7027, %v7051
        %v7053 = vlaneseq
        %v7054 = vshrl.u32 %v7053, 7
        %v7055 = vsub.s32 6, %v7054
        %v7056 = vrot.slane %v7027, %v7055
        %v7057 = vlaneseq
        %v7058 = vshrl.u32 %v7057, 7
        %v7059 = vsub.s32 7, %v7058
        %v7060 = vrot.slane %v7027, %v7059
        %v7069 = vmul.f32 %v4174, %v7032
        %v7070 = vmul.f32 %v4183, %v7036
        %v7071 = vmul.f32 %v4192, %v7040
        %v7072 = vmul.f32 %v4201, %v7044
        %v7073 = vmul.f32 %v4210, %v7048
        %v7074 = vmul.f32 %v4219, %v7052
        %v7075 = vmul.f32 %v4228, %v7056
        %v7076 = vmul.f32 %v4237, %v7060
        %v7077 = vsel %vm1399, %v7069, 0.0
        %v7078 = vsel %vm1399, %v7070, 0.0
        %v7079 = vadd.f32 %v7077, %v7078
        %v7080 = vsel %vm1399, %v7071, 0.0
        %v7081 = vadd.f32 %v7079, %v7080
        %v7082 = vsel %vm1399, %v7072, 0.0
        %v7083 = vadd.f32 %v7081, %v7082
        %v7084 = vsel %vm1399, %v7073, 0.0
        %v7085 = vadd.f32 %v7083, %v7084
        %v7086 = vsel %vm1399, %v7074, 0.0
        %v7087 = vadd.f32 %v7085, %v7086
        %v7088 = vsel %vm1399, %v7075, 0.0
        %v7089 = vadd.f32 %v7087, %v7088
        %v7090 = vsel %vm1399, %v7076, 0.0
        %v7091 = vadd.f32 %v7089, %v7090
        %7092 = vadd.xlane.f32.xlu0 %v7091
        %v7093 = vpop.xlane.xlu0 %7092
        %v7094 = vld [vmem:[#allocation2] sm:$0x1]
        %v7095 = vadd.f32 %v7093, %v7094
        %v7096 = vpack.c.bf16 %v6904, %v6904
        %v7097 = vpack.c.bf16 %v6913, %v6913
        %v7098 = vpack.c.bf16 %v6922, %v6922
        %v7099 = vpack.c.bf16 %v6931, %v6931
        %v7100 = vpack.c.bf16 %v6940, %v6940
        %v7101 = vpack.c.bf16 %v6949, %v6949
        %v7102 = vpack.c.bf16 %v6958, %v6958
        %v7103 = vpack.c.bf16 %v6967, %v6967
        %v7104 = vld [vmem:[%s19] sm:$0xf]
        %v7105 = vld [vmem:[%s19 + $0x4] sm:$0xf]
        %v7106 = vld [vmem:[%s19 + $0x8] sm:$0xf]
        %v7107 = vld [vmem:[%s19 + $0xc] sm:$0xf]
        %v7108 = vld [vmem:[%s19 + $0x10] sm:$0xf]
        %v7109 = vld [vmem:[%s19 + $0x14] sm:$0xf]
        %v7110 = vld [vmem:[%s19 + $0x18] sm:$0xf]
        %v7111 = vld [vmem:[%s19 + $0x1c] sm:$0xf]
        %v7112 = vld [vmem:[%s19 + $0x20] sm:$0xf]
        %v7113 = vld [vmem:[%s19 + $0x24] sm:$0xf]
        %v7114 = vld [vmem:[%s19 + $0x28] sm:$0xf]
        %v7115 = vld [vmem:[%s19 + $0x2c] sm:$0xf]
        %v7116 = vld [vmem:[%s19 + $0x30] sm:$0xf]
        %v7117 = vld [vmem:[%s19 + $0x34] sm:$0xf]
        %v7118 = vld [vmem:[%s19 + $0x38] sm:$0xf]
        %v7119 = vld [vmem:[%s19 + $0x3c] sm:$0xf]
        %v7120 = vld [vmem:[%s19 + $0x40] sm:$0xf]
        %v7121 = vld [vmem:[%s19 + $0x44] sm:$0xf]
        %v7122 = vld [vmem:[%s19 + $0x48] sm:$0xf]
        %v7123 = vld [vmem:[%s19 + $0x4c] sm:$0xf]
        %v7124 = vld [vmem:[%s19 + $0x50] sm:$0xf]
        %v7125 = vld [vmem:[%s19 + $0x54] sm:$0xf]
        %v7126 = vld [vmem:[%s19 + $0x58] sm:$0xf]
        %v7127 = vld [vmem:[%s19 + $0x5c] sm:$0xf]
        %v7128 = vld [vmem:[%s19 + $0x60] sm:$0xf]
        %v7129 = vld [vmem:[%s19 + $0x64] sm:$0xf]
        %v7130 = vld [vmem:[%s19 + $0x68] sm:$0xf]
        %v7131 = vld [vmem:[%s19 + $0x6c] sm:$0xf]
        %v7132 = vld [vmem:[%s19 + $0x70] sm:$0xf]
        %v7133 = vld [vmem:[%s19 + $0x74] sm:$0xf]
        %v7134 = vld [vmem:[%s19 + $0x78] sm:$0xf]
        %v7135 = vld [vmem:[%s19 + $0x7c] sm:$0xf]
        %v7136 = vld [vmem:[%s19 + $0x80] sm:$0xf]
        %v7137 = vld [vmem:[%s19 + $0x84] sm:$0xf]
        %v7138 = vld [vmem:[%s19 + $0x88] sm:$0xf]
        %v7139 = vld [vmem:[%s19 + $0x8c] sm:$0xf]
        %v7140 = vld [vmem:[%s19 + $0x90] sm:$0xf]
        %v7141 = vld [vmem:[%s19 + $0x94] sm:$0xf]
        %v7142 = vld [vmem:[%s19 + $0x98] sm:$0xf]
        %v7143 = vld [vmem:[%s19 + $0x9c] sm:$0xf]
        %v7144 = vld [vmem:[%s19 + $0xa0] sm:$0xf]
        %v7145 = vld [vmem:[%s19 + $0xa4] sm:$0xf]
        %v7146 = vld [vmem:[%s19 + $0xa8] sm:$0xf]
        %v7147 = vld [vmem:[%s19 + $0xac] sm:$0xf]
        %v7148 = vld [vmem:[%s19 + $0xb0] sm:$0xf]
        %v7149 = vld [vmem:[%s19 + $0xb4] sm:$0xf]
        %v7150 = vld [vmem:[%s19 + $0xb8] sm:$0xf]
        %v7151 = vld [vmem:[%s19 + $0xbc] sm:$0xf]
        %v7152 = vld [vmem:[%s19 + $0xc0] sm:$0xf]
        %v7153 = vld [vmem:[%s19 + $0xc4] sm:$0xf]
        %v7154 = vld [vmem:[%s19 + $0xc8] sm:$0xf]
        %v7155 = vld [vmem:[%s19 + $0xcc] sm:$0xf]
        %v7156 = vld [vmem:[%s19 + $0xd0] sm:$0xf]
        %v7157 = vld [vmem:[%s19 + $0xd4] sm:$0xf]
        %v7158 = vld [vmem:[%s19 + $0xd8] sm:$0xf]
        %v7159 = vld [vmem:[%s19 + $0xdc] sm:$0xf]
        %v7160 = vld [vmem:[%s19 + $0xe0] sm:$0xf]
        %v7161 = vld [vmem:[%s19 + $0xe4] sm:$0xf]
        %v7162 = vld [vmem:[%s19 + $0xe8] sm:$0xf]
        %v7163 = vld [vmem:[%s19 + $0xec] sm:$0xf]
        %v7164 = vld [vmem:[%s19 + $0xf0] sm:$0xf]
        %v7165 = vld [vmem:[%s19 + $0xf4] sm:$0xf]
        %v7166 = vld [vmem:[%s19 + $0xf8] sm:$0xf]
        %v7167 = vld [vmem:[%s19 + $0xfc] sm:$0xf]
        %v7168 = vld [vmem:[%s19 + $0x100] sm:$0xf]
        %v7169 = vld [vmem:[%s19 + $0x104] sm:$0xf]
        %v7170 = vld [vmem:[%s19 + $0x108] sm:$0xf]
        %v7171 = vld [vmem:[%s19 + $0x10c] sm:$0xf]
        %v7172 = vld [vmem:[%s19 + $0x110] sm:$0xf]
        %v7173 = vld [vmem:[%s19 + $0x114] sm:$0xf]
        %v7174 = vld [vmem:[%s19 + $0x118] sm:$0xf]
        %v7175 = vld [vmem:[%s19 + $0x11c] sm:$0xf]
        %v7176 = vld [vmem:[%s19 + $0x120] sm:$0xf]
        %v7177 = vld [vmem:[%s19 + $0x124] sm:$0xf]
        %v7178 = vld [vmem:[%s19 + $0x128] sm:$0xf]
        %v7179 = vld [vmem:[%s19 + $0x12c] sm:$0xf]
        %v7180 = vld [vmem:[%s19 + $0x130] sm:$0xf]
        %v7181 = vld [vmem:[%s19 + $0x134] sm:$0xf]
        %v7182 = vld [vmem:[%s19 + $0x138] sm:$0xf]
        %v7183 = vld [vmem:[%s19 + $0x13c] sm:$0xf]
        %v7184 = vld [vmem:[%s19 + $0x140] sm:$0xf]
        %v7185 = vld [vmem:[%s19 + $0x144] sm:$0xf]
        %v7186 = vld [vmem:[%s19 + $0x148] sm:$0xf]
        %v7187 = vld [vmem:[%s19 + $0x14c] sm:$0xf]
        %v7188 = vld [vmem:[%s19 + $0x150] sm:$0xf]
        %v7189 = vld [vmem:[%s19 + $0x154] sm:$0xf]
        %v7190 = vld [vmem:[%s19 + $0x158] sm:$0xf]
        %v7191 = vld [vmem:[%s19 + $0x15c] sm:$0xf]
        %v7192 = vld [vmem:[%s19 + $0x160] sm:$0xf]
        %v7193 = vld [vmem:[%s19 + $0x164] sm:$0xf]
        %v7194 = vld [vmem:[%s19 + $0x168] sm:$0xf]
        %v7195 = vld [vmem:[%s19 + $0x16c] sm:$0xf]
        %v7196 = vld [vmem:[%s19 + $0x170] sm:$0xf]
        %v7197 = vld [vmem:[%s19 + $0x174] sm:$0xf]
        %v7198 = vld [vmem:[%s19 + $0x178] sm:$0xf]
        %v7199 = vld [vmem:[%s19 + $0x17c] sm:$0xf]
        %v7200 = vld [vmem:[%s19 + $0x180] sm:$0xf]
        %v7201 = vld [vmem:[%s19 + $0x184] sm:$0xf]
        %v7202 = vld [vmem:[%s19 + $0x188] sm:$0xf]
        %v7203 = vld [vmem:[%s19 + $0x18c] sm:$0xf]
        %v7204 = vld [vmem:[%s19 + $0x190] sm:$0xf]
        %v7205 = vld [vmem:[%s19 + $0x194] sm:$0xf]
        %v7206 = vld [vmem:[%s19 + $0x198] sm:$0xf]
        %v7207 = vld [vmem:[%s19 + $0x19c] sm:$0xf]
        %v7208 = vld [vmem:[%s19 + $0x1a0] sm:$0xf]
        %v7209 = vld [vmem:[%s19 + $0x1a4] sm:$0xf]
        %v7210 = vld [vmem:[%s19 + $0x1a8] sm:$0xf]
        %v7211 = vld [vmem:[%s19 + $0x1ac] sm:$0xf]
        %v7212 = vld [vmem:[%s19 + $0x1b0] sm:$0xf]
        %v7213 = vld [vmem:[%s19 + $0x1b4] sm:$0xf]
        %v7214 = vld [vmem:[%s19 + $0x1b8] sm:$0xf]
        %v7215 = vld [vmem:[%s19 + $0x1bc] sm:$0xf]
        %v7216 = vld [vmem:[%s19 + $0x1c0] sm:$0xf]
        %v7217 = vld [vmem:[%s19 + $0x1c4] sm:$0xf]
        %v7218 = vld [vmem:[%s19 + $0x1c8] sm:$0xf]
        %v7219 = vld [vmem:[%s19 + $0x1cc] sm:$0xf]
        %v7220 = vld [vmem:[%s19 + $0x1d0] sm:$0xf]
        %v7221 = vld [vmem:[%s19 + $0x1d4] sm:$0xf]
        %v7222 = vld [vmem:[%s19 + $0x1d8] sm:$0xf]
        %v7223 = vld [vmem:[%s19 + $0x1dc] sm:$0xf]
        %v7224 = vld [vmem:[%s19 + $0x1e0] sm:$0xf]
        %v7225 = vld [vmem:[%s19 + $0x1e4] sm:$0xf]
        %v7226 = vld [vmem:[%s19 + $0x1e8] sm:$0xf]
        %v7227 = vld [vmem:[%s19 + $0x1ec] sm:$0xf]
        %v7228 = vld [vmem:[%s19 + $0x1f0] sm:$0xf]
        %v7229 = vld [vmem:[%s19 + $0x1f4] sm:$0xf]
        %v7230 = vld [vmem:[%s19 + $0x1f8] sm:$0xf]
        %v7231 = vld [vmem:[%s19 + $0x1fc] sm:$0xf]
        %v7232 = vld [vmem:[%s20] sm:$0x1]
        %v7361 = vunpack.c.l.b16 %v7104
        %v7362 = vunpack.c.l.b16 %v7105
        %v7363 = vunpack.c.l.b16 %v7106
        %v7364 = vunpack.c.l.b16 %v7107
        %v7365 = vunpack.c.l.b16 %v7108
        %v7366 = vunpack.c.l.b16 %v7109
        %v7367 = vunpack.c.l.b16 %v7110
        %v7368 = vunpack.c.l.b16 %v7111
        %v7369 = vunpack.c.l.b16 %v7112
        %v7370 = vunpack.c.l.b16 %v7113
        %v7371 = vunpack.c.l.b16 %v7114
        %v7372 = vunpack.c.l.b16 %v7115
        %v7373 = vunpack.c.l.b16 %v7116
        %v7374 = vunpack.c.l.b16 %v7117
        %v7375 = vunpack.c.l.b16 %v7118
        %v7376 = vunpack.c.l.b16 %v7119
        %v7377 = vunpack.c.l.b16 %v7120
        %v7378 = vunpack.c.l.b16 %v7121
        %v7379 = vunpack.c.l.b16 %v7122
        %v7380 = vunpack.c.l.b16 %v7123
        %v7381 = vunpack.c.l.b16 %v7124
        %v7382 = vunpack.c.l.b16 %v7125
        %v7383 = vunpack.c.l.b16 %v7126
        %v7384 = vunpack.c.l.b16 %v7127
        %v7385 = vunpack.c.l.b16 %v7128
        %v7386 = vunpack.c.l.b16 %v7129
        %v7387 = vunpack.c.l.b16 %v7130
        %v7388 = vunpack.c.l.b16 %v7131
        %v7389 = vunpack.c.l.b16 %v7132
        %v7390 = vunpack.c.l.b16 %v7133
        %v7391 = vunpack.c.l.b16 %v7134
        %v7392 = vunpack.c.l.b16 %v7135
        %v7393 = vunpack.c.l.b16 %v7136
        %v7394 = vunpack.c.l.b16 %v7137
        %v7395 = vunpack.c.l.b16 %v7138
        %v7396 = vunpack.c.l.b16 %v7139
        %v7397 = vunpack.c.l.b16 %v7140
        %v7398 = vunpack.c.l.b16 %v7141
        %v7399 = vunpack.c.l.b16 %v7142
        %v7400 = vunpack.c.l.b16 %v7143
        %v7401 = vunpack.c.l.b16 %v7144
        %v7402 = vunpack.c.l.b16 %v7145
        %v7403 = vunpack.c.l.b16 %v7146
        %v7404 = vunpack.c.l.b16 %v7147
        %v7405 = vunpack.c.l.b16 %v7148
        %v7406 = vunpack.c.l.b16 %v7149
        %v7407 = vunpack.c.l.b16 %v7150
        %v7408 = vunpack.c.l.b16 %v7151
        %v7409 = vunpack.c.l.b16 %v7152
        %v7410 = vunpack.c.l.b16 %v7153
        %v7411 = vunpack.c.l.b16 %v7154
        %v7412 = vunpack.c.l.b16 %v7155
        %v7413 = vunpack.c.l.b16 %v7156
        %v7414 = vunpack.c.l.b16 %v7157
        %v7415 = vunpack.c.l.b16 %v7158
        %v7416 = vunpack.c.l.b16 %v7159
        %v7417 = vunpack.c.l.b16 %v7160
        %v7418 = vunpack.c.l.b16 %v7161
        %v7419 = vunpack.c.l.b16 %v7162
        %v7420 = vunpack.c.l.b16 %v7163
        %v7421 = vunpack.c.l.b16 %v7164
        %v7422 = vunpack.c.l.b16 %v7165
        %v7423 = vunpack.c.l.b16 %v7166
        %v7424 = vunpack.c.l.b16 %v7167
        %v7425 = vunpack.c.l.b16 %v7168
        %v7426 = vunpack.c.l.b16 %v7169
        %v7427 = vunpack.c.l.b16 %v7170
        %v7428 = vunpack.c.l.b16 %v7171
        %v7429 = vunpack.c.l.b16 %v7172
        %v7430 = vunpack.c.l.b16 %v7173
        %v7431 = vunpack.c.l.b16 %v7174
        %v7432 = vunpack.c.l.b16 %v7175
        %v7433 = vunpack.c.l.b16 %v7176
        %v7434 = vunpack.c.l.b16 %v7177
        %v7435 = vunpack.c.l.b16 %v7178
        %v7436 = vunpack.c.l.b16 %v7179
        %v7437 = vunpack.c.l.b16 %v7180
        %v7438 = vunpack.c.l.b16 %v7181
        %v7439 = vunpack.c.l.b16 %v7182
        %v7440 = vunpack.c.l.b16 %v7183
        %v7441 = vunpack.c.l.b16 %v7184
        %v7442 = vunpack.c.l.b16 %v7185
        %v7443 = vunpack.c.l.b16 %v7186
        %v7444 = vunpack.c.l.b16 %v7187
        %v7445 = vunpack.c.l.b16 %v7188
        %v7446 = vunpack.c.l.b16 %v7189
        %v7447 = vunpack.c.l.b16 %v7190
        %v7448 = vunpack.c.l.b16 %v7191
        %v7449 = vunpack.c.l.b16 %v7192
        %v7450 = vunpack.c.l.b16 %v7193
        %v7451 = vunpack.c.l.b16 %v7194
        %v7452 = vunpack.c.l.b16 %v7195
        %v7453 = vunpack.c.l.b16 %v7196
        %v7454 = vunpack.c.l.b16 %v7197
        %v7455 = vunpack.c.l.b16 %v7198
        %v7456 = vunpack.c.l.b16 %v7199
        %v7457 = vunpack.c.l.b16 %v7200
        %v7458 = vunpack.c.l.b16 %v7201
        %v7459 = vunpack.c.l.b16 %v7202
        %v7460 = vunpack.c.l.b16 %v7203
        %v7461 = vunpack.c.l.b16 %v7204
        %v7462 = vunpack.c.l.b16 %v7205
        %v7463 = vunpack.c.l.b16 %v7206
        %v7464 = vunpack.c.l.b16 %v7207
        %v7465 = vunpack.c.l.b16 %v7208
        %v7466 = vunpack.c.l.b16 %v7209
        %v7467 = vunpack.c.l.b16 %v7210
        %v7468 = vunpack.c.l.b16 %v7211
        %v7469 = vunpack.c.l.b16 %v7212
        %v7470 = vunpack.c.l.b16 %v7213
        %v7471 = vunpack.c.l.b16 %v7214
        %v7472 = vunpack.c.l.b16 %v7215
        %v7473 = vunpack.c.l.b16 %v7216
        %v7474 = vunpack.c.l.b16 %v7217
        %v7475 = vunpack.c.l.b16 %v7218
        %v7476 = vunpack.c.l.b16 %v7219
        %v7477 = vunpack.c.l.b16 %v7220
        %v7478 = vunpack.c.l.b16 %v7221
        %v7479 = vunpack.c.l.b16 %v7222
        %v7480 = vunpack.c.l.b16 %v7223
        %v7481 = vunpack.c.l.b16 %v7224
        %v7482 = vunpack.c.l.b16 %v7225
        %v7483 = vunpack.c.l.b16 %v7226
        %v7484 = vunpack.c.l.b16 %v7227
        %v7485 = vunpack.c.l.b16 %v7228
        %v7486 = vunpack.c.l.b16 %v7229
        %v7487 = vunpack.c.l.b16 %v7230
        %v7488 = vunpack.c.l.b16 %v7231
        %v7489 = vpack.c.b16 %v7362, %v7361
        %v7490 = vpack.c.b16 %v7364, %v7363
        %v7491 = vpack.c.b16 %v7366, %v7365
        %v7492 = vpack.c.b16 %v7368, %v7367
        %v7493 = vpack.c.b16 %v7370, %v7369
        %v7494 = vpack.c.b16 %v7372, %v7371
        %v7495 = vpack.c.b16 %v7374, %v7373
        %v7496 = vpack.c.b16 %v7376, %v7375
        %v7497 = vpack.c.b16 %v7378, %v7377
        %v7498 = vpack.c.b16 %v7380, %v7379
        %v7499 = vpack.c.b16 %v7382, %v7381
        %v7500 = vpack.c.b16 %v7384, %v7383
        %v7501 = vpack.c.b16 %v7386, %v7385
        %v7502 = vpack.c.b16 %v7388, %v7387
        %v7503 = vpack.c.b16 %v7390, %v7389
        %v7504 = vpack.c.b16 %v7392, %v7391
        %v7505 = vpack.c.b16 %v7394, %v7393
        %v7506 = vpack.c.b16 %v7396, %v7395
        %v7507 = vpack.c.b16 %v7398, %v7397
        %v7508 = vpack.c.b16 %v7400, %v7399
        %v7509 = vpack.c.b16 %v7402, %v7401
        %v7510 = vpack.c.b16 %v7404, %v7403
        %v7511 = vpack.c.b16 %v7406, %v7405
        %v7512 = vpack.c.b16 %v7408, %v7407
        %v7513 = vpack.c.b16 %v7410, %v7409
        %v7514 = vpack.c.b16 %v7412, %v7411
        %v7515 = vpack.c.b16 %v7414, %v7413
        %v7516 = vpack.c.b16 %v7416, %v7415
        %v7517 = vpack.c.b16 %v7418, %v7417
        %v7518 = vpack.c.b16 %v7420, %v7419
        %v7519 = vpack.c.b16 %v7422, %v7421
        %v7520 = vpack.c.b16 %v7424, %v7423
        %v7521 = vpack.c.b16 %v7426, %v7425
        %v7522 = vpack.c.b16 %v7428, %v7427
        %v7523 = vpack.c.b16 %v7430, %v7429
        %v7524 = vpack.c.b16 %v7432, %v7431
        %v7525 = vpack.c.b16 %v7434, %v7433
        %v7526 = vpack.c.b16 %v7436, %v7435
        %v7527 = vpack.c.b16 %v7438, %v7437
        %v7528 = vpack.c.b16 %v7440, %v7439
        %v7529 = vpack.c.b16 %v7442, %v7441
        %v7530 = vpack.c.b16 %v7444, %v7443
        %v7531 = vpack.c.b16 %v7446, %v7445
        %v7532 = vpack.c.b16 %v7448, %v7447
        %v7533 = vpack.c.b16 %v7450, %v7449
        %v7534 = vpack.c.b16 %v7452, %v7451
        %v7535 = vpack.c.b16 %v7454, %v7453
        %v7536 = vpack.c.b16 %v7456, %v7455
        %v7537 = vpack.c.b16 %v7458, %v7457
        %v7538 = vpack.c.b16 %v7460, %v7459
        %v7539 = vpack.c.b16 %v7462, %v7461
        %v7540 = vpack.c.b16 %v7464, %v7463
        %v7541 = vpack.c.b16 %v7466, %v7465
        %v7542 = vpack.c.b16 %v7468, %v7467
        %v7543 = vpack.c.b16 %v7470, %v7469
        %v7544 = vpack.c.b16 %v7472, %v7471
        %v7545 = vpack.c.b16 %v7474, %v7473
        %v7546 = vpack.c.b16 %v7476, %v7475
        %v7547 = vpack.c.b16 %v7478, %v7477
        %v7548 = vpack.c.b16 %v7480, %v7479
        %v7549 = vpack.c.b16 %v7482, %v7481
        %v7550 = vpack.c.b16 %v7484, %v7483
        %v7551 = vpack.c.b16 %v7486, %v7485
        %v7552 = vpack.c.b16 %v7488, %v7487
        %7617 = vmatprep.subr.bf16.mxu0 0
        %7618 = vmatpush1.bf16.msra.mxu0 %v7489
        %7619 = vmatprep.subr.bf16.mxu0 0
        %7620 = vmatpush1.bf16.msra.mxu0 %v7490
        %7621 = vmatprep.subr.bf16.mxu0 0
        %7622 = vmatpush1.bf16.msra.mxu0 %v7491
        %7623 = vmatprep.subr.bf16.mxu0 0
        %7624 = vmatpush1.bf16.msra.mxu0 %v7492
        %7625 = vmatprep.subr.bf16.mxu0 0
        %7626 = vmatpush1.bf16.msra.mxu0 %v7493
        %7627 = vmatprep.subr.bf16.mxu0 0
        %7628 = vmatpush1.bf16.msra.mxu0 %v7494
        %7629 = vmatprep.subr.bf16.mxu0 0
        %7630 = vmatpush1.bf16.msra.mxu0 %v7495
        %7631 = vmatprep.subr.bf16.mxu0 0
        %7632 = vmatpush1.bf16.msra.mxu0 %v7496
        %7633 = vmatprep.subr.bf16.mxu0 0
        %7634 = vmatpush1.bf16.msra.mxu0 %v7497
        %7635 = vmatprep.subr.bf16.mxu0 0
        %7636 = vmatpush1.bf16.msra.mxu0 %v7498
        %7637 = vmatprep.subr.bf16.mxu0 0
        %7638 = vmatpush1.bf16.msra.mxu0 %v7499
        %7639 = vmatprep.subr.bf16.mxu0 0
        %7640 = vmatpush1.bf16.msra.mxu0 %v7500
        %7641 = vmatprep.subr.bf16.mxu0 0
        %7642 = vmatpush1.bf16.msra.mxu0 %v7501
        %7643 = vmatprep.subr.bf16.mxu0 0
        %7644 = vmatpush1.bf16.msra.mxu0 %v7502
        %7645 = vmatprep.subr.bf16.mxu0 0
        %7646 = vmatpush1.bf16.msra.mxu0 %v7503
        %7647 = vmatprep.subr.bf16.mxu0 0
        %7648 = vmatpush1.bf16.msra.mxu0 %v7504
        %7649 = vmatprep.mubr.bf16.mxu0 %v7097
        %7650 = vmatmul.mubr.bf16.gmra.mrb[0].mxu0 %v7096
        %v7651 = vpop.f32.mrb[0].mxu0
        %v7652 = vadd.f32 %v7232, %v7651
        %v7653 = vpop.f32.mrb[0].mxu0
        %v7654 = vpop.f32.mrb[0].mxu0
        %v7655 = vpop.f32.mrb[0].mxu0
        %7656 = vdwg.mxu0
        %7657 = vmatprep.subr.bf16.mxu0 0
        %7658 = vmatpush1.bf16.msra.mxu0 %v7505
        %7659 = vmatprep.subr.bf16.mxu0 0
        %7660 = vmatpush1.bf16.msra.mxu0 %v7506
        %7661 = vmatprep.subr.bf16.mxu0 0
        %7662 = vmatpush1.bf16.msra.mxu0 %v7507
        %7663 = vmatprep.subr.bf16.mxu0 0
        %7664 = vmatpush1.bf16.msra.mxu0 %v7508
        %7665 = vmatprep.subr.bf16.mxu0 0
        %7666 = vmatpush1.bf16.msra.mxu0 %v7509
        %7667 = vmatprep.subr.bf16.mxu0 0
        %7668 = vmatpush1.bf16.msra.mxu0 %v7510
        %7669 = vmatprep.subr.bf16.mxu0 0
        %7670 = vmatpush1.bf16.msra.mxu0 %v7511
        %7671 = vmatprep.subr.bf16.mxu0 0
        %7672 = vmatpush1.bf16.msra.mxu0 %v7512
        %7673 = vmatprep.subr.bf16.mxu0 0
        %7674 = vmatpush1.bf16.msra.mxu0 %v7513
        %7675 = vmatprep.subr.bf16.mxu0 0
        %7676 = vmatpush1.bf16.msra.mxu0 %v7514
        %7677 = vmatprep.subr.bf16.mxu0 0
        %7678 = vmatpush1.bf16.msra.mxu0 %v7515
        %7679 = vmatprep.subr.bf16.mxu0 0
        %7680 = vmatpush1.bf16.msra.mxu0 %v7516
        %7681 = vmatprep.subr.bf16.mxu0 0
        %7682 = vmatpush1.bf16.msra.mxu0 %v7517
        %7683 = vmatprep.subr.bf16.mxu0 0
        %7684 = vmatpush1.bf16.msra.mxu0 %v7518
        %7685 = vmatprep.subr.bf16.mxu0 0
        %7686 = vmatpush1.bf16.msra.mxu0 %v7519
        %7687 = vmatprep.subr.bf16.mxu0 0
        %7688 = vmatpush1.bf16.msra.mxu0 %v7520
        %7689 = vmatprep.mubr.bf16.mxu0 %v7099
        %7690 = vmatmul.mubr.bf16.gmra.mrb[0].mxu0 %v7098
        %v7691 = vpop.f32.mrb[0].mxu0
        %v7692 = vadd.f32 %v7652, %v7691
        %v7693 = vpop.f32.mrb[0].mxu0
        %v7694 = vpop.f32.mrb[0].mxu0
        %v7695 = vpop.f32.mrb[0].mxu0
        %7696 = vdwg.mxu0
        %7697 = vmatprep.subr.bf16.mxu0 0
        %7698 = vmatpush1.bf16.msra.mxu0 %v7521
        %7699 = vmatprep.subr.bf16.mxu0 0
        %7700 = vmatpush1.bf16.msra.mxu0 %v7522
        %7701 = vmatprep.subr.bf16.mxu0 0
        %7702 = vmatpush1.bf16.msra.mxu0 %v7523
        %7703 = vmatprep.subr.bf16.mxu0 0
        %7704 = vmatpush1.bf16.msra.mxu0 %v7524
        %7705 = vmatprep.subr.bf16.mxu0 0
        %7706 = vmatpush1.bf16.msra.mxu0 %v7525
        %7707 = vmatprep.subr.bf16.mxu0 0
        %7708 = vmatpush1.bf16.msra.mxu0 %v7526
        %7709 = vmatprep.subr.bf16.mxu0 0
        %7710 = vmatpush1.bf16.msra.mxu0 %v7527
        %7711 = vmatprep.subr.bf16.mxu0 0
        %7712 = vmatpush1.bf16.msra.mxu0 %v7528
        %7713 = vmatprep.subr.bf16.mxu0 0
        %7714 = vmatpush1.bf16.msra.mxu0 %v7529
        %7715 = vmatprep.subr.bf16.mxu0 0
        %7716 = vmatpush1.bf16.msra.mxu0 %v7530
        %7717 = vmatprep.subr.bf16.mxu0 0
        %7718 = vmatpush1.bf16.msra.mxu0 %v7531
        %7719 = vmatprep.subr.bf16.mxu0 0
        %7720 = vmatpush1.bf16.msra.mxu0 %v7532
        %7721 = vmatprep.subr.bf16.mxu0 0
        %7722 = vmatpush1.bf16.msra.mxu0 %v7533
        %7723 = vmatprep.subr.bf16.mxu0 0
        %7724 = vmatpush1.bf16.msra.mxu0 %v7534
        %7725 = vmatprep.subr.bf16.mxu0 0
        %7726 = vmatpush1.bf16.msra.mxu0 %v7535
        %7727 = vmatprep.subr.bf16.mxu0 0
        %7728 = vmatpush1.bf16.msra.mxu0 %v7536
        %7729 = vmatprep.mubr.bf16.mxu0 %v7101
        %7730 = vmatmul.mubr.bf16.gmra.mrb[0].mxu0 %v7100
        %v7731 = vpop.f32.mrb[0].mxu0
        %v7732 = vadd.f32 %v7692, %v7731
        %v7733 = vpop.f32.mrb[0].mxu0
        %v7734 = vpop.f32.mrb[0].mxu0
        %v7735 = vpop.f32.mrb[0].mxu0
        %7736 = vdwg.mxu0
        %7737 = vmatprep.subr.bf16.mxu0 0
        %7738 = vmatpush1.bf16.msra.mxu0 %v7537
        %7739 = vmatprep.subr.bf16.mxu0 0
        %7740 = vmatpush1.bf16.msra.mxu0 %v7538
        %7741 = vmatprep.subr.bf16.mxu0 0
        %7742 = vmatpush1.bf16.msra.mxu0 %v7539
        %7743 = vmatprep.subr.bf16.mxu0 0
        %7744 = vmatpush1.bf16.msra.mxu0 %v7540
        %7745 = vmatprep.subr.bf16.mxu0 0
        %7746 = vmatpush1.bf16.msra.mxu0 %v7541
        %7747 = vmatprep.subr.bf16.mxu0 0
        %7748 = vmatpush1.bf16.msra.mxu0 %v7542
        %7749 = vmatprep.subr.bf16.mxu0 0
        %7750 = vmatpush1.bf16.msra.mxu0 %v7543
        %7751 = vmatprep.subr.bf16.mxu0 0
        %7752 = vmatpush1.bf16.msra.mxu0 %v7544
        %7753 = vmatprep.subr.bf16.mxu0 0
        %7754 = vmatpush1.bf16.msra.mxu0 %v7545
        %7755 = vmatprep.subr.bf16.mxu0 0
        %7756 = vmatpush1.bf16.msra.mxu0 %v7546
        %7757 = vmatprep.subr.bf16.mxu0 0
        %7758 = vmatpush1.bf16.msra.mxu0 %v7547
        %7759 = vmatprep.subr.bf16.mxu0 0
        %7760 = vmatpush1.bf16.msra.mxu0 %v7548
        %7761 = vmatprep.subr.bf16.mxu0 0
        %7762 = vmatpush1.bf16.msra.mxu0 %v7549
        %7763 = vmatprep.subr.bf16.mxu0 0
        %7764 = vmatpush1.bf16.msra.mxu0 %v7550
        %7765 = vmatprep.subr.bf16.mxu0 0
        %7766 = vmatpush1.bf16.msra.mxu0 %v7551
        %7767 = vmatprep.subr.bf16.mxu0 0
        %7768 = vmatpush1.bf16.msra.mxu0 %v7552
        %7769 = vmatprep.mubr.bf16.mxu0 %v7103
        %7770 = vmatmul.mubr.bf16.gmra.mrb[0].mxu0 %v7102
        %v7771 = vpop.f32.mrb[0].mxu0
        %v7772 = vadd.f32 %v7732, %v7771
        %v7773 = vpop.f32.mrb[0].mxu0
        %v7774 = vpop.f32.mrb[0].mxu0
        %v7775 = vpop.f32.mrb[0].mxu0
        %7776 = vdwg.mxu0
        %v7777 = vsel %vm1399, %v7772, -inf
        %7778 = vmax.xlane.f32.xlu0 %v7777
        %v7779 = vpop.xlane.xlu0 %7778
        %v7780 = vsub.f32 %v7772, %v7779
        %v7781 = vmul.f32 %v7780, 1.442695
        %v7782 = vpow.pop %v7781
        %v7783 = vsel %vm1399, %v7782, 0.0
        %7784 = vadd.xlane.f32.xlu0 %v7783
        %v7785 = vpop.xlane.xlu0 %7784
        %v7786 = vrcp.pop %v7785
        %v7787 = vmul.f32 %v7782, %v7786
        %v7788 = vld [vmem:[%s21] sm:$0x1]
        %7790 = vset.pattern.permute.xlu0 0
        %7791 = vperm.xlu0 %7790, %v7095
        %v7792 = vpop.permute.xlu0 %7791
        %v7794 = vmul.f32 %v7792, %v7788
        %v7795 = vadd.f32 %v7787, %v7794
        %7796 = vst [vmem:[%s878] sm:$0x1] %v7795
        %p7797 = scmp.lt.s32.totalorder %s43, 1
        %s7798 = scalar_select %p7797, %s43, 1
        %s7799 = scalar_lea.vmem %s22, %s7798
        %p7800 = scmp.lt.s32.totalorder %s43, 1
        %s7801 = scalar_select %p7800, %s43, 1
        %s7802 = smul.addr %s7801, 8
        %s7803 = scalar_lea.vmem %s23, %s7802
        %p7804 = scmp.lt.s32.totalorder %s43, 1
        %s7805 = scalar_select %p7804, %s43, 1
        %s7806 = smul.addr %s7805, 8
        %s7807 = scalar_lea.vmem %s24, %s7806
        %p7808 = scmp.lt.s32.totalorder %s43, 1
        %s7809 = scalar_select %p7808, %s43, 1
        %s7810 = smul.addr %s7809, 8
        %s7811 = scalar_lea.vmem %s25, %s7810
        // Predicated region
        $region137: #{discriminator_1024v1_forward.1} parent=107 // pred_check
          %p7812 = pneg %p528
        $region138: #{discriminator_1024v1_forward.1} parent=107 // pred_check_branch
          %7814 = sbr.rel (%p7812) target = $region140
        $region139: #{discriminator_1024v1_forward.1} parent=107 // pred_region
          _
        $region140: #{discriminator_1024v1_forward.1} parent=107 // pred_fallthru
          _
        // Predicated region
        $region141: #{discriminator_1024v1_forward.1} parent=107 // pred_check
          %p7815 = pneg %p554
        $region142: #{discriminator_1024v1_forward.1} parent=107 // pred_check_branch
          %7817 = sbr.rel (%p7815) target = $region144
        $region143: #{discriminator_1024v1_forward.1} parent=107 // pred_region
          _
        $region144: #{discriminator_1024v1_forward.1} parent=107 // pred_fallthru
          _
        // Predicated region
        $region145: #{discriminator_1024v1_forward.1} parent=107 // pred_check
          %p7818 = pneg %p580
        $region146: #{discriminator_1024v1_forward.1} parent=107 // pred_check_branch
          %7820 = sbr.rel (%p7818) target = $region148
        $region147: #{discriminator_1024v1_forward.1} parent=107 // pred_region
          _
        $region148: #{discriminator_1024v1_forward.1} parent=107 // pred_fallthru
          _
        // Predicated region
        $region149: #{discriminator_1024v1_forward.1} parent=107 // pred_check
          %p7821 = pneg %p606
        $region150: #{discriminator_1024v1_forward.1} parent=107 // pred_check_branch
          %7823 = sbr.rel (%p7821) target = $region152
        $region151: #{discriminator_1024v1_forward.1} parent=107 // pred_region
          _
        $region152: #{discriminator_1024v1_forward.1} parent=107 // pred_fallthru
          _
      $region108: #{discriminator_1024v1_forward.1} parent=5 // pred_fallthru
        _
      %p7824 = scmp.le.s32.totalorder 2, %s38
      // Predicated region
      $region153: #{discriminator_1024v1_forward.1} parent=5 // pred_check
        %p7825 = pneg %p7824
      $region154: #{discriminator_1024v1_forward.1} parent=5 // pred_check_branch
        %7827 = sbr.rel (%p7825) target = $region156
      $region155: #{discriminator_1024v1_forward.1} parent=5 // pred_region
        %s7828 = ssub.s32 %s38, 2
        // Predicated region
        $region157: #{discriminator_1024v1_forward.1} parent=155 // pred_check
          %p7829 = pneg %p534
        $region158: #{discriminator_1024v1_forward.1} parent=155 // pred_check_branch
          %7831 = sbr.rel (%p7829) target = $region160
        $region159: #{discriminator_1024v1_forward.1} parent=155 // pred_region
          %p7832 = scmp.lt.s32.totalorder %s44, 1
          %s7833 = scalar_select %p7832, %s44, 1
          %s7834 = scalar_lea.vmem %s22, %s7833
        $region160: #{discriminator_1024v1_forward.1} parent=155 // pred_fallthru
          _
        // Predicated region
        $region161: #{discriminator_1024v1_forward.1} parent=155 // pred_check
          %p7835 = pneg %p560
        $region162: #{discriminator_1024v1_forward.1} parent=155 // pred_check_branch
          %7837 = sbr.rel (%p7835) target = $region164
        $region163: #{discriminator_1024v1_forward.1} parent=155 // pred_region
          %p7838 = scmp.lt.s32.totalorder %s44, 1
          %s7839 = scalar_select %p7838, %s44, 1
          %s7840 = smul.addr %s7839, 8
          %s7841 = scalar_lea.vmem %s23, %s7840
        $region164: #{discriminator_1024v1_forward.1} parent=155 // pred_fallthru
          _
        // Predicated region
        $region165: #{discriminator_1024v1_forward.1} parent=155 // pred_check
          %p7842 = pneg %p586
        $region166: #{discriminator_1024v1_forward.1} parent=155 // pred_check_branch
          %7844 = sbr.rel (%p7842) target = $region168
        $region167: #{discriminator_1024v1_forward.1} parent=155 // pred_region
          %p7845 = scmp.lt.s32.totalorder %s44, 1
          %s7846 = scalar_select %p7845, %s44, 1
          %s7847 = smul.addr %s7846, 8
          %s7848 = scalar_lea.vmem %s24, %s7847
        $region168: #{discriminator_1024v1_forward.1} parent=155 // pred_fallthru
          _
        // Predicated region
        $region169: #{discriminator_1024v1_forward.1} parent=155 // pred_check
          %p7849 = pneg %p612
        $region170: #{discriminator_1024v1_forward.1} parent=155 // pred_check_branch
          %7851 = sbr.rel (%p7849) target = $region172
        $region171: #{discriminator_1024v1_forward.1} parent=155 // pred_region
          %p7852 = scmp.lt.s32.totalorder %s44, 1
          %s7853 = scalar_select %p7852, %s44, 1
          %s7854 = smul.addr %s7853, 8
          %s7855 = scalar_lea.vmem %s25, %s7854
        $region172: #{discriminator_1024v1_forward.1} parent=155 // pred_fallthru
          _
      $region156: #{discriminator_1024v1_forward.1} parent=5 // pred_fallthru
        _
    $region6: #{discriminator_1024v1_forward.1} parent=1 // loop_footer
      %s42 = sadd.s32 1, %s38
    $region7: #{discriminator_1024v1_forward.1} parent=1 // loop_footer_branch
      %37 = sbr.rel target = $region3
    $region8: #{discriminator_1024v1_forward.1} parent=1 // loop_exit
      _
    %7856 = vsyncpa [#allocation4], 1
    %s7857 = scalar_lea.sflag [#allocation4], 1
    %7858 = vsyncpa %s7857, 1
    %7859 = vsyncpa [#allocation6], 1
    %7860 = vsyncpa [#allocation9], 1
    %7861 = vsyncpa [#allocation12], 1

</llo_original>
